<compile_context>
chip_gen: v6e
topology: v6e:2x2x1
jax: 0.10.0
libtpu: 0.0.40
codegen_flags: <defaults>
</compile_context>

<pallas_src>
import jax
import jax.numpy as jnp
from jax import lax
from jax.experimental import pallas as pl
from jax.experimental.pallas import tpu as pltpu

D_MODEL = 32
NHEAD = 4
HEAD_DIM = D_MODEL // NHEAD
DIM_FF = 64
NUM_LAYERS = 2
LN_EPS = 1e-5


# ----------------------------- kernel helpers ------------------------------

def _layer_norm(x, gamma, beta):
    """PyTorch LayerNorm (last dim, biased variance, eps=1e-5) with fused stats.

    A single cross-lane reduction over [x ; x*x] stacked along sublanes gives
    both sum(x) and sum(x^2); var = E[x^2] - mean^2.
    """
    n = x.shape[0]
    inv_d = 1.0 / x.shape[-1]
    stats = jnp.sum(jnp.concatenate([x, x * x], axis=0), axis=-1, keepdims=True)
    mean = stats[:n] * inv_d
    var = stats[n:] * inv_d - mean * mean
    return (x - mean) * lax.rsqrt(var + LN_EPS) * gamma + beta


def _attention(q, k, v, wo, bo, B, Tq, Tk):
    """nn.MultiheadAttention core (no masks, eval mode). Q pre-scaled by 1/sqrt(hd).

    q : (B*Tq, D); k, v : (B*Tk, D)  -- full-width projection results
    wo : (D, D)  = out_proj.weight.T ; bo : (1, D)
    Heads are static lane slices; per-head score/ctx use batched einsums.
    """
    ctx_heads = []
    for h in range(NHEAD):                       # static unroll over 4 heads
        sl = slice(h * HEAD_DIM, (h + 1) * HEAD_DIM)
        qh = q[:, sl].reshape(B, Tq, HEAD_DIM)
        kh = k[:, sl].reshape(B, Tk, HEAD_DIM)
        vh = v[:, sl].reshape(B, Tk, HEAD_DIM)
        s = jnp.einsum("btc,bsc->bts", qh, kh, preferred_element_type=jnp.float32)
        s = s - jnp.max(s, axis=-1, keepdims=True)
        p = jnp.exp(s)
        # EUP reciprocal; ~1e-3 relative error on the softmax denom is acceptable here.
        p = p * pl.reciprocal(jnp.sum(p, axis=-1, keepdims=True), approx=True)
        ctx = jnp.einsum("bts,bsc->btc", p, vh, preferred_element_type=jnp.float32)
        ctx_heads.append(ctx.reshape(B * Tq, HEAD_DIM))
    ctx_all = jnp.concatenate(ctx_heads, axis=-1)            # (B*Tq, D) = concat(heads)
    return jnp.dot(ctx_all, wo, preferred_element_type=jnp.float32) + bo


# ------------------------------ host wrapper ---------------------------------

def transformer_decoder(tgt, memory, query_pos, pos, packed):
    """Mirrors TransformerDecoder.forward (return_intermediate=False, eval mode)."""
    B, T, D = tgt.shape
    S = memory.shape[1]
    F = DIM_FF
    weights = list(packed)   # 9 packed weight slabs, resident in VMEM

    def kernel(x_ref, mem_ref, qpos_ref, pos_ref,
               win_ref, bin_ref, wout_ref, bout_ref,
               w1_ref, w2_ref, fb_ref, norms_ref, fnorm_ref, out_ref):
        x = x_ref[...]              # (B*T, D)
        mem = mem_ref[...]          # (B*S, D)
        qpos = qpos_ref[...]        # (B*T, D)
        kmem = mem + pos_ref[...]   # cross-attention key input (layer-invariant)

        for l in range(NUM_LAYERS):            # static unroll, NUM_LAYERS is small
            norms = norms_ref[l]               # (6, D): [g1, b1, g2, b2, g3, b3]

            # --- self-attention: q = k = x + query_pos, v = x ---
            w_in = win_ref[2 * l]              # (D, 3D), Q columns pre-scaled
            b_in = bin_ref[2 * l]              # (1, 3D)
            qk_in = x + qpos
            qk = jnp.dot(qk_in, w_in[:, :2 * D],
                         preferred_element_type=jnp.float32) + b_in[:, :2 * D]
            v = jnp.dot(x, w_in[:, 2 * D:],
                        preferred_element_type=jnp.float32) + b_in[:, 2 * D:]
            sa = _attention(qk[:, :D], qk[:, D:], v,
                            wout_ref[2 * l], bout_ref[2 * l], B, T, T)
            x = _layer_norm(x + sa, norms[0:1], norms[1:2])

            # --- cross-attention: q = x + query_pos, k = memory + pos, v = memory ---
            w_in = win_ref[2 * l + 1]
            b_in = bin_ref[2 * l + 1]
            q = jnp.dot(x + qpos, w_in[:, :D],
                        preferred_element_type=jnp.float32) + b_in[:, :D]
            k = jnp.dot(kmem, w_in[:, D:2 * D],
                        preferred_element_type=jnp.float32) + b_in[:, D:2 * D]
            v = jnp.dot(mem, w_in[:, 2 * D:],
                        preferred_element_type=jnp.float32) + b_in[:, 2 * D:]
            ca = _attention(q, k, v, wout_ref[2 * l + 1], bout_ref[2 * l + 1], B, T, S)
            x = _layer_norm(x + ca, norms[2:3], norms[3:4])

            # --- FFN: linear2(relu(linear1(x))) ---
            fb = fb_ref[l]                     # (1, F + D)
            h = jnp.maximum(
                jnp.dot(x, w1_ref[l], preferred_element_type=jnp.float32) + fb[:, :F],
                0.0)
            f = jnp.dot(h, w2_ref[l], preferred_element_type=jnp.float32) + fb[:, F:]
            x = _layer_norm(x + f, norms[4:5], norms[5:6])

        # --- final TransformerDecoder.norm ---
        fn = fnorm_ref[...]                    # (2, D)
        x = _layer_norm(x, fn[0:1], fn[1:2])
        out_ref[...] = x.astype(out_ref.dtype)

    vmem_spec = lambda: pl.BlockSpec(memory_space=pltpu.MemorySpace.VMEM)
    n_in = 4 + len(weights)

    out = pl.pallas_call(
        kernel,
        out_shape=jax.ShapeDtypeStruct((B * T, D), tgt.dtype),
        in_specs=[vmem_spec() for _ in range(n_in)],
        out_specs=vmem_spec(),
    )(tgt.reshape(B * T, D), memory.reshape(B * S, D),
      query_pos.reshape(B * T, D), pos.reshape(B * S, D), *weights)

    return out.reshape(B, T, D)[None]          # output.unsqueeze(0)


# ------------------------- parameter prep (host side) ------------------------

def init_torch_style_params(key):
    """Random parameters in PyTorch layout (nn.MultiheadAttention / nn.Linear)."""
    D, F = D_MODEL, DIM_FF
    ks = jax.random.split(key, 10)
    s = 0.05

    def rn(k, shape):
        return jax.random.normal(k, shape, jnp.float32) * s

    p = dict(
        sa_in_w=rn(ks[0], (3 * D, D)), sa_in_b=rn(ks[1], (3 * D,)),
        sa_out_w=rn(ks[2], (D, D)),    sa_out_b=jnp.zeros((D,), jnp.float32),
        ca_in_w=rn(ks[3], (3 * D, D)), ca_in_b=rn(ks[4], (3 * D,)),
        ca_out_w=rn(ks[5], (D, D)),    ca_out_b=jnp.zeros((D,), jnp.float32),
        lin1_w=rn(ks[6], (F, D)),      lin1_b=rn(ks[7], (F,)),
        lin2_w=rn(ks[8], (D, F)),      lin2_b=rn(ks[9], (D,)),
    )
    for i in (1, 2, 3):
        p[f"n{i}_g"] = jnp.ones((D,), jnp.float32)
        p[f"n{i}_b"] = jnp.zeros((D,), jnp.float32)
    return p


def _attn_pack(in_w, in_b, out_w, out_b):
    """PyTorch MultiheadAttention params -> full-width kernel layout.

    Returns:
      w_in  : (D, 3D)  columns [Q | K | V] for `x @ w_in`, Q pre-scaled by 1/sqrt(hd)
      b_in  : (1, 3D)
      w_out : (D, D)   = out_proj.weight.T  (concat(heads) @ w_out)
      b_out : (1, D)
    """
    D = D_MODEL
    scale = 1.0 / (HEAD_DIM ** 0.5)
    wq, wk, wv = in_w[0:D], in_w[D:2 * D], in_w[2 * D:3 * D]
    bq, bk, bv = in_b[0:D], in_b[D:2 * D], in_b[2 * D:3 * D]
    w_in = jnp.concatenate([wq.T * scale, wk.T, wv.T], axis=1)          # (D, 3D)
    b_in = jnp.concatenate([bq * scale, bk, bv]).reshape(1, 3 * D)      # (1, 3D)
    return w_in, b_in, out_w.T, out_b.reshape(1, D)


def pack_params(layer_params, final_gamma, final_beta):
    """Pack all decoder parameters into 9 contiguous slabs (grouped over layers)."""
    win_l, bin_l, wout_l, bout_l = [], [], [], []
    w1_l, w2_l, ffnb_l, norms_l = [], [], [], []
    for p in layer_params:
        for prefix in ("sa", "ca"):
            w_in, b_in, w_out, b_out = _attn_pack(p[f"{prefix}_in_w"], p[f"{prefix}_in_b"],
                                                  p[f"{prefix}_out_w"], p[f"{prefix}_out_b"])
            win_l.append(w_in)
            bin_l.append(b_in)
            wout_l.append(w_out)
            bout_l.append(b_out)
        w1_l.append(p["lin1_w"].T)                       # (D, F)
        w2_l.append(p["lin2_w"].T)                       # (F, D)
        ffnb_l.append(jnp.concatenate([p["lin1_b"], p["lin2_b"]])
                      .reshape(1, DIM_FF + D_MODEL))
        norms_l.append(jnp.stack([p["n1_g"], p["n1_b"], p["n2_g"], p["n2_b"],
                                  p["n3_g"], p["n3_b"]], axis=0))
    return (
        jnp.stack(win_l),           # (2L, D, 3D)
        jnp.stack(bin_l),           # (2L, 1, 3D)
        jnp.stack(wout_l),          # (2L, D, D)
        jnp.stack(bout_l),          # (2L, 1, D)
        jnp.stack(w1_l),            # (L, D, F)
        jnp.stack(w2_l),            # (L, F, D)
        jnp.stack(ffnb_l),          # (L, 1, F + D)
        jnp.stack(norms_l),         # (L, 6, D)
        jnp.stack([final_gamma, final_beta], axis=0),    # (2, D)
    )


# ----------------------------------- main ------------------------------------

if __name__ == "__main__":
    key = jax.random.PRNGKey(0)
    B, T, S, D = 2, 8, 16, D_MODEL

    k_tgt, k_mem, k_qp, k_pos, k_params = jax.random.split(key, 5)
    tgt = jax.random.normal(k_tgt, (B, T, D), jnp.float32)
    memory = jax.random.normal(k_mem, (B, S, D), jnp.float32)
    query_pos = jax.random.normal(k_qp, (B, T, D), jnp.float32)
    pos = jax.random.normal(k_pos, (B, S, D), jnp.float32)

    layer_keys = jax.random.split(k_params, NUM_LAYERS)
    layer_params = [init_torch_style_params(lk) for lk in layer_keys]
    final_gamma = jnp.ones((D,), jnp.float32)
    final_beta = jnp.zeros((D,), jnp.float32)

    packed = pack_params(layer_params, final_gamma, final_beta)
    out = transformer_decoder(tgt, memory, query_pos, pos, packed)
    out = jax.block_until_ready(out)
    assert out.shape == (1, B, T, D), out.shape
    assert bool(jnp.all(jnp.isfinite(out)))
    print("KERNEL_OK")
</pallas_src>

<mosaic_0001>
module attributes {stable_mosaic.version = 11 : i64} {
  func.func @kernel(%arg0: memref<16x32xf32, #tpu.memory_space<vmem>>, %arg1: memref<32x32xf32, #tpu.memory_space<vmem>>, %arg2: memref<16x32xf32, #tpu.memory_space<vmem>>, %arg3: memref<32x32xf32, #tpu.memory_space<vmem>>, %arg4: memref<4x32x96xf32, #tpu.memory_space<vmem>>, %arg5: memref<4x1x96xf32, #tpu.memory_space<vmem>>, %arg6: memref<4x32x32xf32, #tpu.memory_space<vmem>>, %arg7: memref<4x1x32xf32, #tpu.memory_space<vmem>>, %arg8: memref<2x32x64xf32, #tpu.memory_space<vmem>>, %arg9: memref<2x64x32xf32, #tpu.memory_space<vmem>>, %arg10: memref<2x1x96xf32, #tpu.memory_space<vmem>>, %arg11: memref<2x6x32xf32, #tpu.memory_space<vmem>>, %arg12: memref<2x32xf32, #tpu.memory_space<vmem>>, %arg13: memref<16x32xf32, #tpu.memory_space<vmem>>) attributes {dimension_semantics = [], scalar_prefetch = 0 : i64, scratch_operands = 0 : i64, tpu.core_type = #tpu.core_type<tc>} {
    %c0 = arith.constant 0 : index
    %c0_0 = arith.constant 0 : index
    %0 = vector.load %arg0[%c0, %c0_0] : memref<16x32xf32, #tpu.memory_space<vmem>>, vector<16x32xf32>
    %c0_1 = arith.constant 0 : index
    %c0_2 = arith.constant 0 : index
    %1 = vector.load %arg1[%c0_1, %c0_2] : memref<32x32xf32, #tpu.memory_space<vmem>>, vector<32x32xf32>
    %c0_3 = arith.constant 0 : index
    %c0_4 = arith.constant 0 : index
    %2 = vector.load %arg2[%c0_3, %c0_4] : memref<16x32xf32, #tpu.memory_space<vmem>>, vector<16x32xf32>
    %c0_5 = arith.constant 0 : index
    %c0_6 = arith.constant 0 : index
    %3 = vector.load %arg3[%c0_5, %c0_6] : memref<32x32xf32, #tpu.memory_space<vmem>>, vector<32x32xf32>
    %4 = arith.addf %1, %3 : vector<32x32xf32>
    %c0_7 = arith.constant 0 : index
    %c0_8 = arith.constant 0 : index
    %c0_9 = arith.constant 0 : index
    %5 = vector.load %arg11[%c0_7, %c0_8, %c0_9] : memref<2x6x32xf32, #tpu.memory_space<vmem>>, vector<1x6x32xf32>
    %6 = vector.shape_cast %5 : vector<1x6x32xf32> to vector<6x32xf32>
    %c0_10 = arith.constant 0 : index
    %c0_11 = arith.constant 0 : index
    %c0_12 = arith.constant 0 : index
    %7 = vector.load %arg4[%c0_10, %c0_11, %c0_12] : memref<4x32x96xf32, #tpu.memory_space<vmem>>, vector<1x32x96xf32>
    %8 = vector.shape_cast %7 : vector<1x32x96xf32> to vector<32x96xf32>
    %c0_13 = arith.constant 0 : index
    %c0_14 = arith.constant 0 : index
    %c0_15 = arith.constant 0 : index
    %9 = vector.load %arg5[%c0_13, %c0_14, %c0_15] : memref<4x1x96xf32, #tpu.memory_space<vmem>>, vector<1x1x96xf32>
    %10 = vector.shape_cast %9 : vector<1x1x96xf32> to vector<1x96xf32>
    %11 = arith.addf %0, %2 : vector<16x32xf32>
    %12 = vector.extract_strided_slice %8 {offsets = [0, 0], sizes = [32, 64], strides = [1, 1]} : vector<32x96xf32> to vector<32x64xf32>
    %cst = arith.constant dense<0.000000e+00> : vector<16x64xf32>
    %13 = tpu.matmul %11, %12, %cst {dimension_numbers = #tpu.dot_dimension_numbers<[1], [0], [0], [1], [0, 0, 1, 1], [], []>} : vector<16x32xf32>, vector<32x64xf32>, vector<16x64xf32> -> vector<16x64xf32>
    %14 = vector.extract_strided_slice %10 {offsets = [0, 0], sizes = [1, 64], strides = [1, 1]} : vector<1x96xf32> to vector<1x64xf32>
    %15 = vector.broadcast %14 : vector<1x64xf32> to vector<16x64xf32>
    %16 = arith.addf %13, %15 : vector<16x64xf32>
    %17 = vector.extract_strided_slice %8 {offsets = [0, 64], sizes = [32, 32], strides = [1, 1]} : vector<32x96xf32> to vector<32x32xf32>
    %cst_16 = arith.constant dense<0.000000e+00> : vector<16x32xf32>
    %18 = tpu.matmul %0, %17, %cst_16 {dimension_numbers = #tpu.dot_dimension_numbers<[1], [0], [0], [1], [0, 0, 1, 1], [], []>} : vector<16x32xf32>, vector<32x32xf32>, vector<16x32xf32> -> vector<16x32xf32>
    %19 = vector.extract_strided_slice %10 {offsets = [0, 64], sizes = [1, 32], strides = [1, 1]} : vector<1x96xf32> to vector<1x32xf32>
    %20 = vector.broadcast %19 : vector<1x32xf32> to vector<16x32xf32>
    %21 = arith.addf %18, %20 : vector<16x32xf32>
    %22 = vector.extract_strided_slice %16 {offsets = [0, 0], sizes = [16, 32], strides = [1, 1]} : vector<16x64xf32> to vector<16x32xf32>
    %23 = vector.extract_strided_slice %16 {offsets = [0, 32], sizes = [16, 32], strides = [1, 1]} : vector<16x64xf32> to vector<16x32xf32>
    %c0_17 = arith.constant 0 : index
    %c0_18 = arith.constant 0 : index
    %c0_19 = arith.constant 0 : index
    %24 = vector.load %arg6[%c0_17, %c0_18, %c0_19] : memref<4x32x32xf32, #tpu.memory_space<vmem>>, vector<1x32x32xf32>
    %25 = vector.shape_cast %24 : vector<1x32x32xf32> to vector<32x32xf32>
    %c0_20 = arith.constant 0 : index
    %c0_21 = arith.constant 0 : index
    %c0_22 = arith.constant 0 : index
    %26 = vector.load %arg7[%c0_20, %c0_21, %c0_22] : memref<4x1x32xf32, #tpu.memory_space<vmem>>, vector<1x1x32xf32>
    %27 = vector.shape_cast %26 : vector<1x1x32xf32> to vector<1x32xf32>
    %28 = vector.extract_strided_slice %22 {offsets = [0, 0], sizes = [16, 8], strides = [1, 1]} : vector<16x32xf32> to vector<16x8xf32>
    %29 = vector.shape_cast %28 : vector<16x8xf32> to vector<2x8x8xf32>
    %30 = vector.extract_strided_slice %23 {offsets = [0, 0], sizes = [16, 8], strides = [1, 1]} : vector<16x32xf32> to vector<16x8xf32>
    %31 = vector.shape_cast %30 : vector<16x8xf32> to vector<2x8x8xf32>
    %32 = vector.extract_strided_slice %21 {offsets = [0, 0], sizes = [16, 8], strides = [1, 1]} : vector<16x32xf32> to vector<16x8xf32>
    %33 = vector.shape_cast %32 : vector<16x8xf32> to vector<2x8x8xf32>
    "tpu.trace_start"() <{level = 10 : i32, message = "btc,bsc->bts"}> : () -> ()
    %cst_23 = arith.constant dense<0.000000e+00> : vector<2x8x8xf32>
    %34 = tpu.matmul %29, %31, %cst_23 {dimension_numbers = #tpu.dot_dimension_numbers<[2], [2], [1], [1], [0, 0, 0, 1, 1, 1], [0], [0]>} : vector<2x8x8xf32>, vector<2x8x8xf32>, vector<2x8x8xf32> -> vector<2x8x8xf32>
    "tpu.trace_stop"() : () -> ()
    %cst_24 = arith.constant dense<0xFF800000> : vector<2x8xf32>
    %35 = vector.multi_reduction <maximumf>, %34, %cst_24 [2] : vector<2x8x8xf32> to vector<2x8xf32>
    %36 = vector.shape_cast %35 : vector<2x8xf32> to vector<2x8x1xf32>
    %37 = vector.broadcast %36 : vector<2x8x1xf32> to vector<2x8x8xf32>
    %38 = arith.subf %34, %37 : vector<2x8x8xf32>
    %39 = math.exp %38 : vector<2x8x8xf32>
    %cst_25 = arith.constant dense<0.000000e+00> : vector<2x8xf32>
    %40 = vector.multi_reduction <add>, %39, %cst_25 [2] : vector<2x8x8xf32> to vector<2x8xf32>
    %41 = vector.shape_cast %40 : vector<2x8xf32> to vector<2x8x1xf32>
    %42 = tpu.reciprocal %41 {approx = true} : vector<2x8x1xf32> -> vector<2x8x1xf32>
    %43 = vector.broadcast %42 : vector<2x8x1xf32> to vector<2x8x8xf32>
    %44 = arith.mulf %39, %43 : vector<2x8x8xf32>
    "tpu.trace_start"() <{level = 10 : i32, message = "bts,bsc->btc"}> : () -> ()
    %cst_26 = arith.constant dense<0.000000e+00> : vector<2x8x8xf32>
    %45 = tpu.matmul %44, %33, %cst_26 {dimension_numbers = #tpu.dot_dimension_numbers<[2], [1], [1], [2], [0, 0, 0, 1, 1, 2], [0], [0]>} : vector<2x8x8xf32>, vector<2x8x8xf32>, vector<2x8x8xf32> -> vector<2x8x8xf32>
    "tpu.trace_stop"() : () -> ()
    %46 = vector.shape_cast %45 : vector<2x8x8xf32> to vector<16x8xf32>
    %47 = vector.extract_strided_slice %22 {offsets = [0, 8], sizes = [16, 8], strides = [1, 1]} : vector<16x32xf32> to vector<16x8xf32>
    %48 = vector.shape_cast %47 : vector<16x8xf32> to vector<2x8x8xf32>
    %49 = vector.extract_strided_slice %23 {offsets = [0, 8], sizes = [16, 8], strides = [1, 1]} : vector<16x32xf32> to vector<16x8xf32>
    %50 = vector.shape_cast %49 : vector<16x8xf32> to vector<2x8x8xf32>
    %51 = vector.extract_strided_slice %21 {offsets = [0, 8], sizes = [16, 8], strides = [1, 1]} : vector<16x32xf32> to vector<16x8xf32>
    %52 = vector.shape_cast %51 : vector<16x8xf32> to vector<2x8x8xf32>
    "tpu.trace_start"() <{level = 10 : i32, message = "btc,bsc->bts"}> : () -> ()
    %cst_27 = arith.constant dense<0.000000e+00> : vector<2x8x8xf32>
    %53 = tpu.matmul %48, %50, %cst_27 {dimension_numbers = #tpu.dot_dimension_numbers<[2], [2], [1], [1], [0, 0, 0, 1, 1, 1], [0], [0]>} : vector<2x8x8xf32>, vector<2x8x8xf32>, vector<2x8x8xf32> -> vector<2x8x8xf32>
    "tpu.trace_stop"() : () -> ()
    %cst_28 = arith.constant dense<0xFF800000> : vector<2x8xf32>
    %54 = vector.multi_reduction <maximumf>, %53, %cst_28 [2] : vector<2x8x8xf32> to vector<2x8xf32>
    %55 = vector.shape_cast %54 : vector<2x8xf32> to vector<2x8x1xf32>
    %56 = vector.broadcast %55 : vector<2x8x1xf32> to vector<2x8x8xf32>
    %57 = arith.subf %53, %56 : vector<2x8x8xf32>
    %58 = math.exp %57 : vector<2x8x8xf32>
    %cst_29 = arith.constant dense<0.000000e+00> : vector<2x8xf32>
    %59 = vector.multi_reduction <add>, %58, %cst_29 [2] : vector<2x8x8xf32> to vector<2x8xf32>
    %60 = vector.shape_cast %59 : vector<2x8xf32> to vector<2x8x1xf32>
    %61 = tpu.reciprocal %60 {approx = true} : vector<2x8x1xf32> -> vector<2x8x1xf32>
    %62 = vector.broadcast %61 : vector<2x8x1xf32> to vector<2x8x8xf32>
    %63 = arith.mulf %58, %62 : vector<2x8x8xf32>
    "tpu.trace_start"() <{level = 10 : i32, message = "bts,bsc->btc"}> : () -> ()
    %cst_30 = arith.constant dense<0.000000e+00> : vector<2x8x8xf32>
    %64 = tpu.matmul %63, %52, %cst_30 {dimension_numbers = #tpu.dot_dimension_numbers<[2], [1], [1], [2], [0, 0, 0, 1, 1, 2], [0], [0]>} : vector<2x8x8xf32>, vector<2x8x8xf32>, vector<2x8x8xf32> -> vector<2x8x8xf32>
    "tpu.trace_stop"() : () -> ()
    %65 = vector.shape_cast %64 : vector<2x8x8xf32> to vector<16x8xf32>
    %66 = vector.extract_strided_slice %22 {offsets = [0, 16], sizes = [16, 8], strides = [1, 1]} : vector<16x32xf32> to vector<16x8xf32>
    %67 = vector.shape_cast %66 : vector<16x8xf32> to vector<2x8x8xf32>
    %68 = vector.extract_strided_slice %23 {offsets = [0, 16], sizes = [16, 8], strides = [1, 1]} : vector<16x32xf32> to vector<16x8xf32>
    %69 = vector.shape_cast %68 : vector<16x8xf32> to vector<2x8x8xf32>
    %70 = vector.extract_strided_slice %21 {offsets = [0, 16], sizes = [16, 8], strides = [1, 1]} : vector<16x32xf32> to vector<16x8xf32>
    %71 = vector.shape_cast %70 : vector<16x8xf32> to vector<2x8x8xf32>
    "tpu.trace_start"() <{level = 10 : i32, message = "btc,bsc->bts"}> : () -> ()
    %cst_31 = arith.constant dense<0.000000e+00> : vector<2x8x8xf32>
    %72 = tpu.matmul %67, %69, %cst_31 {dimension_numbers = #tpu.dot_dimension_numbers<[2], [2], [1], [1], [0, 0, 0, 1, 1, 1], [0], [0]>} : vector<2x8x8xf32>, vector<2x8x8xf32>, vector<2x8x8xf32> -> vector<2x8x8xf32>
    "tpu.trace_stop"() : () -> ()
    %cst_32 = arith.constant dense<0xFF800000> : vector<2x8xf32>
    %73 = vector.multi_reduction <maximumf>, %72, %cst_32 [2] : vector<2x8x8xf32> to vector<2x8xf32>
    %74 = vector.shape_cast %73 : vector<2x8xf32> to vector<2x8x1xf32>
    %75 = vector.broadcast %74 : vector<2x8x1xf32> to vector<2x8x8xf32>
    %76 = arith.subf %72, %75 : vector<2x8x8xf32>
    %77 = math.exp %76 : vector<2x8x8xf32>
    %cst_33 = arith.constant dense<0.000000e+00> : vector<2x8xf32>
    %78 = vector.multi_reduction <add>, %77, %cst_33 [2] : vector<2x8x8xf32> to vector<2x8xf32>
    %79 = vector.shape_cast %78 : vector<2x8xf32> to vector<2x8x1xf32>
    %80 = tpu.reciprocal %79 {approx = true} : vector<2x8x1xf32> -> vector<2x8x1xf32>
    %81 = vector.broadcast %80 : vector<2x8x1xf32> to vector<2x8x8xf32>
    %82 = arith.mulf %77, %81 : vector<2x8x8xf32>
    "tpu.trace_start"() <{level = 10 : i32, message = "bts,bsc->btc"}> : () -> ()
    %cst_34 = arith.constant dense<0.000000e+00> : vector<2x8x8xf32>
    %83 = tpu.matmul %82, %71, %cst_34 {dimension_numbers = #tpu.dot_dimension_numbers<[2], [1], [1], [2], [0, 0, 0, 1, 1, 2], [0], [0]>} : vector<2x8x8xf32>, vector<2x8x8xf32>, vector<2x8x8xf32> -> vector<2x8x8xf32>
    "tpu.trace_stop"() : () -> ()
    %84 = vector.shape_cast %83 : vector<2x8x8xf32> to vector<16x8xf32>
    %85 = vector.extract_strided_slice %22 {offsets = [0, 24], sizes = [16, 8], strides = [1, 1]} : vector<16x32xf32> to vector<16x8xf32>
    %86 = vector.shape_cast %85 : vector<16x8xf32> to vector<2x8x8xf32>
    %87 = vector.extract_strided_slice %23 {offsets = [0, 24], sizes = [16, 8], strides = [1, 1]} : vector<16x32xf32> to vector<16x8xf32>
    %88 = vector.shape_cast %87 : vector<16x8xf32> to vector<2x8x8xf32>
    %89 = vector.extract_strided_slice %21 {offsets = [0, 24], sizes = [16, 8], strides = [1, 1]} : vector<16x32xf32> to vector<16x8xf32>
    %90 = vector.shape_cast %89 : vector<16x8xf32> to vector<2x8x8xf32>
    "tpu.trace_start"() <{level = 10 : i32, message = "btc,bsc->bts"}> : () -> ()
    %cst_35 = arith.constant dense<0.000000e+00> : vector<2x8x8xf32>
    %91 = tpu.matmul %86, %88, %cst_35 {dimension_numbers = #tpu.dot_dimension_numbers<[2], [2], [1], [1], [0, 0, 0, 1, 1, 1], [0], [0]>} : vector<2x8x8xf32>, vector<2x8x8xf32>, vector<2x8x8xf32> -> vector<2x8x8xf32>
    "tpu.trace_stop"() : () -> ()
    %cst_36 = arith.constant dense<0xFF800000> : vector<2x8xf32>
    %92 = vector.multi_reduction <maximumf>, %91, %cst_36 [2] : vector<2x8x8xf32> to vector<2x8xf32>
    %93 = vector.shape_cast %92 : vector<2x8xf32> to vector<2x8x1xf32>
    %94 = vector.broadcast %93 : vector<2x8x1xf32> to vector<2x8x8xf32>
    %95 = arith.subf %91, %94 : vector<2x8x8xf32>
    %96 = math.exp %95 : vector<2x8x8xf32>
    %cst_37 = arith.constant dense<0.000000e+00> : vector<2x8xf32>
    %97 = vector.multi_reduction <add>, %96, %cst_37 [2] : vector<2x8x8xf32> to vector<2x8xf32>
    %98 = vector.shape_cast %97 : vector<2x8xf32> to vector<2x8x1xf32>
    %99 = tpu.reciprocal %98 {approx = true} : vector<2x8x1xf32> -> vector<2x8x1xf32>
    %100 = vector.broadcast %99 : vector<2x8x1xf32> to vector<2x8x8xf32>
    %101 = arith.mulf %96, %100 : vector<2x8x8xf32>
    "tpu.trace_start"() <{level = 10 : i32, message = "bts,bsc->btc"}> : () -> ()
    %cst_38 = arith.constant dense<0.000000e+00> : vector<2x8x8xf32>
    %102 = tpu.matmul %101, %90, %cst_38 {dimension_numbers = #tpu.dot_dimension_numbers<[2], [1], [1], [2], [0, 0, 0, 1, 1, 2], [0], [0]>} : vector<2x8x8xf32>, vector<2x8x8xf32>, vector<2x8x8xf32> -> vector<2x8x8xf32>
    "tpu.trace_stop"() : () -> ()
    %103 = vector.shape_cast %102 : vector<2x8x8xf32> to vector<16x8xf32>
    %104 = tpu.concatenate %46, %65, %84, %103 in 1 : vector<16x8xf32>, vector<16x8xf32>, vector<16x8xf32>, vector<16x8xf32> -> vector<16x32xf32>
    %cst_39 = arith.constant dense<0.000000e+00> : vector<16x32xf32>
    %105 = tpu.matmul %104, %25, %cst_39 {dimension_numbers = #tpu.dot_dimension_numbers<[1], [0], [0], [1], [0, 0, 1, 1], [], []>} : vector<16x32xf32>, vector<32x32xf32>, vector<16x32xf32> -> vector<16x32xf32>
    %106 = vector.broadcast %27 : vector<1x32xf32> to vector<16x32xf32>
    %107 = arith.addf %105, %106 : vector<16x32xf32>
    %108 = arith.addf %0, %107 : vector<16x32xf32>
    %109 = vector.extract_strided_slice %6 {offsets = [0, 0], sizes = [1, 32], strides = [1, 1]} : vector<6x32xf32> to vector<1x32xf32>
    %110 = vector.extract_strided_slice %6 {offsets = [1, 0], sizes = [1, 32], strides = [1, 1]} : vector<6x32xf32> to vector<1x32xf32>
    %111 = arith.mulf %108, %108 : vector<16x32xf32>
    %112 = tpu.concatenate %108, %111 in 0 : vector<16x32xf32>, vector<16x32xf32> -> vector<32x32xf32>
    %cst_40 = arith.constant dense<0.000000e+00> : vector<32xf32>
    %113 = vector.multi_reduction <add>, %112, %cst_40 [1] : vector<32x32xf32> to vector<32xf32>
    %114 = vector.shape_cast %113 : vector<32xf32> to vector<32x1xf32>
    %115 = vector.extract_strided_slice %114 {offsets = [0, 0], sizes = [16, 1], strides = [1, 1]} : vector<32x1xf32> to vector<16x1xf32>
    %cst_41 = arith.constant 3.125000e-02 : f32
    %116 = vector.broadcast %cst_41 : f32 to vector<16x1xf32>
    %117 = arith.mulf %115, %116 : vector<16x1xf32>
    %118 = vector.extract_strided_slice %114 {offsets = [16, 0], sizes = [16, 1], strides = [1, 1]} : vector<32x1xf32> to vector<16x1xf32>
    %cst_42 = arith.constant 3.125000e-02 : f32
    %119 = vector.broadcast %cst_42 : f32 to vector<16x1xf32>
    %120 = arith.mulf %118, %119 : vector<16x1xf32>
    %121 = arith.mulf %117, %117 : vector<16x1xf32>
    %122 = arith.subf %120, %121 : vector<16x1xf32>
    %123 = vector.broadcast %117 : vector<16x1xf32> to vector<16x32xf32>
    %124 = arith.subf %108, %123 : vector<16x32xf32>
    %cst_43 = arith.constant 9.99999974E-6 : f32
    %125 = vector.broadcast %cst_43 : f32 to vector<16x1xf32>
    %126 = arith.addf %122, %125 : vector<16x1xf32>
    %127 = math.rsqrt %126 : vector<16x1xf32>
    %128 = vector.broadcast %127 : vector<16x1xf32> to vector<16x32xf32>
    %129 = arith.mulf %124, %128 : vector<16x32xf32>
    %130 = vector.broadcast %109 : vector<1x32xf32> to vector<16x32xf32>
    %131 = arith.mulf %129, %130 : vector<16x32xf32>
    %132 = vector.broadcast %110 : vector<1x32xf32> to vector<16x32xf32>
    %133 = arith.addf %131, %132 : vector<16x32xf32>
    %c1 = arith.constant 1 : index
    %c0_44 = arith.constant 0 : index
    %c0_45 = arith.constant 0 : index
    %134 = vector.load %arg4[%c1, %c0_44, %c0_45] : memref<4x32x96xf32, #tpu.memory_space<vmem>>, vector<1x32x96xf32>
    %135 = vector.shape_cast %134 : vector<1x32x96xf32> to vector<32x96xf32>
    %c1_46 = arith.constant 1 : index
    %c0_47 = arith.constant 0 : index
    %c0_48 = arith.constant 0 : index
    %136 = vector.load %arg5[%c1_46, %c0_47, %c0_48] : memref<4x1x96xf32, #tpu.memory_space<vmem>>, vector<1x1x96xf32>
    %137 = vector.shape_cast %136 : vector<1x1x96xf32> to vector<1x96xf32>
    %138 = arith.addf %133, %2 : vector<16x32xf32>
    %139 = vector.extract_strided_slice %135 {offsets = [0, 0], sizes = [32, 32], strides = [1, 1]} : vector<32x96xf32> to vector<32x32xf32>
    %cst_49 = arith.constant dense<0.000000e+00> : vector<16x32xf32>
    %140 = tpu.matmul %138, %139, %cst_49 {dimension_numbers = #tpu.dot_dimension_numbers<[1], [0], [0], [1], [0, 0, 1, 1], [], []>} : vector<16x32xf32>, vector<32x32xf32>, vector<16x32xf32> -> vector<16x32xf32>
    %141 = vector.extract_strided_slice %137 {offsets = [0, 0], sizes = [1, 32], strides = [1, 1]} : vector<1x96xf32> to vector<1x32xf32>
    %142 = vector.broadcast %141 : vector<1x32xf32> to vector<16x32xf32>
    %143 = arith.addf %140, %142 : vector<16x32xf32>
    %144 = vector.extract_strided_slice %135 {offsets = [0, 32], sizes = [32, 32], strides = [1, 1]} : vector<32x96xf32> to vector<32x32xf32>
    %cst_50 = arith.constant dense<0.000000e+00> : vector<32x32xf32>
    %145 = tpu.matmul %4, %144, %cst_50 {dimension_numbers = #tpu.dot_dimension_numbers<[1], [0], [0], [1], [0, 0, 1, 1], [], []>} : vector<32x32xf32>, vector<32x32xf32>, vector<32x32xf32> -> vector<32x32xf32>
    %146 = vector.extract_strided_slice %137 {offsets = [0, 32], sizes = [1, 32], strides = [1, 1]} : vector<1x96xf32> to vector<1x32xf32>
    %147 = vector.broadcast %146 : vector<1x32xf32> to vector<32x32xf32>
    %148 = arith.addf %145, %147 : vector<32x32xf32>
    %149 = vector.extract_strided_slice %135 {offsets = [0, 64], sizes = [32, 32], strides = [1, 1]} : vector<32x96xf32> to vector<32x32xf32>
    %cst_51 = arith.constant dense<0.000000e+00> : vector<32x32xf32>
    %150 = tpu.matmul %1, %149, %cst_51 {dimension_numbers = #tpu.dot_dimension_numbers<[1], [0], [0], [1], [0, 0, 1, 1], [], []>} : vector<32x32xf32>, vector<32x32xf32>, vector<32x32xf32> -> vector<32x32xf32>
    %151 = vector.extract_strided_slice %137 {offsets = [0, 64], sizes = [1, 32], strides = [1, 1]} : vector<1x96xf32> to vector<1x32xf32>
    %152 = vector.broadcast %151 : vector<1x32xf32> to vector<32x32xf32>
    %153 = arith.addf %150, %152 : vector<32x32xf32>
    %c1_52 = arith.constant 1 : index
    %c0_53 = arith.constant 0 : index
    %c0_54 = arith.constant 0 : index
    %154 = vector.load %arg6[%c1_52, %c0_53, %c0_54] : memref<4x32x32xf32, #tpu.memory_space<vmem>>, vector<1x32x32xf32>
    %155 = vector.shape_cast %154 : vector<1x32x32xf32> to vector<32x32xf32>
    %c1_55 = arith.constant 1 : index
    %c0_56 = arith.constant 0 : index
    %c0_57 = arith.constant 0 : index
    %156 = vector.load %arg7[%c1_55, %c0_56, %c0_57] : memref<4x1x32xf32, #tpu.memory_space<vmem>>, vector<1x1x32xf32>
    %157 = vector.shape_cast %156 : vector<1x1x32xf32> to vector<1x32xf32>
    %158 = vector.extract_strided_slice %143 {offsets = [0, 0], sizes = [16, 8], strides = [1, 1]} : vector<16x32xf32> to vector<16x8xf32>
    %159 = vector.shape_cast %158 : vector<16x8xf32> to vector<2x8x8xf32>
    %160 = vector.extract_strided_slice %148 {offsets = [0, 0], sizes = [32, 8], strides = [1, 1]} : vector<32x32xf32> to vector<32x8xf32>
    %161 = vector.shape_cast %160 : vector<32x8xf32> to vector<2x16x8xf32>
    %162 = vector.extract_strided_slice %153 {offsets = [0, 0], sizes = [32, 8], strides = [1, 1]} : vector<32x32xf32> to vector<32x8xf32>
    %163 = vector.shape_cast %162 : vector<32x8xf32> to vector<2x16x8xf32>
    "tpu.trace_start"() <{level = 10 : i32, message = "btc,bsc->bts"}> : () -> ()
    %cst_58 = arith.constant dense<0.000000e+00> : vector<2x8x16xf32>
    %164 = tpu.matmul %159, %161, %cst_58 {dimension_numbers = #tpu.dot_dimension_numbers<[2], [2], [1], [1], [0, 0, 0, 1, 1, 1], [0], [0]>} : vector<2x8x8xf32>, vector<2x16x8xf32>, vector<2x8x16xf32> -> vector<2x8x16xf32>
    "tpu.trace_stop"() : () -> ()
    %cst_59 = arith.constant dense<0xFF800000> : vector<2x8xf32>
    %165 = vector.multi_reduction <maximumf>, %164, %cst_59 [2] : vector<2x8x16xf32> to vector<2x8xf32>
    %166 = vector.shape_cast %165 : vector<2x8xf32> to vector<2x8x1xf32>
    %167 = vector.broadcast %166 : vector<2x8x1xf32> to vector<2x8x16xf32>
    %168 = arith.subf %164, %167 : vector<2x8x16xf32>
    %169 = math.exp %168 : vector<2x8x16xf32>
    %cst_60 = arith.constant dense<0.000000e+00> : vector<2x8xf32>
    %170 = vector.multi_reduction <add>, %169, %cst_60 [2] : vector<2x8x16xf32> to vector<2x8xf32>
    %171 = vector.shape_cast %170 : vector<2x8xf32> to vector<2x8x1xf32>
    %172 = tpu.reciprocal %171 {approx = true} : vector<2x8x1xf32> -> vector<2x8x1xf32>
    %173 = vector.broadcast %172 : vector<2x8x1xf32> to vector<2x8x16xf32>
    %174 = arith.mulf %169, %173 : vector<2x8x16xf32>
    "tpu.trace_start"() <{level = 10 : i32, message = "bts,bsc->btc"}> : () -> ()
    %cst_61 = arith.constant dense<0.000000e+00> : vector<2x8x8xf32>
    %175 = tpu.matmul %174, %163, %cst_61 {dimension_numbers = #tpu.dot_dimension_numbers<[2], [1], [1], [2], [0, 0, 0, 1, 1, 2], [0], [0]>} : vector<2x8x16xf32>, vector<2x16x8xf32>, vector<2x8x8xf32> -> vector<2x8x8xf32>
    "tpu.trace_stop"() : () -> ()
    %176 = vector.shape_cast %175 : vector<2x8x8xf32> to vector<16x8xf32>
    %177 = vector.extract_strided_slice %143 {offsets = [0, 8], sizes = [16, 8], strides = [1, 1]} : vector<16x32xf32> to vector<16x8xf32>
    %178 = vector.shape_cast %177 : vector<16x8xf32> to vector<2x8x8xf32>
    %179 = vector.extract_strided_slice %148 {offsets = [0, 8], sizes = [32, 8], strides = [1, 1]} : vector<32x32xf32> to vector<32x8xf32>
    %180 = vector.shape_cast %179 : vector<32x8xf32> to vector<2x16x8xf32>
    %181 = vector.extract_strided_slice %153 {offsets = [0, 8], sizes = [32, 8], strides = [1, 1]} : vector<32x32xf32> to vector<32x8xf32>
    %182 = vector.shape_cast %181 : vector<32x8xf32> to vector<2x16x8xf32>
    "tpu.trace_start"() <{level = 10 : i32, message = "btc,bsc->bts"}> : () -> ()
    %cst_62 = arith.constant dense<0.000000e+00> : vector<2x8x16xf32>
    %183 = tpu.matmul %178, %180, %cst_62 {dimension_numbers = #tpu.dot_dimension_numbers<[2], [2], [1], [1], [0, 0, 0, 1, 1, 1], [0], [0]>} : vector<2x8x8xf32>, vector<2x16x8xf32>, vector<2x8x16xf32> -> vector<2x8x16xf32>
    "tpu.trace_stop"() : () -> ()
    %cst_63 = arith.constant dense<0xFF800000> : vector<2x8xf32>
    %184 = vector.multi_reduction <maximumf>, %183, %cst_63 [2] : vector<2x8x16xf32> to vector<2x8xf32>
    %185 = vector.shape_cast %184 : vector<2x8xf32> to vector<2x8x1xf32>
    %186 = vector.broadcast %185 : vector<2x8x1xf32> to vector<2x8x16xf32>
    %187 = arith.subf %183, %186 : vector<2x8x16xf32>
    %188 = math.exp %187 : vector<2x8x16xf32>
    %cst_64 = arith.constant dense<0.000000e+00> : vector<2x8xf32>
    %189 = vector.multi_reduction <add>, %188, %cst_64 [2] : vector<2x8x16xf32> to vector<2x8xf32>
    %190 = vector.shape_cast %189 : vector<2x8xf32> to vector<2x8x1xf32>
    %191 = tpu.reciprocal %190 {approx = true} : vector<2x8x1xf32> -> vector<2x8x1xf32>
    %192 = vector.broadcast %191 : vector<2x8x1xf32> to vector<2x8x16xf32>
    %193 = arith.mulf %188, %192 : vector<2x8x16xf32>
    "tpu.trace_start"() <{level = 10 : i32, message = "bts,bsc->btc"}> : () -> ()
    %cst_65 = arith.constant dense<0.000000e+00> : vector<2x8x8xf32>
    %194 = tpu.matmul %193, %182, %cst_65 {dimension_numbers = #tpu.dot_dimension_numbers<[2], [1], [1], [2], [0, 0, 0, 1, 1, 2], [0], [0]>} : vector<2x8x16xf32>, vector<2x16x8xf32>, vector<2x8x8xf32> -> vector<2x8x8xf32>
    "tpu.trace_stop"() : () -> ()
    %195 = vector.shape_cast %194 : vector<2x8x8xf32> to vector<16x8xf32>
    %196 = vector.extract_strided_slice %143 {offsets = [0, 16], sizes = [16, 8], strides = [1, 1]} : vector<16x32xf32> to vector<16x8xf32>
    %197 = vector.shape_cast %196 : vector<16x8xf32> to vector<2x8x8xf32>
    %198 = vector.extract_strided_slice %148 {offsets = [0, 16], sizes = [32, 8], strides = [1, 1]} : vector<32x32xf32> to vector<32x8xf32>
    %199 = vector.shape_cast %198 : vector<32x8xf32> to vector<2x16x8xf32>
    %200 = vector.extract_strided_slice %153 {offsets = [0, 16], sizes = [32, 8], strides = [1, 1]} : vector<32x32xf32> to vector<32x8xf32>
    %201 = vector.shape_cast %200 : vector<32x8xf32> to vector<2x16x8xf32>
    "tpu.trace_start"() <{level = 10 : i32, message = "btc,bsc->bts"}> : () -> ()
    %cst_66 = arith.constant dense<0.000000e+00> : vector<2x8x16xf32>
    %202 = tpu.matmul %197, %199, %cst_66 {dimension_numbers = #tpu.dot_dimension_numbers<[2], [2], [1], [1], [0, 0, 0, 1, 1, 1], [0], [0]>} : vector<2x8x8xf32>, vector<2x16x8xf32>, vector<2x8x16xf32> -> vector<2x8x16xf32>
    "tpu.trace_stop"() : () -> ()
    %cst_67 = arith.constant dense<0xFF800000> : vector<2x8xf32>
    %203 = vector.multi_reduction <maximumf>, %202, %cst_67 [2] : vector<2x8x16xf32> to vector<2x8xf32>
    %204 = vector.shape_cast %203 : vector<2x8xf32> to vector<2x8x1xf32>
    %205 = vector.broadcast %204 : vector<2x8x1xf32> to vector<2x8x16xf32>
    %206 = arith.subf %202, %205 : vector<2x8x16xf32>
    %207 = math.exp %206 : vector<2x8x16xf32>
    %cst_68 = arith.constant dense<0.000000e+00> : vector<2x8xf32>
    %208 = vector.multi_reduction <add>, %207, %cst_68 [2] : vector<2x8x16xf32> to vector<2x8xf32>
    %209 = vector.shape_cast %208 : vector<2x8xf32> to vector<2x8x1xf32>
    %210 = tpu.reciprocal %209 {approx = true} : vector<2x8x1xf32> -> vector<2x8x1xf32>
    %211 = vector.broadcast %210 : vector<2x8x1xf32> to vector<2x8x16xf32>
    %212 = arith.mulf %207, %211 : vector<2x8x16xf32>
    "tpu.trace_start"() <{level = 10 : i32, message = "bts,bsc->btc"}> : () -> ()
    %cst_69 = arith.constant dense<0.000000e+00> : vector<2x8x8xf32>
    %213 = tpu.matmul %212, %201, %cst_69 {dimension_numbers = #tpu.dot_dimension_numbers<[2], [1], [1], [2], [0, 0, 0, 1, 1, 2], [0], [0]>} : vector<2x8x16xf32>, vector<2x16x8xf32>, vector<2x8x8xf32> -> vector<2x8x8xf32>
    "tpu.trace_stop"() : () -> ()
    %214 = vector.shape_cast %213 : vector<2x8x8xf32> to vector<16x8xf32>
    %215 = vector.extract_strided_slice %143 {offsets = [0, 24], sizes = [16, 8], strides = [1, 1]} : vector<16x32xf32> to vector<16x8xf32>
    %216 = vector.shape_cast %215 : vector<16x8xf32> to vector<2x8x8xf32>
    %217 = vector.extract_strided_slice %148 {offsets = [0, 24], sizes = [32, 8], strides = [1, 1]} : vector<32x32xf32> to vector<32x8xf32>
    %218 = vector.shape_cast %217 : vector<32x8xf32> to vector<2x16x8xf32>
    %219 = vector.extract_strided_slice %153 {offsets = [0, 24], sizes = [32, 8], strides = [1, 1]} : vector<32x32xf32> to vector<32x8xf32>
    %220 = vector.shape_cast %219 : vector<32x8xf32> to vector<2x16x8xf32>
    "tpu.trace_start"() <{level = 10 : i32, message = "btc,bsc->bts"}> : () -> ()
    %cst_70 = arith.constant dense<0.000000e+00> : vector<2x8x16xf32>
    %221 = tpu.matmul %216, %218, %cst_70 {dimension_numbers = #tpu.dot_dimension_numbers<[2], [2], [1], [1], [0, 0, 0, 1, 1, 1], [0], [0]>} : vector<2x8x8xf32>, vector<2x16x8xf32>, vector<2x8x16xf32> -> vector<2x8x16xf32>
    "tpu.trace_stop"() : () -> ()
    %cst_71 = arith.constant dense<0xFF800000> : vector<2x8xf32>
    %222 = vector.multi_reduction <maximumf>, %221, %cst_71 [2] : vector<2x8x16xf32> to vector<2x8xf32>
    %223 = vector.shape_cast %222 : vector<2x8xf32> to vector<2x8x1xf32>
    %224 = vector.broadcast %223 : vector<2x8x1xf32> to vector<2x8x16xf32>
    %225 = arith.subf %221, %224 : vector<2x8x16xf32>
    %226 = math.exp %225 : vector<2x8x16xf32>
    %cst_72 = arith.constant dense<0.000000e+00> : vector<2x8xf32>
    %227 = vector.multi_reduction <add>, %226, %cst_72 [2] : vector<2x8x16xf32> to vector<2x8xf32>
    %228 = vector.shape_cast %227 : vector<2x8xf32> to vector<2x8x1xf32>
    %229 = tpu.reciprocal %228 {approx = true} : vector<2x8x1xf32> -> vector<2x8x1xf32>
    %230 = vector.broadcast %229 : vector<2x8x1xf32> to vector<2x8x16xf32>
    %231 = arith.mulf %226, %230 : vector<2x8x16xf32>
    "tpu.trace_start"() <{level = 10 : i32, message = "bts,bsc->btc"}> : () -> ()
    %cst_73 = arith.constant dense<0.000000e+00> : vector<2x8x8xf32>
    %232 = tpu.matmul %231, %220, %cst_73 {dimension_numbers = #tpu.dot_dimension_numbers<[2], [1], [1], [2], [0, 0, 0, 1, 1, 2], [0], [0]>} : vector<2x8x16xf32>, vector<2x16x8xf32>, vector<2x8x8xf32> -> vector<2x8x8xf32>
    "tpu.trace_stop"() : () -> ()
    %233 = vector.shape_cast %232 : vector<2x8x8xf32> to vector<16x8xf32>
    %234 = tpu.concatenate %176, %195, %214, %233 in 1 : vector<16x8xf32>, vector<16x8xf32>, vector<16x8xf32>, vector<16x8xf32> -> vector<16x32xf32>
    %cst_74 = arith.constant dense<0.000000e+00> : vector<16x32xf32>
    %235 = tpu.matmul %234, %155, %cst_74 {dimension_numbers = #tpu.dot_dimension_numbers<[1], [0], [0], [1], [0, 0, 1, 1], [], []>} : vector<16x32xf32>, vector<32x32xf32>, vector<16x32xf32> -> vector<16x32xf32>
    %236 = vector.broadcast %157 : vector<1x32xf32> to vector<16x32xf32>
    %237 = arith.addf %235, %236 : vector<16x32xf32>
    %238 = arith.addf %133, %237 : vector<16x32xf32>
    %239 = vector.extract_strided_slice %6 {offsets = [2, 0], sizes = [1, 32], strides = [1, 1]} : vector<6x32xf32> to vector<1x32xf32>
    %240 = vector.extract_strided_slice %6 {offsets = [3, 0], sizes = [1, 32], strides = [1, 1]} : vector<6x32xf32> to vector<1x32xf32>
    %241 = arith.mulf %238, %238 : vector<16x32xf32>
    %242 = tpu.concatenate %238, %241 in 0 : vector<16x32xf32>, vector<16x32xf32> -> vector<32x32xf32>
    %cst_75 = arith.constant dense<0.000000e+00> : vector<32xf32>
    %243 = vector.multi_reduction <add>, %242, %cst_75 [1] : vector<32x32xf32> to vector<32xf32>
    %244 = vector.shape_cast %243 : vector<32xf32> to vector<32x1xf32>
    %245 = vector.extract_strided_slice %244 {offsets = [0, 0], sizes = [16, 1], strides = [1, 1]} : vector<32x1xf32> to vector<16x1xf32>
    %cst_76 = arith.constant 3.125000e-02 : f32
    %246 = vector.broadcast %cst_76 : f32 to vector<16x1xf32>
    %247 = arith.mulf %245, %246 : vector<16x1xf32>
    %248 = vector.extract_strided_slice %244 {offsets = [16, 0], sizes = [16, 1], strides = [1, 1]} : vector<32x1xf32> to vector<16x1xf32>
    %cst_77 = arith.constant 3.125000e-02 : f32
    %249 = vector.broadcast %cst_77 : f32 to vector<16x1xf32>
    %250 = arith.mulf %248, %249 : vector<16x1xf32>
    %251 = arith.mulf %247, %247 : vector<16x1xf32>
    %252 = arith.subf %250, %251 : vector<16x1xf32>
    %253 = vector.broadcast %247 : vector<16x1xf32> to vector<16x32xf32>
    %254 = arith.subf %238, %253 : vector<16x32xf32>
    %cst_78 = arith.constant 9.99999974E-6 : f32
    %255 = vector.broadcast %cst_78 : f32 to vector<16x1xf32>
    %256 = arith.addf %252, %255 : vector<16x1xf32>
    %257 = math.rsqrt %256 : vector<16x1xf32>
    %258 = vector.broadcast %257 : vector<16x1xf32> to vector<16x32xf32>
    %259 = arith.mulf %254, %258 : vector<16x32xf32>
    %260 = vector.broadcast %239 : vector<1x32xf32> to vector<16x32xf32>
    %261 = arith.mulf %259, %260 : vector<16x32xf32>
    %262 = vector.broadcast %240 : vector<1x32xf32> to vector<16x32xf32>
    %263 = arith.addf %261, %262 : vector<16x32xf32>
    %c0_79 = arith.constant 0 : index
    %c0_80 = arith.constant 0 : index
    %c0_81 = arith.constant 0 : index
    %264 = vector.load %arg10[%c0_79, %c0_80, %c0_81] : memref<2x1x96xf32, #tpu.memory_space<vmem>>, vector<1x1x96xf32>
    %265 = vector.shape_cast %264 : vector<1x1x96xf32> to vector<1x96xf32>
    %c0_82 = arith.constant 0 : index
    %c0_83 = arith.constant 0 : index
    %c0_84 = arith.constant 0 : index
    %266 = vector.load %arg8[%c0_82, %c0_83, %c0_84] : memref<2x32x64xf32, #tpu.memory_space<vmem>>, vector<1x32x64xf32>
    %267 = vector.shape_cast %266 : vector<1x32x64xf32> to vector<32x64xf32>
    %cst_85 = arith.constant dense<0.000000e+00> : vector<16x64xf32>
    %268 = tpu.matmul %263, %267, %cst_85 {dimension_numbers = #tpu.dot_dimension_numbers<[1], [0], [0], [1], [0, 0, 1, 1], [], []>} : vector<16x32xf32>, vector<32x64xf32>, vector<16x64xf32> -> vector<16x64xf32>
    %269 = vector.extract_strided_slice %265 {offsets = [0, 0], sizes = [1, 64], strides = [1, 1]} : vector<1x96xf32> to vector<1x64xf32>
    %270 = vector.broadcast %269 : vector<1x64xf32> to vector<16x64xf32>
    %271 = arith.addf %268, %270 : vector<16x64xf32>
    %cst_86 = arith.constant 0.000000e+00 : f32
    %272 = vector.broadcast %cst_86 : f32 to vector<16x64xf32>
    %273 = arith.maximumf %271, %272 : vector<16x64xf32>
    %c0_87 = arith.constant 0 : index
    %c0_88 = arith.constant 0 : index
    %c0_89 = arith.constant 0 : index
    %274 = vector.load %arg9[%c0_87, %c0_88, %c0_89] : memref<2x64x32xf32, #tpu.memory_space<vmem>>, vector<1x64x32xf32>
    %275 = vector.shape_cast %274 : vector<1x64x32xf32> to vector<64x32xf32>
    %cst_90 = arith.constant dense<0.000000e+00> : vector<16x32xf32>
    %276 = tpu.matmul %273, %275, %cst_90 {dimension_numbers = #tpu.dot_dimension_numbers<[1], [0], [0], [1], [0, 0, 1, 1], [], []>} : vector<16x64xf32>, vector<64x32xf32>, vector<16x32xf32> -> vector<16x32xf32>
    %277 = vector.extract_strided_slice %265 {offsets = [0, 64], sizes = [1, 32], strides = [1, 1]} : vector<1x96xf32> to vector<1x32xf32>
    %278 = vector.broadcast %277 : vector<1x32xf32> to vector<16x32xf32>
    %279 = arith.addf %276, %278 : vector<16x32xf32>
    %280 = arith.addf %263, %279 : vector<16x32xf32>
    %281 = vector.extract_strided_slice %6 {offsets = [4, 0], sizes = [1, 32], strides = [1, 1]} : vector<6x32xf32> to vector<1x32xf32>
    %282 = vector.extract_strided_slice %6 {offsets = [5, 0], sizes = [1, 32], strides = [1, 1]} : vector<6x32xf32> to vector<1x32xf32>
    %283 = arith.mulf %280, %280 : vector<16x32xf32>
    %284 = tpu.concatenate %280, %283 in 0 : vector<16x32xf32>, vector<16x32xf32> -> vector<32x32xf32>
    %cst_91 = arith.constant dense<0.000000e+00> : vector<32xf32>
    %285 = vector.multi_reduction <add>, %284, %cst_91 [1] : vector<32x32xf32> to vector<32xf32>
    %286 = vector.shape_cast %285 : vector<32xf32> to vector<32x1xf32>
    %287 = vector.extract_strided_slice %286 {offsets = [0, 0], sizes = [16, 1], strides = [1, 1]} : vector<32x1xf32> to vector<16x1xf32>
    %cst_92 = arith.constant 3.125000e-02 : f32
    %288 = vector.broadcast %cst_92 : f32 to vector<16x1xf32>
    %289 = arith.mulf %287, %288 : vector<16x1xf32>
    %290 = vector.extract_strided_slice %286 {offsets = [16, 0], sizes = [16, 1], strides = [1, 1]} : vector<32x1xf32> to vector<16x1xf32>
    %cst_93 = arith.constant 3.125000e-02 : f32
    %291 = vector.broadcast %cst_93 : f32 to vector<16x1xf32>
    %292 = arith.mulf %290, %291 : vector<16x1xf32>
    %293 = arith.mulf %289, %289 : vector<16x1xf32>
    %294 = arith.subf %292, %293 : vector<16x1xf32>
    %295 = vector.broadcast %289 : vector<16x1xf32> to vector<16x32xf32>
    %296 = arith.subf %280, %295 : vector<16x32xf32>
    %cst_94 = arith.constant 9.99999974E-6 : f32
    %297 = vector.broadcast %cst_94 : f32 to vector<16x1xf32>
    %298 = arith.addf %294, %297 : vector<16x1xf32>
    %299 = math.rsqrt %298 : vector<16x1xf32>
    %300 = vector.broadcast %299 : vector<16x1xf32> to vector<16x32xf32>
    %301 = arith.mulf %296, %300 : vector<16x32xf32>
    %302 = vector.broadcast %281 : vector<1x32xf32> to vector<16x32xf32>
    %303 = arith.mulf %301, %302 : vector<16x32xf32>
    %304 = vector.broadcast %282 : vector<1x32xf32> to vector<16x32xf32>
    %305 = arith.addf %303, %304 : vector<16x32xf32>
    %c1_95 = arith.constant 1 : index
    %c0_96 = arith.constant 0 : index
    %c0_97 = arith.constant 0 : index
    %306 = vector.load %arg11[%c1_95, %c0_96, %c0_97] : memref<2x6x32xf32, #tpu.memory_space<vmem>>, vector<1x6x32xf32>
    %307 = vector.shape_cast %306 : vector<1x6x32xf32> to vector<6x32xf32>
    %c2 = arith.constant 2 : index
    %c0_98 = arith.constant 0 : index
    %c0_99 = arith.constant 0 : index
    %308 = vector.load %arg4[%c2, %c0_98, %c0_99] : memref<4x32x96xf32, #tpu.memory_space<vmem>>, vector<1x32x96xf32>
    %309 = vector.shape_cast %308 : vector<1x32x96xf32> to vector<32x96xf32>
    %c2_100 = arith.constant 2 : index
    %c0_101 = arith.constant 0 : index
    %c0_102 = arith.constant 0 : index
    %310 = vector.load %arg5[%c2_100, %c0_101, %c0_102] : memref<4x1x96xf32, #tpu.memory_space<vmem>>, vector<1x1x96xf32>
    %311 = vector.shape_cast %310 : vector<1x1x96xf32> to vector<1x96xf32>
    %312 = arith.addf %305, %2 : vector<16x32xf32>
    %313 = vector.extract_strided_slice %309 {offsets = [0, 0], sizes = [32, 64], strides = [1, 1]} : vector<32x96xf32> to vector<32x64xf32>
    %cst_103 = arith.constant dense<0.000000e+00> : vector<16x64xf32>
    %314 = tpu.matmul %312, %313, %cst_103 {dimension_numbers = #tpu.dot_dimension_numbers<[1], [0], [0], [1], [0, 0, 1, 1], [], []>} : vector<16x32xf32>, vector<32x64xf32>, vector<16x64xf32> -> vector<16x64xf32>
    %315 = vector.extract_strided_slice %311 {offsets = [0, 0], sizes = [1, 64], strides = [1, 1]} : vector<1x96xf32> to vector<1x64xf32>
    %316 = vector.broadcast %315 : vector<1x64xf32> to vector<16x64xf32>
    %317 = arith.addf %314, %316 : vector<16x64xf32>
    %318 = vector.extract_strided_slice %309 {offsets = [0, 64], sizes = [32, 32], strides = [1, 1]} : vector<32x96xf32> to vector<32x32xf32>
    %cst_104 = arith.constant dense<0.000000e+00> : vector<16x32xf32>
    %319 = tpu.matmul %305, %318, %cst_104 {dimension_numbers = #tpu.dot_dimension_numbers<[1], [0], [0], [1], [0, 0, 1, 1], [], []>} : vector<16x32xf32>, vector<32x32xf32>, vector<16x32xf32> -> vector<16x32xf32>
    %320 = vector.extract_strided_slice %311 {offsets = [0, 64], sizes = [1, 32], strides = [1, 1]} : vector<1x96xf32> to vector<1x32xf32>
    %321 = vector.broadcast %320 : vector<1x32xf32> to vector<16x32xf32>
    %322 = arith.addf %319, %321 : vector<16x32xf32>
    %323 = vector.extract_strided_slice %317 {offsets = [0, 0], sizes = [16, 32], strides = [1, 1]} : vector<16x64xf32> to vector<16x32xf32>
    %324 = vector.extract_strided_slice %317 {offsets = [0, 32], sizes = [16, 32], strides = [1, 1]} : vector<16x64xf32> to vector<16x32xf32>
    %c2_105 = arith.constant 2 : index
    %c0_106 = arith.constant 0 : index
    %c0_107 = arith.constant 0 : index
    %325 = vector.load %arg6[%c2_105, %c0_106, %c0_107] : memref<4x32x32xf32, #tpu.memory_space<vmem>>, vector<1x32x32xf32>
    %326 = vector.shape_cast %325 : vector<1x32x32xf32> to vector<32x32xf32>
    %c2_108 = arith.constant 2 : index
    %c0_109 = arith.constant 0 : index
    %c0_110 = arith.constant 0 : index
    %327 = vector.load %arg7[%c2_108, %c0_109, %c0_110] : memref<4x1x32xf32, #tpu.memory_space<vmem>>, vector<1x1x32xf32>
    %328 = vector.shape_cast %327 : vector<1x1x32xf32> to vector<1x32xf32>
    %329 = vector.extract_strided_slice %323 {offsets = [0, 0], sizes = [16, 8], strides = [1, 1]} : vector<16x32xf32> to vector<16x8xf32>
    %330 = vector.shape_cast %329 : vector<16x8xf32> to vector<2x8x8xf32>
    %331 = vector.extract_strided_slice %324 {offsets = [0, 0], sizes = [16, 8], strides = [1, 1]} : vector<16x32xf32> to vector<16x8xf32>
    %332 = vector.shape_cast %331 : vector<16x8xf32> to vector<2x8x8xf32>
    %333 = vector.extract_strided_slice %322 {offsets = [0, 0], sizes = [16, 8], strides = [1, 1]} : vector<16x32xf32> to vector<16x8xf32>
    %334 = vector.shape_cast %333 : vector<16x8xf32> to vector<2x8x8xf32>
    "tpu.trace_start"() <{level = 10 : i32, message = "btc,bsc->bts"}> : () -> ()
    %cst_111 = arith.constant dense<0.000000e+00> : vector<2x8x8xf32>
    %335 = tpu.matmul %330, %332, %cst_111 {dimension_numbers = #tpu.dot_dimension_numbers<[2], [2], [1], [1], [0, 0, 0, 1, 1, 1], [0], [0]>} : vector<2x8x8xf32>, vector<2x8x8xf32>, vector<2x8x8xf32> -> vector<2x8x8xf32>
    "tpu.trace_stop"() : () -> ()
    %cst_112 = arith.constant dense<0xFF800000> : vector<2x8xf32>
    %336 = vector.multi_reduction <maximumf>, %335, %cst_112 [2] : vector<2x8x8xf32> to vector<2x8xf32>
    %337 = vector.shape_cast %336 : vector<2x8xf32> to vector<2x8x1xf32>
    %338 = vector.broadcast %337 : vector<2x8x1xf32> to vector<2x8x8xf32>
    %339 = arith.subf %335, %338 : vector<2x8x8xf32>
    %340 = math.exp %339 : vector<2x8x8xf32>
    %cst_113 = arith.constant dense<0.000000e+00> : vector<2x8xf32>
    %341 = vector.multi_reduction <add>, %340, %cst_113 [2] : vector<2x8x8xf32> to vector<2x8xf32>
    %342 = vector.shape_cast %341 : vector<2x8xf32> to vector<2x8x1xf32>
    %343 = tpu.reciprocal %342 {approx = true} : vector<2x8x1xf32> -> vector<2x8x1xf32>
    %344 = vector.broadcast %343 : vector<2x8x1xf32> to vector<2x8x8xf32>
    %345 = arith.mulf %340, %344 : vector<2x8x8xf32>
    "tpu.trace_start"() <{level = 10 : i32, message = "bts,bsc->btc"}> : () -> ()
    %cst_114 = arith.constant dense<0.000000e+00> : vector<2x8x8xf32>
    %346 = tpu.matmul %345, %334, %cst_114 {dimension_numbers = #tpu.dot_dimension_numbers<[2], [1], [1], [2], [0, 0, 0, 1, 1, 2], [0], [0]>} : vector<2x8x8xf32>, vector<2x8x8xf32>, vector<2x8x8xf32> -> vector<2x8x8xf32>
    "tpu.trace_stop"() : () -> ()
    %347 = vector.shape_cast %346 : vector<2x8x8xf32> to vector<16x8xf32>
    %348 = vector.extract_strided_slice %323 {offsets = [0, 8], sizes = [16, 8], strides = [1, 1]} : vector<16x32xf32> to vector<16x8xf32>
    %349 = vector.shape_cast %348 : vector<16x8xf32> to vector<2x8x8xf32>
    %350 = vector.extract_strided_slice %324 {offsets = [0, 8], sizes = [16, 8], strides = [1, 1]} : vector<16x32xf32> to vector<16x8xf32>
    %351 = vector.shape_cast %350 : vector<16x8xf32> to vector<2x8x8xf32>
    %352 = vector.extract_strided_slice %322 {offsets = [0, 8], sizes = [16, 8], strides = [1, 1]} : vector<16x32xf32> to vector<16x8xf32>
    %353 = vector.shape_cast %352 : vector<16x8xf32> to vector<2x8x8xf32>
    "tpu.trace_start"() <{level = 10 : i32, message = "btc,bsc->bts"}> : () -> ()
    %cst_115 = arith.constant dense<0.000000e+00> : vector<2x8x8xf32>
    %354 = tpu.matmul %349, %351, %cst_115 {dimension_numbers = #tpu.dot_dimension_numbers<[2], [2], [1], [1], [0, 0, 0, 1, 1, 1], [0], [0]>} : vector<2x8x8xf32>, vector<2x8x8xf32>, vector<2x8x8xf32> -> vector<2x8x8xf32>
    "tpu.trace_stop"() : () -> ()
    %cst_116 = arith.constant dense<0xFF800000> : vector<2x8xf32>
    %355 = vector.multi_reduction <maximumf>, %354, %cst_116 [2] : vector<2x8x8xf32> to vector<2x8xf32>
    %356 = vector.shape_cast %355 : vector<2x8xf32> to vector<2x8x1xf32>
    %357 = vector.broadcast %356 : vector<2x8x1xf32> to vector<2x8x8xf32>
    %358 = arith.subf %354, %357 : vector<2x8x8xf32>
    %359 = math.exp %358 : vector<2x8x8xf32>
    %cst_117 = arith.constant dense<0.000000e+00> : vector<2x8xf32>
    %360 = vector.multi_reduction <add>, %359, %cst_117 [2] : vector<2x8x8xf32> to vector<2x8xf32>
    %361 = vector.shape_cast %360 : vector<2x8xf32> to vector<2x8x1xf32>
    %362 = tpu.reciprocal %361 {approx = true} : vector<2x8x1xf32> -> vector<2x8x1xf32>
    %363 = vector.broadcast %362 : vector<2x8x1xf32> to vector<2x8x8xf32>
    %364 = arith.mulf %359, %363 : vector<2x8x8xf32>
    "tpu.trace_start"() <{level = 10 : i32, message = "bts,bsc->btc"}> : () -> ()
    %cst_118 = arith.constant dense<0.000000e+00> : vector<2x8x8xf32>
    %365 = tpu.matmul %364, %353, %cst_118 {dimension_numbers = #tpu.dot_dimension_numbers<[2], [1], [1], [2], [0, 0, 0, 1, 1, 2], [0], [0]>} : vector<2x8x8xf32>, vector<2x8x8xf32>, vector<2x8x8xf32> -> vector<2x8x8xf32>
    "tpu.trace_stop"() : () -> ()
    %366 = vector.shape_cast %365 : vector<2x8x8xf32> to vector<16x8xf32>
    %367 = vector.extract_strided_slice %323 {offsets = [0, 16], sizes = [16, 8], strides = [1, 1]} : vector<16x32xf32> to vector<16x8xf32>
    %368 = vector.shape_cast %367 : vector<16x8xf32> to vector<2x8x8xf32>
    %369 = vector.extract_strided_slice %324 {offsets = [0, 16], sizes = [16, 8], strides = [1, 1]} : vector<16x32xf32> to vector<16x8xf32>
    %370 = vector.shape_cast %369 : vector<16x8xf32> to vector<2x8x8xf32>
    %371 = vector.extract_strided_slice %322 {offsets = [0, 16], sizes = [16, 8], strides = [1, 1]} : vector<16x32xf32> to vector<16x8xf32>
    %372 = vector.shape_cast %371 : vector<16x8xf32> to vector<2x8x8xf32>
    "tpu.trace_start"() <{level = 10 : i32, message = "btc,bsc->bts"}> : () -> ()
    %cst_119 = arith.constant dense<0.000000e+00> : vector<2x8x8xf32>
    %373 = tpu.matmul %368, %370, %cst_119 {dimension_numbers = #tpu.dot_dimension_numbers<[2], [2], [1], [1], [0, 0, 0, 1, 1, 1], [0], [0]>} : vector<2x8x8xf32>, vector<2x8x8xf32>, vector<2x8x8xf32> -> vector<2x8x8xf32>
    "tpu.trace_stop"() : () -> ()
    %cst_120 = arith.constant dense<0xFF800000> : vector<2x8xf32>
    %374 = vector.multi_reduction <maximumf>, %373, %cst_120 [2] : vector<2x8x8xf32> to vector<2x8xf32>
    %375 = vector.shape_cast %374 : vector<2x8xf32> to vector<2x8x1xf32>
    %376 = vector.broadcast %375 : vector<2x8x1xf32> to vector<2x8x8xf32>
    %377 = arith.subf %373, %376 : vector<2x8x8xf32>
    %378 = math.exp %377 : vector<2x8x8xf32>
    %cst_121 = arith.constant dense<0.000000e+00> : vector<2x8xf32>
    %379 = vector.multi_reduction <add>, %378, %cst_121 [2] : vector<2x8x8xf32> to vector<2x8xf32>
    %380 = vector.shape_cast %379 : vector<2x8xf32> to vector<2x8x1xf32>
    %381 = tpu.reciprocal %380 {approx = true} : vector<2x8x1xf32> -> vector<2x8x1xf32>
    %382 = vector.broadcast %381 : vector<2x8x1xf32> to vector<2x8x8xf32>
    %383 = arith.mulf %378, %382 : vector<2x8x8xf32>
    "tpu.trace_start"() <{level = 10 : i32, message = "bts,bsc->btc"}> : () -> ()
    %cst_122 = arith.constant dense<0.000000e+00> : vector<2x8x8xf32>
    %384 = tpu.matmul %383, %372, %cst_122 {dimension_numbers = #tpu.dot_dimension_numbers<[2], [1], [1], [2], [0, 0, 0, 1, 1, 2], [0], [0]>} : vector<2x8x8xf32>, vector<2x8x8xf32>, vector<2x8x8xf32> -> vector<2x8x8xf32>
    "tpu.trace_stop"() : () -> ()
    %385 = vector.shape_cast %384 : vector<2x8x8xf32> to vector<16x8xf32>
    %386 = vector.extract_strided_slice %323 {offsets = [0, 24], sizes = [16, 8], strides = [1, 1]} : vector<16x32xf32> to vector<16x8xf32>
    %387 = vector.shape_cast %386 : vector<16x8xf32> to vector<2x8x8xf32>
    %388 = vector.extract_strided_slice %324 {offsets = [0, 24], sizes = [16, 8], strides = [1, 1]} : vector<16x32xf32> to vector<16x8xf32>
    %389 = vector.shape_cast %388 : vector<16x8xf32> to vector<2x8x8xf32>
    %390 = vector.extract_strided_slice %322 {offsets = [0, 24], sizes = [16, 8], strides = [1, 1]} : vector<16x32xf32> to vector<16x8xf32>
    %391 = vector.shape_cast %390 : vector<16x8xf32> to vector<2x8x8xf32>
    "tpu.trace_start"() <{level = 10 : i32, message = "btc,bsc->bts"}> : () -> ()
    %cst_123 = arith.constant dense<0.000000e+00> : vector<2x8x8xf32>
    %392 = tpu.matmul %387, %389, %cst_123 {dimension_numbers = #tpu.dot_dimension_numbers<[2], [2], [1], [1], [0, 0, 0, 1, 1, 1], [0], [0]>} : vector<2x8x8xf32>, vector<2x8x8xf32>, vector<2x8x8xf32> -> vector<2x8x8xf32>
    "tpu.trace_stop"() : () -> ()
    %cst_124 = arith.constant dense<0xFF800000> : vector<2x8xf32>
    %393 = vector.multi_reduction <maximumf>, %392, %cst_124 [2] : vector<2x8x8xf32> to vector<2x8xf32>
    %394 = vector.shape_cast %393 : vector<2x8xf32> to vector<2x8x1xf32>
    %395 = vector.broadcast %394 : vector<2x8x1xf32> to vector<2x8x8xf32>
    %396 = arith.subf %392, %395 : vector<2x8x8xf32>
    %397 = math.exp %396 : vector<2x8x8xf32>
    %cst_125 = arith.constant dense<0.000000e+00> : vector<2x8xf32>
    %398 = vector.multi_reduction <add>, %397, %cst_125 [2] : vector<2x8x8xf32> to vector<2x8xf32>
    %399 = vector.shape_cast %398 : vector<2x8xf32> to vector<2x8x1xf32>
    %400 = tpu.reciprocal %399 {approx = true} : vector<2x8x1xf32> -> vector<2x8x1xf32>
    %401 = vector.broadcast %400 : vector<2x8x1xf32> to vector<2x8x8xf32>
    %402 = arith.mulf %397, %401 : vector<2x8x8xf32>
    "tpu.trace_start"() <{level = 10 : i32, message = "bts,bsc->btc"}> : () -> ()
    %cst_126 = arith.constant dense<0.000000e+00> : vector<2x8x8xf32>
    %403 = tpu.matmul %402, %391, %cst_126 {dimension_numbers = #tpu.dot_dimension_numbers<[2], [1], [1], [2], [0, 0, 0, 1, 1, 2], [0], [0]>} : vector<2x8x8xf32>, vector<2x8x8xf32>, vector<2x8x8xf32> -> vector<2x8x8xf32>
    "tpu.trace_stop"() : () -> ()
    %404 = vector.shape_cast %403 : vector<2x8x8xf32> to vector<16x8xf32>
    %405 = tpu.concatenate %347, %366, %385, %404 in 1 : vector<16x8xf32>, vector<16x8xf32>, vector<16x8xf32>, vector<16x8xf32> -> vector<16x32xf32>
    %cst_127 = arith.constant dense<0.000000e+00> : vector<16x32xf32>
    %406 = tpu.matmul %405, %326, %cst_127 {dimension_numbers = #tpu.dot_dimension_numbers<[1], [0], [0], [1], [0, 0, 1, 1], [], []>} : vector<16x32xf32>, vector<32x32xf32>, vector<16x32xf32> -> vector<16x32xf32>
    %407 = vector.broadcast %328 : vector<1x32xf32> to vector<16x32xf32>
    %408 = arith.addf %406, %407 : vector<16x32xf32>
    %409 = arith.addf %305, %408 : vector<16x32xf32>
    %410 = vector.extract_strided_slice %307 {offsets = [0, 0], sizes = [1, 32], strides = [1, 1]} : vector<6x32xf32> to vector<1x32xf32>
    %411 = vector.extract_strided_slice %307 {offsets = [1, 0], sizes = [1, 32], strides = [1, 1]} : vector<6x32xf32> to vector<1x32xf32>
    %412 = arith.mulf %409, %409 : vector<16x32xf32>
    %413 = tpu.concatenate %409, %412 in 0 : vector<16x32xf32>, vector<16x32xf32> -> vector<32x32xf32>
    %cst_128 = arith.constant dense<0.000000e+00> : vector<32xf32>
    %414 = vector.multi_reduction <add>, %413, %cst_128 [1] : vector<32x32xf32> to vector<32xf32>
    %415 = vector.shape_cast %414 : vector<32xf32> to vector<32x1xf32>
    %416 = vector.extract_strided_slice %415 {offsets = [0, 0], sizes = [16, 1], strides = [1, 1]} : vector<32x1xf32> to vector<16x1xf32>
    %cst_129 = arith.constant 3.125000e-02 : f32
    %417 = vector.broadcast %cst_129 : f32 to vector<16x1xf32>
    %418 = arith.mulf %416, %417 : vector<16x1xf32>
    %419 = vector.extract_strided_slice %415 {offsets = [16, 0], sizes = [16, 1], strides = [1, 1]} : vector<32x1xf32> to vector<16x1xf32>
    %cst_130 = arith.constant 3.125000e-02 : f32
    %420 = vector.broadcast %cst_130 : f32 to vector<16x1xf32>
    %421 = arith.mulf %419, %420 : vector<16x1xf32>
    %422 = arith.mulf %418, %418 : vector<16x1xf32>
    %423 = arith.subf %421, %422 : vector<16x1xf32>
    %424 = vector.broadcast %418 : vector<16x1xf32> to vector<16x32xf32>
    %425 = arith.subf %409, %424 : vector<16x32xf32>
    %cst_131 = arith.constant 9.99999974E-6 : f32
    %426 = vector.broadcast %cst_131 : f32 to vector<16x1xf32>
    %427 = arith.addf %423, %426 : vector<16x1xf32>
    %428 = math.rsqrt %427 : vector<16x1xf32>
    %429 = vector.broadcast %428 : vector<16x1xf32> to vector<16x32xf32>
    %430 = arith.mulf %425, %429 : vector<16x32xf32>
    %431 = vector.broadcast %410 : vector<1x32xf32> to vector<16x32xf32>
    %432 = arith.mulf %430, %431 : vector<16x32xf32>
    %433 = vector.broadcast %411 : vector<1x32xf32> to vector<16x32xf32>
    %434 = arith.addf %432, %433 : vector<16x32xf32>
    %c3 = arith.constant 3 : index
    %c0_132 = arith.constant 0 : index
    %c0_133 = arith.constant 0 : index
    %435 = vector.load %arg4[%c3, %c0_132, %c0_133] : memref<4x32x96xf32, #tpu.memory_space<vmem>>, vector<1x32x96xf32>
    %436 = vector.shape_cast %435 : vector<1x32x96xf32> to vector<32x96xf32>
    %c3_134 = arith.constant 3 : index
    %c0_135 = arith.constant 0 : index
    %c0_136 = arith.constant 0 : index
    %437 = vector.load %arg5[%c3_134, %c0_135, %c0_136] : memref<4x1x96xf32, #tpu.memory_space<vmem>>, vector<1x1x96xf32>
    %438 = vector.shape_cast %437 : vector<1x1x96xf32> to vector<1x96xf32>
    %439 = arith.addf %434, %2 : vector<16x32xf32>
    %440 = vector.extract_strided_slice %436 {offsets = [0, 0], sizes = [32, 32], strides = [1, 1]} : vector<32x96xf32> to vector<32x32xf32>
    %cst_137 = arith.constant dense<0.000000e+00> : vector<16x32xf32>
    %441 = tpu.matmul %439, %440, %cst_137 {dimension_numbers = #tpu.dot_dimension_numbers<[1], [0], [0], [1], [0, 0, 1, 1], [], []>} : vector<16x32xf32>, vector<32x32xf32>, vector<16x32xf32> -> vector<16x32xf32>
    %442 = vector.extract_strided_slice %438 {offsets = [0, 0], sizes = [1, 32], strides = [1, 1]} : vector<1x96xf32> to vector<1x32xf32>
    %443 = vector.broadcast %442 : vector<1x32xf32> to vector<16x32xf32>
    %444 = arith.addf %441, %443 : vector<16x32xf32>
    %445 = vector.extract_strided_slice %436 {offsets = [0, 32], sizes = [32, 32], strides = [1, 1]} : vector<32x96xf32> to vector<32x32xf32>
    %cst_138 = arith.constant dense<0.000000e+00> : vector<32x32xf32>
    %446 = tpu.matmul %4, %445, %cst_138 {dimension_numbers = #tpu.dot_dimension_numbers<[1], [0], [0], [1], [0, 0, 1, 1], [], []>} : vector<32x32xf32>, vector<32x32xf32>, vector<32x32xf32> -> vector<32x32xf32>
    %447 = vector.extract_strided_slice %438 {offsets = [0, 32], sizes = [1, 32], strides = [1, 1]} : vector<1x96xf32> to vector<1x32xf32>
    %448 = vector.broadcast %447 : vector<1x32xf32> to vector<32x32xf32>
    %449 = arith.addf %446, %448 : vector<32x32xf32>
    %450 = vector.extract_strided_slice %436 {offsets = [0, 64], sizes = [32, 32], strides = [1, 1]} : vector<32x96xf32> to vector<32x32xf32>
    %cst_139 = arith.constant dense<0.000000e+00> : vector<32x32xf32>
    %451 = tpu.matmul %1, %450, %cst_139 {dimension_numbers = #tpu.dot_dimension_numbers<[1], [0], [0], [1], [0, 0, 1, 1], [], []>} : vector<32x32xf32>, vector<32x32xf32>, vector<32x32xf32> -> vector<32x32xf32>
    %452 = vector.extract_strided_slice %438 {offsets = [0, 64], sizes = [1, 32], strides = [1, 1]} : vector<1x96xf32> to vector<1x32xf32>
    %453 = vector.broadcast %452 : vector<1x32xf32> to vector<32x32xf32>
    %454 = arith.addf %451, %453 : vector<32x32xf32>
    %c3_140 = arith.constant 3 : index
    %c0_141 = arith.constant 0 : index
    %c0_142 = arith.constant 0 : index
    %455 = vector.load %arg6[%c3_140, %c0_141, %c0_142] : memref<4x32x32xf32, #tpu.memory_space<vmem>>, vector<1x32x32xf32>
    %456 = vector.shape_cast %455 : vector<1x32x32xf32> to vector<32x32xf32>
    %c3_143 = arith.constant 3 : index
    %c0_144 = arith.constant 0 : index
    %c0_145 = arith.constant 0 : index
    %457 = vector.load %arg7[%c3_143, %c0_144, %c0_145] : memref<4x1x32xf32, #tpu.memory_space<vmem>>, vector<1x1x32xf32>
    %458 = vector.shape_cast %457 : vector<1x1x32xf32> to vector<1x32xf32>
    %459 = vector.extract_strided_slice %444 {offsets = [0, 0], sizes = [16, 8], strides = [1, 1]} : vector<16x32xf32> to vector<16x8xf32>
    %460 = vector.shape_cast %459 : vector<16x8xf32> to vector<2x8x8xf32>
    %461 = vector.extract_strided_slice %449 {offsets = [0, 0], sizes = [32, 8], strides = [1, 1]} : vector<32x32xf32> to vector<32x8xf32>
    %462 = vector.shape_cast %461 : vector<32x8xf32> to vector<2x16x8xf32>
    %463 = vector.extract_strided_slice %454 {offsets = [0, 0], sizes = [32, 8], strides = [1, 1]} : vector<32x32xf32> to vector<32x8xf32>
    %464 = vector.shape_cast %463 : vector<32x8xf32> to vector<2x16x8xf32>
    "tpu.trace_start"() <{level = 10 : i32, message = "btc,bsc->bts"}> : () -> ()
    %cst_146 = arith.constant dense<0.000000e+00> : vector<2x8x16xf32>
    %465 = tpu.matmul %460, %462, %cst_146 {dimension_numbers = #tpu.dot_dimension_numbers<[2], [2], [1], [1], [0, 0, 0, 1, 1, 1], [0], [0]>} : vector<2x8x8xf32>, vector<2x16x8xf32>, vector<2x8x16xf32> -> vector<2x8x16xf32>
    "tpu.trace_stop"() : () -> ()
    %cst_147 = arith.constant dense<0xFF800000> : vector<2x8xf32>
    %466 = vector.multi_reduction <maximumf>, %465, %cst_147 [2] : vector<2x8x16xf32> to vector<2x8xf32>
    %467 = vector.shape_cast %466 : vector<2x8xf32> to vector<2x8x1xf32>
    %468 = vector.broadcast %467 : vector<2x8x1xf32> to vector<2x8x16xf32>
    %469 = arith.subf %465, %468 : vector<2x8x16xf32>
    %470 = math.exp %469 : vector<2x8x16xf32>
    %cst_148 = arith.constant dense<0.000000e+00> : vector<2x8xf32>
    %471 = vector.multi_reduction <add>, %470, %cst_148 [2] : vector<2x8x16xf32> to vector<2x8xf32>
    %472 = vector.shape_cast %471 : vector<2x8xf32> to vector<2x8x1xf32>
    %473 = tpu.reciprocal %472 {approx = true} : vector<2x8x1xf32> -> vector<2x8x1xf32>
    %474 = vector.broadcast %473 : vector<2x8x1xf32> to vector<2x8x16xf32>
    %475 = arith.mulf %470, %474 : vector<2x8x16xf32>
    "tpu.trace_start"() <{level = 10 : i32, message = "bts,bsc->btc"}> : () -> ()
    %cst_149 = arith.constant dense<0.000000e+00> : vector<2x8x8xf32>
    %476 = tpu.matmul %475, %464, %cst_149 {dimension_numbers = #tpu.dot_dimension_numbers<[2], [1], [1], [2], [0, 0, 0, 1, 1, 2], [0], [0]>} : vector<2x8x16xf32>, vector<2x16x8xf32>, vector<2x8x8xf32> -> vector<2x8x8xf32>
    "tpu.trace_stop"() : () -> ()
    %477 = vector.shape_cast %476 : vector<2x8x8xf32> to vector<16x8xf32>
    %478 = vector.extract_strided_slice %444 {offsets = [0, 8], sizes = [16, 8], strides = [1, 1]} : vector<16x32xf32> to vector<16x8xf32>
    %479 = vector.shape_cast %478 : vector<16x8xf32> to vector<2x8x8xf32>
    %480 = vector.extract_strided_slice %449 {offsets = [0, 8], sizes = [32, 8], strides = [1, 1]} : vector<32x32xf32> to vector<32x8xf32>
    %481 = vector.shape_cast %480 : vector<32x8xf32> to vector<2x16x8xf32>
    %482 = vector.extract_strided_slice %454 {offsets = [0, 8], sizes = [32, 8], strides = [1, 1]} : vector<32x32xf32> to vector<32x8xf32>
    %483 = vector.shape_cast %482 : vector<32x8xf32> to vector<2x16x8xf32>
    "tpu.trace_start"() <{level = 10 : i32, message = "btc,bsc->bts"}> : () -> ()
    %cst_150 = arith.constant dense<0.000000e+00> : vector<2x8x16xf32>
    %484 = tpu.matmul %479, %481, %cst_150 {dimension_numbers = #tpu.dot_dimension_numbers<[2], [2], [1], [1], [0, 0, 0, 1, 1, 1], [0], [0]>} : vector<2x8x8xf32>, vector<2x16x8xf32>, vector<2x8x16xf32> -> vector<2x8x16xf32>
    "tpu.trace_stop"() : () -> ()
    %cst_151 = arith.constant dense<0xFF800000> : vector<2x8xf32>
    %485 = vector.multi_reduction <maximumf>, %484, %cst_151 [2] : vector<2x8x16xf32> to vector<2x8xf32>
    %486 = vector.shape_cast %485 : vector<2x8xf32> to vector<2x8x1xf32>
    %487 = vector.broadcast %486 : vector<2x8x1xf32> to vector<2x8x16xf32>
    %488 = arith.subf %484, %487 : vector<2x8x16xf32>
    %489 = math.exp %488 : vector<2x8x16xf32>
    %cst_152 = arith.constant dense<0.000000e+00> : vector<2x8xf32>
    %490 = vector.multi_reduction <add>, %489, %cst_152 [2] : vector<2x8x16xf32> to vector<2x8xf32>
    %491 = vector.shape_cast %490 : vector<2x8xf32> to vector<2x8x1xf32>
    %492 = tpu.reciprocal %491 {approx = true} : vector<2x8x1xf32> -> vector<2x8x1xf32>
    %493 = vector.broadcast %492 : vector<2x8x1xf32> to vector<2x8x16xf32>
    %494 = arith.mulf %489, %493 : vector<2x8x16xf32>
    "tpu.trace_start"() <{level = 10 : i32, message = "bts,bsc->btc"}> : () -> ()
    %cst_153 = arith.constant dense<0.000000e+00> : vector<2x8x8xf32>
    %495 = tpu.matmul %494, %483, %cst_153 {dimension_numbers = #tpu.dot_dimension_numbers<[2], [1], [1], [2], [0, 0, 0, 1, 1, 2], [0], [0]>} : vector<2x8x16xf32>, vector<2x16x8xf32>, vector<2x8x8xf32> -> vector<2x8x8xf32>
    "tpu.trace_stop"() : () -> ()
    %496 = vector.shape_cast %495 : vector<2x8x8xf32> to vector<16x8xf32>
    %497 = vector.extract_strided_slice %444 {offsets = [0, 16], sizes = [16, 8], strides = [1, 1]} : vector<16x32xf32> to vector<16x8xf32>
    %498 = vector.shape_cast %497 : vector<16x8xf32> to vector<2x8x8xf32>
    %499 = vector.extract_strided_slice %449 {offsets = [0, 16], sizes = [32, 8], strides = [1, 1]} : vector<32x32xf32> to vector<32x8xf32>
    %500 = vector.shape_cast %499 : vector<32x8xf32> to vector<2x16x8xf32>
    %501 = vector.extract_strided_slice %454 {offsets = [0, 16], sizes = [32, 8], strides = [1, 1]} : vector<32x32xf32> to vector<32x8xf32>
    %502 = vector.shape_cast %501 : vector<32x8xf32> to vector<2x16x8xf32>
    "tpu.trace_start"() <{level = 10 : i32, message = "btc,bsc->bts"}> : () -> ()
    %cst_154 = arith.constant dense<0.000000e+00> : vector<2x8x16xf32>
    %503 = tpu.matmul %498, %500, %cst_154 {dimension_numbers = #tpu.dot_dimension_numbers<[2], [2], [1], [1], [0, 0, 0, 1, 1, 1], [0], [0]>} : vector<2x8x8xf32>, vector<2x16x8xf32>, vector<2x8x16xf32> -> vector<2x8x16xf32>
    "tpu.trace_stop"() : () -> ()
    %cst_155 = arith.constant dense<0xFF800000> : vector<2x8xf32>
    %504 = vector.multi_reduction <maximumf>, %503, %cst_155 [2] : vector<2x8x16xf32> to vector<2x8xf32>
    %505 = vector.shape_cast %504 : vector<2x8xf32> to vector<2x8x1xf32>
    %506 = vector.broadcast %505 : vector<2x8x1xf32> to vector<2x8x16xf32>
    %507 = arith.subf %503, %506 : vector<2x8x16xf32>
    %508 = math.exp %507 : vector<2x8x16xf32>
    %cst_156 = arith.constant dense<0.000000e+00> : vector<2x8xf32>
    %509 = vector.multi_reduction <add>, %508, %cst_156 [2] : vector<2x8x16xf32> to vector<2x8xf32>
    %510 = vector.shape_cast %509 : vector<2x8xf32> to vector<2x8x1xf32>
    %511 = tpu.reciprocal %510 {approx = true} : vector<2x8x1xf32> -> vector<2x8x1xf32>
    %512 = vector.broadcast %511 : vector<2x8x1xf32> to vector<2x8x16xf32>
    %513 = arith.mulf %508, %512 : vector<2x8x16xf32>
    "tpu.trace_start"() <{level = 10 : i32, message = "bts,bsc->btc"}> : () -> ()
    %cst_157 = arith.constant dense<0.000000e+00> : vector<2x8x8xf32>
    %514 = tpu.matmul %513, %502, %cst_157 {dimension_numbers = #tpu.dot_dimension_numbers<[2], [1], [1], [2], [0, 0, 0, 1, 1, 2], [0], [0]>} : vector<2x8x16xf32>, vector<2x16x8xf32>, vector<2x8x8xf32> -> vector<2x8x8xf32>
    "tpu.trace_stop"() : () -> ()
    %515 = vector.shape_cast %514 : vector<2x8x8xf32> to vector<16x8xf32>
    %516 = vector.extract_strided_slice %444 {offsets = [0, 24], sizes = [16, 8], strides = [1, 1]} : vector<16x32xf32> to vector<16x8xf32>
    %517 = vector.shape_cast %516 : vector<16x8xf32> to vector<2x8x8xf32>
    %518 = vector.extract_strided_slice %449 {offsets = [0, 24], sizes = [32, 8], strides = [1, 1]} : vector<32x32xf32> to vector<32x8xf32>
    %519 = vector.shape_cast %518 : vector<32x8xf32> to vector<2x16x8xf32>
    %520 = vector.extract_strided_slice %454 {offsets = [0, 24], sizes = [32, 8], strides = [1, 1]} : vector<32x32xf32> to vector<32x8xf32>
    %521 = vector.shape_cast %520 : vector<32x8xf32> to vector<2x16x8xf32>
    "tpu.trace_start"() <{level = 10 : i32, message = "btc,bsc->bts"}> : () -> ()
    %cst_158 = arith.constant dense<0.000000e+00> : vector<2x8x16xf32>
    %522 = tpu.matmul %517, %519, %cst_158 {dimension_numbers = #tpu.dot_dimension_numbers<[2], [2], [1], [1], [0, 0, 0, 1, 1, 1], [0], [0]>} : vector<2x8x8xf32>, vector<2x16x8xf32>, vector<2x8x16xf32> -> vector<2x8x16xf32>
    "tpu.trace_stop"() : () -> ()
    %cst_159 = arith.constant dense<0xFF800000> : vector<2x8xf32>
    %523 = vector.multi_reduction <maximumf>, %522, %cst_159 [2] : vector<2x8x16xf32> to vector<2x8xf32>
    %524 = vector.shape_cast %523 : vector<2x8xf32> to vector<2x8x1xf32>
    %525 = vector.broadcast %524 : vector<2x8x1xf32> to vector<2x8x16xf32>
    %526 = arith.subf %522, %525 : vector<2x8x16xf32>
    %527 = math.exp %526 : vector<2x8x16xf32>
    %cst_160 = arith.constant dense<0.000000e+00> : vector<2x8xf32>
    %528 = vector.multi_reduction <add>, %527, %cst_160 [2] : vector<2x8x16xf32> to vector<2x8xf32>
    %529 = vector.shape_cast %528 : vector<2x8xf32> to vector<2x8x1xf32>
    %530 = tpu.reciprocal %529 {approx = true} : vector<2x8x1xf32> -> vector<2x8x1xf32>
    %531 = vector.broadcast %530 : vector<2x8x1xf32> to vector<2x8x16xf32>
    %532 = arith.mulf %527, %531 : vector<2x8x16xf32>
    "tpu.trace_start"() <{level = 10 : i32, message = "bts,bsc->btc"}> : () -> ()
    %cst_161 = arith.constant dense<0.000000e+00> : vector<2x8x8xf32>
    %533 = tpu.matmul %532, %521, %cst_161 {dimension_numbers = #tpu.dot_dimension_numbers<[2], [1], [1], [2], [0, 0, 0, 1, 1, 2], [0], [0]>} : vector<2x8x16xf32>, vector<2x16x8xf32>, vector<2x8x8xf32> -> vector<2x8x8xf32>
    "tpu.trace_stop"() : () -> ()
    %534 = vector.shape_cast %533 : vector<2x8x8xf32> to vector<16x8xf32>
    %535 = tpu.concatenate %477, %496, %515, %534 in 1 : vector<16x8xf32>, vector<16x8xf32>, vector<16x8xf32>, vector<16x8xf32> -> vector<16x32xf32>
    %cst_162 = arith.constant dense<0.000000e+00> : vector<16x32xf32>
    %536 = tpu.matmul %535, %456, %cst_162 {dimension_numbers = #tpu.dot_dimension_numbers<[1], [0], [0], [1], [0, 0, 1, 1], [], []>} : vector<16x32xf32>, vector<32x32xf32>, vector<16x32xf32> -> vector<16x32xf32>
    %537 = vector.broadcast %458 : vector<1x32xf32> to vector<16x32xf32>
    %538 = arith.addf %536, %537 : vector<16x32xf32>
    %539 = arith.addf %434, %538 : vector<16x32xf32>
    %540 = vector.extract_strided_slice %307 {offsets = [2, 0], sizes = [1, 32], strides = [1, 1]} : vector<6x32xf32> to vector<1x32xf32>
    %541 = vector.extract_strided_slice %307 {offsets = [3, 0], sizes = [1, 32], strides = [1, 1]} : vector<6x32xf32> to vector<1x32xf32>
    %542 = arith.mulf %539, %539 : vector<16x32xf32>
    %543 = tpu.concatenate %539, %542 in 0 : vector<16x32xf32>, vector<16x32xf32> -> vector<32x32xf32>
    %cst_163 = arith.constant dense<0.000000e+00> : vector<32xf32>
    %544 = vector.multi_reduction <add>, %543, %cst_163 [1] : vector<32x32xf32> to vector<32xf32>
    %545 = vector.shape_cast %544 : vector<32xf32> to vector<32x1xf32>
    %546 = vector.extract_strided_slice %545 {offsets = [0, 0], sizes = [16, 1], strides = [1, 1]} : vector<32x1xf32> to vector<16x1xf32>
    %cst_164 = arith.constant 3.125000e-02 : f32
    %547 = vector.broadcast %cst_164 : f32 to vector<16x1xf32>
    %548 = arith.mulf %546, %547 : vector<16x1xf32>
    %549 = vector.extract_strided_slice %545 {offsets = [16, 0], sizes = [16, 1], strides = [1, 1]} : vector<32x1xf32> to vector<16x1xf32>
    %cst_165 = arith.constant 3.125000e-02 : f32
    %550 = vector.broadcast %cst_165 : f32 to vector<16x1xf32>
    %551 = arith.mulf %549, %550 : vector<16x1xf32>
    %552 = arith.mulf %548, %548 : vector<16x1xf32>
    %553 = arith.subf %551, %552 : vector<16x1xf32>
    %554 = vector.broadcast %548 : vector<16x1xf32> to vector<16x32xf32>
    %555 = arith.subf %539, %554 : vector<16x32xf32>
    %cst_166 = arith.constant 9.99999974E-6 : f32
    %556 = vector.broadcast %cst_166 : f32 to vector<16x1xf32>
    %557 = arith.addf %553, %556 : vector<16x1xf32>
    %558 = math.rsqrt %557 : vector<16x1xf32>
    %559 = vector.broadcast %558 : vector<16x1xf32> to vector<16x32xf32>
    %560 = arith.mulf %555, %559 : vector<16x32xf32>
    %561 = vector.broadcast %540 : vector<1x32xf32> to vector<16x32xf32>
    %562 = arith.mulf %560, %561 : vector<16x32xf32>
    %563 = vector.broadcast %541 : vector<1x32xf32> to vector<16x32xf32>
    %564 = arith.addf %562, %563 : vector<16x32xf32>
    %c1_167 = arith.constant 1 : index
    %c0_168 = arith.constant 0 : index
    %c0_169 = arith.constant 0 : index
    %565 = vector.load %arg10[%c1_167, %c0_168, %c0_169] : memref<2x1x96xf32, #tpu.memory_space<vmem>>, vector<1x1x96xf32>
    %566 = vector.shape_cast %565 : vector<1x1x96xf32> to vector<1x96xf32>
    %c1_170 = arith.constant 1 : index
    %c0_171 = arith.constant 0 : index
    %c0_172 = arith.constant 0 : index
    %567 = vector.load %arg8[%c1_170, %c0_171, %c0_172] : memref<2x32x64xf32, #tpu.memory_space<vmem>>, vector<1x32x64xf32>
    %568 = vector.shape_cast %567 : vector<1x32x64xf32> to vector<32x64xf32>
    %cst_173 = arith.constant dense<0.000000e+00> : vector<16x64xf32>
    %569 = tpu.matmul %564, %568, %cst_173 {dimension_numbers = #tpu.dot_dimension_numbers<[1], [0], [0], [1], [0, 0, 1, 1], [], []>} : vector<16x32xf32>, vector<32x64xf32>, vector<16x64xf32> -> vector<16x64xf32>
    %570 = vector.extract_strided_slice %566 {offsets = [0, 0], sizes = [1, 64], strides = [1, 1]} : vector<1x96xf32> to vector<1x64xf32>
    %571 = vector.broadcast %570 : vector<1x64xf32> to vector<16x64xf32>
    %572 = arith.addf %569, %571 : vector<16x64xf32>
    %cst_174 = arith.constant 0.000000e+00 : f32
    %573 = vector.broadcast %cst_174 : f32 to vector<16x64xf32>
    %574 = arith.maximumf %572, %573 : vector<16x64xf32>
    %c1_175 = arith.constant 1 : index
    %c0_176 = arith.constant 0 : index
    %c0_177 = arith.constant 0 : index
    %575 = vector.load %arg9[%c1_175, %c0_176, %c0_177] : memref<2x64x32xf32, #tpu.memory_space<vmem>>, vector<1x64x32xf32>
    %576 = vector.shape_cast %575 : vector<1x64x32xf32> to vector<64x32xf32>
    %cst_178 = arith.constant dense<0.000000e+00> : vector<16x32xf32>
    %577 = tpu.matmul %574, %576, %cst_178 {dimension_numbers = #tpu.dot_dimension_numbers<[1], [0], [0], [1], [0, 0, 1, 1], [], []>} : vector<16x64xf32>, vector<64x32xf32>, vector<16x32xf32> -> vector<16x32xf32>
    %578 = vector.extract_strided_slice %566 {offsets = [0, 64], sizes = [1, 32], strides = [1, 1]} : vector<1x96xf32> to vector<1x32xf32>
    %579 = vector.broadcast %578 : vector<1x32xf32> to vector<16x32xf32>
    %580 = arith.addf %577, %579 : vector<16x32xf32>
    %581 = arith.addf %564, %580 : vector<16x32xf32>
    %582 = vector.extract_strided_slice %307 {offsets = [4, 0], sizes = [1, 32], strides = [1, 1]} : vector<6x32xf32> to vector<1x32xf32>
    %583 = vector.extract_strided_slice %307 {offsets = [5, 0], sizes = [1, 32], strides = [1, 1]} : vector<6x32xf32> to vector<1x32xf32>
    %584 = arith.mulf %581, %581 : vector<16x32xf32>
    %585 = tpu.concatenate %581, %584 in 0 : vector<16x32xf32>, vector<16x32xf32> -> vector<32x32xf32>
    %cst_179 = arith.constant dense<0.000000e+00> : vector<32xf32>
    %586 = vector.multi_reduction <add>, %585, %cst_179 [1] : vector<32x32xf32> to vector<32xf32>
    %587 = vector.shape_cast %586 : vector<32xf32> to vector<32x1xf32>
    %588 = vector.extract_strided_slice %587 {offsets = [0, 0], sizes = [16, 1], strides = [1, 1]} : vector<32x1xf32> to vector<16x1xf32>
    %cst_180 = arith.constant 3.125000e-02 : f32
    %589 = vector.broadcast %cst_180 : f32 to vector<16x1xf32>
    %590 = arith.mulf %588, %589 : vector<16x1xf32>
    %591 = vector.extract_strided_slice %587 {offsets = [16, 0], sizes = [16, 1], strides = [1, 1]} : vector<32x1xf32> to vector<16x1xf32>
    %cst_181 = arith.constant 3.125000e-02 : f32
    %592 = vector.broadcast %cst_181 : f32 to vector<16x1xf32>
    %593 = arith.mulf %591, %592 : vector<16x1xf32>
    %594 = arith.mulf %590, %590 : vector<16x1xf32>
    %595 = arith.subf %593, %594 : vector<16x1xf32>
    %596 = vector.broadcast %590 : vector<16x1xf32> to vector<16x32xf32>
    %597 = arith.subf %581, %596 : vector<16x32xf32>
    %cst_182 = arith.constant 9.99999974E-6 : f32
    %598 = vector.broadcast %cst_182 : f32 to vector<16x1xf32>
    %599 = arith.addf %595, %598 : vector<16x1xf32>
    %600 = math.rsqrt %599 : vector<16x1xf32>
    %601 = vector.broadcast %600 : vector<16x1xf32> to vector<16x32xf32>
    %602 = arith.mulf %597, %601 : vector<16x32xf32>
    %603 = vector.broadcast %582 : vector<1x32xf32> to vector<16x32xf32>
    %604 = arith.mulf %602, %603 : vector<16x32xf32>
    %605 = vector.broadcast %583 : vector<1x32xf32> to vector<16x32xf32>
    %606 = arith.addf %604, %605 : vector<16x32xf32>
    %c0_183 = arith.constant 0 : index
    %c0_184 = arith.constant 0 : index
    %607 = vector.load %arg12[%c0_183, %c0_184] : memref<2x32xf32, #tpu.memory_space<vmem>>, vector<2x32xf32>
    %608 = vector.extract_strided_slice %607 {offsets = [0, 0], sizes = [1, 32], strides = [1, 1]} : vector<2x32xf32> to vector<1x32xf32>
    %609 = vector.extract_strided_slice %607 {offsets = [1, 0], sizes = [1, 32], strides = [1, 1]} : vector<2x32xf32> to vector<1x32xf32>
    %610 = arith.mulf %606, %606 : vector<16x32xf32>
    %611 = tpu.concatenate %606, %610 in 0 : vector<16x32xf32>, vector<16x32xf32> -> vector<32x32xf32>
    %cst_185 = arith.constant dense<0.000000e+00> : vector<32xf32>
    %612 = vector.multi_reduction <add>, %611, %cst_185 [1] : vector<32x32xf32> to vector<32xf32>
    %613 = vector.shape_cast %612 : vector<32xf32> to vector<32x1xf32>
    %614 = vector.extract_strided_slice %613 {offsets = [0, 0], sizes = [16, 1], strides = [1, 1]} : vector<32x1xf32> to vector<16x1xf32>
    %cst_186 = arith.constant 3.125000e-02 : f32
    %615 = vector.broadcast %cst_186 : f32 to vector<16x1xf32>
    %616 = arith.mulf %614, %615 : vector<16x1xf32>
    %617 = vector.extract_strided_slice %613 {offsets = [16, 0], sizes = [16, 1], strides = [1, 1]} : vector<32x1xf32> to vector<16x1xf32>
    %cst_187 = arith.constant 3.125000e-02 : f32
    %618 = vector.broadcast %cst_187 : f32 to vector<16x1xf32>
    %619 = arith.mulf %617, %618 : vector<16x1xf32>
    %620 = arith.mulf %616, %616 : vector<16x1xf32>
    %621 = arith.subf %619, %620 : vector<16x1xf32>
    %622 = vector.broadcast %616 : vector<16x1xf32> to vector<16x32xf32>
    %623 = arith.subf %606, %622 : vector<16x32xf32>
    %cst_188 = arith.constant 9.99999974E-6 : f32
    %624 = vector.broadcast %cst_188 : f32 to vector<16x1xf32>
    %625 = arith.addf %621, %624 : vector<16x1xf32>
    %626 = math.rsqrt %625 : vector<16x1xf32>
    %627 = vector.broadcast %626 : vector<16x1xf32> to vector<16x32xf32>
    %628 = arith.mulf %623, %627 : vector<16x32xf32>
    %629 = vector.broadcast %608 : vector<1x32xf32> to vector<16x32xf32>
    %630 = arith.mulf %628, %629 : vector<16x32xf32>
    %631 = vector.broadcast %609 : vector<1x32xf32> to vector<16x32xf32>
    %632 = arith.addf %630, %631 : vector<16x32xf32>
    %c0_189 = arith.constant 0 : index
    %c0_190 = arith.constant 0 : index
    %633 = vector.load %arg13[%c0_189, %c0_190] : memref<16x32xf32, #tpu.memory_space<vmem>>, vector<16x32xf32>
    tpu.vector_store %arg13[%c0_189, %c0_190], %632 {strides = array<i32>} : memref<16x32xf32, #tpu.memory_space<vmem>>, vector<16x32xf32>,
    return
  }
}

</mosaic_0001>

<llo_original>
// kernel: tpu_custom_call.1
$region0: #{tpu_custom_call.1}
  #allocation0 [shape = 'u32[]', space=smem, size = 0x4, offset = 0x4, fixed_abs, tag = 'smem constant byte address 0x4 - core index']
  #allocation1 [shape = 'u32[144,128]{1,0:T(1,128)}', space=vmem, size = 0x12000, scoped, tag = 'internal scratch']
  %s0 = inlined_call_operand.hbm [shape: f32[16,32], index: 0, kind: input, shape index: {}]
  %s1 = inlined_call_operand.vmem [shape: f32[32,32], index: 1, kind: input, shape index: {}]
  %s2 = inlined_call_operand.hbm [shape: f32[16,32], index: 2, kind: input, shape index: {}]
  %s3 = inlined_call_operand.hbm [shape: f32[32,32], index: 3, kind: input, shape index: {}]
  %s4 = inlined_call_operand.vmem [shape: f32[4,32,96], index: 4, kind: input, shape index: {}]
  %s5 = inlined_call_operand.hbm [shape: f32[4,1,96], index: 5, kind: input, shape index: {}]
  %s6 = inlined_call_operand.hbm [shape: f32[4,32,32], index: 6, kind: input, shape index: {}]
  %s7 = inlined_call_operand.vmem [shape: f32[4,1,32], index: 7, kind: input, shape index: {}]
  %s8 = inlined_call_operand.vmem [shape: f32[2,32,64], index: 8, kind: input, shape index: {}]
  %s9 = inlined_call_operand.vmem [shape: f32[2,64,32], index: 9, kind: input, shape index: {}]
  %s10 = inlined_call_operand.hbm [shape: f32[2,1,96], index: 10, kind: input, shape index: {}]
  %s11 = inlined_call_operand.vmem [shape: f32[2,6,32], index: 11, kind: input, shape index: {}]
  %s12 = inlined_call_operand.hbm [shape: f32[2,32], index: 12, kind: input, shape index: {}]
  %s13 = inlined_call_operand.hbm [shape: f32[16,32], index: 13, kind: output, shape index: {}]
  %s14 = sld [smem:[#allocation0]]
  $region90: #{tpu_custom_call.1} parent=0
    _
  %s16 = ssub.s32 1, %s14
  %s17 = scalar_select 0, %s16, %s14
  $region1: #{tpu_custom_call.1} parent=0
    #allocation2 [shape = 'u8[8192]{0}', space=vmem, size = 0x2000, scoped, tag = 'input window, operand 0, single buffered']
    #allocation3 [shape = 's32[1]{0}', space=sflag, size = 0x4, scoped, tag = 'scoped memory for tpu_custom_call.1']
    #allocation4 [shape = 's32[1]{0}', space=sflag, size = 0x4, scoped, tag = 'scoped memory for tpu_custom_call.1']
    #allocation5 [shape = 'u8[8192]{0}', space=vmem, size = 0x2000, scoped, tag = 'input window, operand 2, single buffered']
    #allocation6 [shape = 's32[1]{0}', space=sflag, size = 0x4, scoped, tag = 'scoped memory for tpu_custom_call.1']
    #allocation7 [shape = 'u8[16384]{0}', space=vmem, size = 0x4000, scoped, tag = 'input window, operand 3, single buffered']
    #allocation8 [shape = 'u8[2048]{0}', space=vmem, size = 0x800, scoped, tag = 'input window, operand 5, single buffered']
    #allocation9 [shape = 's32[1]{0}', space=sflag, size = 0x4, scoped, tag = 'scoped memory for tpu_custom_call.1']
    #allocation10 [shape = 'u8[65536]{0}', space=vmem, size = 0x10000, scoped, tag = 'input window, operand 6, single buffered']
    #allocation11 [shape = 'u8[1024]{0}', space=vmem, size = 0x400, scoped, tag = 'input window, operand 10, single buffered']
    #allocation12 [shape = 's32[1]{0}', space=sflag, size = 0x4, scoped, tag = 'scoped memory for tpu_custom_call.1']
    #allocation13 [shape = 'u8[1024]{0}', space=vmem, size = 0x400, scoped, tag = 'input window, operand 12, single buffered']
    #allocation14 [shape = 'u8[8192]{0}', space=vmem, size = 0x2000, scoped, tag = 'output window, operand 0, single buffered']
    %18 = vsyncpa [#allocation3], 0
    %19 = vsyncpa [#allocation6], 0
    %20 = vsyncpa [#allocation9], 0
    %21 = vsyncpa [#allocation12], 0
    %22 = vsyncpa [#allocation4], 0
    // Predicated region
    $region2: #{tpu_custom_call.1} parent=1 // pred_check
      _
    $region3: #{tpu_custom_call.1} parent=1 // pred_check_branch
      %24 = sbr.rel (0) target = $region5
    $region4: #{tpu_custom_call.1} parent=1 // pred_region
      %s26 = ssub.s32 256, 256
      %27 = vsyncadd [#allocation3], %s26
      %s28 = sshll.u32 [#allocation2], 4
      %s29 = int_to_ptr.vmem [resolvable:$true] %s28
      %34 = dma.hbm_to_vmem [thread:$0]  %s0, 256, %s29, [#allocation3], 128, 128, 8
    $region5: #{tpu_custom_call.1} parent=1 // pred_fallthru
      _
    // Predicated region
    $region6: #{tpu_custom_call.1} parent=1 // pred_check
      _
    $region7: #{tpu_custom_call.1} parent=1 // pred_check_branch
      %36 = sbr.rel (0) target = $region9
    $region8: #{tpu_custom_call.1} parent=1 // pred_region
      _
    $region9: #{tpu_custom_call.1} parent=1 // pred_fallthru
      _
    // Predicated region
    $region10: #{tpu_custom_call.1} parent=1 // pred_check
      _
    $region11: #{tpu_custom_call.1} parent=1 // pred_check_branch
      %38 = sbr.rel (0) target = $region13
    $region12: #{tpu_custom_call.1} parent=1 // pred_region
      %s40 = ssub.s32 256, 256
      %41 = vsyncadd [#allocation6], %s40
      %s42 = sshll.u32 [#allocation5], 4
      %s43 = int_to_ptr.vmem [resolvable:$true] %s42
      %48 = dma.hbm_to_vmem [thread:$0]  %s2, 256, %s43, [#allocation6], 128, 128, 8
    $region13: #{tpu_custom_call.1} parent=1 // pred_fallthru
      _
    // Predicated region
    $region14: #{tpu_custom_call.1} parent=1 // pred_check
      _
    $region15: #{tpu_custom_call.1} parent=1 // pred_check_branch
      %50 = sbr.rel (0) target = $region17
    $region16: #{tpu_custom_call.1} parent=1 // pred_region
      %s52 = ssub.s32 512, 512
      %53 = vsyncadd [#allocation6], %s52
      %s54 = sshll.u32 [#allocation7], 4
      %s55 = int_to_ptr.vmem [resolvable:$true] %s54
      %60 = dma.hbm_to_vmem [thread:$0]  %s3, 512, %s55, [#allocation6], 128, 128, 8
    $region17: #{tpu_custom_call.1} parent=1 // pred_fallthru
      _
    // Predicated region
    $region18: #{tpu_custom_call.1} parent=1 // pred_check
      _
    $region19: #{tpu_custom_call.1} parent=1 // pred_check_branch
      %62 = sbr.rel (0) target = $region21
    $region20: #{tpu_custom_call.1} parent=1 // pred_region
      _
    $region21: #{tpu_custom_call.1} parent=1 // pred_fallthru
      _
    // Predicated region
    $region22: #{tpu_custom_call.1} parent=1 // pred_check
      _
    $region23: #{tpu_custom_call.1} parent=1 // pred_check_branch
      %64 = sbr.rel (0) target = $region25
    $region24: #{tpu_custom_call.1} parent=1 // pred_region
      %s66 = ssub.s32 64, 64
      %67 = vsyncadd [#allocation9], %s66
      %s68 = sshll.u32 [#allocation8], 4
      %s69 = int_to_ptr.vmem [resolvable:$true] %s68
      %74 = dma.hbm_to_vmem [thread:$0]  %s5, 64, %s69, [#allocation9], 16, 16, 1
    $region25: #{tpu_custom_call.1} parent=1 // pred_fallthru
      _
    // Predicated region
    $region26: #{tpu_custom_call.1} parent=1 // pred_check
      _
    $region27: #{tpu_custom_call.1} parent=1 // pred_check_branch
      %76 = sbr.rel (0) target = $region29
    $region28: #{tpu_custom_call.1} parent=1 // pred_region
      %s78 = ssub.s32 2048, 2048
      %79 = vsyncadd [#allocation9], %s78
      %s80 = sshll.u32 [#allocation10], 4
      %s81 = int_to_ptr.vmem [resolvable:$true] %s80
      %86 = dma.hbm_to_vmem [thread:$0]  %s6, 2048, %s81, [#allocation9], 128, 128, 8
    $region29: #{tpu_custom_call.1} parent=1 // pred_fallthru
      _
    // Predicated region
    $region30: #{tpu_custom_call.1} parent=1 // pred_check
      _
    $region31: #{tpu_custom_call.1} parent=1 // pred_check_branch
      %88 = sbr.rel (0) target = $region33
    $region32: #{tpu_custom_call.1} parent=1 // pred_region
      _
    $region33: #{tpu_custom_call.1} parent=1 // pred_fallthru
      _
    // Predicated region
    $region34: #{tpu_custom_call.1} parent=1 // pred_check
      _
    $region35: #{tpu_custom_call.1} parent=1 // pred_check_branch
      %90 = sbr.rel (0) target = $region37
    $region36: #{tpu_custom_call.1} parent=1 // pred_region
      _
    $region37: #{tpu_custom_call.1} parent=1 // pred_fallthru
      _
    // Predicated region
    $region38: #{tpu_custom_call.1} parent=1 // pred_check
      _
    $region39: #{tpu_custom_call.1} parent=1 // pred_check_branch
      %92 = sbr.rel (0) target = $region41
    $region40: #{tpu_custom_call.1} parent=1 // pred_region
      _
    $region41: #{tpu_custom_call.1} parent=1 // pred_fallthru
      _
    // Predicated region
    $region42: #{tpu_custom_call.1} parent=1 // pred_check
      _
    $region43: #{tpu_custom_call.1} parent=1 // pred_check_branch
      %94 = sbr.rel (0) target = $region45
    $region44: #{tpu_custom_call.1} parent=1 // pred_region
      %s96 = ssub.s32 32, 32
      %97 = vsyncadd [#allocation12], %s96
      %s98 = sshll.u32 [#allocation11], 4
      %s99 = int_to_ptr.vmem [resolvable:$true] %s98
      %104 = dma.hbm_to_vmem [thread:$0]  %s10, 32, %s99, [#allocation12], 16, 16, 1
    $region45: #{tpu_custom_call.1} parent=1 // pred_fallthru
      _
    // Predicated region
    $region46: #{tpu_custom_call.1} parent=1 // pred_check
      _
    $region47: #{tpu_custom_call.1} parent=1 // pred_check_branch
      %106 = sbr.rel (0) target = $region49
    $region48: #{tpu_custom_call.1} parent=1 // pred_region
      _
    $region49: #{tpu_custom_call.1} parent=1 // pred_fallthru
      _
    // Predicated region
    $region50: #{tpu_custom_call.1} parent=1 // pred_check
      _
    $region51: #{tpu_custom_call.1} parent=1 // pred_check_branch
      %108 = sbr.rel (0) target = $region53
    $region52: #{tpu_custom_call.1} parent=1 // pred_region
      %s110 = ssub.s32 32, 32
      %111 = vsyncadd [#allocation12], %s110
      %s113 = sshll.u32 [#allocation13], 4
      %s114 = int_to_ptr.vmem [resolvable:$true] %s113
      %116 = dma.hbm_to_vmem [thread:$0]  %s12, 32, %s114, [#allocation12]
    $region53: #{tpu_custom_call.1} parent=1 // pred_fallthru
      _
    // Predicated region
    $region54: #{tpu_custom_call.1} parent=1 // pred_check
      _
    $region55: #{tpu_custom_call.1} parent=1 // pred_check_branch
      %118 = sbr.rel (0) target = $region57
    $region56: #{tpu_custom_call.1} parent=1 // pred_region
      %119 = dma.done [#allocation3], 256
    $region57: #{tpu_custom_call.1} parent=1 // pred_fallthru
      _
    // Predicated region
    $region58: #{tpu_custom_call.1} parent=1 // pred_check
      _
    $region59: #{tpu_custom_call.1} parent=1 // pred_check_branch
      %121 = sbr.rel (0) target = $region61
    $region60: #{tpu_custom_call.1} parent=1 // pred_region
      %122 = dma.done [#allocation6], 256
    $region61: #{tpu_custom_call.1} parent=1 // pred_fallthru
      _
    // Predicated region
    $region62: #{tpu_custom_call.1} parent=1 // pred_check
      _
    $region63: #{tpu_custom_call.1} parent=1 // pred_check_branch
      %124 = sbr.rel (0) target = $region65
    $region64: #{tpu_custom_call.1} parent=1 // pred_region
      %125 = dma.done [#allocation6], 512
    $region65: #{tpu_custom_call.1} parent=1 // pred_fallthru
      _
    // Predicated region
    $region66: #{tpu_custom_call.1} parent=1 // pred_check
      _
    $region67: #{tpu_custom_call.1} parent=1 // pred_check_branch
      %127 = sbr.rel (0) target = $region69
    $region68: #{tpu_custom_call.1} parent=1 // pred_region
      %128 = dma.done [#allocation9], 64
    $region69: #{tpu_custom_call.1} parent=1 // pred_fallthru
      _
    // Predicated region
    $region70: #{tpu_custom_call.1} parent=1 // pred_check
      _
    $region71: #{tpu_custom_call.1} parent=1 // pred_check_branch
      %130 = sbr.rel (0) target = $region73
    $region72: #{tpu_custom_call.1} parent=1 // pred_region
      %131 = dma.done [#allocation9], 2048
    $region73: #{tpu_custom_call.1} parent=1 // pred_fallthru
      _
    // Predicated region
    $region74: #{tpu_custom_call.1} parent=1 // pred_check
      _
    $region75: #{tpu_custom_call.1} parent=1 // pred_check_branch
      %133 = sbr.rel (0) target = $region77
    $region76: #{tpu_custom_call.1} parent=1 // pred_region
      %134 = dma.done [#allocation12], 32
    $region77: #{tpu_custom_call.1} parent=1 // pred_fallthru
      _
    // Predicated region
    $region78: #{tpu_custom_call.1} parent=1 // pred_check
      _
    $region79: #{tpu_custom_call.1} parent=1 // pred_check_branch
      %136 = sbr.rel (0) target = $region81
    $region80: #{tpu_custom_call.1} parent=1 // pred_region
      %137 = dma.done [#allocation12], 32
    $region81: #{tpu_custom_call.1} parent=1 // pred_fallthru
      _
    %v138 = vld [vmem:[#allocation2] sm:$0xff]
    %v139 = vld [vmem:[#allocation2 + $0x8] sm:$0xff]
    %v140 = vld [vmem:[%s1] sm:$0xff]
    %v141 = vld [vmem:[%s1 + $0x8] sm:$0xff]
    %v142 = vld [vmem:[%s1 + $0x10] sm:$0xff]
    %v143 = vld [vmem:[%s1 + $0x18] sm:$0xff]
    %v144 = vld [vmem:[#allocation5] sm:$0xff]
    %v145 = vld [vmem:[#allocation5 + $0x8] sm:$0xff]
    %v146 = vld [vmem:[#allocation7] sm:$0xff]
    %v147 = vld [vmem:[#allocation7 + $0x8] sm:$0xff]
    %v148 = vld [vmem:[#allocation7 + $0x10] sm:$0xff]
    %v149 = vld [vmem:[#allocation7 + $0x18] sm:$0xff]
    %v150 = vadd.f32 %v140, %v146
    %v151 = vadd.f32 %v141, %v147
    %v152 = vadd.f32 %v142, %v148
    %v153 = vadd.f32 %v143, %v149
    %v154 = vld [vmem:[%s11] sm:$0x3f]
    %v155 = vld [vmem:[%s4] sm:$0xff]
    %v156 = vld [vmem:[%s4 + $0x8] sm:$0xff]
    %v157 = vld [vmem:[%s4 + $0x10] sm:$0xff]
    %v158 = vld [vmem:[%s4 + $0x18] sm:$0xff]
    %v159 = vld [vmem:[#allocation8] sm:$0x1]
    %v160 = vadd.f32 %v138, %v144
    %v161 = vadd.f32 %v139, %v145
    %v163 = vlaneseq
    %v164 = vshrl.u32 %v163, 7
    %v165 = vsub.s32 0, %v164
    %v166 = vrot.slane %v159, %v165
    %vm168 = vcmask 261120
    %v170 = vsel %vm168, %v160, 0
    %v173 = vsel %vm168, %v161, 0
    %175 = vmatprep.subr.mxu0 0.0
    %176 = vmatpush1.msra.mxu0 0.0
    %177 = vmatprep.subr.mxu0 0.0
    %178 = vmatpush1.msra.mxu0 0.0
    %179 = vmatprep.subr.mxu0 0.0
    %180 = vmatpush1.msra.mxu0 0.0
    %181 = vmatprep.subr.mxu0 0.0
    %182 = vmatpush1.msra.mxu0 0.0
    %183 = vmatprep.subr.mxu0 0.0
    %184 = vmatpush1.msra.mxu0 0.0
    %185 = vmatprep.subr.mxu0 0.0
    %186 = vmatpush1.msra.mxu0 0.0
    %187 = vmatprep.subr.mxu0 0.0
    %188 = vmatpush1.msra.mxu0 0.0
    %189 = vmatprep.subr.mxu0 0.0
    %190 = vmatpush1.msra.mxu0 0.0
    %191 = vmatprep.subr.mxu0 0.0
    %192 = vmatpush1.msra.mxu0 0.0
    %193 = vmatprep.subr.mxu0 0.0
    %194 = vmatpush1.msra.mxu0 0.0
    %195 = vmatprep.subr.mxu0 0.0
    %196 = vmatpush1.msra.mxu0 0.0
    %197 = vmatprep.subr.mxu0 0.0
    %198 = vmatpush1.msra.mxu0 0.0
    %199 = vmatprep.subr.mxu0 0.0
    %200 = vmatpush1.msra.mxu0 %v158
    %201 = vmatprep.subr.mxu0 0.0
    %202 = vmatpush1.msra.mxu0 %v157
    %203 = vmatprep.subr.mxu0 0.0
    %204 = vmatpush1.msra.mxu0 %v156
    %205 = vmatprep.subr.mxu0 0.0
    %206 = vmatpush1.msra.mxu0 %v155
    %207 = vmatprep.subr.mxu0 0.0
    %208 = vmatpush2.msra.mxu0 0.0
    %209 = vmatprep.subr.mxu0 0.0
    %210 = vmatpush2.msra.mxu0 0.0
    %211 = vmatprep.subr.mxu0 0.0
    %212 = vmatpush2.msra.mxu0 0.0
    %213 = vmatprep.subr.mxu0 0.0
    %214 = vmatpush2.msra.mxu0 0.0
    %215 = vmatprep.subr.mxu0 0.0
    %216 = vmatpush2.msra.mxu0 0.0
    %217 = vmatprep.subr.mxu0 0.0
    %218 = vmatpush2.msra.mxu0 0.0
    %219 = vmatprep.subr.mxu0 0.0
    %220 = vmatpush2.msra.mxu0 0.0
    %221 = vmatprep.subr.mxu0 0.0
    %222 = vmatpush2.msra.mxu0 0.0
    %223 = vmatprep.subr.mxu0 0.0
    %224 = vmatpush2.msra.mxu0 0.0
    %225 = vmatprep.subr.mxu0 0.0
    %226 = vmatpush2.msra.mxu0 0.0
    %227 = vmatprep.subr.mxu0 0.0
    %228 = vmatpush2.msra.mxu0 0.0
    %229 = vmatprep.subr.mxu0 0.0
    %230 = vmatpush2.msra.mxu0 0.0
    %231 = vmatprep.subr.mxu0 0.0
    %232 = vmatpush2.msra.mxu0 0.0
    %233 = vmatprep.subr.mxu0 0.0
    %234 = vmatpush2.msra.mxu0 0.0
    %235 = vmatprep.subr.mxu0 0.0
    %236 = vmatpush2.msra.mxu0 0.0
    %237 = vmatprep.subr.mxu0 0.0
    %238 = vmatpush2.msra.mxu0 0.0
    %239 = vmatprep.mubr.f32.mxu0 0.0
    %240 = vmatmul.mubr.f32.gmra.mxu0 %v170
    %v241 = vpop.f32.mrf.mxu0
    %v242 = vadd.f32 %v166, %v241
    %v243 = vpop.f32.mrf.mxu0
    %244 = vmatprep.mubr.f32.mxu0 0.0
    %245 = vmatmul.mubr.f32.gmra.mxu0 %v173
    %v246 = vpop.f32.mrf.mxu0
    %v247 = vadd.f32 %v166, %v246
    %v248 = vpop.f32.mrf.mxu0
    %249 = vdwg.mxu0
    %254 = vrot.lane.b32.xlu0 %v155, 64
    %v255 = vpop.permute.xlu0 %254
    %256 = vrot.lane.b32.xlu0 %v156, 64
    %v257 = vpop.permute.xlu0 %256
    %258 = vrot.lane.b32.xlu0 %v157, 64
    %v259 = vpop.permute.xlu0 %258
    %260 = vrot.lane.b32.xlu0 %v158, 64
    %v261 = vpop.permute.xlu0 %260
    %266 = vrot.lane.b32.xlu0 %v166, 64
    %v267 = vpop.permute.xlu0 %266
    %v270 = vsel %vm168, %v138, 0
    %v273 = vsel %vm168, %v139, 0
    %275 = vmatprep.subr.mxu0 0.0
    %276 = vmatpush1.msra.mxu0 0.0
    %277 = vmatprep.subr.mxu0 0.0
    %278 = vmatpush1.msra.mxu0 0.0
    %279 = vmatprep.subr.mxu0 0.0
    %280 = vmatpush1.msra.mxu0 0.0
    %281 = vmatprep.subr.mxu0 0.0
    %282 = vmatpush1.msra.mxu0 0.0
    %283 = vmatprep.subr.mxu0 0.0
    %284 = vmatpush1.msra.mxu0 0.0
    %285 = vmatprep.subr.mxu0 0.0
    %286 = vmatpush1.msra.mxu0 0.0
    %287 = vmatprep.subr.mxu0 0.0
    %288 = vmatpush1.msra.mxu0 0.0
    %289 = vmatprep.subr.mxu0 0.0
    %290 = vmatpush1.msra.mxu0 0.0
    %291 = vmatprep.subr.mxu0 0.0
    %292 = vmatpush1.msra.mxu0 0.0
    %293 = vmatprep.subr.mxu0 0.0
    %294 = vmatpush1.msra.mxu0 0.0
    %295 = vmatprep.subr.mxu0 0.0
    %296 = vmatpush1.msra.mxu0 0.0
    %297 = vmatprep.subr.mxu0 0.0
    %298 = vmatpush1.msra.mxu0 0.0
    %299 = vmatprep.subr.mxu0 0.0
    %300 = vmatpush1.msra.mxu0 %v261
    %301 = vmatprep.subr.mxu0 0.0
    %302 = vmatpush1.msra.mxu0 %v259
    %303 = vmatprep.subr.mxu0 0.0
    %304 = vmatpush1.msra.mxu0 %v257
    %305 = vmatprep.subr.mxu0 0.0
    %306 = vmatpush1.msra.mxu0 %v255
    %307 = vmatprep.subr.mxu0 0.0
    %308 = vmatpush2.msra.mxu0 0.0
    %309 = vmatprep.subr.mxu0 0.0
    %310 = vmatpush2.msra.mxu0 0.0
    %311 = vmatprep.subr.mxu0 0.0
    %312 = vmatpush2.msra.mxu0 0.0
    %313 = vmatprep.subr.mxu0 0.0
    %314 = vmatpush2.msra.mxu0 0.0
    %315 = vmatprep.subr.mxu0 0.0
    %316 = vmatpush2.msra.mxu0 0.0
    %317 = vmatprep.subr.mxu0 0.0
    %318 = vmatpush2.msra.mxu0 0.0
    %319 = vmatprep.subr.mxu0 0.0
    %320 = vmatpush2.msra.mxu0 0.0
    %321 = vmatprep.subr.mxu0 0.0
    %322 = vmatpush2.msra.mxu0 0.0
    %323 = vmatprep.subr.mxu0 0.0
    %324 = vmatpush2.msra.mxu0 0.0
    %325 = vmatprep.subr.mxu0 0.0
    %326 = vmatpush2.msra.mxu0 0.0
    %327 = vmatprep.subr.mxu0 0.0
    %328 = vmatpush2.msra.mxu0 0.0
    %329 = vmatprep.subr.mxu0 0.0
    %330 = vmatpush2.msra.mxu0 0.0
    %331 = vmatprep.subr.mxu0 0.0
    %332 = vmatpush2.msra.mxu0 0.0
    %333 = vmatprep.subr.mxu0 0.0
    %334 = vmatpush2.msra.mxu0 0.0
    %335 = vmatprep.subr.mxu0 0.0
    %336 = vmatpush2.msra.mxu0 0.0
    %337 = vmatprep.subr.mxu0 0.0
    %338 = vmatpush2.msra.mxu0 0.0
    %339 = vmatprep.mubr.f32.mxu0 0.0
    %340 = vmatmul.mubr.f32.gmra.mxu0 %v270
    %v341 = vpop.f32.mrf.mxu0
    %v342 = vadd.f32 %v267, %v341
    %v343 = vpop.f32.mrf.mxu0
    %344 = vmatprep.mubr.f32.mxu0 0.0
    %345 = vmatmul.mubr.f32.gmra.mxu0 %v273
    %v346 = vpop.f32.mrf.mxu0
    %v347 = vadd.f32 %v267, %v346
    %v348 = vpop.f32.mrf.mxu0
    %349 = vdwg.mxu0
    %v350 = vld [vmem:[#allocation10] sm:$0xff]
    %v351 = vld [vmem:[#allocation10 + $0x8] sm:$0xff]
    %v352 = vld [vmem:[#allocation10 + $0x10] sm:$0xff]
    %v353 = vld [vmem:[#allocation10 + $0x18] sm:$0xff]
    %v354 = vld [vmem:[%s7] sm:$0x1]
    %356 = vrot.lane.b32.xlu0 %v242, 96
    %v357 = vpop.permute.xlu0 %356
    %vm358 = vcmask 64512
    %v359 = vsel %vm358, %v242, 0
    %v361 = vsel %vm358, %v357, 0
    %363 = vmatprep.subr.mxu0 0.0
    %364 = vmatpush1.xpose.msra.mxu0 0.0
    %365 = vmatprep.subr.mxu0 0.0
    %366 = vmatpush1.xpose.msra.mxu0 0.0
    %367 = vmatprep.subr.mxu0 0.0
    %368 = vmatpush1.xpose.msra.mxu0 0.0
    %369 = vmatprep.subr.mxu0 0.0
    %370 = vmatpush1.xpose.msra.mxu0 0.0
    %371 = vmatprep.subr.mxu0 0.0
    %372 = vmatpush1.xpose.msra.mxu0 0.0
    %373 = vmatprep.subr.mxu0 0.0
    %374 = vmatpush1.xpose.msra.mxu0 0.0
    %375 = vmatprep.subr.mxu0 0.0
    %376 = vmatpush1.xpose.msra.mxu0 0.0
    %377 = vmatprep.subr.mxu0 0.0
    %378 = vmatpush1.xpose.msra.mxu0 0.0
    %379 = vmatprep.subr.mxu0 0.0
    %380 = vmatpush1.xpose.msra.mxu0 0.0
    %381 = vmatprep.subr.mxu0 0.0
    %382 = vmatpush1.xpose.msra.mxu0 0.0
    %383 = vmatprep.subr.mxu0 0.0
    %384 = vmatpush1.xpose.msra.mxu0 0.0
    %385 = vmatprep.subr.mxu0 0.0
    %386 = vmatpush1.xpose.msra.mxu0 0.0
    %387 = vmatprep.subr.mxu0 0.0
    %388 = vmatpush1.xpose.msra.mxu0 0.0
    %389 = vmatprep.subr.mxu0 0.0
    %390 = vmatpush1.xpose.msra.mxu0 0.0
    %391 = vmatprep.subr.mxu0 0.0
    %392 = vmatpush1.xpose.msra.mxu0 0.0
    %393 = vmatprep.subr.mxu0 0.0
    %394 = vmatpush1.xpose.msra.mxu0 %v361
    %395 = vmatprep.subr.mxu0 0.0
    %396 = vmatpush2.xpose.msra.mxu0 0.0
    %397 = vmatprep.subr.mxu0 0.0
    %398 = vmatpush2.xpose.msra.mxu0 0.0
    %399 = vmatprep.subr.mxu0 0.0
    %400 = vmatpush2.xpose.msra.mxu0 0.0
    %401 = vmatprep.subr.mxu0 0.0
    %402 = vmatpush2.xpose.msra.mxu0 0.0
    %403 = vmatprep.subr.mxu0 0.0
    %404 = vmatpush2.xpose.msra.mxu0 0.0
    %405 = vmatprep.subr.mxu0 0.0
    %406 = vmatpush2.xpose.msra.mxu0 0.0
    %407 = vmatprep.subr.mxu0 0.0
    %408 = vmatpush2.xpose.msra.mxu0 0.0
    %409 = vmatprep.subr.mxu0 0.0
    %410 = vmatpush2.xpose.msra.mxu0 0.0
    %411 = vmatprep.subr.mxu0 0.0
    %412 = vmatpush2.xpose.msra.mxu0 0.0
    %413 = vmatprep.subr.mxu0 0.0
    %414 = vmatpush2.xpose.msra.mxu0 0.0
    %415 = vmatprep.subr.mxu0 0.0
    %416 = vmatpush2.xpose.msra.mxu0 0.0
    %417 = vmatprep.subr.mxu0 0.0
    %418 = vmatpush2.xpose.msra.mxu0 0.0
    %419 = vmatprep.subr.mxu0 0.0
    %420 = vmatpush2.xpose.msra.mxu0 0.0
    %421 = vmatprep.subr.mxu0 0.0
    %422 = vmatpush2.xpose.msra.mxu0 0.0
    %423 = vmatprep.subr.mxu0 0.0
    %424 = vmatpush2.xpose.msra.mxu0 0.0
    %425 = vmatprep.subr.mxu0 0.0
    %426 = vmatpush2.xpose.msra.mxu0 0.0
    %427 = vmatprep.mubr.f32.mxu0 0.0
    %428 = vmatmul.mubr.f32.gmra.mxu0 %v359
    %v429 = vpop.f32.mrf.mxu0
    %v430 = vadd.f32 0.0, %v429
    %v431 = vpop.f32.mrf.mxu0
    %432 = vdwg.mxu0
    %434 = vrot.lane.b32.xlu0 %v247, 96
    %v435 = vpop.permute.xlu0 %434
    %v436 = vsel %vm358, %v247, 0
    %v438 = vsel %vm358, %v435, 0
    %440 = vmatprep.subr.mxu0 0.0
    %441 = vmatpush1.xpose.msra.mxu0 0.0
    %442 = vmatprep.subr.mxu0 0.0
    %443 = vmatpush1.xpose.msra.mxu0 0.0
    %444 = vmatprep.subr.mxu0 0.0
    %445 = vmatpush1.xpose.msra.mxu0 0.0
    %446 = vmatprep.subr.mxu0 0.0
    %447 = vmatpush1.xpose.msra.mxu0 0.0
    %448 = vmatprep.subr.mxu0 0.0
    %449 = vmatpush1.xpose.msra.mxu0 0.0
    %450 = vmatprep.subr.mxu0 0.0
    %451 = vmatpush1.xpose.msra.mxu0 0.0
    %452 = vmatprep.subr.mxu0 0.0
    %453 = vmatpush1.xpose.msra.mxu0 0.0
    %454 = vmatprep.subr.mxu0 0.0
    %455 = vmatpush1.xpose.msra.mxu0 0.0
    %456 = vmatprep.subr.mxu0 0.0
    %457 = vmatpush1.xpose.msra.mxu0 0.0
    %458 = vmatprep.subr.mxu0 0.0
    %459 = vmatpush1.xpose.msra.mxu0 0.0
    %460 = vmatprep.subr.mxu0 0.0
    %461 = vmatpush1.xpose.msra.mxu0 0.0
    %462 = vmatprep.subr.mxu0 0.0
    %463 = vmatpush1.xpose.msra.mxu0 0.0
    %464 = vmatprep.subr.mxu0 0.0
    %465 = vmatpush1.xpose.msra.mxu0 0.0
    %466 = vmatprep.subr.mxu0 0.0
    %467 = vmatpush1.xpose.msra.mxu0 0.0
    %468 = vmatprep.subr.mxu0 0.0
    %469 = vmatpush1.xpose.msra.mxu0 0.0
    %470 = vmatprep.subr.mxu0 0.0
    %471 = vmatpush1.xpose.msra.mxu0 %v438
    %472 = vmatprep.subr.mxu0 0.0
    %473 = vmatpush2.xpose.msra.mxu0 0.0
    %474 = vmatprep.subr.mxu0 0.0
    %475 = vmatpush2.xpose.msra.mxu0 0.0
    %476 = vmatprep.subr.mxu0 0.0
    %477 = vmatpush2.xpose.msra.mxu0 0.0
    %478 = vmatprep.subr.mxu0 0.0
    %479 = vmatpush2.xpose.msra.mxu0 0.0
    %480 = vmatprep.subr.mxu0 0.0
    %481 = vmatpush2.xpose.msra.mxu0 0.0
    %482 = vmatprep.subr.mxu0 0.0
    %483 = vmatpush2.xpose.msra.mxu0 0.0
    %484 = vmatprep.subr.mxu0 0.0
    %485 = vmatpush2.xpose.msra.mxu0 0.0
    %486 = vmatprep.subr.mxu0 0.0
    %487 = vmatpush2.xpose.msra.mxu0 0.0
    %488 = vmatprep.subr.mxu0 0.0
    %489 = vmatpush2.xpose.msra.mxu0 0.0
    %490 = vmatprep.subr.mxu0 0.0
    %491 = vmatpush2.xpose.msra.mxu0 0.0
    %492 = vmatprep.subr.mxu0 0.0
    %493 = vmatpush2.xpose.msra.mxu0 0.0
    %494 = vmatprep.subr.mxu0 0.0
    %495 = vmatpush2.xpose.msra.mxu0 0.0
    %496 = vmatprep.subr.mxu0 0.0
    %497 = vmatpush2.xpose.msra.mxu0 0.0
    %498 = vmatprep.subr.mxu0 0.0
    %499 = vmatpush2.xpose.msra.mxu0 0.0
    %500 = vmatprep.subr.mxu0 0.0
    %501 = vmatpush2.xpose.msra.mxu0 0.0
    %502 = vmatprep.subr.mxu0 0.0
    %503 = vmatpush2.xpose.msra.mxu0 0.0
    %504 = vmatprep.mubr.f32.mxu0 0.0
    %505 = vmatmul.mubr.f32.gmra.mxu0 %v436
    %v506 = vpop.f32.mrf.mxu0
    %v507 = vadd.f32 0.0, %v506
    %v508 = vpop.f32.mrf.mxu0
    %509 = vdwg.mxu0
    %v510 = vsel %vm358, %v430, -inf
    %511 = vmax.xlane.f32.xlu0 %v510
    %v512 = vpop.xlane.xlu0 %511
    %v513 = vsel %vm358, %v507, -inf
    %514 = vmax.xlane.f32.xlu0 %v513
    %v515 = vpop.xlane.xlu0 %514
    %v516 = vsub.f32 %v430, %v512
    %v517 = vsub.f32 %v507, %v515
    %v518 = vmul.f32 %v516, 1.442695
    %v519 = vpow.pop %v518
    %v520 = vmul.f32 %v517, 1.442695
    %v521 = vpow.pop %v520
    %v522 = vsel %vm358, %v519, 0.0
    %523 = vadd.xlane.f32.xlu0 %v522
    %v524 = vpop.xlane.xlu0 %523
    %v525 = vsel %vm358, %v521, 0.0
    %526 = vadd.xlane.f32.xlu0 %v525
    %v527 = vpop.xlane.xlu0 %526
    %v528 = vrcp.pop %v524
    %v529 = vrcp.pop %v527
    %v530 = vmul.f32 %v519, %v528
    %v531 = vmul.f32 %v521, %v529
    %v533 = vsel %vm358, %v530, 0
    %535 = vmatprep.subr.mxu0 0.0
    %536 = vmatpush1.msra.mxu0 0.0
    %537 = vmatprep.subr.mxu0 0.0
    %538 = vmatpush1.msra.mxu0 0.0
    %539 = vmatprep.subr.mxu0 0.0
    %540 = vmatpush1.msra.mxu0 0.0
    %541 = vmatprep.subr.mxu0 0.0
    %542 = vmatpush1.msra.mxu0 0.0
    %543 = vmatprep.subr.mxu0 0.0
    %544 = vmatpush1.msra.mxu0 0.0
    %545 = vmatprep.subr.mxu0 0.0
    %546 = vmatpush1.msra.mxu0 0.0
    %547 = vmatprep.subr.mxu0 0.0
    %548 = vmatpush1.msra.mxu0 0.0
    %549 = vmatprep.subr.mxu0 0.0
    %550 = vmatpush1.msra.mxu0 0.0
    %551 = vmatprep.subr.mxu0 0.0
    %552 = vmatpush1.msra.mxu0 0.0
    %553 = vmatprep.subr.mxu0 0.0
    %554 = vmatpush1.msra.mxu0 0.0
    %555 = vmatprep.subr.mxu0 0.0
    %556 = vmatpush1.msra.mxu0 0.0
    %557 = vmatprep.subr.mxu0 0.0
    %558 = vmatpush1.msra.mxu0 0.0
    %559 = vmatprep.subr.mxu0 0.0
    %560 = vmatpush1.msra.mxu0 0.0
    %561 = vmatprep.subr.mxu0 0.0
    %562 = vmatpush1.msra.mxu0 0.0
    %563 = vmatprep.subr.mxu0 0.0
    %564 = vmatpush1.msra.mxu0 0.0
    %565 = vmatprep.subr.mxu0 0.0
    %566 = vmatpush1.msra.mxu0 %v342
    %567 = vmatprep.subr.mxu0 0.0
    %568 = vmatpush2.msra.mxu0 0.0
    %569 = vmatprep.subr.mxu0 0.0
    %570 = vmatpush2.msra.mxu0 0.0
    %571 = vmatprep.subr.mxu0 0.0
    %572 = vmatpush2.msra.mxu0 0.0
    %573 = vmatprep.subr.mxu0 0.0
    %574 = vmatpush2.msra.mxu0 0.0
    %575 = vmatprep.subr.mxu0 0.0
    %576 = vmatpush2.msra.mxu0 0.0
    %577 = vmatprep.subr.mxu0 0.0
    %578 = vmatpush2.msra.mxu0 0.0
    %579 = vmatprep.subr.mxu0 0.0
    %580 = vmatpush2.msra.mxu0 0.0
    %581 = vmatprep.subr.mxu0 0.0
    %582 = vmatpush2.msra.mxu0 0.0
    %583 = vmatprep.subr.mxu0 0.0
    %584 = vmatpush2.msra.mxu0 0.0
    %585 = vmatprep.subr.mxu0 0.0
    %586 = vmatpush2.msra.mxu0 0.0
    %587 = vmatprep.subr.mxu0 0.0
    %588 = vmatpush2.msra.mxu0 0.0
    %589 = vmatprep.subr.mxu0 0.0
    %590 = vmatpush2.msra.mxu0 0.0
    %591 = vmatprep.subr.mxu0 0.0
    %592 = vmatpush2.msra.mxu0 0.0
    %593 = vmatprep.subr.mxu0 0.0
    %594 = vmatpush2.msra.mxu0 0.0
    %595 = vmatprep.subr.mxu0 0.0
    %596 = vmatpush2.msra.mxu0 0.0
    %597 = vmatprep.subr.mxu0 0.0
    %598 = vmatpush2.msra.mxu0 0.0
    %599 = vmatprep.mubr.f32.mxu0 0.0
    %600 = vmatmul.mubr.f32.gmra.mxu0 %v533
    %v601 = vpop.f32.mrf.mxu0
    %v602 = vadd.f32 0.0, %v601
    %v603 = vpop.f32.mrf.mxu0
    %604 = vdwg.mxu0
    %v606 = vsel %vm358, %v531, 0
    %608 = vmatprep.subr.mxu0 0.0
    %609 = vmatpush1.msra.mxu0 0.0
    %610 = vmatprep.subr.mxu0 0.0
    %611 = vmatpush1.msra.mxu0 0.0
    %612 = vmatprep.subr.mxu0 0.0
    %613 = vmatpush1.msra.mxu0 0.0
    %614 = vmatprep.subr.mxu0 0.0
    %615 = vmatpush1.msra.mxu0 0.0
    %616 = vmatprep.subr.mxu0 0.0
    %617 = vmatpush1.msra.mxu0 0.0
    %618 = vmatprep.subr.mxu0 0.0
    %619 = vmatpush1.msra.mxu0 0.0
    %620 = vmatprep.subr.mxu0 0.0
    %621 = vmatpush1.msra.mxu0 0.0
    %622 = vmatprep.subr.mxu0 0.0
    %623 = vmatpush1.msra.mxu0 0.0
    %624 = vmatprep.subr.mxu0 0.0
    %625 = vmatpush1.msra.mxu0 0.0
    %626 = vmatprep.subr.mxu0 0.0
    %627 = vmatpush1.msra.mxu0 0.0
    %628 = vmatprep.subr.mxu0 0.0
    %629 = vmatpush1.msra.mxu0 0.0
    %630 = vmatprep.subr.mxu0 0.0
    %631 = vmatpush1.msra.mxu0 0.0
    %632 = vmatprep.subr.mxu0 0.0
    %633 = vmatpush1.msra.mxu0 0.0
    %634 = vmatprep.subr.mxu0 0.0
    %635 = vmatpush1.msra.mxu0 0.0
    %636 = vmatprep.subr.mxu0 0.0
    %637 = vmatpush1.msra.mxu0 0.0
    %638 = vmatprep.subr.mxu0 0.0
    %639 = vmatpush1.msra.mxu0 %v347
    %640 = vmatprep.subr.mxu0 0.0
    %641 = vmatpush2.msra.mxu0 0.0
    %642 = vmatprep.subr.mxu0 0.0
    %643 = vmatpush2.msra.mxu0 0.0
    %644 = vmatprep.subr.mxu0 0.0
    %645 = vmatpush2.msra.mxu0 0.0
    %646 = vmatprep.subr.mxu0 0.0
    %647 = vmatpush2.msra.mxu0 0.0
    %648 = vmatprep.subr.mxu0 0.0
    %649 = vmatpush2.msra.mxu0 0.0
    %650 = vmatprep.subr.mxu0 0.0
    %651 = vmatpush2.msra.mxu0 0.0
    %652 = vmatprep.subr.mxu0 0.0
    %653 = vmatpush2.msra.mxu0 0.0
    %654 = vmatprep.subr.mxu0 0.0
    %655 = vmatpush2.msra.mxu0 0.0
    %656 = vmatprep.subr.mxu0 0.0
    %657 = vmatpush2.msra.mxu0 0.0
    %658 = vmatprep.subr.mxu0 0.0
    %659 = vmatpush2.msra.mxu0 0.0
    %660 = vmatprep.subr.mxu0 0.0
    %661 = vmatpush2.msra.mxu0 0.0
    %662 = vmatprep.subr.mxu0 0.0
    %663 = vmatpush2.msra.mxu0 0.0
    %664 = vmatprep.subr.mxu0 0.0
    %665 = vmatpush2.msra.mxu0 0.0
    %666 = vmatprep.subr.mxu0 0.0
    %667 = vmatpush2.msra.mxu0 0.0
    %668 = vmatprep.subr.mxu0 0.0
    %669 = vmatpush2.msra.mxu0 0.0
    %670 = vmatprep.subr.mxu0 0.0
    %671 = vmatpush2.msra.mxu0 0.0
    %672 = vmatprep.mubr.f32.mxu0 0.0
    %673 = vmatmul.mubr.f32.gmra.mxu0 %v606
    %v674 = vpop.f32.mrf.mxu0
    %v675 = vadd.f32 0.0, %v674
    %v676 = vpop.f32.mrf.mxu0
    %677 = vdwg.mxu0
    %678 = vrot.lane.b32.xlu0 %v242, 120
    %v679 = vpop.permute.xlu0 %678
    %680 = vrot.lane.b32.xlu0 %v242, 88
    %v681 = vpop.permute.xlu0 %680
    %v682 = vsel %vm358, %v679, 0
    %v684 = vsel %vm358, %v681, 0
    %686 = vmatprep.subr.mxu0 0.0
    %687 = vmatpush1.xpose.msra.mxu0 0.0
    %688 = vmatprep.subr.mxu0 0.0
    %689 = vmatpush1.xpose.msra.mxu0 0.0
    %690 = vmatprep.subr.mxu0 0.0
    %691 = vmatpush1.xpose.msra.mxu0 0.0
    %692 = vmatprep.subr.mxu0 0.0
    %693 = vmatpush1.xpose.msra.mxu0 0.0
    %694 = vmatprep.subr.mxu0 0.0
    %695 = vmatpush1.xpose.msra.mxu0 0.0
    %696 = vmatprep.subr.mxu0 0.0
    %697 = vmatpush1.xpose.msra.mxu0 0.0
    %698 = vmatprep.subr.mxu0 0.0
    %699 = vmatpush1.xpose.msra.mxu0 0.0
    %700 = vmatprep.subr.mxu0 0.0
    %701 = vmatpush1.xpose.msra.mxu0 0.0
    %702 = vmatprep.subr.mxu0 0.0
    %703 = vmatpush1.xpose.msra.mxu0 0.0
    %704 = vmatprep.subr.mxu0 0.0
    %705 = vmatpush1.xpose.msra.mxu0 0.0
    %706 = vmatprep.subr.mxu0 0.0
    %707 = vmatpush1.xpose.msra.mxu0 0.0
    %708 = vmatprep.subr.mxu0 0.0
    %709 = vmatpush1.xpose.msra.mxu0 0.0
    %710 = vmatprep.subr.mxu0 0.0
    %711 = vmatpush1.xpose.msra.mxu0 0.0
    %712 = vmatprep.subr.mxu0 0.0
    %713 = vmatpush1.xpose.msra.mxu0 0.0
    %714 = vmatprep.subr.mxu0 0.0
    %715 = vmatpush1.xpose.msra.mxu0 0.0
    %716 = vmatprep.subr.mxu0 0.0
    %717 = vmatpush1.xpose.msra.mxu0 %v684
    %718 = vmatprep.subr.mxu0 0.0
    %719 = vmatpush2.xpose.msra.mxu0 0.0
    %720 = vmatprep.subr.mxu0 0.0
    %721 = vmatpush2.xpose.msra.mxu0 0.0
    %722 = vmatprep.subr.mxu0 0.0
    %723 = vmatpush2.xpose.msra.mxu0 0.0
    %724 = vmatprep.subr.mxu0 0.0
    %725 = vmatpush2.xpose.msra.mxu0 0.0
    %726 = vmatprep.subr.mxu0 0.0
    %727 = vmatpush2.xpose.msra.mxu0 0.0
    %728 = vmatprep.subr.mxu0 0.0
    %729 = vmatpush2.xpose.msra.mxu0 0.0
    %730 = vmatprep.subr.mxu0 0.0
    %731 = vmatpush2.xpose.msra.mxu0 0.0
    %732 = vmatprep.subr.mxu0 0.0
    %733 = vmatpush2.xpose.msra.mxu0 0.0
    %734 = vmatprep.subr.mxu0 0.0
    %735 = vmatpush2.xpose.msra.mxu0 0.0
    %736 = vmatprep.subr.mxu0 0.0
    %737 = vmatpush2.xpose.msra.mxu0 0.0
    %738 = vmatprep.subr.mxu0 0.0
    %739 = vmatpush2.xpose.msra.mxu0 0.0
    %740 = vmatprep.subr.mxu0 0.0
    %741 = vmatpush2.xpose.msra.mxu0 0.0
    %742 = vmatprep.subr.mxu0 0.0
    %743 = vmatpush2.xpose.msra.mxu0 0.0
    %744 = vmatprep.subr.mxu0 0.0
    %745 = vmatpush2.xpose.msra.mxu0 0.0
    %746 = vmatprep.subr.mxu0 0.0
    %747 = vmatpush2.xpose.msra.mxu0 0.0
    %748 = vmatprep.subr.mxu0 0.0
    %749 = vmatpush2.xpose.msra.mxu0 0.0
    %750 = vmatprep.mubr.f32.mxu0 0.0
    %751 = vmatmul.mubr.f32.gmra.mxu0 %v682
    %v752 = vpop.f32.mrf.mxu0
    %v753 = vadd.f32 0.0, %v752
    %v754 = vpop.f32.mrf.mxu0
    %755 = vdwg.mxu0
    %756 = vrot.lane.b32.xlu0 %v247, 120
    %v757 = vpop.permute.xlu0 %756
    %758 = vrot.lane.b32.xlu0 %v247, 88
    %v759 = vpop.permute.xlu0 %758
    %v760 = vsel %vm358, %v757, 0
    %v762 = vsel %vm358, %v759, 0
    %764 = vmatprep.subr.mxu0 0.0
    %765 = vmatpush1.xpose.msra.mxu0 0.0
    %766 = vmatprep.subr.mxu0 0.0
    %767 = vmatpush1.xpose.msra.mxu0 0.0
    %768 = vmatprep.subr.mxu0 0.0
    %769 = vmatpush1.xpose.msra.mxu0 0.0
    %770 = vmatprep.subr.mxu0 0.0
    %771 = vmatpush1.xpose.msra.mxu0 0.0
    %772 = vmatprep.subr.mxu0 0.0
    %773 = vmatpush1.xpose.msra.mxu0 0.0
    %774 = vmatprep.subr.mxu0 0.0
    %775 = vmatpush1.xpose.msra.mxu0 0.0
    %776 = vmatprep.subr.mxu0 0.0
    %777 = vmatpush1.xpose.msra.mxu0 0.0
    %778 = vmatprep.subr.mxu0 0.0
    %779 = vmatpush1.xpose.msra.mxu0 0.0
    %780 = vmatprep.subr.mxu0 0.0
    %781 = vmatpush1.xpose.msra.mxu0 0.0
    %782 = vmatprep.subr.mxu0 0.0
    %783 = vmatpush1.xpose.msra.mxu0 0.0
    %784 = vmatprep.subr.mxu0 0.0
    %785 = vmatpush1.xpose.msra.mxu0 0.0
    %786 = vmatprep.subr.mxu0 0.0
    %787 = vmatpush1.xpose.msra.mxu0 0.0
    %788 = vmatprep.subr.mxu0 0.0
    %789 = vmatpush1.xpose.msra.mxu0 0.0
    %790 = vmatprep.subr.mxu0 0.0
    %791 = vmatpush1.xpose.msra.mxu0 0.0
    %792 = vmatprep.subr.mxu0 0.0
    %793 = vmatpush1.xpose.msra.mxu0 0.0
    %794 = vmatprep.subr.mxu0 0.0
    %795 = vmatpush1.xpose.msra.mxu0 %v762
    %796 = vmatprep.subr.mxu0 0.0
    %797 = vmatpush2.xpose.msra.mxu0 0.0
    %798 = vmatprep.subr.mxu0 0.0
    %799 = vmatpush2.xpose.msra.mxu0 0.0
    %800 = vmatprep.subr.mxu0 0.0
    %801 = vmatpush2.xpose.msra.mxu0 0.0
    %802 = vmatprep.subr.mxu0 0.0
    %803 = vmatpush2.xpose.msra.mxu0 0.0
    %804 = vmatprep.subr.mxu0 0.0
    %805 = vmatpush2.xpose.msra.mxu0 0.0
    %806 = vmatprep.subr.mxu0 0.0
    %807 = vmatpush2.xpose.msra.mxu0 0.0
    %808 = vmatprep.subr.mxu0 0.0
    %809 = vmatpush2.xpose.msra.mxu0 0.0
    %810 = vmatprep.subr.mxu0 0.0
    %811 = vmatpush2.xpose.msra.mxu0 0.0
    %812 = vmatprep.subr.mxu0 0.0
    %813 = vmatpush2.xpose.msra.mxu0 0.0
    %814 = vmatprep.subr.mxu0 0.0
    %815 = vmatpush2.xpose.msra.mxu0 0.0
    %816 = vmatprep.subr.mxu0 0.0
    %817 = vmatpush2.xpose.msra.mxu0 0.0
    %818 = vmatprep.subr.mxu0 0.0
    %819 = vmatpush2.xpose.msra.mxu0 0.0
    %820 = vmatprep.subr.mxu0 0.0
    %821 = vmatpush2.xpose.msra.mxu0 0.0
    %822 = vmatprep.subr.mxu0 0.0
    %823 = vmatpush2.xpose.msra.mxu0 0.0
    %824 = vmatprep.subr.mxu0 0.0
    %825 = vmatpush2.xpose.msra.mxu0 0.0
    %826 = vmatprep.subr.mxu0 0.0
    %827 = vmatpush2.xpose.msra.mxu0 0.0
    %828 = vmatprep.mubr.f32.mxu0 0.0
    %829 = vmatmul.mubr.f32.gmra.mxu0 %v760
    %v830 = vpop.f32.mrf.mxu0
    %v831 = vadd.f32 0.0, %v830
    %v832 = vpop.f32.mrf.mxu0
    %833 = vdwg.mxu0
    %v834 = vsel %vm358, %v753, -inf
    %835 = vmax.xlane.f32.xlu0 %v834
    %v836 = vpop.xlane.xlu0 %835
    %v837 = vsel %vm358, %v831, -inf
    %838 = vmax.xlane.f32.xlu0 %v837
    %v839 = vpop.xlane.xlu0 %838
    %v840 = vsub.f32 %v753, %v836
    %v841 = vsub.f32 %v831, %v839
    %v842 = vmul.f32 %v840, 1.442695
    %v843 = vpow.pop %v842
    %v844 = vmul.f32 %v841, 1.442695
    %v845 = vpow.pop %v844
    %v846 = vsel %vm358, %v843, 0.0
    %847 = vadd.xlane.f32.xlu0 %v846
    %v848 = vpop.xlane.xlu0 %847
    %v849 = vsel %vm358, %v845, 0.0
    %850 = vadd.xlane.f32.xlu0 %v849
    %v851 = vpop.xlane.xlu0 %850
    %v852 = vrcp.pop %v848
    %v853 = vrcp.pop %v851
    %v854 = vmul.f32 %v843, %v852
    %v855 = vmul.f32 %v845, %v853
    %857 = vrot.lane.b32.xlu0 %v342, 120
    %v858 = vpop.permute.xlu0 %857
    %v861 = vsel %vm358, %v854, 0
    %863 = vmatprep.subr.mxu0 0.0
    %864 = vmatpush1.msra.mxu0 0.0
    %865 = vmatprep.subr.mxu0 0.0
    %866 = vmatpush1.msra.mxu0 0.0
    %867 = vmatprep.subr.mxu0 0.0
    %868 = vmatpush1.msra.mxu0 0.0
    %869 = vmatprep.subr.mxu0 0.0
    %870 = vmatpush1.msra.mxu0 0.0
    %871 = vmatprep.subr.mxu0 0.0
    %872 = vmatpush1.msra.mxu0 0.0
    %873 = vmatprep.subr.mxu0 0.0
    %874 = vmatpush1.msra.mxu0 0.0
    %875 = vmatprep.subr.mxu0 0.0
    %876 = vmatpush1.msra.mxu0 0.0
    %877 = vmatprep.subr.mxu0 0.0
    %878 = vmatpush1.msra.mxu0 0.0
    %879 = vmatprep.subr.mxu0 0.0
    %880 = vmatpush1.msra.mxu0 0.0
    %881 = vmatprep.subr.mxu0 0.0
    %882 = vmatpush1.msra.mxu0 0.0
    %883 = vmatprep.subr.mxu0 0.0
    %884 = vmatpush1.msra.mxu0 0.0
    %885 = vmatprep.subr.mxu0 0.0
    %886 = vmatpush1.msra.mxu0 0.0
    %887 = vmatprep.subr.mxu0 0.0
    %888 = vmatpush1.msra.mxu0 0.0
    %889 = vmatprep.subr.mxu0 0.0
    %890 = vmatpush1.msra.mxu0 0.0
    %891 = vmatprep.subr.mxu0 0.0
    %892 = vmatpush1.msra.mxu0 0.0
    %893 = vmatprep.subr.mxu0 0.0
    %894 = vmatpush1.msra.mxu0 %v858
    %895 = vmatprep.subr.mxu0 0.0
    %896 = vmatpush2.msra.mxu0 0.0
    %897 = vmatprep.subr.mxu0 0.0
    %898 = vmatpush2.msra.mxu0 0.0
    %899 = vmatprep.subr.mxu0 0.0
    %900 = vmatpush2.msra.mxu0 0.0
    %901 = vmatprep.subr.mxu0 0.0
    %902 = vmatpush2.msra.mxu0 0.0
    %903 = vmatprep.subr.mxu0 0.0
    %904 = vmatpush2.msra.mxu0 0.0
    %905 = vmatprep.subr.mxu0 0.0
    %906 = vmatpush2.msra.mxu0 0.0
    %907 = vmatprep.subr.mxu0 0.0
    %908 = vmatpush2.msra.mxu0 0.0
    %909 = vmatprep.subr.mxu0 0.0
    %910 = vmatpush2.msra.mxu0 0.0
    %911 = vmatprep.subr.mxu0 0.0
    %912 = vmatpush2.msra.mxu0 0.0
    %913 = vmatprep.subr.mxu0 0.0
    %914 = vmatpush2.msra.mxu0 0.0
    %915 = vmatprep.subr.mxu0 0.0
    %916 = vmatpush2.msra.mxu0 0.0
    %917 = vmatprep.subr.mxu0 0.0
    %918 = vmatpush2.msra.mxu0 0.0
    %919 = vmatprep.subr.mxu0 0.0
    %920 = vmatpush2.msra.mxu0 0.0
    %921 = vmatprep.subr.mxu0 0.0
    %922 = vmatpush2.msra.mxu0 0.0
    %923 = vmatprep.subr.mxu0 0.0
    %924 = vmatpush2.msra.mxu0 0.0
    %925 = vmatprep.subr.mxu0 0.0
    %926 = vmatpush2.msra.mxu0 0.0
    %927 = vmatprep.mubr.f32.mxu0 0.0
    %928 = vmatmul.mubr.f32.gmra.mxu0 %v861
    %v929 = vpop.f32.mrf.mxu0
    %v930 = vadd.f32 0.0, %v929
    %v931 = vpop.f32.mrf.mxu0
    %932 = vdwg.mxu0
    %934 = vrot.lane.b32.xlu0 %v347, 120
    %v935 = vpop.permute.xlu0 %934
    %v938 = vsel %vm358, %v855, 0
    %940 = vmatprep.subr.mxu0 0.0
    %941 = vmatpush1.msra.mxu0 0.0
    %942 = vmatprep.subr.mxu0 0.0
    %943 = vmatpush1.msra.mxu0 0.0
    %944 = vmatprep.subr.mxu0 0.0
    %945 = vmatpush1.msra.mxu0 0.0
    %946 = vmatprep.subr.mxu0 0.0
    %947 = vmatpush1.msra.mxu0 0.0
    %948 = vmatprep.subr.mxu0 0.0
    %949 = vmatpush1.msra.mxu0 0.0
    %950 = vmatprep.subr.mxu0 0.0
    %951 = vmatpush1.msra.mxu0 0.0
    %952 = vmatprep.subr.mxu0 0.0
    %953 = vmatpush1.msra.mxu0 0.0
    %954 = vmatprep.subr.mxu0 0.0
    %955 = vmatpush1.msra.mxu0 0.0
    %956 = vmatprep.subr.mxu0 0.0
    %957 = vmatpush1.msra.mxu0 0.0
    %958 = vmatprep.subr.mxu0 0.0
    %959 = vmatpush1.msra.mxu0 0.0
    %960 = vmatprep.subr.mxu0 0.0
    %961 = vmatpush1.msra.mxu0 0.0
    %962 = vmatprep.subr.mxu0 0.0
    %963 = vmatpush1.msra.mxu0 0.0
    %964 = vmatprep.subr.mxu0 0.0
    %965 = vmatpush1.msra.mxu0 0.0
    %966 = vmatprep.subr.mxu0 0.0
    %967 = vmatpush1.msra.mxu0 0.0
    %968 = vmatprep.subr.mxu0 0.0
    %969 = vmatpush1.msra.mxu0 0.0
    %970 = vmatprep.subr.mxu0 0.0
    %971 = vmatpush1.msra.mxu0 %v935
    %972 = vmatprep.subr.mxu0 0.0
    %973 = vmatpush2.msra.mxu0 0.0
    %974 = vmatprep.subr.mxu0 0.0
    %975 = vmatpush2.msra.mxu0 0.0
    %976 = vmatprep.subr.mxu0 0.0
    %977 = vmatpush2.msra.mxu0 0.0
    %978 = vmatprep.subr.mxu0 0.0
    %979 = vmatpush2.msra.mxu0 0.0
    %980 = vmatprep.subr.mxu0 0.0
    %981 = vmatpush2.msra.mxu0 0.0
    %982 = vmatprep.subr.mxu0 0.0
    %983 = vmatpush2.msra.mxu0 0.0
    %984 = vmatprep.subr.mxu0 0.0
    %985 = vmatpush2.msra.mxu0 0.0
    %986 = vmatprep.subr.mxu0 0.0
    %987 = vmatpush2.msra.mxu0 0.0
    %988 = vmatprep.subr.mxu0 0.0
    %989 = vmatpush2.msra.mxu0 0.0
    %990 = vmatprep.subr.mxu0 0.0
    %991 = vmatpush2.msra.mxu0 0.0
    %992 = vmatprep.subr.mxu0 0.0
    %993 = vmatpush2.msra.mxu0 0.0
    %994 = vmatprep.subr.mxu0 0.0
    %995 = vmatpush2.msra.mxu0 0.0
    %996 = vmatprep.subr.mxu0 0.0
    %997 = vmatpush2.msra.mxu0 0.0
    %998 = vmatprep.subr.mxu0 0.0
    %999 = vmatpush2.msra.mxu0 0.0
    %1000 = vmatprep.subr.mxu0 0.0
    %1001 = vmatpush2.msra.mxu0 0.0
    %1002 = vmatprep.subr.mxu0 0.0
    %1003 = vmatpush2.msra.mxu0 0.0
    %1004 = vmatprep.mubr.f32.mxu0 0.0
    %1005 = vmatmul.mubr.f32.gmra.mxu0 %v938
    %v1006 = vpop.f32.mrf.mxu0
    %v1007 = vadd.f32 0.0, %v1006
    %v1008 = vpop.f32.mrf.mxu0
    %1009 = vdwg.mxu0
    %1010 = vrot.lane.b32.xlu0 %v242, 112
    %v1011 = vpop.permute.xlu0 %1010
    %1012 = vrot.lane.b32.xlu0 %v242, 80
    %v1013 = vpop.permute.xlu0 %1012
    %v1014 = vsel %vm358, %v1011, 0
    %v1016 = vsel %vm358, %v1013, 0
    %1018 = vmatprep.subr.mxu0 0.0
    %1019 = vmatpush1.xpose.msra.mxu0 0.0
    %1020 = vmatprep.subr.mxu0 0.0
    %1021 = vmatpush1.xpose.msra.mxu0 0.0
    %1022 = vmatprep.subr.mxu0 0.0
    %1023 = vmatpush1.xpose.msra.mxu0 0.0
    %1024 = vmatprep.subr.mxu0 0.0
    %1025 = vmatpush1.xpose.msra.mxu0 0.0
    %1026 = vmatprep.subr.mxu0 0.0
    %1027 = vmatpush1.xpose.msra.mxu0 0.0
    %1028 = vmatprep.subr.mxu0 0.0
    %1029 = vmatpush1.xpose.msra.mxu0 0.0
    %1030 = vmatprep.subr.mxu0 0.0
    %1031 = vmatpush1.xpose.msra.mxu0 0.0
    %1032 = vmatprep.subr.mxu0 0.0
    %1033 = vmatpush1.xpose.msra.mxu0 0.0
    %1034 = vmatprep.subr.mxu0 0.0
    %1035 = vmatpush1.xpose.msra.mxu0 0.0
    %1036 = vmatprep.subr.mxu0 0.0
    %1037 = vmatpush1.xpose.msra.mxu0 0.0
    %1038 = vmatprep.subr.mxu0 0.0
    %1039 = vmatpush1.xpose.msra.mxu0 0.0
    %1040 = vmatprep.subr.mxu0 0.0
    %1041 = vmatpush1.xpose.msra.mxu0 0.0
    %1042 = vmatprep.subr.mxu0 0.0
    %1043 = vmatpush1.xpose.msra.mxu0 0.0
    %1044 = vmatprep.subr.mxu0 0.0
    %1045 = vmatpush1.xpose.msra.mxu0 0.0
    %1046 = vmatprep.subr.mxu0 0.0
    %1047 = vmatpush1.xpose.msra.mxu0 0.0
    %1048 = vmatprep.subr.mxu0 0.0
    %1049 = vmatpush1.xpose.msra.mxu0 %v1016
    %1050 = vmatprep.subr.mxu0 0.0
    %1051 = vmatpush2.xpose.msra.mxu0 0.0
    %1052 = vmatprep.subr.mxu0 0.0
    %1053 = vmatpush2.xpose.msra.mxu0 0.0
    %1054 = vmatprep.subr.mxu0 0.0
    %1055 = vmatpush2.xpose.msra.mxu0 0.0
    %1056 = vmatprep.subr.mxu0 0.0
    %1057 = vmatpush2.xpose.msra.mxu0 0.0
    %1058 = vmatprep.subr.mxu0 0.0
    %1059 = vmatpush2.xpose.msra.mxu0 0.0
    %1060 = vmatprep.subr.mxu0 0.0
    %1061 = vmatpush2.xpose.msra.mxu0 0.0
    %1062 = vmatprep.subr.mxu0 0.0
    %1063 = vmatpush2.xpose.msra.mxu0 0.0
    %1064 = vmatprep.subr.mxu0 0.0
    %1065 = vmatpush2.xpose.msra.mxu0 0.0
    %1066 = vmatprep.subr.mxu0 0.0
    %1067 = vmatpush2.xpose.msra.mxu0 0.0
    %1068 = vmatprep.subr.mxu0 0.0
    %1069 = vmatpush2.xpose.msra.mxu0 0.0
    %1070 = vmatprep.subr.mxu0 0.0
    %1071 = vmatpush2.xpose.msra.mxu0 0.0
    %1072 = vmatprep.subr.mxu0 0.0
    %1073 = vmatpush2.xpose.msra.mxu0 0.0
    %1074 = vmatprep.subr.mxu0 0.0
    %1075 = vmatpush2.xpose.msra.mxu0 0.0
    %1076 = vmatprep.subr.mxu0 0.0
    %1077 = vmatpush2.xpose.msra.mxu0 0.0
    %1078 = vmatprep.subr.mxu0 0.0
    %1079 = vmatpush2.xpose.msra.mxu0 0.0
    %1080 = vmatprep.subr.mxu0 0.0
    %1081 = vmatpush2.xpose.msra.mxu0 0.0
    %1082 = vmatprep.mubr.f32.mxu0 0.0
    %1083 = vmatmul.mubr.f32.gmra.mxu0 %v1014
    %v1084 = vpop.f32.mrf.mxu0
    %v1085 = vadd.f32 0.0, %v1084
    %v1086 = vpop.f32.mrf.mxu0
    %1087 = vdwg.mxu0
    %1088 = vrot.lane.b32.xlu0 %v247, 112
    %v1089 = vpop.permute.xlu0 %1088
    %1090 = vrot.lane.b32.xlu0 %v247, 80
    %v1091 = vpop.permute.xlu0 %1090
    %v1092 = vsel %vm358, %v1089, 0
    %v1094 = vsel %vm358, %v1091, 0
    %1096 = vmatprep.subr.mxu0 0.0
    %1097 = vmatpush1.xpose.msra.mxu0 0.0
    %1098 = vmatprep.subr.mxu0 0.0
    %1099 = vmatpush1.xpose.msra.mxu0 0.0
    %1100 = vmatprep.subr.mxu0 0.0
    %1101 = vmatpush1.xpose.msra.mxu0 0.0
    %1102 = vmatprep.subr.mxu0 0.0
    %1103 = vmatpush1.xpose.msra.mxu0 0.0
    %1104 = vmatprep.subr.mxu0 0.0
    %1105 = vmatpush1.xpose.msra.mxu0 0.0
    %1106 = vmatprep.subr.mxu0 0.0
    %1107 = vmatpush1.xpose.msra.mxu0 0.0
    %1108 = vmatprep.subr.mxu0 0.0
    %1109 = vmatpush1.xpose.msra.mxu0 0.0
    %1110 = vmatprep.subr.mxu0 0.0
    %1111 = vmatpush1.xpose.msra.mxu0 0.0
    %1112 = vmatprep.subr.mxu0 0.0
    %1113 = vmatpush1.xpose.msra.mxu0 0.0
    %1114 = vmatprep.subr.mxu0 0.0
    %1115 = vmatpush1.xpose.msra.mxu0 0.0
    %1116 = vmatprep.subr.mxu0 0.0
    %1117 = vmatpush1.xpose.msra.mxu0 0.0
    %1118 = vmatprep.subr.mxu0 0.0
    %1119 = vmatpush1.xpose.msra.mxu0 0.0
    %1120 = vmatprep.subr.mxu0 0.0
    %1121 = vmatpush1.xpose.msra.mxu0 0.0
    %1122 = vmatprep.subr.mxu0 0.0
    %1123 = vmatpush1.xpose.msra.mxu0 0.0
    %1124 = vmatprep.subr.mxu0 0.0
    %1125 = vmatpush1.xpose.msra.mxu0 0.0
    %1126 = vmatprep.subr.mxu0 0.0
    %1127 = vmatpush1.xpose.msra.mxu0 %v1094
    %1128 = vmatprep.subr.mxu0 0.0
    %1129 = vmatpush2.xpose.msra.mxu0 0.0
    %1130 = vmatprep.subr.mxu0 0.0
    %1131 = vmatpush2.xpose.msra.mxu0 0.0
    %1132 = vmatprep.subr.mxu0 0.0
    %1133 = vmatpush2.xpose.msra.mxu0 0.0
    %1134 = vmatprep.subr.mxu0 0.0
    %1135 = vmatpush2.xpose.msra.mxu0 0.0
    %1136 = vmatprep.subr.mxu0 0.0
    %1137 = vmatpush2.xpose.msra.mxu0 0.0
    %1138 = vmatprep.subr.mxu0 0.0
    %1139 = vmatpush2.xpose.msra.mxu0 0.0
    %1140 = vmatprep.subr.mxu0 0.0
    %1141 = vmatpush2.xpose.msra.mxu0 0.0
    %1142 = vmatprep.subr.mxu0 0.0
    %1143 = vmatpush2.xpose.msra.mxu0 0.0
    %1144 = vmatprep.subr.mxu0 0.0
    %1145 = vmatpush2.xpose.msra.mxu0 0.0
    %1146 = vmatprep.subr.mxu0 0.0
    %1147 = vmatpush2.xpose.msra.mxu0 0.0
    %1148 = vmatprep.subr.mxu0 0.0
    %1149 = vmatpush2.xpose.msra.mxu0 0.0
    %1150 = vmatprep.subr.mxu0 0.0
    %1151 = vmatpush2.xpose.msra.mxu0 0.0
    %1152 = vmatprep.subr.mxu0 0.0
    %1153 = vmatpush2.xpose.msra.mxu0 0.0
    %1154 = vmatprep.subr.mxu0 0.0
    %1155 = vmatpush2.xpose.msra.mxu0 0.0
    %1156 = vmatprep.subr.mxu0 0.0
    %1157 = vmatpush2.xpose.msra.mxu0 0.0
    %1158 = vmatprep.subr.mxu0 0.0
    %1159 = vmatpush2.xpose.msra.mxu0 0.0
    %1160 = vmatprep.mubr.f32.mxu0 0.0
    %1161 = vmatmul.mubr.f32.gmra.mxu0 %v1092
    %v1162 = vpop.f32.mrf.mxu0
    %v1163 = vadd.f32 0.0, %v1162
    %v1164 = vpop.f32.mrf.mxu0
    %1165 = vdwg.mxu0
    %v1166 = vsel %vm358, %v1085, -inf
    %1167 = vmax.xlane.f32.xlu0 %v1166
    %v1168 = vpop.xlane.xlu0 %1167
    %v1169 = vsel %vm358, %v1163, -inf
    %1170 = vmax.xlane.f32.xlu0 %v1169
    %v1171 = vpop.xlane.xlu0 %1170
    %v1172 = vsub.f32 %v1085, %v1168
    %v1173 = vsub.f32 %v1163, %v1171
    %v1174 = vmul.f32 %v1172, 1.442695
    %v1175 = vpow.pop %v1174
    %v1176 = vmul.f32 %v1173, 1.442695
    %v1177 = vpow.pop %v1176
    %v1178 = vsel %vm358, %v1175, 0.0
    %1179 = vadd.xlane.f32.xlu0 %v1178
    %v1180 = vpop.xlane.xlu0 %1179
    %v1181 = vsel %vm358, %v1177, 0.0
    %1182 = vadd.xlane.f32.xlu0 %v1181
    %v1183 = vpop.xlane.xlu0 %1182
    %v1184 = vrcp.pop %v1180
    %v1185 = vrcp.pop %v1183
    %v1186 = vmul.f32 %v1175, %v1184
    %v1187 = vmul.f32 %v1177, %v1185
    %1188 = vrot.lane.b32.xlu0 %v342, 112
    %v1189 = vpop.permute.xlu0 %1188
    %v1192 = vsel %vm358, %v1186, 0
    %1194 = vmatprep.subr.mxu0 0.0
    %1195 = vmatpush1.msra.mxu0 0.0
    %1196 = vmatprep.subr.mxu0 0.0
    %1197 = vmatpush1.msra.mxu0 0.0
    %1198 = vmatprep.subr.mxu0 0.0
    %1199 = vmatpush1.msra.mxu0 0.0
    %1200 = vmatprep.subr.mxu0 0.0
    %1201 = vmatpush1.msra.mxu0 0.0
    %1202 = vmatprep.subr.mxu0 0.0
    %1203 = vmatpush1.msra.mxu0 0.0
    %1204 = vmatprep.subr.mxu0 0.0
    %1205 = vmatpush1.msra.mxu0 0.0
    %1206 = vmatprep.subr.mxu0 0.0
    %1207 = vmatpush1.msra.mxu0 0.0
    %1208 = vmatprep.subr.mxu0 0.0
    %1209 = vmatpush1.msra.mxu0 0.0
    %1210 = vmatprep.subr.mxu0 0.0
    %1211 = vmatpush1.msra.mxu0 0.0
    %1212 = vmatprep.subr.mxu0 0.0
    %1213 = vmatpush1.msra.mxu0 0.0
    %1214 = vmatprep.subr.mxu0 0.0
    %1215 = vmatpush1.msra.mxu0 0.0
    %1216 = vmatprep.subr.mxu0 0.0
    %1217 = vmatpush1.msra.mxu0 0.0
    %1218 = vmatprep.subr.mxu0 0.0
    %1219 = vmatpush1.msra.mxu0 0.0
    %1220 = vmatprep.subr.mxu0 0.0
    %1221 = vmatpush1.msra.mxu0 0.0
    %1222 = vmatprep.subr.mxu0 0.0
    %1223 = vmatpush1.msra.mxu0 0.0
    %1224 = vmatprep.subr.mxu0 0.0
    %1225 = vmatpush1.msra.mxu0 %v1189
    %1226 = vmatprep.subr.mxu0 0.0
    %1227 = vmatpush2.msra.mxu0 0.0
    %1228 = vmatprep.subr.mxu0 0.0
    %1229 = vmatpush2.msra.mxu0 0.0
    %1230 = vmatprep.subr.mxu0 0.0
    %1231 = vmatpush2.msra.mxu0 0.0
    %1232 = vmatprep.subr.mxu0 0.0
    %1233 = vmatpush2.msra.mxu0 0.0
    %1234 = vmatprep.subr.mxu0 0.0
    %1235 = vmatpush2.msra.mxu0 0.0
    %1236 = vmatprep.subr.mxu0 0.0
    %1237 = vmatpush2.msra.mxu0 0.0
    %1238 = vmatprep.subr.mxu0 0.0
    %1239 = vmatpush2.msra.mxu0 0.0
    %1240 = vmatprep.subr.mxu0 0.0
    %1241 = vmatpush2.msra.mxu0 0.0
    %1242 = vmatprep.subr.mxu0 0.0
    %1243 = vmatpush2.msra.mxu0 0.0
    %1244 = vmatprep.subr.mxu0 0.0
    %1245 = vmatpush2.msra.mxu0 0.0
    %1246 = vmatprep.subr.mxu0 0.0
    %1247 = vmatpush2.msra.mxu0 0.0
    %1248 = vmatprep.subr.mxu0 0.0
    %1249 = vmatpush2.msra.mxu0 0.0
    %1250 = vmatprep.subr.mxu0 0.0
    %1251 = vmatpush2.msra.mxu0 0.0
    %1252 = vmatprep.subr.mxu0 0.0
    %1253 = vmatpush2.msra.mxu0 0.0
    %1254 = vmatprep.subr.mxu0 0.0
    %1255 = vmatpush2.msra.mxu0 0.0
    %1256 = vmatprep.subr.mxu0 0.0
    %1257 = vmatpush2.msra.mxu0 0.0
    %1258 = vmatprep.mubr.f32.mxu0 0.0
    %1259 = vmatmul.mubr.f32.gmra.mxu0 %v1192
    %v1260 = vpop.f32.mrf.mxu0
    %v1261 = vadd.f32 0.0, %v1260
    %v1262 = vpop.f32.mrf.mxu0
    %1263 = vdwg.mxu0
    %1264 = vrot.lane.b32.xlu0 %v347, 112
    %v1265 = vpop.permute.xlu0 %1264
    %v1268 = vsel %vm358, %v1187, 0
    %1270 = vmatprep.subr.mxu0 0.0
    %1271 = vmatpush1.msra.mxu0 0.0
    %1272 = vmatprep.subr.mxu0 0.0
    %1273 = vmatpush1.msra.mxu0 0.0
    %1274 = vmatprep.subr.mxu0 0.0
    %1275 = vmatpush1.msra.mxu0 0.0
    %1276 = vmatprep.subr.mxu0 0.0
    %1277 = vmatpush1.msra.mxu0 0.0
    %1278 = vmatprep.subr.mxu0 0.0
    %1279 = vmatpush1.msra.mxu0 0.0
    %1280 = vmatprep.subr.mxu0 0.0
    %1281 = vmatpush1.msra.mxu0 0.0
    %1282 = vmatprep.subr.mxu0 0.0
    %1283 = vmatpush1.msra.mxu0 0.0
    %1284 = vmatprep.subr.mxu0 0.0
    %1285 = vmatpush1.msra.mxu0 0.0
    %1286 = vmatprep.subr.mxu0 0.0
    %1287 = vmatpush1.msra.mxu0 0.0
    %1288 = vmatprep.subr.mxu0 0.0
    %1289 = vmatpush1.msra.mxu0 0.0
    %1290 = vmatprep.subr.mxu0 0.0
    %1291 = vmatpush1.msra.mxu0 0.0
    %1292 = vmatprep.subr.mxu0 0.0
    %1293 = vmatpush1.msra.mxu0 0.0
    %1294 = vmatprep.subr.mxu0 0.0
    %1295 = vmatpush1.msra.mxu0 0.0
    %1296 = vmatprep.subr.mxu0 0.0
    %1297 = vmatpush1.msra.mxu0 0.0
    %1298 = vmatprep.subr.mxu0 0.0
    %1299 = vmatpush1.msra.mxu0 0.0
    %1300 = vmatprep.subr.mxu0 0.0
    %1301 = vmatpush1.msra.mxu0 %v1265
    %1302 = vmatprep.subr.mxu0 0.0
    %1303 = vmatpush2.msra.mxu0 0.0
    %1304 = vmatprep.subr.mxu0 0.0
    %1305 = vmatpush2.msra.mxu0 0.0
    %1306 = vmatprep.subr.mxu0 0.0
    %1307 = vmatpush2.msra.mxu0 0.0
    %1308 = vmatprep.subr.mxu0 0.0
    %1309 = vmatpush2.msra.mxu0 0.0
    %1310 = vmatprep.subr.mxu0 0.0
    %1311 = vmatpush2.msra.mxu0 0.0
    %1312 = vmatprep.subr.mxu0 0.0
    %1313 = vmatpush2.msra.mxu0 0.0
    %1314 = vmatprep.subr.mxu0 0.0
    %1315 = vmatpush2.msra.mxu0 0.0
    %1316 = vmatprep.subr.mxu0 0.0
    %1317 = vmatpush2.msra.mxu0 0.0
    %1318 = vmatprep.subr.mxu0 0.0
    %1319 = vmatpush2.msra.mxu0 0.0
    %1320 = vmatprep.subr.mxu0 0.0
    %1321 = vmatpush2.msra.mxu0 0.0
    %1322 = vmatprep.subr.mxu0 0.0
    %1323 = vmatpush2.msra.mxu0 0.0
    %1324 = vmatprep.subr.mxu0 0.0
    %1325 = vmatpush2.msra.mxu0 0.0
    %1326 = vmatprep.subr.mxu0 0.0
    %1327 = vmatpush2.msra.mxu0 0.0
    %1328 = vmatprep.subr.mxu0 0.0
    %1329 = vmatpush2.msra.mxu0 0.0
    %1330 = vmatprep.subr.mxu0 0.0
    %1331 = vmatpush2.msra.mxu0 0.0
    %1332 = vmatprep.subr.mxu0 0.0
    %1333 = vmatpush2.msra.mxu0 0.0
    %1334 = vmatprep.mubr.f32.mxu0 0.0
    %1335 = vmatmul.mubr.f32.gmra.mxu0 %v1268
    %v1336 = vpop.f32.mrf.mxu0
    %v1337 = vadd.f32 0.0, %v1336
    %v1338 = vpop.f32.mrf.mxu0
    %1339 = vdwg.mxu0
    %1340 = vrot.lane.b32.xlu0 %v242, 104
    %v1341 = vpop.permute.xlu0 %1340
    %1342 = vrot.lane.b32.xlu0 %v242, 72
    %v1343 = vpop.permute.xlu0 %1342
    %v1344 = vsel %vm358, %v1341, 0
    %v1346 = vsel %vm358, %v1343, 0
    %1348 = vmatprep.subr.mxu0 0.0
    %1349 = vmatpush1.xpose.msra.mxu0 0.0
    %1350 = vmatprep.subr.mxu0 0.0
    %1351 = vmatpush1.xpose.msra.mxu0 0.0
    %1352 = vmatprep.subr.mxu0 0.0
    %1353 = vmatpush1.xpose.msra.mxu0 0.0
    %1354 = vmatprep.subr.mxu0 0.0
    %1355 = vmatpush1.xpose.msra.mxu0 0.0
    %1356 = vmatprep.subr.mxu0 0.0
    %1357 = vmatpush1.xpose.msra.mxu0 0.0
    %1358 = vmatprep.subr.mxu0 0.0
    %1359 = vmatpush1.xpose.msra.mxu0 0.0
    %1360 = vmatprep.subr.mxu0 0.0
    %1361 = vmatpush1.xpose.msra.mxu0 0.0
    %1362 = vmatprep.subr.mxu0 0.0
    %1363 = vmatpush1.xpose.msra.mxu0 0.0
    %1364 = vmatprep.subr.mxu0 0.0
    %1365 = vmatpush1.xpose.msra.mxu0 0.0
    %1366 = vmatprep.subr.mxu0 0.0
    %1367 = vmatpush1.xpose.msra.mxu0 0.0
    %1368 = vmatprep.subr.mxu0 0.0
    %1369 = vmatpush1.xpose.msra.mxu0 0.0
    %1370 = vmatprep.subr.mxu0 0.0
    %1371 = vmatpush1.xpose.msra.mxu0 0.0
    %1372 = vmatprep.subr.mxu0 0.0
    %1373 = vmatpush1.xpose.msra.mxu0 0.0
    %1374 = vmatprep.subr.mxu0 0.0
    %1375 = vmatpush1.xpose.msra.mxu0 0.0
    %1376 = vmatprep.subr.mxu0 0.0
    %1377 = vmatpush1.xpose.msra.mxu0 0.0
    %1378 = vmatprep.subr.mxu0 0.0
    %1379 = vmatpush1.xpose.msra.mxu0 %v1346
    %1380 = vmatprep.subr.mxu0 0.0
    %1381 = vmatpush2.xpose.msra.mxu0 0.0
    %1382 = vmatprep.subr.mxu0 0.0
    %1383 = vmatpush2.xpose.msra.mxu0 0.0
    %1384 = vmatprep.subr.mxu0 0.0
    %1385 = vmatpush2.xpose.msra.mxu0 0.0
    %1386 = vmatprep.subr.mxu0 0.0
    %1387 = vmatpush2.xpose.msra.mxu0 0.0
    %1388 = vmatprep.subr.mxu0 0.0
    %1389 = vmatpush2.xpose.msra.mxu0 0.0
    %1390 = vmatprep.subr.mxu0 0.0
    %1391 = vmatpush2.xpose.msra.mxu0 0.0
    %1392 = vmatprep.subr.mxu0 0.0
    %1393 = vmatpush2.xpose.msra.mxu0 0.0
    %1394 = vmatprep.subr.mxu0 0.0
    %1395 = vmatpush2.xpose.msra.mxu0 0.0
    %1396 = vmatprep.subr.mxu0 0.0
    %1397 = vmatpush2.xpose.msra.mxu0 0.0
    %1398 = vmatprep.subr.mxu0 0.0
    %1399 = vmatpush2.xpose.msra.mxu0 0.0
    %1400 = vmatprep.subr.mxu0 0.0
    %1401 = vmatpush2.xpose.msra.mxu0 0.0
    %1402 = vmatprep.subr.mxu0 0.0
    %1403 = vmatpush2.xpose.msra.mxu0 0.0
    %1404 = vmatprep.subr.mxu0 0.0
    %1405 = vmatpush2.xpose.msra.mxu0 0.0
    %1406 = vmatprep.subr.mxu0 0.0
    %1407 = vmatpush2.xpose.msra.mxu0 0.0
    %1408 = vmatprep.subr.mxu0 0.0
    %1409 = vmatpush2.xpose.msra.mxu0 0.0
    %1410 = vmatprep.subr.mxu0 0.0
    %1411 = vmatpush2.xpose.msra.mxu0 0.0
    %1412 = vmatprep.mubr.f32.mxu0 0.0
    %1413 = vmatmul.mubr.f32.gmra.mxu0 %v1344
    %v1414 = vpop.f32.mrf.mxu0
    %v1415 = vadd.f32 0.0, %v1414
    %v1416 = vpop.f32.mrf.mxu0
    %1417 = vdwg.mxu0
    %1418 = vrot.lane.b32.xlu0 %v247, 104
    %v1419 = vpop.permute.xlu0 %1418
    %1420 = vrot.lane.b32.xlu0 %v247, 72
    %v1421 = vpop.permute.xlu0 %1420
    %v1422 = vsel %vm358, %v1419, 0
    %v1424 = vsel %vm358, %v1421, 0
    %1426 = vmatprep.subr.mxu0 0.0
    %1427 = vmatpush1.xpose.msra.mxu0 0.0
    %1428 = vmatprep.subr.mxu0 0.0
    %1429 = vmatpush1.xpose.msra.mxu0 0.0
    %1430 = vmatprep.subr.mxu0 0.0
    %1431 = vmatpush1.xpose.msra.mxu0 0.0
    %1432 = vmatprep.subr.mxu0 0.0
    %1433 = vmatpush1.xpose.msra.mxu0 0.0
    %1434 = vmatprep.subr.mxu0 0.0
    %1435 = vmatpush1.xpose.msra.mxu0 0.0
    %1436 = vmatprep.subr.mxu0 0.0
    %1437 = vmatpush1.xpose.msra.mxu0 0.0
    %1438 = vmatprep.subr.mxu0 0.0
    %1439 = vmatpush1.xpose.msra.mxu0 0.0
    %1440 = vmatprep.subr.mxu0 0.0
    %1441 = vmatpush1.xpose.msra.mxu0 0.0
    %1442 = vmatprep.subr.mxu0 0.0
    %1443 = vmatpush1.xpose.msra.mxu0 0.0
    %1444 = vmatprep.subr.mxu0 0.0
    %1445 = vmatpush1.xpose.msra.mxu0 0.0
    %1446 = vmatprep.subr.mxu0 0.0
    %1447 = vmatpush1.xpose.msra.mxu0 0.0
    %1448 = vmatprep.subr.mxu0 0.0
    %1449 = vmatpush1.xpose.msra.mxu0 0.0
    %1450 = vmatprep.subr.mxu0 0.0
    %1451 = vmatpush1.xpose.msra.mxu0 0.0
    %1452 = vmatprep.subr.mxu0 0.0
    %1453 = vmatpush1.xpose.msra.mxu0 0.0
    %1454 = vmatprep.subr.mxu0 0.0
    %1455 = vmatpush1.xpose.msra.mxu0 0.0
    %1456 = vmatprep.subr.mxu0 0.0
    %1457 = vmatpush1.xpose.msra.mxu0 %v1424
    %1458 = vmatprep.subr.mxu0 0.0
    %1459 = vmatpush2.xpose.msra.mxu0 0.0
    %1460 = vmatprep.subr.mxu0 0.0
    %1461 = vmatpush2.xpose.msra.mxu0 0.0
    %1462 = vmatprep.subr.mxu0 0.0
    %1463 = vmatpush2.xpose.msra.mxu0 0.0
    %1464 = vmatprep.subr.mxu0 0.0
    %1465 = vmatpush2.xpose.msra.mxu0 0.0
    %1466 = vmatprep.subr.mxu0 0.0
    %1467 = vmatpush2.xpose.msra.mxu0 0.0
    %1468 = vmatprep.subr.mxu0 0.0
    %1469 = vmatpush2.xpose.msra.mxu0 0.0
    %1470 = vmatprep.subr.mxu0 0.0
    %1471 = vmatpush2.xpose.msra.mxu0 0.0
    %1472 = vmatprep.subr.mxu0 0.0
    %1473 = vmatpush2.xpose.msra.mxu0 0.0
    %1474 = vmatprep.subr.mxu0 0.0
    %1475 = vmatpush2.xpose.msra.mxu0 0.0
    %1476 = vmatprep.subr.mxu0 0.0
    %1477 = vmatpush2.xpose.msra.mxu0 0.0
    %1478 = vmatprep.subr.mxu0 0.0
    %1479 = vmatpush2.xpose.msra.mxu0 0.0
    %1480 = vmatprep.subr.mxu0 0.0
    %1481 = vmatpush2.xpose.msra.mxu0 0.0
    %1482 = vmatprep.subr.mxu0 0.0
    %1483 = vmatpush2.xpose.msra.mxu0 0.0
    %1484 = vmatprep.subr.mxu0 0.0
    %1485 = vmatpush2.xpose.msra.mxu0 0.0
    %1486 = vmatprep.subr.mxu0 0.0
    %1487 = vmatpush2.xpose.msra.mxu0 0.0
    %1488 = vmatprep.subr.mxu0 0.0
    %1489 = vmatpush2.xpose.msra.mxu0 0.0
    %1490 = vmatprep.mubr.f32.mxu0 0.0
    %1491 = vmatmul.mubr.f32.gmra.mxu0 %v1422
    %v1492 = vpop.f32.mrf.mxu0
    %v1493 = vadd.f32 0.0, %v1492
    %v1494 = vpop.f32.mrf.mxu0
    %1495 = vdwg.mxu0
    %v1496 = vsel %vm358, %v1415, -inf
    %1497 = vmax.xlane.f32.xlu0 %v1496
    %v1498 = vpop.xlane.xlu0 %1497
    %v1499 = vsel %vm358, %v1493, -inf
    %1500 = vmax.xlane.f32.xlu0 %v1499
    %v1501 = vpop.xlane.xlu0 %1500
    %v1502 = vsub.f32 %v1415, %v1498
    %v1503 = vsub.f32 %v1493, %v1501
    %v1504 = vmul.f32 %v1502, 1.442695
    %v1505 = vpow.pop %v1504
    %v1506 = vmul.f32 %v1503, 1.442695
    %v1507 = vpow.pop %v1506
    %v1508 = vsel %vm358, %v1505, 0.0
    %1509 = vadd.xlane.f32.xlu0 %v1508
    %v1510 = vpop.xlane.xlu0 %1509
    %v1511 = vsel %vm358, %v1507, 0.0
    %1512 = vadd.xlane.f32.xlu0 %v1511
    %v1513 = vpop.xlane.xlu0 %1512
    %v1514 = vrcp.pop %v1510
    %v1515 = vrcp.pop %v1513
    %v1516 = vmul.f32 %v1505, %v1514
    %v1517 = vmul.f32 %v1507, %v1515
    %1518 = vrot.lane.b32.xlu0 %v342, 104
    %v1519 = vpop.permute.xlu0 %1518
    %v1522 = vsel %vm358, %v1516, 0
    %1524 = vmatprep.subr.mxu0 0.0
    %1525 = vmatpush1.msra.mxu0 0.0
    %1526 = vmatprep.subr.mxu0 0.0
    %1527 = vmatpush1.msra.mxu0 0.0
    %1528 = vmatprep.subr.mxu0 0.0
    %1529 = vmatpush1.msra.mxu0 0.0
    %1530 = vmatprep.subr.mxu0 0.0
    %1531 = vmatpush1.msra.mxu0 0.0
    %1532 = vmatprep.subr.mxu0 0.0
    %1533 = vmatpush1.msra.mxu0 0.0
    %1534 = vmatprep.subr.mxu0 0.0
    %1535 = vmatpush1.msra.mxu0 0.0
    %1536 = vmatprep.subr.mxu0 0.0
    %1537 = vmatpush1.msra.mxu0 0.0
    %1538 = vmatprep.subr.mxu0 0.0
    %1539 = vmatpush1.msra.mxu0 0.0
    %1540 = vmatprep.subr.mxu0 0.0
    %1541 = vmatpush1.msra.mxu0 0.0
    %1542 = vmatprep.subr.mxu0 0.0
    %1543 = vmatpush1.msra.mxu0 0.0
    %1544 = vmatprep.subr.mxu0 0.0
    %1545 = vmatpush1.msra.mxu0 0.0
    %1546 = vmatprep.subr.mxu0 0.0
    %1547 = vmatpush1.msra.mxu0 0.0
    %1548 = vmatprep.subr.mxu0 0.0
    %1549 = vmatpush1.msra.mxu0 0.0
    %1550 = vmatprep.subr.mxu0 0.0
    %1551 = vmatpush1.msra.mxu0 0.0
    %1552 = vmatprep.subr.mxu0 0.0
    %1553 = vmatpush1.msra.mxu0 0.0
    %1554 = vmatprep.subr.mxu0 0.0
    %1555 = vmatpush1.msra.mxu0 %v1519
    %1556 = vmatprep.subr.mxu0 0.0
    %1557 = vmatpush2.msra.mxu0 0.0
    %1558 = vmatprep.subr.mxu0 0.0
    %1559 = vmatpush2.msra.mxu0 0.0
    %1560 = vmatprep.subr.mxu0 0.0
    %1561 = vmatpush2.msra.mxu0 0.0
    %1562 = vmatprep.subr.mxu0 0.0
    %1563 = vmatpush2.msra.mxu0 0.0
    %1564 = vmatprep.subr.mxu0 0.0
    %1565 = vmatpush2.msra.mxu0 0.0
    %1566 = vmatprep.subr.mxu0 0.0
    %1567 = vmatpush2.msra.mxu0 0.0
    %1568 = vmatprep.subr.mxu0 0.0
    %1569 = vmatpush2.msra.mxu0 0.0
    %1570 = vmatprep.subr.mxu0 0.0
    %1571 = vmatpush2.msra.mxu0 0.0
    %1572 = vmatprep.subr.mxu0 0.0
    %1573 = vmatpush2.msra.mxu0 0.0
    %1574 = vmatprep.subr.mxu0 0.0
    %1575 = vmatpush2.msra.mxu0 0.0
    %1576 = vmatprep.subr.mxu0 0.0
    %1577 = vmatpush2.msra.mxu0 0.0
    %1578 = vmatprep.subr.mxu0 0.0
    %1579 = vmatpush2.msra.mxu0 0.0
    %1580 = vmatprep.subr.mxu0 0.0
    %1581 = vmatpush2.msra.mxu0 0.0
    %1582 = vmatprep.subr.mxu0 0.0
    %1583 = vmatpush2.msra.mxu0 0.0
    %1584 = vmatprep.subr.mxu0 0.0
    %1585 = vmatpush2.msra.mxu0 0.0
    %1586 = vmatprep.subr.mxu0 0.0
    %1587 = vmatpush2.msra.mxu0 0.0
    %1588 = vmatprep.mubr.f32.mxu0 0.0
    %1589 = vmatmul.mubr.f32.gmra.mxu0 %v1522
    %v1590 = vpop.f32.mrf.mxu0
    %v1591 = vadd.f32 0.0, %v1590
    %v1592 = vpop.f32.mrf.mxu0
    %1593 = vdwg.mxu0
    %1594 = vrot.lane.b32.xlu0 %v347, 104
    %v1595 = vpop.permute.xlu0 %1594
    %v1598 = vsel %vm358, %v1517, 0
    %1600 = vmatprep.subr.mxu0 0.0
    %1601 = vmatpush1.msra.mxu0 0.0
    %1602 = vmatprep.subr.mxu0 0.0
    %1603 = vmatpush1.msra.mxu0 0.0
    %1604 = vmatprep.subr.mxu0 0.0
    %1605 = vmatpush1.msra.mxu0 0.0
    %1606 = vmatprep.subr.mxu0 0.0
    %1607 = vmatpush1.msra.mxu0 0.0
    %1608 = vmatprep.subr.mxu0 0.0
    %1609 = vmatpush1.msra.mxu0 0.0
    %1610 = vmatprep.subr.mxu0 0.0
    %1611 = vmatpush1.msra.mxu0 0.0
    %1612 = vmatprep.subr.mxu0 0.0
    %1613 = vmatpush1.msra.mxu0 0.0
    %1614 = vmatprep.subr.mxu0 0.0
    %1615 = vmatpush1.msra.mxu0 0.0
    %1616 = vmatprep.subr.mxu0 0.0
    %1617 = vmatpush1.msra.mxu0 0.0
    %1618 = vmatprep.subr.mxu0 0.0
    %1619 = vmatpush1.msra.mxu0 0.0
    %1620 = vmatprep.subr.mxu0 0.0
    %1621 = vmatpush1.msra.mxu0 0.0
    %1622 = vmatprep.subr.mxu0 0.0
    %1623 = vmatpush1.msra.mxu0 0.0
    %1624 = vmatprep.subr.mxu0 0.0
    %1625 = vmatpush1.msra.mxu0 0.0
    %1626 = vmatprep.subr.mxu0 0.0
    %1627 = vmatpush1.msra.mxu0 0.0
    %1628 = vmatprep.subr.mxu0 0.0
    %1629 = vmatpush1.msra.mxu0 0.0
    %1630 = vmatprep.subr.mxu0 0.0
    %1631 = vmatpush1.msra.mxu0 %v1595
    %1632 = vmatprep.subr.mxu0 0.0
    %1633 = vmatpush2.msra.mxu0 0.0
    %1634 = vmatprep.subr.mxu0 0.0
    %1635 = vmatpush2.msra.mxu0 0.0
    %1636 = vmatprep.subr.mxu0 0.0
    %1637 = vmatpush2.msra.mxu0 0.0
    %1638 = vmatprep.subr.mxu0 0.0
    %1639 = vmatpush2.msra.mxu0 0.0
    %1640 = vmatprep.subr.mxu0 0.0
    %1641 = vmatpush2.msra.mxu0 0.0
    %1642 = vmatprep.subr.mxu0 0.0
    %1643 = vmatpush2.msra.mxu0 0.0
    %1644 = vmatprep.subr.mxu0 0.0
    %1645 = vmatpush2.msra.mxu0 0.0
    %1646 = vmatprep.subr.mxu0 0.0
    %1647 = vmatpush2.msra.mxu0 0.0
    %1648 = vmatprep.subr.mxu0 0.0
    %1649 = vmatpush2.msra.mxu0 0.0
    %1650 = vmatprep.subr.mxu0 0.0
    %1651 = vmatpush2.msra.mxu0 0.0
    %1652 = vmatprep.subr.mxu0 0.0
    %1653 = vmatpush2.msra.mxu0 0.0
    %1654 = vmatprep.subr.mxu0 0.0
    %1655 = vmatpush2.msra.mxu0 0.0
    %1656 = vmatprep.subr.mxu0 0.0
    %1657 = vmatpush2.msra.mxu0 0.0
    %1658 = vmatprep.subr.mxu0 0.0
    %1659 = vmatpush2.msra.mxu0 0.0
    %1660 = vmatprep.subr.mxu0 0.0
    %1661 = vmatpush2.msra.mxu0 0.0
    %1662 = vmatprep.subr.mxu0 0.0
    %1663 = vmatpush2.msra.mxu0 0.0
    %1664 = vmatprep.mubr.f32.mxu0 0.0
    %1665 = vmatmul.mubr.f32.gmra.mxu0 %v1598
    %v1666 = vpop.f32.mrf.mxu0
    %v1667 = vadd.f32 0.0, %v1666
    %v1668 = vpop.f32.mrf.mxu0
    %1669 = vdwg.mxu0
    %1672 = vrot.lane.b32.xlu0 %v930, 8
    %v1673 = vpop.permute.xlu0 %1672
    %1674 = vrot.lane.b32.xlu0 %v1007, 8
    %v1675 = vpop.permute.xlu0 %1674
    %1680 = vrot.lane.b32.xlu0 %v1261, 16
    %v1681 = vpop.permute.xlu0 %1680
    %1682 = vrot.lane.b32.xlu0 %v1337, 16
    %v1683 = vpop.permute.xlu0 %1682
    %1688 = vrot.lane.b32.xlu0 %v1591, 24
    %v1689 = vpop.permute.xlu0 %1688
    %1690 = vrot.lane.b32.xlu0 %v1667, 24
    %v1691 = vpop.permute.xlu0 %1690
    %v1694 = vsel %vm358, %v602, %v1673
    %v1695 = vsel %vm358, %v675, %v1675
    %vm1696 = vcmask 130048
    %v1697 = vsel %vm1696, %v1694, %v1681
    %v1698 = vsel %vm1696, %v1695, %v1683
    %vm1699 = vcmask 195584
    %v1700 = vsel %vm1699, %v1697, %v1689
    %v1701 = vsel %vm1699, %v1698, %v1691
    %v1703 = vlaneseq
    %v1704 = vshrl.u32 %v1703, 7
    %v1705 = vsub.s32 0, %v1704
    %v1706 = vrot.slane %v354, %v1705
    %v1709 = vsel %vm168, %v1700, 0
    %v1712 = vsel %vm168, %v1701, 0
    %1714 = vmatprep.subr.mxu0 0.0
    %1715 = vmatpush1.msra.mxu0 0.0
    %1716 = vmatprep.subr.mxu0 0.0
    %1717 = vmatpush1.msra.mxu0 0.0
    %1718 = vmatprep.subr.mxu0 0.0
    %1719 = vmatpush1.msra.mxu0 0.0
    %1720 = vmatprep.subr.mxu0 0.0
    %1721 = vmatpush1.msra.mxu0 0.0
    %1722 = vmatprep.subr.mxu0 0.0
    %1723 = vmatpush1.msra.mxu0 0.0
    %1724 = vmatprep.subr.mxu0 0.0
    %1725 = vmatpush1.msra.mxu0 0.0
    %1726 = vmatprep.subr.mxu0 0.0
    %1727 = vmatpush1.msra.mxu0 0.0
    %1728 = vmatprep.subr.mxu0 0.0
    %1729 = vmatpush1.msra.mxu0 0.0
    %1730 = vmatprep.subr.mxu0 0.0
    %1731 = vmatpush1.msra.mxu0 0.0
    %1732 = vmatprep.subr.mxu0 0.0
    %1733 = vmatpush1.msra.mxu0 0.0
    %1734 = vmatprep.subr.mxu0 0.0
    %1735 = vmatpush1.msra.mxu0 0.0
    %1736 = vmatprep.subr.mxu0 0.0
    %1737 = vmatpush1.msra.mxu0 0.0
    %1738 = vmatprep.subr.mxu0 0.0
    %1739 = vmatpush1.msra.mxu0 %v353
    %1740 = vmatprep.subr.mxu0 0.0
    %1741 = vmatpush1.msra.mxu0 %v352
    %1742 = vmatprep.subr.mxu0 0.0
    %1743 = vmatpush1.msra.mxu0 %v351
    %1744 = vmatprep.subr.mxu0 0.0
    %1745 = vmatpush1.msra.mxu0 %v350
    %1746 = vmatprep.subr.mxu0 0.0
    %1747 = vmatpush2.msra.mxu0 0.0
    %1748 = vmatprep.subr.mxu0 0.0
    %1749 = vmatpush2.msra.mxu0 0.0
    %1750 = vmatprep.subr.mxu0 0.0
    %1751 = vmatpush2.msra.mxu0 0.0
    %1752 = vmatprep.subr.mxu0 0.0
    %1753 = vmatpush2.msra.mxu0 0.0
    %1754 = vmatprep.subr.mxu0 0.0
    %1755 = vmatpush2.msra.mxu0 0.0
    %1756 = vmatprep.subr.mxu0 0.0
    %1757 = vmatpush2.msra.mxu0 0.0
    %1758 = vmatprep.subr.mxu0 0.0
    %1759 = vmatpush2.msra.mxu0 0.0
    %1760 = vmatprep.subr.mxu0 0.0
    %1761 = vmatpush2.msra.mxu0 0.0
    %1762 = vmatprep.subr.mxu0 0.0
    %1763 = vmatpush2.msra.mxu0 0.0
    %1764 = vmatprep.subr.mxu0 0.0
    %1765 = vmatpush2.msra.mxu0 0.0
    %1766 = vmatprep.subr.mxu0 0.0
    %1767 = vmatpush2.msra.mxu0 0.0
    %1768 = vmatprep.subr.mxu0 0.0
    %1769 = vmatpush2.msra.mxu0 0.0
    %1770 = vmatprep.subr.mxu0 0.0
    %1771 = vmatpush2.msra.mxu0 0.0
    %1772 = vmatprep.subr.mxu0 0.0
    %1773 = vmatpush2.msra.mxu0 0.0
    %1774 = vmatprep.subr.mxu0 0.0
    %1775 = vmatpush2.msra.mxu0 0.0
    %1776 = vmatprep.subr.mxu0 0.0
    %1777 = vmatpush2.msra.mxu0 0.0
    %1778 = vmatprep.mubr.f32.mxu0 0.0
    %1779 = vmatmul.mubr.f32.gmra.mxu0 %v1709
    %v1780 = vpop.f32.mrf.mxu0
    %v1781 = vadd.f32 %v1706, %v1780
    %v1782 = vpop.f32.mrf.mxu0
    %1783 = vmatprep.mubr.f32.mxu0 0.0
    %1784 = vmatmul.mubr.f32.gmra.mxu0 %v1712
    %v1785 = vpop.f32.mrf.mxu0
    %v1786 = vadd.f32 %v1706, %v1785
    %v1787 = vpop.f32.mrf.mxu0
    %1788 = vdwg.mxu0
    %v1789 = vadd.f32 %v138, %v1781
    %v1790 = vadd.f32 %v139, %v1786
    %v1791 = vmul.f32 %v1789, %v1789
    %v1792 = vmul.f32 %v1790, %v1790
    %v1793 = vsel %vm168, %v1789, 0.0
    %1794 = vadd.xlane.f32.xlu0 %v1793
    %v1795 = vpop.xlane.xlu0 %1794
    %v1796 = vsel %vm168, %v1790, 0.0
    %1797 = vadd.xlane.f32.xlu0 %v1796
    %v1798 = vpop.xlane.xlu0 %1797
    %v1799 = vsel %vm168, %v1791, 0.0
    %1800 = vadd.xlane.f32.xlu0 %v1799
    %v1801 = vpop.xlane.xlu0 %1800
    %v1802 = vsel %vm168, %v1792, 0.0
    %1803 = vadd.xlane.f32.xlu0 %v1802
    %v1804 = vpop.xlane.xlu0 %1803
    %v1805 = vmul.f32 %v1795, 0.03125
    %v1806 = vmul.f32 %v1798, 0.03125
    %v1807 = vmul.f32 %v1801, 0.03125
    %v1808 = vmul.f32 %v1804, 0.03125
    %v1809 = vmul.f32 %v1805, %v1805
    %v1810 = vmul.f32 %v1806, %v1806
    %v1811 = vsub.f32 %v1807, %v1809
    %v1812 = vsub.f32 %v1808, %v1810
    %v1813 = vsub.f32 %v1789, %v1805
    %v1814 = vsub.f32 %v1790, %v1806
    %v1815 = vadd.f32 %v1811, 1e-05
    %v1816 = vadd.f32 %v1812, 1e-05
    %v1817 = vrsqrt.pop %v1815
    %v1818 = vrsqrt.pop %v1816
    %v1819 = vmul.f32 %v1813, %v1817
    %v1820 = vmul.f32 %v1814, %v1818
    %v1821 = vlaneseq
    %v1822 = vshrl.u32 %v1821, 7
    %v1823 = vsub.s32 0, %v1822
    %v1824 = vrot.slane %v154, %v1823
    %v1825 = vmul.f32 %v1819, %v1824
    %v1826 = vmul.f32 %v1820, %v1824
    %v1827 = vlaneseq
    %v1828 = vshrl.u32 %v1827, 7
    %v1829 = vsub.s32 1, %v1828
    %v1830 = vrot.slane %v154, %v1829
    %v1831 = vadd.f32 %v1825, %v1830
    %v1832 = vadd.f32 %v1826, %v1830
    %s1833 = scalar_lea.vmem %s4, 32
    %v1834 = vld [vmem:[%s1833] sm:$0xff]
    %v1835 = vld [vmem:[%s1833 + $0x8] sm:$0xff]
    %v1836 = vld [vmem:[%s1833 + $0x10] sm:$0xff]
    %v1837 = vld [vmem:[%s1833 + $0x18] sm:$0xff]
    %s1838 = scalar_lea.vmem [#allocation8], 1
    %v1839 = vld [vmem:[%s1838] sm:$0x1]
    %v1840 = vadd.f32 %v1831, %v144
    %v1841 = vadd.f32 %v1832, %v145
    %v1843 = vlaneseq
    %v1844 = vshrl.u32 %v1843, 7
    %v1845 = vsub.s32 0, %v1844
    %v1846 = vrot.slane %v1839, %v1845
    %v1849 = vsel %vm168, %v1840, 0
    %v1852 = vsel %vm168, %v1841, 0
    %1854 = vmatprep.subr.mxu0 0.0
    %1855 = vmatpush1.msra.mxu0 0.0
    %1856 = vmatprep.subr.mxu0 0.0
    %1857 = vmatpush1.msra.mxu0 0.0
    %1858 = vmatprep.subr.mxu0 0.0
    %1859 = vmatpush1.msra.mxu0 0.0
    %1860 = vmatprep.subr.mxu0 0.0
    %1861 = vmatpush1.msra.mxu0 0.0
    %1862 = vmatprep.subr.mxu0 0.0
    %1863 = vmatpush1.msra.mxu0 0.0
    %1864 = vmatprep.subr.mxu0 0.0
    %1865 = vmatpush1.msra.mxu0 0.0
    %1866 = vmatprep.subr.mxu0 0.0
    %1867 = vmatpush1.msra.mxu0 0.0
    %1868 = vmatprep.subr.mxu0 0.0
    %1869 = vmatpush1.msra.mxu0 0.0
    %1870 = vmatprep.subr.mxu0 0.0
    %1871 = vmatpush1.msra.mxu0 0.0
    %1872 = vmatprep.subr.mxu0 0.0
    %1873 = vmatpush1.msra.mxu0 0.0
    %1874 = vmatprep.subr.mxu0 0.0
    %1875 = vmatpush1.msra.mxu0 0.0
    %1876 = vmatprep.subr.mxu0 0.0
    %1877 = vmatpush1.msra.mxu0 0.0
    %1878 = vmatprep.subr.mxu0 0.0
    %1879 = vmatpush1.msra.mxu0 %v1837
    %1880 = vmatprep.subr.mxu0 0.0
    %1881 = vmatpush1.msra.mxu0 %v1836
    %1882 = vmatprep.subr.mxu0 0.0
    %1883 = vmatpush1.msra.mxu0 %v1835
    %1884 = vmatprep.subr.mxu0 0.0
    %1885 = vmatpush1.msra.mxu0 %v1834
    %1886 = vmatprep.subr.mxu0 0.0
    %1887 = vmatpush2.msra.mxu0 0.0
    %1888 = vmatprep.subr.mxu0 0.0
    %1889 = vmatpush2.msra.mxu0 0.0
    %1890 = vmatprep.subr.mxu0 0.0
    %1891 = vmatpush2.msra.mxu0 0.0
    %1892 = vmatprep.subr.mxu0 0.0
    %1893 = vmatpush2.msra.mxu0 0.0
    %1894 = vmatprep.subr.mxu0 0.0
    %1895 = vmatpush2.msra.mxu0 0.0
    %1896 = vmatprep.subr.mxu0 0.0
    %1897 = vmatpush2.msra.mxu0 0.0
    %1898 = vmatprep.subr.mxu0 0.0
    %1899 = vmatpush2.msra.mxu0 0.0
    %1900 = vmatprep.subr.mxu0 0.0
    %1901 = vmatpush2.msra.mxu0 0.0
    %1902 = vmatprep.subr.mxu0 0.0
    %1903 = vmatpush2.msra.mxu0 0.0
    %1904 = vmatprep.subr.mxu0 0.0
    %1905 = vmatpush2.msra.mxu0 0.0
    %1906 = vmatprep.subr.mxu0 0.0
    %1907 = vmatpush2.msra.mxu0 0.0
    %1908 = vmatprep.subr.mxu0 0.0
    %1909 = vmatpush2.msra.mxu0 0.0
    %1910 = vmatprep.subr.mxu0 0.0
    %1911 = vmatpush2.msra.mxu0 0.0
    %1912 = vmatprep.subr.mxu0 0.0
    %1913 = vmatpush2.msra.mxu0 0.0
    %1914 = vmatprep.subr.mxu0 0.0
    %1915 = vmatpush2.msra.mxu0 0.0
    %1916 = vmatprep.subr.mxu0 0.0
    %1917 = vmatpush2.msra.mxu0 0.0
    %1918 = vmatprep.mubr.f32.mxu0 0.0
    %1919 = vmatmul.mubr.f32.gmra.mxu0 %v1849
    %v1920 = vpop.f32.mrf.mxu0
    %v1921 = vadd.f32 %v1846, %v1920
    %v1922 = vpop.f32.mrf.mxu0
    %1923 = vmatprep.mubr.f32.mxu0 0.0
    %1924 = vmatmul.mubr.f32.gmra.mxu0 %v1852
    %v1925 = vpop.f32.mrf.mxu0
    %v1926 = vadd.f32 %v1846, %v1925
    %v1927 = vpop.f32.mrf.mxu0
    %1928 = vdwg.mxu0
    %1933 = vrot.lane.b32.xlu0 %v1834, 96
    %v1934 = vpop.permute.xlu0 %1933
    %1935 = vrot.lane.b32.xlu0 %v1835, 96
    %v1936 = vpop.permute.xlu0 %1935
    %1937 = vrot.lane.b32.xlu0 %v1836, 96
    %v1938 = vpop.permute.xlu0 %1937
    %1939 = vrot.lane.b32.xlu0 %v1837, 96
    %v1940 = vpop.permute.xlu0 %1939
    %1945 = vrot.lane.b32.xlu0 %v1846, 96
    %v1946 = vpop.permute.xlu0 %1945
    %v1949 = vsel %vm168, %v150, 0
    %v1952 = vsel %vm168, %v151, 0
    %v1955 = vsel %vm168, %v152, 0
    %v1958 = vsel %vm168, %v153, 0
    %1960 = vmatprep.subr.mxu0 0.0
    %1961 = vmatpush1.msra.mxu0 0.0
    %1962 = vmatprep.subr.mxu0 0.0
    %1963 = vmatpush1.msra.mxu0 0.0
    %1964 = vmatprep.subr.mxu0 0.0
    %1965 = vmatpush1.msra.mxu0 0.0
    %1966 = vmatprep.subr.mxu0 0.0
    %1967 = vmatpush1.msra.mxu0 0.0
    %1968 = vmatprep.subr.mxu0 0.0
    %1969 = vmatpush1.msra.mxu0 0.0
    %1970 = vmatprep.subr.mxu0 0.0
    %1971 = vmatpush1.msra.mxu0 0.0
    %1972 = vmatprep.subr.mxu0 0.0
    %1973 = vmatpush1.msra.mxu0 0.0
    %1974 = vmatprep.subr.mxu0 0.0
    %1975 = vmatpush1.msra.mxu0 0.0
    %1976 = vmatprep.subr.mxu0 0.0
    %1977 = vmatpush1.msra.mxu0 0.0
    %1978 = vmatprep.subr.mxu0 0.0
    %1979 = vmatpush1.msra.mxu0 0.0
    %1980 = vmatprep.subr.mxu0 0.0
    %1981 = vmatpush1.msra.mxu0 0.0
    %1982 = vmatprep.subr.mxu0 0.0
    %1983 = vmatpush1.msra.mxu0 0.0
    %1984 = vmatprep.subr.mxu0 0.0
    %1985 = vmatpush1.msra.mxu0 %v1940
    %1986 = vmatprep.subr.mxu0 0.0
    %1987 = vmatpush1.msra.mxu0 %v1938
    %1988 = vmatprep.subr.mxu0 0.0
    %1989 = vmatpush1.msra.mxu0 %v1936
    %1990 = vmatprep.subr.mxu0 0.0
    %1991 = vmatpush1.msra.mxu0 %v1934
    %1992 = vmatprep.subr.mxu0 0.0
    %1993 = vmatpush2.msra.mxu0 0.0
    %1994 = vmatprep.subr.mxu0 0.0
    %1995 = vmatpush2.msra.mxu0 0.0
    %1996 = vmatprep.subr.mxu0 0.0
    %1997 = vmatpush2.msra.mxu0 0.0
    %1998 = vmatprep.subr.mxu0 0.0
    %1999 = vmatpush2.msra.mxu0 0.0
    %2000 = vmatprep.subr.mxu0 0.0
    %2001 = vmatpush2.msra.mxu0 0.0
    %2002 = vmatprep.subr.mxu0 0.0
    %2003 = vmatpush2.msra.mxu0 0.0
    %2004 = vmatprep.subr.mxu0 0.0
    %2005 = vmatpush2.msra.mxu0 0.0
    %2006 = vmatprep.subr.mxu0 0.0
    %2007 = vmatpush2.msra.mxu0 0.0
    %2008 = vmatprep.subr.mxu0 0.0
    %2009 = vmatpush2.msra.mxu0 0.0
    %2010 = vmatprep.subr.mxu0 0.0
    %2011 = vmatpush2.msra.mxu0 0.0
    %2012 = vmatprep.subr.mxu0 0.0
    %2013 = vmatpush2.msra.mxu0 0.0
    %2014 = vmatprep.subr.mxu0 0.0
    %2015 = vmatpush2.msra.mxu0 0.0
    %2016 = vmatprep.subr.mxu0 0.0
    %2017 = vmatpush2.msra.mxu0 0.0
    %2018 = vmatprep.subr.mxu0 0.0
    %2019 = vmatpush2.msra.mxu0 0.0
    %2020 = vmatprep.subr.mxu0 0.0
    %2021 = vmatpush2.msra.mxu0 0.0
    %2022 = vmatprep.subr.mxu0 0.0
    %2023 = vmatpush2.msra.mxu0 0.0
    %2024 = vmatprep.mubr.f32.mxu0 0.0
    %2025 = vmatmul.mubr.f32.gmra.mxu0 %v1949
    %v2026 = vpop.f32.mrf.mxu0
    %v2027 = vadd.f32 %v1946, %v2026
    %v2028 = vpop.f32.mrf.mxu0
    %2029 = vmatprep.mubr.f32.mxu0 0.0
    %2030 = vmatmul.mubr.f32.gmra.mxu0 %v1952
    %v2031 = vpop.f32.mrf.mxu0
    %v2032 = vadd.f32 %v1946, %v2031
    %v2033 = vpop.f32.mrf.mxu0
    %2034 = vmatprep.mubr.f32.mxu0 0.0
    %2035 = vmatmul.mubr.f32.gmra.mxu0 %v1955
    %v2036 = vpop.f32.mrf.mxu0
    %v2037 = vadd.f32 %v1946, %v2036
    %v2038 = vpop.f32.mrf.mxu0
    %2039 = vmatprep.mubr.f32.mxu0 0.0
    %2040 = vmatmul.mubr.f32.gmra.mxu0 %v1958
    %v2041 = vpop.f32.mrf.mxu0
    %v2042 = vadd.f32 %v1946, %v2041
    %v2043 = vpop.f32.mrf.mxu0
    %2044 = vdwg.mxu0
    %2045 = vrot.lane.b32.xlu0 %v1834, 64
    %v2046 = vpop.permute.xlu0 %2045
    %2047 = vrot.lane.b32.xlu0 %v1835, 64
    %v2048 = vpop.permute.xlu0 %2047
    %2049 = vrot.lane.b32.xlu0 %v1836, 64
    %v2050 = vpop.permute.xlu0 %2049
    %2051 = vrot.lane.b32.xlu0 %v1837, 64
    %v2052 = vpop.permute.xlu0 %2051
    %2057 = vrot.lane.b32.xlu0 %v1846, 64
    %v2058 = vpop.permute.xlu0 %2057
    %v2061 = vsel %vm168, %v140, 0
    %v2064 = vsel %vm168, %v141, 0
    %v2067 = vsel %vm168, %v142, 0
    %v2070 = vsel %vm168, %v143, 0
    %2072 = vmatprep.subr.mxu0 0.0
    %2073 = vmatpush1.msra.mxu0 0.0
    %2074 = vmatprep.subr.mxu0 0.0
    %2075 = vmatpush1.msra.mxu0 0.0
    %2076 = vmatprep.subr.mxu0 0.0
    %2077 = vmatpush1.msra.mxu0 0.0
    %2078 = vmatprep.subr.mxu0 0.0
    %2079 = vmatpush1.msra.mxu0 0.0
    %2080 = vmatprep.subr.mxu0 0.0
    %2081 = vmatpush1.msra.mxu0 0.0
    %2082 = vmatprep.subr.mxu0 0.0
    %2083 = vmatpush1.msra.mxu0 0.0
    %2084 = vmatprep.subr.mxu0 0.0
    %2085 = vmatpush1.msra.mxu0 0.0
    %2086 = vmatprep.subr.mxu0 0.0
    %2087 = vmatpush1.msra.mxu0 0.0
    %2088 = vmatprep.subr.mxu0 0.0
    %2089 = vmatpush1.msra.mxu0 0.0
    %2090 = vmatprep.subr.mxu0 0.0
    %2091 = vmatpush1.msra.mxu0 0.0
    %2092 = vmatprep.subr.mxu0 0.0
    %2093 = vmatpush1.msra.mxu0 0.0
    %2094 = vmatprep.subr.mxu0 0.0
    %2095 = vmatpush1.msra.mxu0 0.0
    %2096 = vmatprep.subr.mxu0 0.0
    %2097 = vmatpush1.msra.mxu0 %v2052
    %2098 = vmatprep.subr.mxu0 0.0
    %2099 = vmatpush1.msra.mxu0 %v2050
    %2100 = vmatprep.subr.mxu0 0.0
    %2101 = vmatpush1.msra.mxu0 %v2048
    %2102 = vmatprep.subr.mxu0 0.0
    %2103 = vmatpush1.msra.mxu0 %v2046
    %2104 = vmatprep.subr.mxu0 0.0
    %2105 = vmatpush2.msra.mxu0 0.0
    %2106 = vmatprep.subr.mxu0 0.0
    %2107 = vmatpush2.msra.mxu0 0.0
    %2108 = vmatprep.subr.mxu0 0.0
    %2109 = vmatpush2.msra.mxu0 0.0
    %2110 = vmatprep.subr.mxu0 0.0
    %2111 = vmatpush2.msra.mxu0 0.0
    %2112 = vmatprep.subr.mxu0 0.0
    %2113 = vmatpush2.msra.mxu0 0.0
    %2114 = vmatprep.subr.mxu0 0.0
    %2115 = vmatpush2.msra.mxu0 0.0
    %2116 = vmatprep.subr.mxu0 0.0
    %2117 = vmatpush2.msra.mxu0 0.0
    %2118 = vmatprep.subr.mxu0 0.0
    %2119 = vmatpush2.msra.mxu0 0.0
    %2120 = vmatprep.subr.mxu0 0.0
    %2121 = vmatpush2.msra.mxu0 0.0
    %2122 = vmatprep.subr.mxu0 0.0
    %2123 = vmatpush2.msra.mxu0 0.0
    %2124 = vmatprep.subr.mxu0 0.0
    %2125 = vmatpush2.msra.mxu0 0.0
    %2126 = vmatprep.subr.mxu0 0.0
    %2127 = vmatpush2.msra.mxu0 0.0
    %2128 = vmatprep.subr.mxu0 0.0
    %2129 = vmatpush2.msra.mxu0 0.0
    %2130 = vmatprep.subr.mxu0 0.0
    %2131 = vmatpush2.msra.mxu0 0.0
    %2132 = vmatprep.subr.mxu0 0.0
    %2133 = vmatpush2.msra.mxu0 0.0
    %2134 = vmatprep.subr.mxu0 0.0
    %2135 = vmatpush2.msra.mxu0 0.0
    %2136 = vmatprep.mubr.f32.mxu0 0.0
    %2137 = vmatmul.mubr.f32.gmra.mxu0 %v2061
    %v2138 = vpop.f32.mrf.mxu0
    %v2139 = vadd.f32 %v2058, %v2138
    %v2140 = vpop.f32.mrf.mxu0
    %2141 = vmatprep.mubr.f32.mxu0 0.0
    %2142 = vmatmul.mubr.f32.gmra.mxu0 %v2064
    %v2143 = vpop.f32.mrf.mxu0
    %v2144 = vadd.f32 %v2058, %v2143
    %v2145 = vpop.f32.mrf.mxu0
    %2146 = vmatprep.mubr.f32.mxu0 0.0
    %2147 = vmatmul.mubr.f32.gmra.mxu0 %v2067
    %v2148 = vpop.f32.mrf.mxu0
    %v2149 = vadd.f32 %v2058, %v2148
    %v2150 = vpop.f32.mrf.mxu0
    %2151 = vmatprep.mubr.f32.mxu0 0.0
    %2152 = vmatmul.mubr.f32.gmra.mxu0 %v2070
    %v2153 = vpop.f32.mrf.mxu0
    %v2154 = vadd.f32 %v2058, %v2153
    %v2155 = vpop.f32.mrf.mxu0
    %2156 = vdwg.mxu0
    %s2157 = scalar_lea.vmem [#allocation10], 32
    %v2158 = vld [vmem:[%s2157] sm:$0xff]
    %v2159 = vld [vmem:[%s2157 + $0x8] sm:$0xff]
    %v2160 = vld [vmem:[%s2157 + $0x10] sm:$0xff]
    %v2161 = vld [vmem:[%s2157 + $0x18] sm:$0xff]
    %s2162 = scalar_lea.vmem %s7, 1
    %v2163 = vld [vmem:[%s2162] sm:$0x1]
    %v2165 = vsel %vm358, %v1921, 0
    %v2168 = vsel %vm358, %v2027, 0
    %v2171 = vsel %vm358, %v2032, 0
    %2173 = vmatprep.subr.mxu0 0.0
    %2174 = vmatpush1.xpose.msra.mxu0 0.0
    %2175 = vmatprep.subr.mxu0 0.0
    %2176 = vmatpush1.xpose.msra.mxu0 0.0
    %2177 = vmatprep.subr.mxu0 0.0
    %2178 = vmatpush1.xpose.msra.mxu0 0.0
    %2179 = vmatprep.subr.mxu0 0.0
    %2180 = vmatpush1.xpose.msra.mxu0 0.0
    %2181 = vmatprep.subr.mxu0 0.0
    %2182 = vmatpush1.xpose.msra.mxu0 0.0
    %2183 = vmatprep.subr.mxu0 0.0
    %2184 = vmatpush1.xpose.msra.mxu0 0.0
    %2185 = vmatprep.subr.mxu0 0.0
    %2186 = vmatpush1.xpose.msra.mxu0 0.0
    %2187 = vmatprep.subr.mxu0 0.0
    %2188 = vmatpush1.xpose.msra.mxu0 0.0
    %2189 = vmatprep.subr.mxu0 0.0
    %2190 = vmatpush1.xpose.msra.mxu0 0.0
    %2191 = vmatprep.subr.mxu0 0.0
    %2192 = vmatpush1.xpose.msra.mxu0 0.0
    %2193 = vmatprep.subr.mxu0 0.0
    %2194 = vmatpush1.xpose.msra.mxu0 0.0
    %2195 = vmatprep.subr.mxu0 0.0
    %2196 = vmatpush1.xpose.msra.mxu0 0.0
    %2197 = vmatprep.subr.mxu0 0.0
    %2198 = vmatpush1.xpose.msra.mxu0 0.0
    %2199 = vmatprep.subr.mxu0 0.0
    %2200 = vmatpush1.xpose.msra.mxu0 0.0
    %2201 = vmatprep.subr.mxu0 0.0
    %2202 = vmatpush1.xpose.msra.mxu0 %v2171
    %2203 = vmatprep.subr.mxu0 0.0
    %2204 = vmatpush1.xpose.msra.mxu0 %v2168
    %2205 = vmatprep.subr.mxu0 0.0
    %2206 = vmatpush2.xpose.msra.mxu0 0.0
    %2207 = vmatprep.subr.mxu0 0.0
    %2208 = vmatpush2.xpose.msra.mxu0 0.0
    %2209 = vmatprep.subr.mxu0 0.0
    %2210 = vmatpush2.xpose.msra.mxu0 0.0
    %2211 = vmatprep.subr.mxu0 0.0
    %2212 = vmatpush2.xpose.msra.mxu0 0.0
    %2213 = vmatprep.subr.mxu0 0.0
    %2214 = vmatpush2.xpose.msra.mxu0 0.0
    %2215 = vmatprep.subr.mxu0 0.0
    %2216 = vmatpush2.xpose.msra.mxu0 0.0
    %2217 = vmatprep.subr.mxu0 0.0
    %2218 = vmatpush2.xpose.msra.mxu0 0.0
    %2219 = vmatprep.subr.mxu0 0.0
    %2220 = vmatpush2.xpose.msra.mxu0 0.0
    %2221 = vmatprep.subr.mxu0 0.0
    %2222 = vmatpush2.xpose.msra.mxu0 0.0
    %2223 = vmatprep.subr.mxu0 0.0
    %2224 = vmatpush2.xpose.msra.mxu0 0.0
    %2225 = vmatprep.subr.mxu0 0.0
    %2226 = vmatpush2.xpose.msra.mxu0 0.0
    %2227 = vmatprep.subr.mxu0 0.0
    %2228 = vmatpush2.xpose.msra.mxu0 0.0
    %2229 = vmatprep.subr.mxu0 0.0
    %2230 = vmatpush2.xpose.msra.mxu0 0.0
    %2231 = vmatprep.subr.mxu0 0.0
    %2232 = vmatpush2.xpose.msra.mxu0 0.0
    %2233 = vmatprep.subr.mxu0 0.0
    %2234 = vmatpush2.xpose.msra.mxu0 0.0
    %2235 = vmatprep.subr.mxu0 0.0
    %2236 = vmatpush2.xpose.msra.mxu0 0.0
    %2237 = vmatprep.mubr.f32.mxu0 0.0
    %2238 = vmatmul.mubr.f32.gmra.mxu0 %v2165
    %v2239 = vpop.f32.mrf.mxu0
    %v2240 = vadd.f32 0.0, %v2239
    %v2241 = vpop.f32.mrf.mxu0
    %2242 = vdwg.mxu0
    %v2244 = vsel %vm358, %v1926, 0
    %v2247 = vsel %vm358, %v2037, 0
    %v2250 = vsel %vm358, %v2042, 0
    %2252 = vmatprep.subr.mxu0 0.0
    %2253 = vmatpush1.xpose.msra.mxu0 0.0
    %2254 = vmatprep.subr.mxu0 0.0
    %2255 = vmatpush1.xpose.msra.mxu0 0.0
    %2256 = vmatprep.subr.mxu0 0.0
    %2257 = vmatpush1.xpose.msra.mxu0 0.0
    %2258 = vmatprep.subr.mxu0 0.0
    %2259 = vmatpush1.xpose.msra.mxu0 0.0
    %2260 = vmatprep.subr.mxu0 0.0
    %2261 = vmatpush1.xpose.msra.mxu0 0.0
    %2262 = vmatprep.subr.mxu0 0.0
    %2263 = vmatpush1.xpose.msra.mxu0 0.0
    %2264 = vmatprep.subr.mxu0 0.0
    %2265 = vmatpush1.xpose.msra.mxu0 0.0
    %2266 = vmatprep.subr.mxu0 0.0
    %2267 = vmatpush1.xpose.msra.mxu0 0.0
    %2268 = vmatprep.subr.mxu0 0.0
    %2269 = vmatpush1.xpose.msra.mxu0 0.0
    %2270 = vmatprep.subr.mxu0 0.0
    %2271 = vmatpush1.xpose.msra.mxu0 0.0
    %2272 = vmatprep.subr.mxu0 0.0
    %2273 = vmatpush1.xpose.msra.mxu0 0.0
    %2274 = vmatprep.subr.mxu0 0.0
    %2275 = vmatpush1.xpose.msra.mxu0 0.0
    %2276 = vmatprep.subr.mxu0 0.0
    %2277 = vmatpush1.xpose.msra.mxu0 0.0
    %2278 = vmatprep.subr.mxu0 0.0
    %2279 = vmatpush1.xpose.msra.mxu0 0.0
    %2280 = vmatprep.subr.mxu0 0.0
    %2281 = vmatpush1.xpose.msra.mxu0 %v2250
    %2282 = vmatprep.subr.mxu0 0.0
    %2283 = vmatpush1.xpose.msra.mxu0 %v2247
    %2284 = vmatprep.subr.mxu0 0.0
    %2285 = vmatpush2.xpose.msra.mxu0 0.0
    %2286 = vmatprep.subr.mxu0 0.0
    %2287 = vmatpush2.xpose.msra.mxu0 0.0
    %2288 = vmatprep.subr.mxu0 0.0
    %2289 = vmatpush2.xpose.msra.mxu0 0.0
    %2290 = vmatprep.subr.mxu0 0.0
    %2291 = vmatpush2.xpose.msra.mxu0 0.0
    %2292 = vmatprep.subr.mxu0 0.0
    %2293 = vmatpush2.xpose.msra.mxu0 0.0
    %2294 = vmatprep.subr.mxu0 0.0
    %2295 = vmatpush2.xpose.msra.mxu0 0.0
    %2296 = vmatprep.subr.mxu0 0.0
    %2297 = vmatpush2.xpose.msra.mxu0 0.0
    %2298 = vmatprep.subr.mxu0 0.0
    %2299 = vmatpush2.xpose.msra.mxu0 0.0
    %2300 = vmatprep.subr.mxu0 0.0
    %2301 = vmatpush2.xpose.msra.mxu0 0.0
    %2302 = vmatprep.subr.mxu0 0.0
    %2303 = vmatpush2.xpose.msra.mxu0 0.0
    %2304 = vmatprep.subr.mxu0 0.0
    %2305 = vmatpush2.xpose.msra.mxu0 0.0
    %2306 = vmatprep.subr.mxu0 0.0
    %2307 = vmatpush2.xpose.msra.mxu0 0.0
    %2308 = vmatprep.subr.mxu0 0.0
    %2309 = vmatpush2.xpose.msra.mxu0 0.0
    %2310 = vmatprep.subr.mxu0 0.0
    %2311 = vmatpush2.xpose.msra.mxu0 0.0
    %2312 = vmatprep.subr.mxu0 0.0
    %2313 = vmatpush2.xpose.msra.mxu0 0.0
    %2314 = vmatprep.subr.mxu0 0.0
    %2315 = vmatpush2.xpose.msra.mxu0 0.0
    %2316 = vmatprep.mubr.f32.mxu0 0.0
    %2317 = vmatmul.mubr.f32.gmra.mxu0 %v2244
    %v2318 = vpop.f32.mrf.mxu0
    %v2319 = vadd.f32 0.0, %v2318
    %v2320 = vpop.f32.mrf.mxu0
    %2321 = vdwg.mxu0
    %v2322 = vsel %vm1696, %v2240, -inf
    %2323 = vmax.xlane.f32.xlu0 %v2322
    %v2324 = vpop.xlane.xlu0 %2323
    %v2325 = vsel %vm1696, %v2319, -inf
    %2326 = vmax.xlane.f32.xlu0 %v2325
    %v2327 = vpop.xlane.xlu0 %2326
    %v2328 = vsub.f32 %v2240, %v2324
    %v2329 = vsub.f32 %v2319, %v2327
    %v2330 = vmul.f32 %v2328, 1.442695
    %v2331 = vpow.pop %v2330
    %v2332 = vmul.f32 %v2329, 1.442695
    %v2333 = vpow.pop %v2332
    %v2334 = vsel %vm1696, %v2331, 0.0
    %2335 = vadd.xlane.f32.xlu0 %v2334
    %v2336 = vpop.xlane.xlu0 %2335
    %v2337 = vsel %vm1696, %v2333, 0.0
    %2338 = vadd.xlane.f32.xlu0 %v2337
    %v2339 = vpop.xlane.xlu0 %2338
    %v2340 = vrcp.pop %v2336
    %v2341 = vrcp.pop %v2339
    %v2342 = vmul.f32 %v2331, %v2340
    %v2343 = vmul.f32 %v2333, %v2341
    %v2345 = vsel %vm1696, %v2342, 0
    %2347 = vmatprep.subr.mxu0 0.0
    %2348 = vmatpush1.msra.mxu0 0.0
    %2349 = vmatprep.subr.mxu0 0.0
    %2350 = vmatpush1.msra.mxu0 0.0
    %2351 = vmatprep.subr.mxu0 0.0
    %2352 = vmatpush1.msra.mxu0 0.0
    %2353 = vmatprep.subr.mxu0 0.0
    %2354 = vmatpush1.msra.mxu0 0.0
    %2355 = vmatprep.subr.mxu0 0.0
    %2356 = vmatpush1.msra.mxu0 0.0
    %2357 = vmatprep.subr.mxu0 0.0
    %2358 = vmatpush1.msra.mxu0 0.0
    %2359 = vmatprep.subr.mxu0 0.0
    %2360 = vmatpush1.msra.mxu0 0.0
    %2361 = vmatprep.subr.mxu0 0.0
    %2362 = vmatpush1.msra.mxu0 0.0
    %2363 = vmatprep.subr.mxu0 0.0
    %2364 = vmatpush1.msra.mxu0 0.0
    %2365 = vmatprep.subr.mxu0 0.0
    %2366 = vmatpush1.msra.mxu0 0.0
    %2367 = vmatprep.subr.mxu0 0.0
    %2368 = vmatpush1.msra.mxu0 0.0
    %2369 = vmatprep.subr.mxu0 0.0
    %2370 = vmatpush1.msra.mxu0 0.0
    %2371 = vmatprep.subr.mxu0 0.0
    %2372 = vmatpush1.msra.mxu0 0.0
    %2373 = vmatprep.subr.mxu0 0.0
    %2374 = vmatpush1.msra.mxu0 0.0
    %2375 = vmatprep.subr.mxu0 0.0
    %2376 = vmatpush1.msra.mxu0 %v2144
    %2377 = vmatprep.subr.mxu0 0.0
    %2378 = vmatpush1.msra.mxu0 %v2139
    %2379 = vmatprep.subr.mxu0 0.0
    %2380 = vmatpush2.msra.mxu0 0.0
    %2381 = vmatprep.subr.mxu0 0.0
    %2382 = vmatpush2.msra.mxu0 0.0
    %2383 = vmatprep.subr.mxu0 0.0
    %2384 = vmatpush2.msra.mxu0 0.0
    %2385 = vmatprep.subr.mxu0 0.0
    %2386 = vmatpush2.msra.mxu0 0.0
    %2387 = vmatprep.subr.mxu0 0.0
    %2388 = vmatpush2.msra.mxu0 0.0
    %2389 = vmatprep.subr.mxu0 0.0
    %2390 = vmatpush2.msra.mxu0 0.0
    %2391 = vmatprep.subr.mxu0 0.0
    %2392 = vmatpush2.msra.mxu0 0.0
    %2393 = vmatprep.subr.mxu0 0.0
    %2394 = vmatpush2.msra.mxu0 0.0
    %2395 = vmatprep.subr.mxu0 0.0
    %2396 = vmatpush2.msra.mxu0 0.0
    %2397 = vmatprep.subr.mxu0 0.0
    %2398 = vmatpush2.msra.mxu0 0.0
    %2399 = vmatprep.subr.mxu0 0.0
    %2400 = vmatpush2.msra.mxu0 0.0
    %2401 = vmatprep.subr.mxu0 0.0
    %2402 = vmatpush2.msra.mxu0 0.0
    %2403 = vmatprep.subr.mxu0 0.0
    %2404 = vmatpush2.msra.mxu0 0.0
    %2405 = vmatprep.subr.mxu0 0.0
    %2406 = vmatpush2.msra.mxu0 0.0
    %2407 = vmatprep.subr.mxu0 0.0
    %2408 = vmatpush2.msra.mxu0 0.0
    %2409 = vmatprep.subr.mxu0 0.0
    %2410 = vmatpush2.msra.mxu0 0.0
    %2411 = vmatprep.mubr.f32.mxu0 0.0
    %2412 = vmatmul.mubr.f32.gmra.mxu0 %v2345
    %v2413 = vpop.f32.mrf.mxu0
    %v2414 = vadd.f32 0.0, %v2413
    %v2415 = vpop.f32.mrf.mxu0
    %2416 = vdwg.mxu0
    %v2418 = vsel %vm1696, %v2343, 0
    %2420 = vmatprep.subr.mxu0 0.0
    %2421 = vmatpush1.msra.mxu0 0.0
    %2422 = vmatprep.subr.mxu0 0.0
    %2423 = vmatpush1.msra.mxu0 0.0
    %2424 = vmatprep.subr.mxu0 0.0
    %2425 = vmatpush1.msra.mxu0 0.0
    %2426 = vmatprep.subr.mxu0 0.0
    %2427 = vmatpush1.msra.mxu0 0.0
    %2428 = vmatprep.subr.mxu0 0.0
    %2429 = vmatpush1.msra.mxu0 0.0
    %2430 = vmatprep.subr.mxu0 0.0
    %2431 = vmatpush1.msra.mxu0 0.0
    %2432 = vmatprep.subr.mxu0 0.0
    %2433 = vmatpush1.msra.mxu0 0.0
    %2434 = vmatprep.subr.mxu0 0.0
    %2435 = vmatpush1.msra.mxu0 0.0
    %2436 = vmatprep.subr.mxu0 0.0
    %2437 = vmatpush1.msra.mxu0 0.0
    %2438 = vmatprep.subr.mxu0 0.0
    %2439 = vmatpush1.msra.mxu0 0.0
    %2440 = vmatprep.subr.mxu0 0.0
    %2441 = vmatpush1.msra.mxu0 0.0
    %2442 = vmatprep.subr.mxu0 0.0
    %2443 = vmatpush1.msra.mxu0 0.0
    %2444 = vmatprep.subr.mxu0 0.0
    %2445 = vmatpush1.msra.mxu0 0.0
    %2446 = vmatprep.subr.mxu0 0.0
    %2447 = vmatpush1.msra.mxu0 0.0
    %2448 = vmatprep.subr.mxu0 0.0
    %2449 = vmatpush1.msra.mxu0 %v2154
    %2450 = vmatprep.subr.mxu0 0.0
    %2451 = vmatpush1.msra.mxu0 %v2149
    %2452 = vmatprep.subr.mxu0 0.0
    %2453 = vmatpush2.msra.mxu0 0.0
    %2454 = vmatprep.subr.mxu0 0.0
    %2455 = vmatpush2.msra.mxu0 0.0
    %2456 = vmatprep.subr.mxu0 0.0
    %2457 = vmatpush2.msra.mxu0 0.0
    %2458 = vmatprep.subr.mxu0 0.0
    %2459 = vmatpush2.msra.mxu0 0.0
    %2460 = vmatprep.subr.mxu0 0.0
    %2461 = vmatpush2.msra.mxu0 0.0
    %2462 = vmatprep.subr.mxu0 0.0
    %2463 = vmatpush2.msra.mxu0 0.0
    %2464 = vmatprep.subr.mxu0 0.0
    %2465 = vmatpush2.msra.mxu0 0.0
    %2466 = vmatprep.subr.mxu0 0.0
    %2467 = vmatpush2.msra.mxu0 0.0
    %2468 = vmatprep.subr.mxu0 0.0
    %2469 = vmatpush2.msra.mxu0 0.0
    %2470 = vmatprep.subr.mxu0 0.0
    %2471 = vmatpush2.msra.mxu0 0.0
    %2472 = vmatprep.subr.mxu0 0.0
    %2473 = vmatpush2.msra.mxu0 0.0
    %2474 = vmatprep.subr.mxu0 0.0
    %2475 = vmatpush2.msra.mxu0 0.0
    %2476 = vmatprep.subr.mxu0 0.0
    %2477 = vmatpush2.msra.mxu0 0.0
    %2478 = vmatprep.subr.mxu0 0.0
    %2479 = vmatpush2.msra.mxu0 0.0
    %2480 = vmatprep.subr.mxu0 0.0
    %2481 = vmatpush2.msra.mxu0 0.0
    %2482 = vmatprep.subr.mxu0 0.0
    %2483 = vmatpush2.msra.mxu0 0.0
    %2484 = vmatprep.mubr.f32.mxu0 0.0
    %2485 = vmatmul.mubr.f32.gmra.mxu0 %v2418
    %v2486 = vpop.f32.mrf.mxu0
    %v2487 = vadd.f32 0.0, %v2486
    %v2488 = vpop.f32.mrf.mxu0
    %2489 = vdwg.mxu0
    %2490 = vrot.lane.b32.xlu0 %v1921, 120
    %v2491 = vpop.permute.xlu0 %2490
    %2492 = vrot.lane.b32.xlu0 %v2027, 120
    %v2493 = vpop.permute.xlu0 %2492
    %2494 = vrot.lane.b32.xlu0 %v2032, 120
    %v2495 = vpop.permute.xlu0 %2494
    %v2496 = vsel %vm358, %v2491, 0
    %v2498 = vsel %vm358, %v2493, 0
    %v2500 = vsel %vm358, %v2495, 0
    %2502 = vmatprep.subr.mxu0 0.0
    %2503 = vmatpush1.xpose.msra.mxu0 0.0
    %2504 = vmatprep.subr.mxu0 0.0
    %2505 = vmatpush1.xpose.msra.mxu0 0.0
    %2506 = vmatprep.subr.mxu0 0.0
    %2507 = vmatpush1.xpose.msra.mxu0 0.0
    %2508 = vmatprep.subr.mxu0 0.0
    %2509 = vmatpush1.xpose.msra.mxu0 0.0
    %2510 = vmatprep.subr.mxu0 0.0
    %2511 = vmatpush1.xpose.msra.mxu0 0.0
    %2512 = vmatprep.subr.mxu0 0.0
    %2513 = vmatpush1.xpose.msra.mxu0 0.0
    %2514 = vmatprep.subr.mxu0 0.0
    %2515 = vmatpush1.xpose.msra.mxu0 0.0
    %2516 = vmatprep.subr.mxu0 0.0
    %2517 = vmatpush1.xpose.msra.mxu0 0.0
    %2518 = vmatprep.subr.mxu0 0.0
    %2519 = vmatpush1.xpose.msra.mxu0 0.0
    %2520 = vmatprep.subr.mxu0 0.0
    %2521 = vmatpush1.xpose.msra.mxu0 0.0
    %2522 = vmatprep.subr.mxu0 0.0
    %2523 = vmatpush1.xpose.msra.mxu0 0.0
    %2524 = vmatprep.subr.mxu0 0.0
    %2525 = vmatpush1.xpose.msra.mxu0 0.0
    %2526 = vmatprep.subr.mxu0 0.0
    %2527 = vmatpush1.xpose.msra.mxu0 0.0
    %2528 = vmatprep.subr.mxu0 0.0
    %2529 = vmatpush1.xpose.msra.mxu0 0.0
    %2530 = vmatprep.subr.mxu0 0.0
    %2531 = vmatpush1.xpose.msra.mxu0 %v2500
    %2532 = vmatprep.subr.mxu0 0.0
    %2533 = vmatpush1.xpose.msra.mxu0 %v2498
    %2534 = vmatprep.subr.mxu0 0.0
    %2535 = vmatpush2.xpose.msra.mxu0 0.0
    %2536 = vmatprep.subr.mxu0 0.0
    %2537 = vmatpush2.xpose.msra.mxu0 0.0
    %2538 = vmatprep.subr.mxu0 0.0
    %2539 = vmatpush2.xpose.msra.mxu0 0.0
    %2540 = vmatprep.subr.mxu0 0.0
    %2541 = vmatpush2.xpose.msra.mxu0 0.0
    %2542 = vmatprep.subr.mxu0 0.0
    %2543 = vmatpush2.xpose.msra.mxu0 0.0
    %2544 = vmatprep.subr.mxu0 0.0
    %2545 = vmatpush2.xpose.msra.mxu0 0.0
    %2546 = vmatprep.subr.mxu0 0.0
    %2547 = vmatpush2.xpose.msra.mxu0 0.0
    %2548 = vmatprep.subr.mxu0 0.0
    %2549 = vmatpush2.xpose.msra.mxu0 0.0
    %2550 = vmatprep.subr.mxu0 0.0
    %2551 = vmatpush2.xpose.msra.mxu0 0.0
    %2552 = vmatprep.subr.mxu0 0.0
    %2553 = vmatpush2.xpose.msra.mxu0 0.0
    %2554 = vmatprep.subr.mxu0 0.0
    %2555 = vmatpush2.xpose.msra.mxu0 0.0
    %2556 = vmatprep.subr.mxu0 0.0
    %2557 = vmatpush2.xpose.msra.mxu0 0.0
    %2558 = vmatprep.subr.mxu0 0.0
    %2559 = vmatpush2.xpose.msra.mxu0 0.0
    %2560 = vmatprep.subr.mxu0 0.0
    %2561 = vmatpush2.xpose.msra.mxu0 0.0
    %2562 = vmatprep.subr.mxu0 0.0
    %2563 = vmatpush2.xpose.msra.mxu0 0.0
    %2564 = vmatprep.subr.mxu0 0.0
    %2565 = vmatpush2.xpose.msra.mxu0 0.0
    %2566 = vmatprep.mubr.f32.mxu0 0.0
    %2567 = vmatmul.mubr.f32.gmra.mxu0 %v2496
    %v2568 = vpop.f32.mrf.mxu0
    %v2569 = vadd.f32 0.0, %v2568
    %v2570 = vpop.f32.mrf.mxu0
    %2571 = vdwg.mxu0
    %2572 = vrot.lane.b32.xlu0 %v1926, 120
    %v2573 = vpop.permute.xlu0 %2572
    %2574 = vrot.lane.b32.xlu0 %v2037, 120
    %v2575 = vpop.permute.xlu0 %2574
    %2576 = vrot.lane.b32.xlu0 %v2042, 120
    %v2577 = vpop.permute.xlu0 %2576
    %v2578 = vsel %vm358, %v2573, 0
    %v2580 = vsel %vm358, %v2575, 0
    %v2582 = vsel %vm358, %v2577, 0
    %2584 = vmatprep.subr.mxu0 0.0
    %2585 = vmatpush1.xpose.msra.mxu0 0.0
    %2586 = vmatprep.subr.mxu0 0.0
    %2587 = vmatpush1.xpose.msra.mxu0 0.0
    %2588 = vmatprep.subr.mxu0 0.0
    %2589 = vmatpush1.xpose.msra.mxu0 0.0
    %2590 = vmatprep.subr.mxu0 0.0
    %2591 = vmatpush1.xpose.msra.mxu0 0.0
    %2592 = vmatprep.subr.mxu0 0.0
    %2593 = vmatpush1.xpose.msra.mxu0 0.0
    %2594 = vmatprep.subr.mxu0 0.0
    %2595 = vmatpush1.xpose.msra.mxu0 0.0
    %2596 = vmatprep.subr.mxu0 0.0
    %2597 = vmatpush1.xpose.msra.mxu0 0.0
    %2598 = vmatprep.subr.mxu0 0.0
    %2599 = vmatpush1.xpose.msra.mxu0 0.0
    %2600 = vmatprep.subr.mxu0 0.0
    %2601 = vmatpush1.xpose.msra.mxu0 0.0
    %2602 = vmatprep.subr.mxu0 0.0
    %2603 = vmatpush1.xpose.msra.mxu0 0.0
    %2604 = vmatprep.subr.mxu0 0.0
    %2605 = vmatpush1.xpose.msra.mxu0 0.0
    %2606 = vmatprep.subr.mxu0 0.0
    %2607 = vmatpush1.xpose.msra.mxu0 0.0
    %2608 = vmatprep.subr.mxu0 0.0
    %2609 = vmatpush1.xpose.msra.mxu0 0.0
    %2610 = vmatprep.subr.mxu0 0.0
    %2611 = vmatpush1.xpose.msra.mxu0 0.0
    %2612 = vmatprep.subr.mxu0 0.0
    %2613 = vmatpush1.xpose.msra.mxu0 %v2582
    %2614 = vmatprep.subr.mxu0 0.0
    %2615 = vmatpush1.xpose.msra.mxu0 %v2580
    %2616 = vmatprep.subr.mxu0 0.0
    %2617 = vmatpush2.xpose.msra.mxu0 0.0
    %2618 = vmatprep.subr.mxu0 0.0
    %2619 = vmatpush2.xpose.msra.mxu0 0.0
    %2620 = vmatprep.subr.mxu0 0.0
    %2621 = vmatpush2.xpose.msra.mxu0 0.0
    %2622 = vmatprep.subr.mxu0 0.0
    %2623 = vmatpush2.xpose.msra.mxu0 0.0
    %2624 = vmatprep.subr.mxu0 0.0
    %2625 = vmatpush2.xpose.msra.mxu0 0.0
    %2626 = vmatprep.subr.mxu0 0.0
    %2627 = vmatpush2.xpose.msra.mxu0 0.0
    %2628 = vmatprep.subr.mxu0 0.0
    %2629 = vmatpush2.xpose.msra.mxu0 0.0
    %2630 = vmatprep.subr.mxu0 0.0
    %2631 = vmatpush2.xpose.msra.mxu0 0.0
    %2632 = vmatprep.subr.mxu0 0.0
    %2633 = vmatpush2.xpose.msra.mxu0 0.0
    %2634 = vmatprep.subr.mxu0 0.0
    %2635 = vmatpush2.xpose.msra.mxu0 0.0
    %2636 = vmatprep.subr.mxu0 0.0
    %2637 = vmatpush2.xpose.msra.mxu0 0.0
    %2638 = vmatprep.subr.mxu0 0.0
    %2639 = vmatpush2.xpose.msra.mxu0 0.0
    %2640 = vmatprep.subr.mxu0 0.0
    %2641 = vmatpush2.xpose.msra.mxu0 0.0
    %2642 = vmatprep.subr.mxu0 0.0
    %2643 = vmatpush2.xpose.msra.mxu0 0.0
    %2644 = vmatprep.subr.mxu0 0.0
    %2645 = vmatpush2.xpose.msra.mxu0 0.0
    %2646 = vmatprep.subr.mxu0 0.0
    %2647 = vmatpush2.xpose.msra.mxu0 0.0
    %2648 = vmatprep.mubr.f32.mxu0 0.0
    %2649 = vmatmul.mubr.f32.gmra.mxu0 %v2578
    %v2650 = vpop.f32.mrf.mxu0
    %v2651 = vadd.f32 0.0, %v2650
    %v2652 = vpop.f32.mrf.mxu0
    %2653 = vdwg.mxu0
    %v2654 = vsel %vm1696, %v2569, -inf
    %2655 = vmax.xlane.f32.xlu0 %v2654
    %v2656 = vpop.xlane.xlu0 %2655
    %v2657 = vsel %vm1696, %v2651, -inf
    %2658 = vmax.xlane.f32.xlu0 %v2657
    %v2659 = vpop.xlane.xlu0 %2658
    %v2660 = vsub.f32 %v2569, %v2656
    %v2661 = vsub.f32 %v2651, %v2659
    %v2662 = vmul.f32 %v2660, 1.442695
    %v2663 = vpow.pop %v2662
    %v2664 = vmul.f32 %v2661, 1.442695
    %v2665 = vpow.pop %v2664
    %v2666 = vsel %vm1696, %v2663, 0.0
    %2667 = vadd.xlane.f32.xlu0 %v2666
    %v2668 = vpop.xlane.xlu0 %2667
    %v2669 = vsel %vm1696, %v2665, 0.0
    %2670 = vadd.xlane.f32.xlu0 %v2669
    %v2671 = vpop.xlane.xlu0 %2670
    %v2672 = vrcp.pop %v2668
    %v2673 = vrcp.pop %v2671
    %v2674 = vmul.f32 %v2663, %v2672
    %v2675 = vmul.f32 %v2665, %v2673
    %2678 = vrot.lane.b32.xlu0 %v2139, 120
    %v2679 = vpop.permute.xlu0 %2678
    %2680 = vrot.lane.b32.xlu0 %v2144, 120
    %v2681 = vpop.permute.xlu0 %2680
    %v2685 = vsel %vm1696, %v2674, 0
    %2687 = vmatprep.subr.mxu0 0.0
    %2688 = vmatpush1.msra.mxu0 0.0
    %2689 = vmatprep.subr.mxu0 0.0
    %2690 = vmatpush1.msra.mxu0 0.0
    %2691 = vmatprep.subr.mxu0 0.0
    %2692 = vmatpush1.msra.mxu0 0.0
    %2693 = vmatprep.subr.mxu0 0.0
    %2694 = vmatpush1.msra.mxu0 0.0
    %2695 = vmatprep.subr.mxu0 0.0
    %2696 = vmatpush1.msra.mxu0 0.0
    %2697 = vmatprep.subr.mxu0 0.0
    %2698 = vmatpush1.msra.mxu0 0.0
    %2699 = vmatprep.subr.mxu0 0.0
    %2700 = vmatpush1.msra.mxu0 0.0
    %2701 = vmatprep.subr.mxu0 0.0
    %2702 = vmatpush1.msra.mxu0 0.0
    %2703 = vmatprep.subr.mxu0 0.0
    %2704 = vmatpush1.msra.mxu0 0.0
    %2705 = vmatprep.subr.mxu0 0.0
    %2706 = vmatpush1.msra.mxu0 0.0
    %2707 = vmatprep.subr.mxu0 0.0
    %2708 = vmatpush1.msra.mxu0 0.0
    %2709 = vmatprep.subr.mxu0 0.0
    %2710 = vmatpush1.msra.mxu0 0.0
    %2711 = vmatprep.subr.mxu0 0.0
    %2712 = vmatpush1.msra.mxu0 0.0
    %2713 = vmatprep.subr.mxu0 0.0
    %2714 = vmatpush1.msra.mxu0 0.0
    %2715 = vmatprep.subr.mxu0 0.0
    %2716 = vmatpush1.msra.mxu0 %v2681
    %2717 = vmatprep.subr.mxu0 0.0
    %2718 = vmatpush1.msra.mxu0 %v2679
    %2719 = vmatprep.subr.mxu0 0.0
    %2720 = vmatpush2.msra.mxu0 0.0
    %2721 = vmatprep.subr.mxu0 0.0
    %2722 = vmatpush2.msra.mxu0 0.0
    %2723 = vmatprep.subr.mxu0 0.0
    %2724 = vmatpush2.msra.mxu0 0.0
    %2725 = vmatprep.subr.mxu0 0.0
    %2726 = vmatpush2.msra.mxu0 0.0
    %2727 = vmatprep.subr.mxu0 0.0
    %2728 = vmatpush2.msra.mxu0 0.0
    %2729 = vmatprep.subr.mxu0 0.0
    %2730 = vmatpush2.msra.mxu0 0.0
    %2731 = vmatprep.subr.mxu0 0.0
    %2732 = vmatpush2.msra.mxu0 0.0
    %2733 = vmatprep.subr.mxu0 0.0
    %2734 = vmatpush2.msra.mxu0 0.0
    %2735 = vmatprep.subr.mxu0 0.0
    %2736 = vmatpush2.msra.mxu0 0.0
    %2737 = vmatprep.subr.mxu0 0.0
    %2738 = vmatpush2.msra.mxu0 0.0
    %2739 = vmatprep.subr.mxu0 0.0
    %2740 = vmatpush2.msra.mxu0 0.0
    %2741 = vmatprep.subr.mxu0 0.0
    %2742 = vmatpush2.msra.mxu0 0.0
    %2743 = vmatprep.subr.mxu0 0.0
    %2744 = vmatpush2.msra.mxu0 0.0
    %2745 = vmatprep.subr.mxu0 0.0
    %2746 = vmatpush2.msra.mxu0 0.0
    %2747 = vmatprep.subr.mxu0 0.0
    %2748 = vmatpush2.msra.mxu0 0.0
    %2749 = vmatprep.subr.mxu0 0.0
    %2750 = vmatpush2.msra.mxu0 0.0
    %2751 = vmatprep.mubr.f32.mxu0 0.0
    %2752 = vmatmul.mubr.f32.gmra.mxu0 %v2685
    %v2753 = vpop.f32.mrf.mxu0
    %v2754 = vadd.f32 0.0, %v2753
    %v2755 = vpop.f32.mrf.mxu0
    %2756 = vdwg.mxu0
    %2759 = vrot.lane.b32.xlu0 %v2149, 120
    %v2760 = vpop.permute.xlu0 %2759
    %2761 = vrot.lane.b32.xlu0 %v2154, 120
    %v2762 = vpop.permute.xlu0 %2761
    %v2766 = vsel %vm1696, %v2675, 0
    %2768 = vmatprep.subr.mxu0 0.0
    %2769 = vmatpush1.msra.mxu0 0.0
    %2770 = vmatprep.subr.mxu0 0.0
    %2771 = vmatpush1.msra.mxu0 0.0
    %2772 = vmatprep.subr.mxu0 0.0
    %2773 = vmatpush1.msra.mxu0 0.0
    %2774 = vmatprep.subr.mxu0 0.0
    %2775 = vmatpush1.msra.mxu0 0.0
    %2776 = vmatprep.subr.mxu0 0.0
    %2777 = vmatpush1.msra.mxu0 0.0
    %2778 = vmatprep.subr.mxu0 0.0
    %2779 = vmatpush1.msra.mxu0 0.0
    %2780 = vmatprep.subr.mxu0 0.0
    %2781 = vmatpush1.msra.mxu0 0.0
    %2782 = vmatprep.subr.mxu0 0.0
    %2783 = vmatpush1.msra.mxu0 0.0
    %2784 = vmatprep.subr.mxu0 0.0
    %2785 = vmatpush1.msra.mxu0 0.0
    %2786 = vmatprep.subr.mxu0 0.0
    %2787 = vmatpush1.msra.mxu0 0.0
    %2788 = vmatprep.subr.mxu0 0.0
    %2789 = vmatpush1.msra.mxu0 0.0
    %2790 = vmatprep.subr.mxu0 0.0
    %2791 = vmatpush1.msra.mxu0 0.0
    %2792 = vmatprep.subr.mxu0 0.0
    %2793 = vmatpush1.msra.mxu0 0.0
    %2794 = vmatprep.subr.mxu0 0.0
    %2795 = vmatpush1.msra.mxu0 0.0
    %2796 = vmatprep.subr.mxu0 0.0
    %2797 = vmatpush1.msra.mxu0 %v2762
    %2798 = vmatprep.subr.mxu0 0.0
    %2799 = vmatpush1.msra.mxu0 %v2760
    %2800 = vmatprep.subr.mxu0 0.0
    %2801 = vmatpush2.msra.mxu0 0.0
    %2802 = vmatprep.subr.mxu0 0.0
    %2803 = vmatpush2.msra.mxu0 0.0
    %2804 = vmatprep.subr.mxu0 0.0
    %2805 = vmatpush2.msra.mxu0 0.0
    %2806 = vmatprep.subr.mxu0 0.0
    %2807 = vmatpush2.msra.mxu0 0.0
    %2808 = vmatprep.subr.mxu0 0.0
    %2809 = vmatpush2.msra.mxu0 0.0
    %2810 = vmatprep.subr.mxu0 0.0
    %2811 = vmatpush2.msra.mxu0 0.0
    %2812 = vmatprep.subr.mxu0 0.0
    %2813 = vmatpush2.msra.mxu0 0.0
    %2814 = vmatprep.subr.mxu0 0.0
    %2815 = vmatpush2.msra.mxu0 0.0
    %2816 = vmatprep.subr.mxu0 0.0
    %2817 = vmatpush2.msra.mxu0 0.0
    %2818 = vmatprep.subr.mxu0 0.0
    %2819 = vmatpush2.msra.mxu0 0.0
    %2820 = vmatprep.subr.mxu0 0.0
    %2821 = vmatpush2.msra.mxu0 0.0
    %2822 = vmatprep.subr.mxu0 0.0
    %2823 = vmatpush2.msra.mxu0 0.0
    %2824 = vmatprep.subr.mxu0 0.0
    %2825 = vmatpush2.msra.mxu0 0.0
    %2826 = vmatprep.subr.mxu0 0.0
    %2827 = vmatpush2.msra.mxu0 0.0
    %2828 = vmatprep.subr.mxu0 0.0
    %2829 = vmatpush2.msra.mxu0 0.0
    %2830 = vmatprep.subr.mxu0 0.0
    %2831 = vmatpush2.msra.mxu0 0.0
    %2832 = vmatprep.mubr.f32.mxu0 0.0
    %2833 = vmatmul.mubr.f32.gmra.mxu0 %v2766
    %v2834 = vpop.f32.mrf.mxu0
    %v2835 = vadd.f32 0.0, %v2834
    %v2836 = vpop.f32.mrf.mxu0
    %2837 = vdwg.mxu0
    %2838 = vrot.lane.b32.xlu0 %v1921, 112
    %v2839 = vpop.permute.xlu0 %2838
    %2840 = vrot.lane.b32.xlu0 %v2027, 112
    %v2841 = vpop.permute.xlu0 %2840
    %2842 = vrot.lane.b32.xlu0 %v2032, 112
    %v2843 = vpop.permute.xlu0 %2842
    %v2844 = vsel %vm358, %v2839, 0
    %v2846 = vsel %vm358, %v2841, 0
    %v2848 = vsel %vm358, %v2843, 0
    %2850 = vmatprep.subr.mxu0 0.0
    %2851 = vmatpush1.xpose.msra.mxu0 0.0
    %2852 = vmatprep.subr.mxu0 0.0
    %2853 = vmatpush1.xpose.msra.mxu0 0.0
    %2854 = vmatprep.subr.mxu0 0.0
    %2855 = vmatpush1.xpose.msra.mxu0 0.0
    %2856 = vmatprep.subr.mxu0 0.0
    %2857 = vmatpush1.xpose.msra.mxu0 0.0
    %2858 = vmatprep.subr.mxu0 0.0
    %2859 = vmatpush1.xpose.msra.mxu0 0.0
    %2860 = vmatprep.subr.mxu0 0.0
    %2861 = vmatpush1.xpose.msra.mxu0 0.0
    %2862 = vmatprep.subr.mxu0 0.0
    %2863 = vmatpush1.xpose.msra.mxu0 0.0
    %2864 = vmatprep.subr.mxu0 0.0
    %2865 = vmatpush1.xpose.msra.mxu0 0.0
    %2866 = vmatprep.subr.mxu0 0.0
    %2867 = vmatpush1.xpose.msra.mxu0 0.0
    %2868 = vmatprep.subr.mxu0 0.0
    %2869 = vmatpush1.xpose.msra.mxu0 0.0
    %2870 = vmatprep.subr.mxu0 0.0
    %2871 = vmatpush1.xpose.msra.mxu0 0.0
    %2872 = vmatprep.subr.mxu0 0.0
    %2873 = vmatpush1.xpose.msra.mxu0 0.0
    %2874 = vmatprep.subr.mxu0 0.0
    %2875 = vmatpush1.xpose.msra.mxu0 0.0
    %2876 = vmatprep.subr.mxu0 0.0
    %2877 = vmatpush1.xpose.msra.mxu0 0.0
    %2878 = vmatprep.subr.mxu0 0.0
    %2879 = vmatpush1.xpose.msra.mxu0 %v2848
    %2880 = vmatprep.subr.mxu0 0.0
    %2881 = vmatpush1.xpose.msra.mxu0 %v2846
    %2882 = vmatprep.subr.mxu0 0.0
    %2883 = vmatpush2.xpose.msra.mxu0 0.0
    %2884 = vmatprep.subr.mxu0 0.0
    %2885 = vmatpush2.xpose.msra.mxu0 0.0
    %2886 = vmatprep.subr.mxu0 0.0
    %2887 = vmatpush2.xpose.msra.mxu0 0.0
    %2888 = vmatprep.subr.mxu0 0.0
    %2889 = vmatpush2.xpose.msra.mxu0 0.0
    %2890 = vmatprep.subr.mxu0 0.0
    %2891 = vmatpush2.xpose.msra.mxu0 0.0
    %2892 = vmatprep.subr.mxu0 0.0
    %2893 = vmatpush2.xpose.msra.mxu0 0.0
    %2894 = vmatprep.subr.mxu0 0.0
    %2895 = vmatpush2.xpose.msra.mxu0 0.0
    %2896 = vmatprep.subr.mxu0 0.0
    %2897 = vmatpush2.xpose.msra.mxu0 0.0
    %2898 = vmatprep.subr.mxu0 0.0
    %2899 = vmatpush2.xpose.msra.mxu0 0.0
    %2900 = vmatprep.subr.mxu0 0.0
    %2901 = vmatpush2.xpose.msra.mxu0 0.0
    %2902 = vmatprep.subr.mxu0 0.0
    %2903 = vmatpush2.xpose.msra.mxu0 0.0
    %2904 = vmatprep.subr.mxu0 0.0
    %2905 = vmatpush2.xpose.msra.mxu0 0.0
    %2906 = vmatprep.subr.mxu0 0.0
    %2907 = vmatpush2.xpose.msra.mxu0 0.0
    %2908 = vmatprep.subr.mxu0 0.0
    %2909 = vmatpush2.xpose.msra.mxu0 0.0
    %2910 = vmatprep.subr.mxu0 0.0
    %2911 = vmatpush2.xpose.msra.mxu0 0.0
    %2912 = vmatprep.subr.mxu0 0.0
    %2913 = vmatpush2.xpose.msra.mxu0 0.0
    %2914 = vmatprep.mubr.f32.mxu0 0.0
    %2915 = vmatmul.mubr.f32.gmra.mxu0 %v2844
    %v2916 = vpop.f32.mrf.mxu0
    %v2917 = vadd.f32 0.0, %v2916
    %v2918 = vpop.f32.mrf.mxu0
    %2919 = vdwg.mxu0
    %2920 = vrot.lane.b32.xlu0 %v1926, 112
    %v2921 = vpop.permute.xlu0 %2920
    %2922 = vrot.lane.b32.xlu0 %v2037, 112
    %v2923 = vpop.permute.xlu0 %2922
    %2924 = vrot.lane.b32.xlu0 %v2042, 112
    %v2925 = vpop.permute.xlu0 %2924
    %v2926 = vsel %vm358, %v2921, 0
    %v2928 = vsel %vm358, %v2923, 0
    %v2930 = vsel %vm358, %v2925, 0
    %2932 = vmatprep.subr.mxu0 0.0
    %2933 = vmatpush1.xpose.msra.mxu0 0.0
    %2934 = vmatprep.subr.mxu0 0.0
    %2935 = vmatpush1.xpose.msra.mxu0 0.0
    %2936 = vmatprep.subr.mxu0 0.0
    %2937 = vmatpush1.xpose.msra.mxu0 0.0
    %2938 = vmatprep.subr.mxu0 0.0
    %2939 = vmatpush1.xpose.msra.mxu0 0.0
    %2940 = vmatprep.subr.mxu0 0.0
    %2941 = vmatpush1.xpose.msra.mxu0 0.0
    %2942 = vmatprep.subr.mxu0 0.0
    %2943 = vmatpush1.xpose.msra.mxu0 0.0
    %2944 = vmatprep.subr.mxu0 0.0
    %2945 = vmatpush1.xpose.msra.mxu0 0.0
    %2946 = vmatprep.subr.mxu0 0.0
    %2947 = vmatpush1.xpose.msra.mxu0 0.0
    %2948 = vmatprep.subr.mxu0 0.0
    %2949 = vmatpush1.xpose.msra.mxu0 0.0
    %2950 = vmatprep.subr.mxu0 0.0
    %2951 = vmatpush1.xpose.msra.mxu0 0.0
    %2952 = vmatprep.subr.mxu0 0.0
    %2953 = vmatpush1.xpose.msra.mxu0 0.0
    %2954 = vmatprep.subr.mxu0 0.0
    %2955 = vmatpush1.xpose.msra.mxu0 0.0
    %2956 = vmatprep.subr.mxu0 0.0
    %2957 = vmatpush1.xpose.msra.mxu0 0.0
    %2958 = vmatprep.subr.mxu0 0.0
    %2959 = vmatpush1.xpose.msra.mxu0 0.0
    %2960 = vmatprep.subr.mxu0 0.0
    %2961 = vmatpush1.xpose.msra.mxu0 %v2930
    %2962 = vmatprep.subr.mxu0 0.0
    %2963 = vmatpush1.xpose.msra.mxu0 %v2928
    %2964 = vmatprep.subr.mxu0 0.0
    %2965 = vmatpush2.xpose.msra.mxu0 0.0
    %2966 = vmatprep.subr.mxu0 0.0
    %2967 = vmatpush2.xpose.msra.mxu0 0.0
    %2968 = vmatprep.subr.mxu0 0.0
    %2969 = vmatpush2.xpose.msra.mxu0 0.0
    %2970 = vmatprep.subr.mxu0 0.0
    %2971 = vmatpush2.xpose.msra.mxu0 0.0
    %2972 = vmatprep.subr.mxu0 0.0
    %2973 = vmatpush2.xpose.msra.mxu0 0.0
    %2974 = vmatprep.subr.mxu0 0.0
    %2975 = vmatpush2.xpose.msra.mxu0 0.0
    %2976 = vmatprep.subr.mxu0 0.0
    %2977 = vmatpush2.xpose.msra.mxu0 0.0
    %2978 = vmatprep.subr.mxu0 0.0
    %2979 = vmatpush2.xpose.msra.mxu0 0.0
    %2980 = vmatprep.subr.mxu0 0.0
    %2981 = vmatpush2.xpose.msra.mxu0 0.0
    %2982 = vmatprep.subr.mxu0 0.0
    %2983 = vmatpush2.xpose.msra.mxu0 0.0
    %2984 = vmatprep.subr.mxu0 0.0
    %2985 = vmatpush2.xpose.msra.mxu0 0.0
    %2986 = vmatprep.subr.mxu0 0.0
    %2987 = vmatpush2.xpose.msra.mxu0 0.0
    %2988 = vmatprep.subr.mxu0 0.0
    %2989 = vmatpush2.xpose.msra.mxu0 0.0
    %2990 = vmatprep.subr.mxu0 0.0
    %2991 = vmatpush2.xpose.msra.mxu0 0.0
    %2992 = vmatprep.subr.mxu0 0.0
    %2993 = vmatpush2.xpose.msra.mxu0 0.0
    %2994 = vmatprep.subr.mxu0 0.0
    %2995 = vmatpush2.xpose.msra.mxu0 0.0
    %2996 = vmatprep.mubr.f32.mxu0 0.0
    %2997 = vmatmul.mubr.f32.gmra.mxu0 %v2926
    %v2998 = vpop.f32.mrf.mxu0
    %v2999 = vadd.f32 0.0, %v2998
    %v3000 = vpop.f32.mrf.mxu0
    %3001 = vdwg.mxu0
    %v3002 = vsel %vm1696, %v2917, -inf
    %3003 = vmax.xlane.f32.xlu0 %v3002
    %v3004 = vpop.xlane.xlu0 %3003
    %v3005 = vsel %vm1696, %v2999, -inf
    %3006 = vmax.xlane.f32.xlu0 %v3005
    %v3007 = vpop.xlane.xlu0 %3006
    %v3008 = vsub.f32 %v2917, %v3004
    %v3009 = vsub.f32 %v2999, %v3007
    %v3010 = vmul.f32 %v3008, 1.442695
    %v3011 = vpow.pop %v3010
    %v3012 = vmul.f32 %v3009, 1.442695
    %v3013 = vpow.pop %v3012
    %v3014 = vsel %vm1696, %v3011, 0.0
    %3015 = vadd.xlane.f32.xlu0 %v3014
    %v3016 = vpop.xlane.xlu0 %3015
    %v3017 = vsel %vm1696, %v3013, 0.0
    %3018 = vadd.xlane.f32.xlu0 %v3017
    %v3019 = vpop.xlane.xlu0 %3018
    %v3020 = vrcp.pop %v3016
    %v3021 = vrcp.pop %v3019
    %v3022 = vmul.f32 %v3011, %v3020
    %v3023 = vmul.f32 %v3013, %v3021
    %3024 = vrot.lane.b32.xlu0 %v2139, 112
    %v3025 = vpop.permute.xlu0 %3024
    %3026 = vrot.lane.b32.xlu0 %v2144, 112
    %v3027 = vpop.permute.xlu0 %3026
    %v3031 = vsel %vm1696, %v3022, 0
    %3033 = vmatprep.subr.mxu0 0.0
    %3034 = vmatpush1.msra.mxu0 0.0
    %3035 = vmatprep.subr.mxu0 0.0
    %3036 = vmatpush1.msra.mxu0 0.0
    %3037 = vmatprep.subr.mxu0 0.0
    %3038 = vmatpush1.msra.mxu0 0.0
    %3039 = vmatprep.subr.mxu0 0.0
    %3040 = vmatpush1.msra.mxu0 0.0
    %3041 = vmatprep.subr.mxu0 0.0
    %3042 = vmatpush1.msra.mxu0 0.0
    %3043 = vmatprep.subr.mxu0 0.0
    %3044 = vmatpush1.msra.mxu0 0.0
    %3045 = vmatprep.subr.mxu0 0.0
    %3046 = vmatpush1.msra.mxu0 0.0
    %3047 = vmatprep.subr.mxu0 0.0
    %3048 = vmatpush1.msra.mxu0 0.0
    %3049 = vmatprep.subr.mxu0 0.0
    %3050 = vmatpush1.msra.mxu0 0.0
    %3051 = vmatprep.subr.mxu0 0.0
    %3052 = vmatpush1.msra.mxu0 0.0
    %3053 = vmatprep.subr.mxu0 0.0
    %3054 = vmatpush1.msra.mxu0 0.0
    %3055 = vmatprep.subr.mxu0 0.0
    %3056 = vmatpush1.msra.mxu0 0.0
    %3057 = vmatprep.subr.mxu0 0.0
    %3058 = vmatpush1.msra.mxu0 0.0
    %3059 = vmatprep.subr.mxu0 0.0
    %3060 = vmatpush1.msra.mxu0 0.0
    %3061 = vmatprep.subr.mxu0 0.0
    %3062 = vmatpush1.msra.mxu0 %v3027
    %3063 = vmatprep.subr.mxu0 0.0
    %3064 = vmatpush1.msra.mxu0 %v3025
    %3065 = vmatprep.subr.mxu0 0.0
    %3066 = vmatpush2.msra.mxu0 0.0
    %3067 = vmatprep.subr.mxu0 0.0
    %3068 = vmatpush2.msra.mxu0 0.0
    %3069 = vmatprep.subr.mxu0 0.0
    %3070 = vmatpush2.msra.mxu0 0.0
    %3071 = vmatprep.subr.mxu0 0.0
    %3072 = vmatpush2.msra.mxu0 0.0
    %3073 = vmatprep.subr.mxu0 0.0
    %3074 = vmatpush2.msra.mxu0 0.0
    %3075 = vmatprep.subr.mxu0 0.0
    %3076 = vmatpush2.msra.mxu0 0.0
    %3077 = vmatprep.subr.mxu0 0.0
    %3078 = vmatpush2.msra.mxu0 0.0
    %3079 = vmatprep.subr.mxu0 0.0
    %3080 = vmatpush2.msra.mxu0 0.0
    %3081 = vmatprep.subr.mxu0 0.0
    %3082 = vmatpush2.msra.mxu0 0.0
    %3083 = vmatprep.subr.mxu0 0.0
    %3084 = vmatpush2.msra.mxu0 0.0
    %3085 = vmatprep.subr.mxu0 0.0
    %3086 = vmatpush2.msra.mxu0 0.0
    %3087 = vmatprep.subr.mxu0 0.0
    %3088 = vmatpush2.msra.mxu0 0.0
    %3089 = vmatprep.subr.mxu0 0.0
    %3090 = vmatpush2.msra.mxu0 0.0
    %3091 = vmatprep.subr.mxu0 0.0
    %3092 = vmatpush2.msra.mxu0 0.0
    %3093 = vmatprep.subr.mxu0 0.0
    %3094 = vmatpush2.msra.mxu0 0.0
    %3095 = vmatprep.subr.mxu0 0.0
    %3096 = vmatpush2.msra.mxu0 0.0
    %3097 = vmatprep.mubr.f32.mxu0 0.0
    %3098 = vmatmul.mubr.f32.gmra.mxu0 %v3031
    %v3099 = vpop.f32.mrf.mxu0
    %v3100 = vadd.f32 0.0, %v3099
    %v3101 = vpop.f32.mrf.mxu0
    %3102 = vdwg.mxu0
    %3103 = vrot.lane.b32.xlu0 %v2149, 112
    %v3104 = vpop.permute.xlu0 %3103
    %3105 = vrot.lane.b32.xlu0 %v2154, 112
    %v3106 = vpop.permute.xlu0 %3105
    %v3110 = vsel %vm1696, %v3023, 0
    %3112 = vmatprep.subr.mxu0 0.0
    %3113 = vmatpush1.msra.mxu0 0.0
    %3114 = vmatprep.subr.mxu0 0.0
    %3115 = vmatpush1.msra.mxu0 0.0
    %3116 = vmatprep.subr.mxu0 0.0
    %3117 = vmatpush1.msra.mxu0 0.0
    %3118 = vmatprep.subr.mxu0 0.0
    %3119 = vmatpush1.msra.mxu0 0.0
    %3120 = vmatprep.subr.mxu0 0.0
    %3121 = vmatpush1.msra.mxu0 0.0
    %3122 = vmatprep.subr.mxu0 0.0
    %3123 = vmatpush1.msra.mxu0 0.0
    %3124 = vmatprep.subr.mxu0 0.0
    %3125 = vmatpush1.msra.mxu0 0.0
    %3126 = vmatprep.subr.mxu0 0.0
    %3127 = vmatpush1.msra.mxu0 0.0
    %3128 = vmatprep.subr.mxu0 0.0
    %3129 = vmatpush1.msra.mxu0 0.0
    %3130 = vmatprep.subr.mxu0 0.0
    %3131 = vmatpush1.msra.mxu0 0.0
    %3132 = vmatprep.subr.mxu0 0.0
    %3133 = vmatpush1.msra.mxu0 0.0
    %3134 = vmatprep.subr.mxu0 0.0
    %3135 = vmatpush1.msra.mxu0 0.0
    %3136 = vmatprep.subr.mxu0 0.0
    %3137 = vmatpush1.msra.mxu0 0.0
    %3138 = vmatprep.subr.mxu0 0.0
    %3139 = vmatpush1.msra.mxu0 0.0
    %3140 = vmatprep.subr.mxu0 0.0
    %3141 = vmatpush1.msra.mxu0 %v3106
    %3142 = vmatprep.subr.mxu0 0.0
    %3143 = vmatpush1.msra.mxu0 %v3104
    %3144 = vmatprep.subr.mxu0 0.0
    %3145 = vmatpush2.msra.mxu0 0.0
    %3146 = vmatprep.subr.mxu0 0.0
    %3147 = vmatpush2.msra.mxu0 0.0
    %3148 = vmatprep.subr.mxu0 0.0
    %3149 = vmatpush2.msra.mxu0 0.0
    %3150 = vmatprep.subr.mxu0 0.0
    %3151 = vmatpush2.msra.mxu0 0.0
    %3152 = vmatprep.subr.mxu0 0.0
    %3153 = vmatpush2.msra.mxu0 0.0
    %3154 = vmatprep.subr.mxu0 0.0
    %3155 = vmatpush2.msra.mxu0 0.0
    %3156 = vmatprep.subr.mxu0 0.0
    %3157 = vmatpush2.msra.mxu0 0.0
    %3158 = vmatprep.subr.mxu0 0.0
    %3159 = vmatpush2.msra.mxu0 0.0
    %3160 = vmatprep.subr.mxu0 0.0
    %3161 = vmatpush2.msra.mxu0 0.0
    %3162 = vmatprep.subr.mxu0 0.0
    %3163 = vmatpush2.msra.mxu0 0.0
    %3164 = vmatprep.subr.mxu0 0.0
    %3165 = vmatpush2.msra.mxu0 0.0
    %3166 = vmatprep.subr.mxu0 0.0
    %3167 = vmatpush2.msra.mxu0 0.0
    %3168 = vmatprep.subr.mxu0 0.0
    %3169 = vmatpush2.msra.mxu0 0.0
    %3170 = vmatprep.subr.mxu0 0.0
    %3171 = vmatpush2.msra.mxu0 0.0
    %3172 = vmatprep.subr.mxu0 0.0
    %3173 = vmatpush2.msra.mxu0 0.0
    %3174 = vmatprep.subr.mxu0 0.0
    %3175 = vmatpush2.msra.mxu0 0.0
    %3176 = vmatprep.mubr.f32.mxu0 0.0
    %3177 = vmatmul.mubr.f32.gmra.mxu0 %v3110
    %v3178 = vpop.f32.mrf.mxu0
    %v3179 = vadd.f32 0.0, %v3178
    %v3180 = vpop.f32.mrf.mxu0
    %3181 = vdwg.mxu0
    %3182 = vrot.lane.b32.xlu0 %v1921, 104
    %v3183 = vpop.permute.xlu0 %3182
    %3184 = vrot.lane.b32.xlu0 %v2027, 104
    %v3185 = vpop.permute.xlu0 %3184
    %3186 = vrot.lane.b32.xlu0 %v2032, 104
    %v3187 = vpop.permute.xlu0 %3186
    %v3188 = vsel %vm358, %v3183, 0
    %v3190 = vsel %vm358, %v3185, 0
    %v3192 = vsel %vm358, %v3187, 0
    %3194 = vmatprep.subr.mxu0 0.0
    %3195 = vmatpush1.xpose.msra.mxu0 0.0
    %3196 = vmatprep.subr.mxu0 0.0
    %3197 = vmatpush1.xpose.msra.mxu0 0.0
    %3198 = vmatprep.subr.mxu0 0.0
    %3199 = vmatpush1.xpose.msra.mxu0 0.0
    %3200 = vmatprep.subr.mxu0 0.0
    %3201 = vmatpush1.xpose.msra.mxu0 0.0
    %3202 = vmatprep.subr.mxu0 0.0
    %3203 = vmatpush1.xpose.msra.mxu0 0.0
    %3204 = vmatprep.subr.mxu0 0.0
    %3205 = vmatpush1.xpose.msra.mxu0 0.0
    %3206 = vmatprep.subr.mxu0 0.0
    %3207 = vmatpush1.xpose.msra.mxu0 0.0
    %3208 = vmatprep.subr.mxu0 0.0
    %3209 = vmatpush1.xpose.msra.mxu0 0.0
    %3210 = vmatprep.subr.mxu0 0.0
    %3211 = vmatpush1.xpose.msra.mxu0 0.0
    %3212 = vmatprep.subr.mxu0 0.0
    %3213 = vmatpush1.xpose.msra.mxu0 0.0
    %3214 = vmatprep.subr.mxu0 0.0
    %3215 = vmatpush1.xpose.msra.mxu0 0.0
    %3216 = vmatprep.subr.mxu0 0.0
    %3217 = vmatpush1.xpose.msra.mxu0 0.0
    %3218 = vmatprep.subr.mxu0 0.0
    %3219 = vmatpush1.xpose.msra.mxu0 0.0
    %3220 = vmatprep.subr.mxu0 0.0
    %3221 = vmatpush1.xpose.msra.mxu0 0.0
    %3222 = vmatprep.subr.mxu0 0.0
    %3223 = vmatpush1.xpose.msra.mxu0 %v3192
    %3224 = vmatprep.subr.mxu0 0.0
    %3225 = vmatpush1.xpose.msra.mxu0 %v3190
    %3226 = vmatprep.subr.mxu0 0.0
    %3227 = vmatpush2.xpose.msra.mxu0 0.0
    %3228 = vmatprep.subr.mxu0 0.0
    %3229 = vmatpush2.xpose.msra.mxu0 0.0
    %3230 = vmatprep.subr.mxu0 0.0
    %3231 = vmatpush2.xpose.msra.mxu0 0.0
    %3232 = vmatprep.subr.mxu0 0.0
    %3233 = vmatpush2.xpose.msra.mxu0 0.0
    %3234 = vmatprep.subr.mxu0 0.0
    %3235 = vmatpush2.xpose.msra.mxu0 0.0
    %3236 = vmatprep.subr.mxu0 0.0
    %3237 = vmatpush2.xpose.msra.mxu0 0.0
    %3238 = vmatprep.subr.mxu0 0.0
    %3239 = vmatpush2.xpose.msra.mxu0 0.0
    %3240 = vmatprep.subr.mxu0 0.0
    %3241 = vmatpush2.xpose.msra.mxu0 0.0
    %3242 = vmatprep.subr.mxu0 0.0
    %3243 = vmatpush2.xpose.msra.mxu0 0.0
    %3244 = vmatprep.subr.mxu0 0.0
    %3245 = vmatpush2.xpose.msra.mxu0 0.0
    %3246 = vmatprep.subr.mxu0 0.0
    %3247 = vmatpush2.xpose.msra.mxu0 0.0
    %3248 = vmatprep.subr.mxu0 0.0
    %3249 = vmatpush2.xpose.msra.mxu0 0.0
    %3250 = vmatprep.subr.mxu0 0.0
    %3251 = vmatpush2.xpose.msra.mxu0 0.0
    %3252 = vmatprep.subr.mxu0 0.0
    %3253 = vmatpush2.xpose.msra.mxu0 0.0
    %3254 = vmatprep.subr.mxu0 0.0
    %3255 = vmatpush2.xpose.msra.mxu0 0.0
    %3256 = vmatprep.subr.mxu0 0.0
    %3257 = vmatpush2.xpose.msra.mxu0 0.0
    %3258 = vmatprep.mubr.f32.mxu0 0.0
    %3259 = vmatmul.mubr.f32.gmra.mxu0 %v3188
    %v3260 = vpop.f32.mrf.mxu0
    %v3261 = vadd.f32 0.0, %v3260
    %v3262 = vpop.f32.mrf.mxu0
    %3263 = vdwg.mxu0
    %3264 = vrot.lane.b32.xlu0 %v1926, 104
    %v3265 = vpop.permute.xlu0 %3264
    %3266 = vrot.lane.b32.xlu0 %v2037, 104
    %v3267 = vpop.permute.xlu0 %3266
    %3268 = vrot.lane.b32.xlu0 %v2042, 104
    %v3269 = vpop.permute.xlu0 %3268
    %v3270 = vsel %vm358, %v3265, 0
    %v3272 = vsel %vm358, %v3267, 0
    %v3274 = vsel %vm358, %v3269, 0
    %3276 = vmatprep.subr.mxu0 0.0
    %3277 = vmatpush1.xpose.msra.mxu0 0.0
    %3278 = vmatprep.subr.mxu0 0.0
    %3279 = vmatpush1.xpose.msra.mxu0 0.0
    %3280 = vmatprep.subr.mxu0 0.0
    %3281 = vmatpush1.xpose.msra.mxu0 0.0
    %3282 = vmatprep.subr.mxu0 0.0
    %3283 = vmatpush1.xpose.msra.mxu0 0.0
    %3284 = vmatprep.subr.mxu0 0.0
    %3285 = vmatpush1.xpose.msra.mxu0 0.0
    %3286 = vmatprep.subr.mxu0 0.0
    %3287 = vmatpush1.xpose.msra.mxu0 0.0
    %3288 = vmatprep.subr.mxu0 0.0
    %3289 = vmatpush1.xpose.msra.mxu0 0.0
    %3290 = vmatprep.subr.mxu0 0.0
    %3291 = vmatpush1.xpose.msra.mxu0 0.0
    %3292 = vmatprep.subr.mxu0 0.0
    %3293 = vmatpush1.xpose.msra.mxu0 0.0
    %3294 = vmatprep.subr.mxu0 0.0
    %3295 = vmatpush1.xpose.msra.mxu0 0.0
    %3296 = vmatprep.subr.mxu0 0.0
    %3297 = vmatpush1.xpose.msra.mxu0 0.0
    %3298 = vmatprep.subr.mxu0 0.0
    %3299 = vmatpush1.xpose.msra.mxu0 0.0
    %3300 = vmatprep.subr.mxu0 0.0
    %3301 = vmatpush1.xpose.msra.mxu0 0.0
    %3302 = vmatprep.subr.mxu0 0.0
    %3303 = vmatpush1.xpose.msra.mxu0 0.0
    %3304 = vmatprep.subr.mxu0 0.0
    %3305 = vmatpush1.xpose.msra.mxu0 %v3274
    %3306 = vmatprep.subr.mxu0 0.0
    %3307 = vmatpush1.xpose.msra.mxu0 %v3272
    %3308 = vmatprep.subr.mxu0 0.0
    %3309 = vmatpush2.xpose.msra.mxu0 0.0
    %3310 = vmatprep.subr.mxu0 0.0
    %3311 = vmatpush2.xpose.msra.mxu0 0.0
    %3312 = vmatprep.subr.mxu0 0.0
    %3313 = vmatpush2.xpose.msra.mxu0 0.0
    %3314 = vmatprep.subr.mxu0 0.0
    %3315 = vmatpush2.xpose.msra.mxu0 0.0
    %3316 = vmatprep.subr.mxu0 0.0
    %3317 = vmatpush2.xpose.msra.mxu0 0.0
    %3318 = vmatprep.subr.mxu0 0.0
    %3319 = vmatpush2.xpose.msra.mxu0 0.0
    %3320 = vmatprep.subr.mxu0 0.0
    %3321 = vmatpush2.xpose.msra.mxu0 0.0
    %3322 = vmatprep.subr.mxu0 0.0
    %3323 = vmatpush2.xpose.msra.mxu0 0.0
    %3324 = vmatprep.subr.mxu0 0.0
    %3325 = vmatpush2.xpose.msra.mxu0 0.0
    %3326 = vmatprep.subr.mxu0 0.0
    %3327 = vmatpush2.xpose.msra.mxu0 0.0
    %3328 = vmatprep.subr.mxu0 0.0
    %3329 = vmatpush2.xpose.msra.mxu0 0.0
    %3330 = vmatprep.subr.mxu0 0.0
    %3331 = vmatpush2.xpose.msra.mxu0 0.0
    %3332 = vmatprep.subr.mxu0 0.0
    %3333 = vmatpush2.xpose.msra.mxu0 0.0
    %3334 = vmatprep.subr.mxu0 0.0
    %3335 = vmatpush2.xpose.msra.mxu0 0.0
    %3336 = vmatprep.subr.mxu0 0.0
    %3337 = vmatpush2.xpose.msra.mxu0 0.0
    %3338 = vmatprep.subr.mxu0 0.0
    %3339 = vmatpush2.xpose.msra.mxu0 0.0
    %3340 = vmatprep.mubr.f32.mxu0 0.0
    %3341 = vmatmul.mubr.f32.gmra.mxu0 %v3270
    %v3342 = vpop.f32.mrf.mxu0
    %v3343 = vadd.f32 0.0, %v3342
    %v3344 = vpop.f32.mrf.mxu0
    %3345 = vdwg.mxu0
    %v3346 = vsel %vm1696, %v3261, -inf
    %3347 = vmax.xlane.f32.xlu0 %v3346
    %v3348 = vpop.xlane.xlu0 %3347
    %v3349 = vsel %vm1696, %v3343, -inf
    %3350 = vmax.xlane.f32.xlu0 %v3349
    %v3351 = vpop.xlane.xlu0 %3350
    %v3352 = vsub.f32 %v3261, %v3348
    %v3353 = vsub.f32 %v3343, %v3351
    %v3354 = vmul.f32 %v3352, 1.442695
    %v3355 = vpow.pop %v3354
    %v3356 = vmul.f32 %v3353, 1.442695
    %v3357 = vpow.pop %v3356
    %v3358 = vsel %vm1696, %v3355, 0.0
    %3359 = vadd.xlane.f32.xlu0 %v3358
    %v3360 = vpop.xlane.xlu0 %3359
    %v3361 = vsel %vm1696, %v3357, 0.0
    %3362 = vadd.xlane.f32.xlu0 %v3361
    %v3363 = vpop.xlane.xlu0 %3362
    %v3364 = vrcp.pop %v3360
    %v3365 = vrcp.pop %v3363
    %v3366 = vmul.f32 %v3355, %v3364
    %v3367 = vmul.f32 %v3357, %v3365
    %3368 = vrot.lane.b32.xlu0 %v2139, 104
    %v3369 = vpop.permute.xlu0 %3368
    %3370 = vrot.lane.b32.xlu0 %v2144, 104
    %v3371 = vpop.permute.xlu0 %3370
    %v3375 = vsel %vm1696, %v3366, 0
    %3377 = vmatprep.subr.mxu0 0.0
    %3378 = vmatpush1.msra.mxu0 0.0
    %3379 = vmatprep.subr.mxu0 0.0
    %3380 = vmatpush1.msra.mxu0 0.0
    %3381 = vmatprep.subr.mxu0 0.0
    %3382 = vmatpush1.msra.mxu0 0.0
    %3383 = vmatprep.subr.mxu0 0.0
    %3384 = vmatpush1.msra.mxu0 0.0
    %3385 = vmatprep.subr.mxu0 0.0
    %3386 = vmatpush1.msra.mxu0 0.0
    %3387 = vmatprep.subr.mxu0 0.0
    %3388 = vmatpush1.msra.mxu0 0.0
    %3389 = vmatprep.subr.mxu0 0.0
    %3390 = vmatpush1.msra.mxu0 0.0
    %3391 = vmatprep.subr.mxu0 0.0
    %3392 = vmatpush1.msra.mxu0 0.0
    %3393 = vmatprep.subr.mxu0 0.0
    %3394 = vmatpush1.msra.mxu0 0.0
    %3395 = vmatprep.subr.mxu0 0.0
    %3396 = vmatpush1.msra.mxu0 0.0
    %3397 = vmatprep.subr.mxu0 0.0
    %3398 = vmatpush1.msra.mxu0 0.0
    %3399 = vmatprep.subr.mxu0 0.0
    %3400 = vmatpush1.msra.mxu0 0.0
    %3401 = vmatprep.subr.mxu0 0.0
    %3402 = vmatpush1.msra.mxu0 0.0
    %3403 = vmatprep.subr.mxu0 0.0
    %3404 = vmatpush1.msra.mxu0 0.0
    %3405 = vmatprep.subr.mxu0 0.0
    %3406 = vmatpush1.msra.mxu0 %v3371
    %3407 = vmatprep.subr.mxu0 0.0
    %3408 = vmatpush1.msra.mxu0 %v3369
    %3409 = vmatprep.subr.mxu0 0.0
    %3410 = vmatpush2.msra.mxu0 0.0
    %3411 = vmatprep.subr.mxu0 0.0
    %3412 = vmatpush2.msra.mxu0 0.0
    %3413 = vmatprep.subr.mxu0 0.0
    %3414 = vmatpush2.msra.mxu0 0.0
    %3415 = vmatprep.subr.mxu0 0.0
    %3416 = vmatpush2.msra.mxu0 0.0
    %3417 = vmatprep.subr.mxu0 0.0
    %3418 = vmatpush2.msra.mxu0 0.0
    %3419 = vmatprep.subr.mxu0 0.0
    %3420 = vmatpush2.msra.mxu0 0.0
    %3421 = vmatprep.subr.mxu0 0.0
    %3422 = vmatpush2.msra.mxu0 0.0
    %3423 = vmatprep.subr.mxu0 0.0
    %3424 = vmatpush2.msra.mxu0 0.0
    %3425 = vmatprep.subr.mxu0 0.0
    %3426 = vmatpush2.msra.mxu0 0.0
    %3427 = vmatprep.subr.mxu0 0.0
    %3428 = vmatpush2.msra.mxu0 0.0
    %3429 = vmatprep.subr.mxu0 0.0
    %3430 = vmatpush2.msra.mxu0 0.0
    %3431 = vmatprep.subr.mxu0 0.0
    %3432 = vmatpush2.msra.mxu0 0.0
    %3433 = vmatprep.subr.mxu0 0.0
    %3434 = vmatpush2.msra.mxu0 0.0
    %3435 = vmatprep.subr.mxu0 0.0
    %3436 = vmatpush2.msra.mxu0 0.0
    %3437 = vmatprep.subr.mxu0 0.0
    %3438 = vmatpush2.msra.mxu0 0.0
    %3439 = vmatprep.subr.mxu0 0.0
    %3440 = vmatpush2.msra.mxu0 0.0
    %3441 = vmatprep.mubr.f32.mxu0 0.0
    %3442 = vmatmul.mubr.f32.gmra.mxu0 %v3375
    %v3443 = vpop.f32.mrf.mxu0
    %v3444 = vadd.f32 0.0, %v3443
    %v3445 = vpop.f32.mrf.mxu0
    %3446 = vdwg.mxu0
    %3447 = vrot.lane.b32.xlu0 %v2149, 104
    %v3448 = vpop.permute.xlu0 %3447
    %3449 = vrot.lane.b32.xlu0 %v2154, 104
    %v3450 = vpop.permute.xlu0 %3449
    %v3454 = vsel %vm1696, %v3367, 0
    %3456 = vmatprep.subr.mxu0 0.0
    %3457 = vmatpush1.msra.mxu0 0.0
    %3458 = vmatprep.subr.mxu0 0.0
    %3459 = vmatpush1.msra.mxu0 0.0
    %3460 = vmatprep.subr.mxu0 0.0
    %3461 = vmatpush1.msra.mxu0 0.0
    %3462 = vmatprep.subr.mxu0 0.0
    %3463 = vmatpush1.msra.mxu0 0.0
    %3464 = vmatprep.subr.mxu0 0.0
    %3465 = vmatpush1.msra.mxu0 0.0
    %3466 = vmatprep.subr.mxu0 0.0
    %3467 = vmatpush1.msra.mxu0 0.0
    %3468 = vmatprep.subr.mxu0 0.0
    %3469 = vmatpush1.msra.mxu0 0.0
    %3470 = vmatprep.subr.mxu0 0.0
    %3471 = vmatpush1.msra.mxu0 0.0
    %3472 = vmatprep.subr.mxu0 0.0
    %3473 = vmatpush1.msra.mxu0 0.0
    %3474 = vmatprep.subr.mxu0 0.0
    %3475 = vmatpush1.msra.mxu0 0.0
    %3476 = vmatprep.subr.mxu0 0.0
    %3477 = vmatpush1.msra.mxu0 0.0
    %3478 = vmatprep.subr.mxu0 0.0
    %3479 = vmatpush1.msra.mxu0 0.0
    %3480 = vmatprep.subr.mxu0 0.0
    %3481 = vmatpush1.msra.mxu0 0.0
    %3482 = vmatprep.subr.mxu0 0.0
    %3483 = vmatpush1.msra.mxu0 0.0
    %3484 = vmatprep.subr.mxu0 0.0
    %3485 = vmatpush1.msra.mxu0 %v3450
    %3486 = vmatprep.subr.mxu0 0.0
    %3487 = vmatpush1.msra.mxu0 %v3448
    %3488 = vmatprep.subr.mxu0 0.0
    %3489 = vmatpush2.msra.mxu0 0.0
    %3490 = vmatprep.subr.mxu0 0.0
    %3491 = vmatpush2.msra.mxu0 0.0
    %3492 = vmatprep.subr.mxu0 0.0
    %3493 = vmatpush2.msra.mxu0 0.0
    %3494 = vmatprep.subr.mxu0 0.0
    %3495 = vmatpush2.msra.mxu0 0.0
    %3496 = vmatprep.subr.mxu0 0.0
    %3497 = vmatpush2.msra.mxu0 0.0
    %3498 = vmatprep.subr.mxu0 0.0
    %3499 = vmatpush2.msra.mxu0 0.0
    %3500 = vmatprep.subr.mxu0 0.0
    %3501 = vmatpush2.msra.mxu0 0.0
    %3502 = vmatprep.subr.mxu0 0.0
    %3503 = vmatpush2.msra.mxu0 0.0
    %3504 = vmatprep.subr.mxu0 0.0
    %3505 = vmatpush2.msra.mxu0 0.0
    %3506 = vmatprep.subr.mxu0 0.0
    %3507 = vmatpush2.msra.mxu0 0.0
    %3508 = vmatprep.subr.mxu0 0.0
    %3509 = vmatpush2.msra.mxu0 0.0
    %3510 = vmatprep.subr.mxu0 0.0
    %3511 = vmatpush2.msra.mxu0 0.0
    %3512 = vmatprep.subr.mxu0 0.0
    %3513 = vmatpush2.msra.mxu0 0.0
    %3514 = vmatprep.subr.mxu0 0.0
    %3515 = vmatpush2.msra.mxu0 0.0
    %3516 = vmatprep.subr.mxu0 0.0
    %3517 = vmatpush2.msra.mxu0 0.0
    %3518 = vmatprep.subr.mxu0 0.0
    %3519 = vmatpush2.msra.mxu0 0.0
    %3520 = vmatprep.mubr.f32.mxu0 0.0
    %3521 = vmatmul.mubr.f32.gmra.mxu0 %v3454
    %v3522 = vpop.f32.mrf.mxu0
    %v3523 = vadd.f32 0.0, %v3522
    %v3524 = vpop.f32.mrf.mxu0
    %3525 = vdwg.mxu0
    %3528 = vrot.lane.b32.xlu0 %v2754, 8
    %v3529 = vpop.permute.xlu0 %3528
    %3530 = vrot.lane.b32.xlu0 %v2835, 8
    %v3531 = vpop.permute.xlu0 %3530
    %3536 = vrot.lane.b32.xlu0 %v3100, 16
    %v3537 = vpop.permute.xlu0 %3536
    %3538 = vrot.lane.b32.xlu0 %v3179, 16
    %v3539 = vpop.permute.xlu0 %3538
    %3544 = vrot.lane.b32.xlu0 %v3444, 24
    %v3545 = vpop.permute.xlu0 %3544
    %3546 = vrot.lane.b32.xlu0 %v3523, 24
    %v3547 = vpop.permute.xlu0 %3546
    %v3550 = vsel %vm358, %v2414, %v3529
    %v3551 = vsel %vm358, %v2487, %v3531
    %v3552 = vsel %vm1696, %v3550, %v3537
    %v3553 = vsel %vm1696, %v3551, %v3539
    %v3554 = vsel %vm1699, %v3552, %v3545
    %v3555 = vsel %vm1699, %v3553, %v3547
    %v3557 = vlaneseq
    %v3558 = vshrl.u32 %v3557, 7
    %v3559 = vsub.s32 0, %v3558
    %v3560 = vrot.slane %v2163, %v3559
    %v3563 = vsel %vm168, %v3554, 0
    %v3566 = vsel %vm168, %v3555, 0
    %3568 = vmatprep.subr.mxu0 0.0
    %3569 = vmatpush1.msra.mxu0 0.0
    %3570 = vmatprep.subr.mxu0 0.0
    %3571 = vmatpush1.msra.mxu0 0.0
    %3572 = vmatprep.subr.mxu0 0.0
    %3573 = vmatpush1.msra.mxu0 0.0
    %3574 = vmatprep.subr.mxu0 0.0
    %3575 = vmatpush1.msra.mxu0 0.0
    %3576 = vmatprep.subr.mxu0 0.0
    %3577 = vmatpush1.msra.mxu0 0.0
    %3578 = vmatprep.subr.mxu0 0.0
    %3579 = vmatpush1.msra.mxu0 0.0
    %3580 = vmatprep.subr.mxu0 0.0
    %3581 = vmatpush1.msra.mxu0 0.0
    %3582 = vmatprep.subr.mxu0 0.0
    %3583 = vmatpush1.msra.mxu0 0.0
    %3584 = vmatprep.subr.mxu0 0.0
    %3585 = vmatpush1.msra.mxu0 0.0
    %3586 = vmatprep.subr.mxu0 0.0
    %3587 = vmatpush1.msra.mxu0 0.0
    %3588 = vmatprep.subr.mxu0 0.0
    %3589 = vmatpush1.msra.mxu0 0.0
    %3590 = vmatprep.subr.mxu0 0.0
    %3591 = vmatpush1.msra.mxu0 0.0
    %3592 = vmatprep.subr.mxu0 0.0
    %3593 = vmatpush1.msra.mxu0 %v2161
    %3594 = vmatprep.subr.mxu0 0.0
    %3595 = vmatpush1.msra.mxu0 %v2160
    %3596 = vmatprep.subr.mxu0 0.0
    %3597 = vmatpush1.msra.mxu0 %v2159
    %3598 = vmatprep.subr.mxu0 0.0
    %3599 = vmatpush1.msra.mxu0 %v2158
    %3600 = vmatprep.subr.mxu0 0.0
    %3601 = vmatpush2.msra.mxu0 0.0
    %3602 = vmatprep.subr.mxu0 0.0
    %3603 = vmatpush2.msra.mxu0 0.0
    %3604 = vmatprep.subr.mxu0 0.0
    %3605 = vmatpush2.msra.mxu0 0.0
    %3606 = vmatprep.subr.mxu0 0.0
    %3607 = vmatpush2.msra.mxu0 0.0
    %3608 = vmatprep.subr.mxu0 0.0
    %3609 = vmatpush2.msra.mxu0 0.0
    %3610 = vmatprep.subr.mxu0 0.0
    %3611 = vmatpush2.msra.mxu0 0.0
    %3612 = vmatprep.subr.mxu0 0.0
    %3613 = vmatpush2.msra.mxu0 0.0
    %3614 = vmatprep.subr.mxu0 0.0
    %3615 = vmatpush2.msra.mxu0 0.0
    %3616 = vmatprep.subr.mxu0 0.0
    %3617 = vmatpush2.msra.mxu0 0.0
    %3618 = vmatprep.subr.mxu0 0.0
    %3619 = vmatpush2.msra.mxu0 0.0
    %3620 = vmatprep.subr.mxu0 0.0
    %3621 = vmatpush2.msra.mxu0 0.0
    %3622 = vmatprep.subr.mxu0 0.0
    %3623 = vmatpush2.msra.mxu0 0.0
    %3624 = vmatprep.subr.mxu0 0.0
    %3625 = vmatpush2.msra.mxu0 0.0
    %3626 = vmatprep.subr.mxu0 0.0
    %3627 = vmatpush2.msra.mxu0 0.0
    %3628 = vmatprep.subr.mxu0 0.0
    %3629 = vmatpush2.msra.mxu0 0.0
    %3630 = vmatprep.subr.mxu0 0.0
    %3631 = vmatpush2.msra.mxu0 0.0
    %3632 = vmatprep.mubr.f32.mxu0 0.0
    %3633 = vmatmul.mubr.f32.gmra.mxu0 %v3563
    %v3634 = vpop.f32.mrf.mxu0
    %v3635 = vadd.f32 %v3560, %v3634
    %v3636 = vpop.f32.mrf.mxu0
    %3637 = vmatprep.mubr.f32.mxu0 0.0
    %3638 = vmatmul.mubr.f32.gmra.mxu0 %v3566
    %v3639 = vpop.f32.mrf.mxu0
    %v3640 = vadd.f32 %v3560, %v3639
    %v3641 = vpop.f32.mrf.mxu0
    %3642 = vdwg.mxu0
    %v3643 = vadd.f32 %v1831, %v3635
    %v3644 = vadd.f32 %v1832, %v3640
    %v3645 = vmul.f32 %v3643, %v3643
    %v3646 = vmul.f32 %v3644, %v3644
    %v3647 = vsel %vm168, %v3643, 0.0
    %3648 = vadd.xlane.f32.xlu0 %v3647
    %v3649 = vpop.xlane.xlu0 %3648
    %v3650 = vsel %vm168, %v3644, 0.0
    %3651 = vadd.xlane.f32.xlu0 %v3650
    %v3652 = vpop.xlane.xlu0 %3651
    %v3653 = vsel %vm168, %v3645, 0.0
    %3654 = vadd.xlane.f32.xlu0 %v3653
    %v3655 = vpop.xlane.xlu0 %3654
    %v3656 = vsel %vm168, %v3646, 0.0
    %3657 = vadd.xlane.f32.xlu0 %v3656
    %v3658 = vpop.xlane.xlu0 %3657
    %v3659 = vmul.f32 %v3649, 0.03125
    %v3660 = vmul.f32 %v3652, 0.03125
    %v3661 = vmul.f32 %v3655, 0.03125
    %v3662 = vmul.f32 %v3658, 0.03125
    %v3663 = vmul.f32 %v3659, %v3659
    %v3664 = vmul.f32 %v3660, %v3660
    %v3665 = vsub.f32 %v3661, %v3663
    %v3666 = vsub.f32 %v3662, %v3664
    %v3667 = vsub.f32 %v3643, %v3659
    %v3668 = vsub.f32 %v3644, %v3660
    %v3669 = vadd.f32 %v3665, 1e-05
    %v3670 = vadd.f32 %v3666, 1e-05
    %v3671 = vrsqrt.pop %v3669
    %v3672 = vrsqrt.pop %v3670
    %v3673 = vmul.f32 %v3667, %v3671
    %v3674 = vmul.f32 %v3668, %v3672
    %v3675 = vlaneseq
    %v3676 = vshrl.u32 %v3675, 7
    %v3677 = vsub.s32 2, %v3676
    %v3678 = vrot.slane %v154, %v3677
    %v3679 = vmul.f32 %v3673, %v3678
    %v3680 = vmul.f32 %v3674, %v3678
    %v3681 = vlaneseq
    %v3682 = vshrl.u32 %v3681, 7
    %v3683 = vsub.s32 3, %v3682
    %v3684 = vrot.slane %v154, %v3683
    %v3685 = vadd.f32 %v3679, %v3684
    %v3686 = vadd.f32 %v3680, %v3684
    %v3687 = vld [vmem:[#allocation11] sm:$0x1]
    %v3688 = vld [vmem:[%s8] sm:$0xff]
    %v3689 = vld [vmem:[%s8 + $0x8] sm:$0xff]
    %v3690 = vld [vmem:[%s8 + $0x10] sm:$0xff]
    %v3691 = vld [vmem:[%s8 + $0x18] sm:$0xff]
    %v3693 = vlaneseq
    %v3694 = vshrl.u32 %v3693, 7
    %v3695 = vsub.s32 0, %v3694
    %v3696 = vrot.slane %v3687, %v3695
    %v3699 = vsel %vm168, %v3685, 0
    %v3702 = vsel %vm168, %v3686, 0
    %3704 = vmatprep.subr.mxu0 0.0
    %3705 = vmatpush1.msra.mxu0 0.0
    %3706 = vmatprep.subr.mxu0 0.0
    %3707 = vmatpush1.msra.mxu0 0.0
    %3708 = vmatprep.subr.mxu0 0.0
    %3709 = vmatpush1.msra.mxu0 0.0
    %3710 = vmatprep.subr.mxu0 0.0
    %3711 = vmatpush1.msra.mxu0 0.0
    %3712 = vmatprep.subr.mxu0 0.0
    %3713 = vmatpush1.msra.mxu0 0.0
    %3714 = vmatprep.subr.mxu0 0.0
    %3715 = vmatpush1.msra.mxu0 0.0
    %3716 = vmatprep.subr.mxu0 0.0
    %3717 = vmatpush1.msra.mxu0 0.0
    %3718 = vmatprep.subr.mxu0 0.0
    %3719 = vmatpush1.msra.mxu0 0.0
    %3720 = vmatprep.subr.mxu0 0.0
    %3721 = vmatpush1.msra.mxu0 0.0
    %3722 = vmatprep.subr.mxu0 0.0
    %3723 = vmatpush1.msra.mxu0 0.0
    %3724 = vmatprep.subr.mxu0 0.0
    %3725 = vmatpush1.msra.mxu0 0.0
    %3726 = vmatprep.subr.mxu0 0.0
    %3727 = vmatpush1.msra.mxu0 0.0
    %3728 = vmatprep.subr.mxu0 0.0
    %3729 = vmatpush1.msra.mxu0 %v3691
    %3730 = vmatprep.subr.mxu0 0.0
    %3731 = vmatpush1.msra.mxu0 %v3690
    %3732 = vmatprep.subr.mxu0 0.0
    %3733 = vmatpush1.msra.mxu0 %v3689
    %3734 = vmatprep.subr.mxu0 0.0
    %3735 = vmatpush1.msra.mxu0 %v3688
    %3736 = vmatprep.subr.mxu0 0.0
    %3737 = vmatpush2.msra.mxu0 0.0
    %3738 = vmatprep.subr.mxu0 0.0
    %3739 = vmatpush2.msra.mxu0 0.0
    %3740 = vmatprep.subr.mxu0 0.0
    %3741 = vmatpush2.msra.mxu0 0.0
    %3742 = vmatprep.subr.mxu0 0.0
    %3743 = vmatpush2.msra.mxu0 0.0
    %3744 = vmatprep.subr.mxu0 0.0
    %3745 = vmatpush2.msra.mxu0 0.0
    %3746 = vmatprep.subr.mxu0 0.0
    %3747 = vmatpush2.msra.mxu0 0.0
    %3748 = vmatprep.subr.mxu0 0.0
    %3749 = vmatpush2.msra.mxu0 0.0
    %3750 = vmatprep.subr.mxu0 0.0
    %3751 = vmatpush2.msra.mxu0 0.0
    %3752 = vmatprep.subr.mxu0 0.0
    %3753 = vmatpush2.msra.mxu0 0.0
    %3754 = vmatprep.subr.mxu0 0.0
    %3755 = vmatpush2.msra.mxu0 0.0
    %3756 = vmatprep.subr.mxu0 0.0
    %3757 = vmatpush2.msra.mxu0 0.0
    %3758 = vmatprep.subr.mxu0 0.0
    %3759 = vmatpush2.msra.mxu0 0.0
    %3760 = vmatprep.subr.mxu0 0.0
    %3761 = vmatpush2.msra.mxu0 0.0
    %3762 = vmatprep.subr.mxu0 0.0
    %3763 = vmatpush2.msra.mxu0 0.0
    %3764 = vmatprep.subr.mxu0 0.0
    %3765 = vmatpush2.msra.mxu0 0.0
    %3766 = vmatprep.subr.mxu0 0.0
    %3767 = vmatpush2.msra.mxu0 0.0
    %3768 = vmatprep.mubr.f32.mxu0 0.0
    %3769 = vmatmul.mubr.f32.gmra.mxu0 %v3699
    %v3770 = vpop.f32.mrf.mxu0
    %v3771 = vadd.f32 %v3696, %v3770
    %v3772 = vpop.f32.mrf.mxu0
    %3773 = vmatprep.mubr.f32.mxu0 0.0
    %3774 = vmatmul.mubr.f32.gmra.mxu0 %v3702
    %v3775 = vpop.f32.mrf.mxu0
    %v3776 = vadd.f32 %v3696, %v3775
    %v3777 = vpop.f32.mrf.mxu0
    %3778 = vdwg.mxu0
    %v3779 = vmax.f32 %v3771, 0.0
    %v3780 = vmax.f32 %v3776, 0.0
    %v3781 = vld [vmem:[%s9] sm:$0xff]
    %v3782 = vld [vmem:[%s9 + $0x8] sm:$0xff]
    %v3783 = vld [vmem:[%s9 + $0x10] sm:$0xff]
    %v3784 = vld [vmem:[%s9 + $0x18] sm:$0xff]
    %v3785 = vld [vmem:[%s9 + $0x20] sm:$0xff]
    %v3786 = vld [vmem:[%s9 + $0x28] sm:$0xff]
    %v3787 = vld [vmem:[%s9 + $0x30] sm:$0xff]
    %v3788 = vld [vmem:[%s9 + $0x38] sm:$0xff]
    %3789 = vrot.lane.b32.xlu0 %v3696, 64
    %v3790 = vpop.permute.xlu0 %3789
    %vm3792 = vcmask 523264
    %v3794 = vsel %vm3792, %v3779, 0
    %v3797 = vsel %vm3792, %v3780, 0
    %3799 = vmatprep.subr.mxu0 0.0
    %3800 = vmatpush1.msra.mxu0 0.0
    %3801 = vmatprep.subr.mxu0 0.0
    %3802 = vmatpush1.msra.mxu0 0.0
    %3803 = vmatprep.subr.mxu0 0.0
    %3804 = vmatpush1.msra.mxu0 0.0
    %3805 = vmatprep.subr.mxu0 0.0
    %3806 = vmatpush1.msra.mxu0 0.0
    %3807 = vmatprep.subr.mxu0 0.0
    %3808 = vmatpush1.msra.mxu0 0.0
    %3809 = vmatprep.subr.mxu0 0.0
    %3810 = vmatpush1.msra.mxu0 0.0
    %3811 = vmatprep.subr.mxu0 0.0
    %3812 = vmatpush1.msra.mxu0 0.0
    %3813 = vmatprep.subr.mxu0 0.0
    %3814 = vmatpush1.msra.mxu0 0.0
    %3815 = vmatprep.subr.mxu0 0.0
    %3816 = vmatpush1.msra.mxu0 %v3788
    %3817 = vmatprep.subr.mxu0 0.0
    %3818 = vmatpush1.msra.mxu0 %v3787
    %3819 = vmatprep.subr.mxu0 0.0
    %3820 = vmatpush1.msra.mxu0 %v3786
    %3821 = vmatprep.subr.mxu0 0.0
    %3822 = vmatpush1.msra.mxu0 %v3785
    %3823 = vmatprep.subr.mxu0 0.0
    %3824 = vmatpush1.msra.mxu0 %v3784
    %3825 = vmatprep.subr.mxu0 0.0
    %3826 = vmatpush1.msra.mxu0 %v3783
    %3827 = vmatprep.subr.mxu0 0.0
    %3828 = vmatpush1.msra.mxu0 %v3782
    %3829 = vmatprep.subr.mxu0 0.0
    %3830 = vmatpush1.msra.mxu0 %v3781
    %3831 = vmatprep.subr.mxu0 0.0
    %3832 = vmatpush2.msra.mxu0 0.0
    %3833 = vmatprep.subr.mxu0 0.0
    %3834 = vmatpush2.msra.mxu0 0.0
    %3835 = vmatprep.subr.mxu0 0.0
    %3836 = vmatpush2.msra.mxu0 0.0
    %3837 = vmatprep.subr.mxu0 0.0
    %3838 = vmatpush2.msra.mxu0 0.0
    %3839 = vmatprep.subr.mxu0 0.0
    %3840 = vmatpush2.msra.mxu0 0.0
    %3841 = vmatprep.subr.mxu0 0.0
    %3842 = vmatpush2.msra.mxu0 0.0
    %3843 = vmatprep.subr.mxu0 0.0
    %3844 = vmatpush2.msra.mxu0 0.0
    %3845 = vmatprep.subr.mxu0 0.0
    %3846 = vmatpush2.msra.mxu0 0.0
    %3847 = vmatprep.subr.mxu0 0.0
    %3848 = vmatpush2.msra.mxu0 0.0
    %3849 = vmatprep.subr.mxu0 0.0
    %3850 = vmatpush2.msra.mxu0 0.0
    %3851 = vmatprep.subr.mxu0 0.0
    %3852 = vmatpush2.msra.mxu0 0.0
    %3853 = vmatprep.subr.mxu0 0.0
    %3854 = vmatpush2.msra.mxu0 0.0
    %3855 = vmatprep.subr.mxu0 0.0
    %3856 = vmatpush2.msra.mxu0 0.0
    %3857 = vmatprep.subr.mxu0 0.0
    %3858 = vmatpush2.msra.mxu0 0.0
    %3859 = vmatprep.subr.mxu0 0.0
    %3860 = vmatpush2.msra.mxu0 0.0
    %3861 = vmatprep.subr.mxu0 0.0
    %3862 = vmatpush2.msra.mxu0 0.0
    %3863 = vmatprep.mubr.f32.mxu0 0.0
    %3864 = vmatmul.mubr.f32.gmra.mxu0 %v3794
    %v3865 = vpop.f32.mrf.mxu0
    %v3866 = vadd.f32 %v3790, %v3865
    %v3867 = vpop.f32.mrf.mxu0
    %3868 = vmatprep.mubr.f32.mxu0 0.0
    %3869 = vmatmul.mubr.f32.gmra.mxu0 %v3797
    %v3870 = vpop.f32.mrf.mxu0
    %v3871 = vadd.f32 %v3790, %v3870
    %v3872 = vpop.f32.mrf.mxu0
    %3873 = vdwg.mxu0
    %v3874 = vadd.f32 %v3685, %v3866
    %v3875 = vadd.f32 %v3686, %v3871
    %v3876 = vmul.f32 %v3874, %v3874
    %v3877 = vmul.f32 %v3875, %v3875
    %v3878 = vsel %vm168, %v3874, 0.0
    %3879 = vadd.xlane.f32.xlu0 %v3878
    %v3880 = vpop.xlane.xlu0 %3879
    %v3881 = vsel %vm168, %v3875, 0.0
    %3882 = vadd.xlane.f32.xlu0 %v3881
    %v3883 = vpop.xlane.xlu0 %3882
    %v3884 = vsel %vm168, %v3876, 0.0
    %3885 = vadd.xlane.f32.xlu0 %v3884
    %v3886 = vpop.xlane.xlu0 %3885
    %v3887 = vsel %vm168, %v3877, 0.0
    %3888 = vadd.xlane.f32.xlu0 %v3887
    %v3889 = vpop.xlane.xlu0 %3888
    %v3890 = vmul.f32 %v3880, 0.03125
    %v3891 = vmul.f32 %v3883, 0.03125
    %v3892 = vmul.f32 %v3886, 0.03125
    %v3893 = vmul.f32 %v3889, 0.03125
    %v3894 = vmul.f32 %v3890, %v3890
    %v3895 = vmul.f32 %v3891, %v3891
    %v3896 = vsub.f32 %v3892, %v3894
    %v3897 = vsub.f32 %v3893, %v3895
    %v3898 = vsub.f32 %v3874, %v3890
    %v3899 = vsub.f32 %v3875, %v3891
    %v3900 = vadd.f32 %v3896, 1e-05
    %v3901 = vadd.f32 %v3897, 1e-05
    %v3902 = vrsqrt.pop %v3900
    %v3903 = vrsqrt.pop %v3901
    %v3904 = vmul.f32 %v3898, %v3902
    %v3905 = vmul.f32 %v3899, %v3903
    %v3906 = vlaneseq
    %v3907 = vshrl.u32 %v3906, 7
    %v3908 = vsub.s32 4, %v3907
    %v3909 = vrot.slane %v154, %v3908
    %v3910 = vmul.f32 %v3904, %v3909
    %v3911 = vmul.f32 %v3905, %v3909
    %v3912 = vlaneseq
    %v3913 = vshrl.u32 %v3912, 7
    %v3914 = vsub.s32 5, %v3913
    %v3915 = vrot.slane %v154, %v3914
    %v3916 = vadd.f32 %v3910, %v3915
    %v3917 = vadd.f32 %v3911, %v3915
    %s3918 = scalar_lea.vmem %s11, 8
    %v3919 = vld [vmem:[%s3918] sm:$0x3f]
    %s3920 = scalar_lea.vmem %s4, 64
    %v3921 = vld [vmem:[%s3920] sm:$0xff]
    %v3922 = vld [vmem:[%s3920 + $0x8] sm:$0xff]
    %v3923 = vld [vmem:[%s3920 + $0x10] sm:$0xff]
    %v3924 = vld [vmem:[%s3920 + $0x18] sm:$0xff]
    %s3925 = scalar_lea.vmem [#allocation8], 2
    %v3926 = vld [vmem:[%s3925] sm:$0x1]
    %v3927 = vadd.f32 %v3916, %v144
    %v3928 = vadd.f32 %v3917, %v145
    %v3930 = vlaneseq
    %v3931 = vshrl.u32 %v3930, 7
    %v3932 = vsub.s32 0, %v3931
    %v3933 = vrot.slane %v3926, %v3932
    %v3936 = vsel %vm168, %v3927, 0
    %v3939 = vsel %vm168, %v3928, 0
    %3941 = vmatprep.subr.mxu0 0.0
    %3942 = vmatpush1.msra.mxu0 0.0
    %3943 = vmatprep.subr.mxu0 0.0
    %3944 = vmatpush1.msra.mxu0 0.0
    %3945 = vmatprep.subr.mxu0 0.0
    %3946 = vmatpush1.msra.mxu0 0.0
    %3947 = vmatprep.subr.mxu0 0.0
    %3948 = vmatpush1.msra.mxu0 0.0
    %3949 = vmatprep.subr.mxu0 0.0
    %3950 = vmatpush1.msra.mxu0 0.0
    %3951 = vmatprep.subr.mxu0 0.0
    %3952 = vmatpush1.msra.mxu0 0.0
    %3953 = vmatprep.subr.mxu0 0.0
    %3954 = vmatpush1.msra.mxu0 0.0
    %3955 = vmatprep.subr.mxu0 0.0
    %3956 = vmatpush1.msra.mxu0 0.0
    %3957 = vmatprep.subr.mxu0 0.0
    %3958 = vmatpush1.msra.mxu0 0.0
    %3959 = vmatprep.subr.mxu0 0.0
    %3960 = vmatpush1.msra.mxu0 0.0
    %3961 = vmatprep.subr.mxu0 0.0
    %3962 = vmatpush1.msra.mxu0 0.0
    %3963 = vmatprep.subr.mxu0 0.0
    %3964 = vmatpush1.msra.mxu0 0.0
    %3965 = vmatprep.subr.mxu0 0.0
    %3966 = vmatpush1.msra.mxu0 %v3924
    %3967 = vmatprep.subr.mxu0 0.0
    %3968 = vmatpush1.msra.mxu0 %v3923
    %3969 = vmatprep.subr.mxu0 0.0
    %3970 = vmatpush1.msra.mxu0 %v3922
    %3971 = vmatprep.subr.mxu0 0.0
    %3972 = vmatpush1.msra.mxu0 %v3921
    %3973 = vmatprep.subr.mxu0 0.0
    %3974 = vmatpush2.msra.mxu0 0.0
    %3975 = vmatprep.subr.mxu0 0.0
    %3976 = vmatpush2.msra.mxu0 0.0
    %3977 = vmatprep.subr.mxu0 0.0
    %3978 = vmatpush2.msra.mxu0 0.0
    %3979 = vmatprep.subr.mxu0 0.0
    %3980 = vmatpush2.msra.mxu0 0.0
    %3981 = vmatprep.subr.mxu0 0.0
    %3982 = vmatpush2.msra.mxu0 0.0
    %3983 = vmatprep.subr.mxu0 0.0
    %3984 = vmatpush2.msra.mxu0 0.0
    %3985 = vmatprep.subr.mxu0 0.0
    %3986 = vmatpush2.msra.mxu0 0.0
    %3987 = vmatprep.subr.mxu0 0.0
    %3988 = vmatpush2.msra.mxu0 0.0
    %3989 = vmatprep.subr.mxu0 0.0
    %3990 = vmatpush2.msra.mxu0 0.0
    %3991 = vmatprep.subr.mxu0 0.0
    %3992 = vmatpush2.msra.mxu0 0.0
    %3993 = vmatprep.subr.mxu0 0.0
    %3994 = vmatpush2.msra.mxu0 0.0
    %3995 = vmatprep.subr.mxu0 0.0
    %3996 = vmatpush2.msra.mxu0 0.0
    %3997 = vmatprep.subr.mxu0 0.0
    %3998 = vmatpush2.msra.mxu0 0.0
    %3999 = vmatprep.subr.mxu0 0.0
    %4000 = vmatpush2.msra.mxu0 0.0
    %4001 = vmatprep.subr.mxu0 0.0
    %4002 = vmatpush2.msra.mxu0 0.0
    %4003 = vmatprep.subr.mxu0 0.0
    %4004 = vmatpush2.msra.mxu0 0.0
    %4005 = vmatprep.mubr.f32.mxu0 0.0
    %4006 = vmatmul.mubr.f32.gmra.mxu0 %v3936
    %v4007 = vpop.f32.mrf.mxu0
    %v4008 = vadd.f32 %v3933, %v4007
    %v4009 = vpop.f32.mrf.mxu0
    %4010 = vmatprep.mubr.f32.mxu0 0.0
    %4011 = vmatmul.mubr.f32.gmra.mxu0 %v3939
    %v4012 = vpop.f32.mrf.mxu0
    %v4013 = vadd.f32 %v3933, %v4012
    %v4014 = vpop.f32.mrf.mxu0
    %4015 = vdwg.mxu0
    %4020 = vrot.lane.b32.xlu0 %v3921, 64
    %v4021 = vpop.permute.xlu0 %4020
    %4022 = vrot.lane.b32.xlu0 %v3922, 64
    %v4023 = vpop.permute.xlu0 %4022
    %4024 = vrot.lane.b32.xlu0 %v3923, 64
    %v4025 = vpop.permute.xlu0 %4024
    %4026 = vrot.lane.b32.xlu0 %v3924, 64
    %v4027 = vpop.permute.xlu0 %4026
    %4032 = vrot.lane.b32.xlu0 %v3933, 64
    %v4033 = vpop.permute.xlu0 %4032
    %v4036 = vsel %vm168, %v3916, 0
    %v4039 = vsel %vm168, %v3917, 0
    %4041 = vmatprep.subr.mxu0 0.0
    %4042 = vmatpush1.msra.mxu0 0.0
    %4043 = vmatprep.subr.mxu0 0.0
    %4044 = vmatpush1.msra.mxu0 0.0
    %4045 = vmatprep.subr.mxu0 0.0
    %4046 = vmatpush1.msra.mxu0 0.0
    %4047 = vmatprep.subr.mxu0 0.0
    %4048 = vmatpush1.msra.mxu0 0.0
    %4049 = vmatprep.subr.mxu0 0.0
    %4050 = vmatpush1.msra.mxu0 0.0
    %4051 = vmatprep.subr.mxu0 0.0
    %4052 = vmatpush1.msra.mxu0 0.0
    %4053 = vmatprep.subr.mxu0 0.0
    %4054 = vmatpush1.msra.mxu0 0.0
    %4055 = vmatprep.subr.mxu0 0.0
    %4056 = vmatpush1.msra.mxu0 0.0
    %4057 = vmatprep.subr.mxu0 0.0
    %4058 = vmatpush1.msra.mxu0 0.0
    %4059 = vmatprep.subr.mxu0 0.0
    %4060 = vmatpush1.msra.mxu0 0.0
    %4061 = vmatprep.subr.mxu0 0.0
    %4062 = vmatpush1.msra.mxu0 0.0
    %4063 = vmatprep.subr.mxu0 0.0
    %4064 = vmatpush1.msra.mxu0 0.0
    %4065 = vmatprep.subr.mxu0 0.0
    %4066 = vmatpush1.msra.mxu0 %v4027
    %4067 = vmatprep.subr.mxu0 0.0
    %4068 = vmatpush1.msra.mxu0 %v4025
    %4069 = vmatprep.subr.mxu0 0.0
    %4070 = vmatpush1.msra.mxu0 %v4023
    %4071 = vmatprep.subr.mxu0 0.0
    %4072 = vmatpush1.msra.mxu0 %v4021
    %4073 = vmatprep.subr.mxu0 0.0
    %4074 = vmatpush2.msra.mxu0 0.0
    %4075 = vmatprep.subr.mxu0 0.0
    %4076 = vmatpush2.msra.mxu0 0.0
    %4077 = vmatprep.subr.mxu0 0.0
    %4078 = vmatpush2.msra.mxu0 0.0
    %4079 = vmatprep.subr.mxu0 0.0
    %4080 = vmatpush2.msra.mxu0 0.0
    %4081 = vmatprep.subr.mxu0 0.0
    %4082 = vmatpush2.msra.mxu0 0.0
    %4083 = vmatprep.subr.mxu0 0.0
    %4084 = vmatpush2.msra.mxu0 0.0
    %4085 = vmatprep.subr.mxu0 0.0
    %4086 = vmatpush2.msra.mxu0 0.0
    %4087 = vmatprep.subr.mxu0 0.0
    %4088 = vmatpush2.msra.mxu0 0.0
    %4089 = vmatprep.subr.mxu0 0.0
    %4090 = vmatpush2.msra.mxu0 0.0
    %4091 = vmatprep.subr.mxu0 0.0
    %4092 = vmatpush2.msra.mxu0 0.0
    %4093 = vmatprep.subr.mxu0 0.0
    %4094 = vmatpush2.msra.mxu0 0.0
    %4095 = vmatprep.subr.mxu0 0.0
    %4096 = vmatpush2.msra.mxu0 0.0
    %4097 = vmatprep.subr.mxu0 0.0
    %4098 = vmatpush2.msra.mxu0 0.0
    %4099 = vmatprep.subr.mxu0 0.0
    %4100 = vmatpush2.msra.mxu0 0.0
    %4101 = vmatprep.subr.mxu0 0.0
    %4102 = vmatpush2.msra.mxu0 0.0
    %4103 = vmatprep.subr.mxu0 0.0
    %4104 = vmatpush2.msra.mxu0 0.0
    %4105 = vmatprep.mubr.f32.mxu0 0.0
    %4106 = vmatmul.mubr.f32.gmra.mxu0 %v4036
    %v4107 = vpop.f32.mrf.mxu0
    %v4108 = vadd.f32 %v4033, %v4107
    %v4109 = vpop.f32.mrf.mxu0
    %4110 = vmatprep.mubr.f32.mxu0 0.0
    %4111 = vmatmul.mubr.f32.gmra.mxu0 %v4039
    %v4112 = vpop.f32.mrf.mxu0
    %v4113 = vadd.f32 %v4033, %v4112
    %v4114 = vpop.f32.mrf.mxu0
    %4115 = vdwg.mxu0
    %s4116 = scalar_lea.vmem [#allocation10], 64
    %v4117 = vld [vmem:[%s4116] sm:$0xff]
    %v4118 = vld [vmem:[%s4116 + $0x8] sm:$0xff]
    %v4119 = vld [vmem:[%s4116 + $0x10] sm:$0xff]
    %v4120 = vld [vmem:[%s4116 + $0x18] sm:$0xff]
    %s4121 = scalar_lea.vmem %s7, 2
    %v4122 = vld [vmem:[%s4121] sm:$0x1]
    %4124 = vrot.lane.b32.xlu0 %v4008, 96
    %v4125 = vpop.permute.xlu0 %4124
    %v4126 = vsel %vm358, %v4008, 0
    %v4128 = vsel %vm358, %v4125, 0
    %4130 = vmatprep.subr.mxu0 0.0
    %4131 = vmatpush1.xpose.msra.mxu0 0.0
    %4132 = vmatprep.subr.mxu0 0.0
    %4133 = vmatpush1.xpose.msra.mxu0 0.0
    %4134 = vmatprep.subr.mxu0 0.0
    %4135 = vmatpush1.xpose.msra.mxu0 0.0
    %4136 = vmatprep.subr.mxu0 0.0
    %4137 = vmatpush1.xpose.msra.mxu0 0.0
    %4138 = vmatprep.subr.mxu0 0.0
    %4139 = vmatpush1.xpose.msra.mxu0 0.0
    %4140 = vmatprep.subr.mxu0 0.0
    %4141 = vmatpush1.xpose.msra.mxu0 0.0
    %4142 = vmatprep.subr.mxu0 0.0
    %4143 = vmatpush1.xpose.msra.mxu0 0.0
    %4144 = vmatprep.subr.mxu0 0.0
    %4145 = vmatpush1.xpose.msra.mxu0 0.0
    %4146 = vmatprep.subr.mxu0 0.0
    %4147 = vmatpush1.xpose.msra.mxu0 0.0
    %4148 = vmatprep.subr.mxu0 0.0
    %4149 = vmatpush1.xpose.msra.mxu0 0.0
    %4150 = vmatprep.subr.mxu0 0.0
    %4151 = vmatpush1.xpose.msra.mxu0 0.0
    %4152 = vmatprep.subr.mxu0 0.0
    %4153 = vmatpush1.xpose.msra.mxu0 0.0
    %4154 = vmatprep.subr.mxu0 0.0
    %4155 = vmatpush1.xpose.msra.mxu0 0.0
    %4156 = vmatprep.subr.mxu0 0.0
    %4157 = vmatpush1.xpose.msra.mxu0 0.0
    %4158 = vmatprep.subr.mxu0 0.0
    %4159 = vmatpush1.xpose.msra.mxu0 0.0
    %4160 = vmatprep.subr.mxu0 0.0
    %4161 = vmatpush1.xpose.msra.mxu0 %v4128
    %4162 = vmatprep.subr.mxu0 0.0
    %4163 = vmatpush2.xpose.msra.mxu0 0.0
    %4164 = vmatprep.subr.mxu0 0.0
    %4165 = vmatpush2.xpose.msra.mxu0 0.0
    %4166 = vmatprep.subr.mxu0 0.0
    %4167 = vmatpush2.xpose.msra.mxu0 0.0
    %4168 = vmatprep.subr.mxu0 0.0
    %4169 = vmatpush2.xpose.msra.mxu0 0.0
    %4170 = vmatprep.subr.mxu0 0.0
    %4171 = vmatpush2.xpose.msra.mxu0 0.0
    %4172 = vmatprep.subr.mxu0 0.0
    %4173 = vmatpush2.xpose.msra.mxu0 0.0
    %4174 = vmatprep.subr.mxu0 0.0
    %4175 = vmatpush2.xpose.msra.mxu0 0.0
    %4176 = vmatprep.subr.mxu0 0.0
    %4177 = vmatpush2.xpose.msra.mxu0 0.0
    %4178 = vmatprep.subr.mxu0 0.0
    %4179 = vmatpush2.xpose.msra.mxu0 0.0
    %4180 = vmatprep.subr.mxu0 0.0
    %4181 = vmatpush2.xpose.msra.mxu0 0.0
    %4182 = vmatprep.subr.mxu0 0.0
    %4183 = vmatpush2.xpose.msra.mxu0 0.0
    %4184 = vmatprep.subr.mxu0 0.0
    %4185 = vmatpush2.xpose.msra.mxu0 0.0
    %4186 = vmatprep.subr.mxu0 0.0
    %4187 = vmatpush2.xpose.msra.mxu0 0.0
    %4188 = vmatprep.subr.mxu0 0.0
    %4189 = vmatpush2.xpose.msra.mxu0 0.0
    %4190 = vmatprep.subr.mxu0 0.0
    %4191 = vmatpush2.xpose.msra.mxu0 0.0
    %4192 = vmatprep.subr.mxu0 0.0
    %4193 = vmatpush2.xpose.msra.mxu0 0.0
    %4194 = vmatprep.mubr.f32.mxu0 0.0
    %4195 = vmatmul.mubr.f32.gmra.mxu0 %v4126
    %v4196 = vpop.f32.mrf.mxu0
    %v4197 = vadd.f32 0.0, %v4196
    %v4198 = vpop.f32.mrf.mxu0
    %4199 = vdwg.mxu0
    %4201 = vrot.lane.b32.xlu0 %v4013, 96
    %v4202 = vpop.permute.xlu0 %4201
    %v4203 = vsel %vm358, %v4013, 0
    %v4205 = vsel %vm358, %v4202, 0
    %4207 = vmatprep.subr.mxu0 0.0
    %4208 = vmatpush1.xpose.msra.mxu0 0.0
    %4209 = vmatprep.subr.mxu0 0.0
    %4210 = vmatpush1.xpose.msra.mxu0 0.0
    %4211 = vmatprep.subr.mxu0 0.0
    %4212 = vmatpush1.xpose.msra.mxu0 0.0
    %4213 = vmatprep.subr.mxu0 0.0
    %4214 = vmatpush1.xpose.msra.mxu0 0.0
    %4215 = vmatprep.subr.mxu0 0.0
    %4216 = vmatpush1.xpose.msra.mxu0 0.0
    %4217 = vmatprep.subr.mxu0 0.0
    %4218 = vmatpush1.xpose.msra.mxu0 0.0
    %4219 = vmatprep.subr.mxu0 0.0
    %4220 = vmatpush1.xpose.msra.mxu0 0.0
    %4221 = vmatprep.subr.mxu0 0.0
    %4222 = vmatpush1.xpose.msra.mxu0 0.0
    %4223 = vmatprep.subr.mxu0 0.0
    %4224 = vmatpush1.xpose.msra.mxu0 0.0
    %4225 = vmatprep.subr.mxu0 0.0
    %4226 = vmatpush1.xpose.msra.mxu0 0.0
    %4227 = vmatprep.subr.mxu0 0.0
    %4228 = vmatpush1.xpose.msra.mxu0 0.0
    %4229 = vmatprep.subr.mxu0 0.0
    %4230 = vmatpush1.xpose.msra.mxu0 0.0
    %4231 = vmatprep.subr.mxu0 0.0
    %4232 = vmatpush1.xpose.msra.mxu0 0.0
    %4233 = vmatprep.subr.mxu0 0.0
    %4234 = vmatpush1.xpose.msra.mxu0 0.0
    %4235 = vmatprep.subr.mxu0 0.0
    %4236 = vmatpush1.xpose.msra.mxu0 0.0
    %4237 = vmatprep.subr.mxu0 0.0
    %4238 = vmatpush1.xpose.msra.mxu0 %v4205
    %4239 = vmatprep.subr.mxu0 0.0
    %4240 = vmatpush2.xpose.msra.mxu0 0.0
    %4241 = vmatprep.subr.mxu0 0.0
    %4242 = vmatpush2.xpose.msra.mxu0 0.0
    %4243 = vmatprep.subr.mxu0 0.0
    %4244 = vmatpush2.xpose.msra.mxu0 0.0
    %4245 = vmatprep.subr.mxu0 0.0
    %4246 = vmatpush2.xpose.msra.mxu0 0.0
    %4247 = vmatprep.subr.mxu0 0.0
    %4248 = vmatpush2.xpose.msra.mxu0 0.0
    %4249 = vmatprep.subr.mxu0 0.0
    %4250 = vmatpush2.xpose.msra.mxu0 0.0
    %4251 = vmatprep.subr.mxu0 0.0
    %4252 = vmatpush2.xpose.msra.mxu0 0.0
    %4253 = vmatprep.subr.mxu0 0.0
    %4254 = vmatpush2.xpose.msra.mxu0 0.0
    %4255 = vmatprep.subr.mxu0 0.0
    %4256 = vmatpush2.xpose.msra.mxu0 0.0
    %4257 = vmatprep.subr.mxu0 0.0
    %4258 = vmatpush2.xpose.msra.mxu0 0.0
    %4259 = vmatprep.subr.mxu0 0.0
    %4260 = vmatpush2.xpose.msra.mxu0 0.0
    %4261 = vmatprep.subr.mxu0 0.0
    %4262 = vmatpush2.xpose.msra.mxu0 0.0
    %4263 = vmatprep.subr.mxu0 0.0
    %4264 = vmatpush2.xpose.msra.mxu0 0.0
    %4265 = vmatprep.subr.mxu0 0.0
    %4266 = vmatpush2.xpose.msra.mxu0 0.0
    %4267 = vmatprep.subr.mxu0 0.0
    %4268 = vmatpush2.xpose.msra.mxu0 0.0
    %4269 = vmatprep.subr.mxu0 0.0
    %4270 = vmatpush2.xpose.msra.mxu0 0.0
    %4271 = vmatprep.mubr.f32.mxu0 0.0
    %4272 = vmatmul.mubr.f32.gmra.mxu0 %v4203
    %v4273 = vpop.f32.mrf.mxu0
    %v4274 = vadd.f32 0.0, %v4273
    %v4275 = vpop.f32.mrf.mxu0
    %4276 = vdwg.mxu0
    %v4277 = vsel %vm358, %v4197, -inf
    %4278 = vmax.xlane.f32.xlu0 %v4277
    %v4279 = vpop.xlane.xlu0 %4278
    %v4280 = vsel %vm358, %v4274, -inf
    %4281 = vmax.xlane.f32.xlu0 %v4280
    %v4282 = vpop.xlane.xlu0 %4281
    %v4283 = vsub.f32 %v4197, %v4279
    %v4284 = vsub.f32 %v4274, %v4282
    %v4285 = vmul.f32 %v4283, 1.442695
    %v4286 = vpow.pop %v4285
    %v4287 = vmul.f32 %v4284, 1.442695
    %v4288 = vpow.pop %v4287
    %v4289 = vsel %vm358, %v4286, 0.0
    %4290 = vadd.xlane.f32.xlu0 %v4289
    %v4291 = vpop.xlane.xlu0 %4290
    %v4292 = vsel %vm358, %v4288, 0.0
    %4293 = vadd.xlane.f32.xlu0 %v4292
    %v4294 = vpop.xlane.xlu0 %4293
    %v4295 = vrcp.pop %v4291
    %v4296 = vrcp.pop %v4294
    %v4297 = vmul.f32 %v4286, %v4295
    %v4298 = vmul.f32 %v4288, %v4296
    %v4300 = vsel %vm358, %v4297, 0
    %4302 = vmatprep.subr.mxu0 0.0
    %4303 = vmatpush1.msra.mxu0 0.0
    %4304 = vmatprep.subr.mxu0 0.0
    %4305 = vmatpush1.msra.mxu0 0.0
    %4306 = vmatprep.subr.mxu0 0.0
    %4307 = vmatpush1.msra.mxu0 0.0
    %4308 = vmatprep.subr.mxu0 0.0
    %4309 = vmatpush1.msra.mxu0 0.0
    %4310 = vmatprep.subr.mxu0 0.0
    %4311 = vmatpush1.msra.mxu0 0.0
    %4312 = vmatprep.subr.mxu0 0.0
    %4313 = vmatpush1.msra.mxu0 0.0
    %4314 = vmatprep.subr.mxu0 0.0
    %4315 = vmatpush1.msra.mxu0 0.0
    %4316 = vmatprep.subr.mxu0 0.0
    %4317 = vmatpush1.msra.mxu0 0.0
    %4318 = vmatprep.subr.mxu0 0.0
    %4319 = vmatpush1.msra.mxu0 0.0
    %4320 = vmatprep.subr.mxu0 0.0
    %4321 = vmatpush1.msra.mxu0 0.0
    %4322 = vmatprep.subr.mxu0 0.0
    %4323 = vmatpush1.msra.mxu0 0.0
    %4324 = vmatprep.subr.mxu0 0.0
    %4325 = vmatpush1.msra.mxu0 0.0
    %4326 = vmatprep.subr.mxu0 0.0
    %4327 = vmatpush1.msra.mxu0 0.0
    %4328 = vmatprep.subr.mxu0 0.0
    %4329 = vmatpush1.msra.mxu0 0.0
    %4330 = vmatprep.subr.mxu0 0.0
    %4331 = vmatpush1.msra.mxu0 0.0
    %4332 = vmatprep.subr.mxu0 0.0
    %4333 = vmatpush1.msra.mxu0 %v4108
    %4334 = vmatprep.subr.mxu0 0.0
    %4335 = vmatpush2.msra.mxu0 0.0
    %4336 = vmatprep.subr.mxu0 0.0
    %4337 = vmatpush2.msra.mxu0 0.0
    %4338 = vmatprep.subr.mxu0 0.0
    %4339 = vmatpush2.msra.mxu0 0.0
    %4340 = vmatprep.subr.mxu0 0.0
    %4341 = vmatpush2.msra.mxu0 0.0
    %4342 = vmatprep.subr.mxu0 0.0
    %4343 = vmatpush2.msra.mxu0 0.0
    %4344 = vmatprep.subr.mxu0 0.0
    %4345 = vmatpush2.msra.mxu0 0.0
    %4346 = vmatprep.subr.mxu0 0.0
    %4347 = vmatpush2.msra.mxu0 0.0
    %4348 = vmatprep.subr.mxu0 0.0
    %4349 = vmatpush2.msra.mxu0 0.0
    %4350 = vmatprep.subr.mxu0 0.0
    %4351 = vmatpush2.msra.mxu0 0.0
    %4352 = vmatprep.subr.mxu0 0.0
    %4353 = vmatpush2.msra.mxu0 0.0
    %4354 = vmatprep.subr.mxu0 0.0
    %4355 = vmatpush2.msra.mxu0 0.0
    %4356 = vmatprep.subr.mxu0 0.0
    %4357 = vmatpush2.msra.mxu0 0.0
    %4358 = vmatprep.subr.mxu0 0.0
    %4359 = vmatpush2.msra.mxu0 0.0
    %4360 = vmatprep.subr.mxu0 0.0
    %4361 = vmatpush2.msra.mxu0 0.0
    %4362 = vmatprep.subr.mxu0 0.0
    %4363 = vmatpush2.msra.mxu0 0.0
    %4364 = vmatprep.subr.mxu0 0.0
    %4365 = vmatpush2.msra.mxu0 0.0
    %4366 = vmatprep.mubr.f32.mxu0 0.0
    %4367 = vmatmul.mubr.f32.gmra.mxu0 %v4300
    %v4368 = vpop.f32.mrf.mxu0
    %v4369 = vadd.f32 0.0, %v4368
    %v4370 = vpop.f32.mrf.mxu0
    %4371 = vdwg.mxu0
    %v4373 = vsel %vm358, %v4298, 0
    %4375 = vmatprep.subr.mxu0 0.0
    %4376 = vmatpush1.msra.mxu0 0.0
    %4377 = vmatprep.subr.mxu0 0.0
    %4378 = vmatpush1.msra.mxu0 0.0
    %4379 = vmatprep.subr.mxu0 0.0
    %4380 = vmatpush1.msra.mxu0 0.0
    %4381 = vmatprep.subr.mxu0 0.0
    %4382 = vmatpush1.msra.mxu0 0.0
    %4383 = vmatprep.subr.mxu0 0.0
    %4384 = vmatpush1.msra.mxu0 0.0
    %4385 = vmatprep.subr.mxu0 0.0
    %4386 = vmatpush1.msra.mxu0 0.0
    %4387 = vmatprep.subr.mxu0 0.0
    %4388 = vmatpush1.msra.mxu0 0.0
    %4389 = vmatprep.subr.mxu0 0.0
    %4390 = vmatpush1.msra.mxu0 0.0
    %4391 = vmatprep.subr.mxu0 0.0
    %4392 = vmatpush1.msra.mxu0 0.0
    %4393 = vmatprep.subr.mxu0 0.0
    %4394 = vmatpush1.msra.mxu0 0.0
    %4395 = vmatprep.subr.mxu0 0.0
    %4396 = vmatpush1.msra.mxu0 0.0
    %4397 = vmatprep.subr.mxu0 0.0
    %4398 = vmatpush1.msra.mxu0 0.0
    %4399 = vmatprep.subr.mxu0 0.0
    %4400 = vmatpush1.msra.mxu0 0.0
    %4401 = vmatprep.subr.mxu0 0.0
    %4402 = vmatpush1.msra.mxu0 0.0
    %4403 = vmatprep.subr.mxu0 0.0
    %4404 = vmatpush1.msra.mxu0 0.0
    %4405 = vmatprep.subr.mxu0 0.0
    %4406 = vmatpush1.msra.mxu0 %v4113
    %4407 = vmatprep.subr.mxu0 0.0
    %4408 = vmatpush2.msra.mxu0 0.0
    %4409 = vmatprep.subr.mxu0 0.0
    %4410 = vmatpush2.msra.mxu0 0.0
    %4411 = vmatprep.subr.mxu0 0.0
    %4412 = vmatpush2.msra.mxu0 0.0
    %4413 = vmatprep.subr.mxu0 0.0
    %4414 = vmatpush2.msra.mxu0 0.0
    %4415 = vmatprep.subr.mxu0 0.0
    %4416 = vmatpush2.msra.mxu0 0.0
    %4417 = vmatprep.subr.mxu0 0.0
    %4418 = vmatpush2.msra.mxu0 0.0
    %4419 = vmatprep.subr.mxu0 0.0
    %4420 = vmatpush2.msra.mxu0 0.0
    %4421 = vmatprep.subr.mxu0 0.0
    %4422 = vmatpush2.msra.mxu0 0.0
    %4423 = vmatprep.subr.mxu0 0.0
    %4424 = vmatpush2.msra.mxu0 0.0
    %4425 = vmatprep.subr.mxu0 0.0
    %4426 = vmatpush2.msra.mxu0 0.0
    %4427 = vmatprep.subr.mxu0 0.0
    %4428 = vmatpush2.msra.mxu0 0.0
    %4429 = vmatprep.subr.mxu0 0.0
    %4430 = vmatpush2.msra.mxu0 0.0
    %4431 = vmatprep.subr.mxu0 0.0
    %4432 = vmatpush2.msra.mxu0 0.0
    %4433 = vmatprep.subr.mxu0 0.0
    %4434 = vmatpush2.msra.mxu0 0.0
    %4435 = vmatprep.subr.mxu0 0.0
    %4436 = vmatpush2.msra.mxu0 0.0
    %4437 = vmatprep.subr.mxu0 0.0
    %4438 = vmatpush2.msra.mxu0 0.0
    %4439 = vmatprep.mubr.f32.mxu0 0.0
    %4440 = vmatmul.mubr.f32.gmra.mxu0 %v4373
    %v4441 = vpop.f32.mrf.mxu0
    %v4442 = vadd.f32 0.0, %v4441
    %v4443 = vpop.f32.mrf.mxu0
    %4444 = vdwg.mxu0
    %4445 = vrot.lane.b32.xlu0 %v4008, 120
    %v4446 = vpop.permute.xlu0 %4445
    %4447 = vrot.lane.b32.xlu0 %v4008, 88
    %v4448 = vpop.permute.xlu0 %4447
    %v4449 = vsel %vm358, %v4446, 0
    %v4451 = vsel %vm358, %v4448, 0
    %4453 = vmatprep.subr.mxu0 0.0
    %4454 = vmatpush1.xpose.msra.mxu0 0.0
    %4455 = vmatprep.subr.mxu0 0.0
    %4456 = vmatpush1.xpose.msra.mxu0 0.0
    %4457 = vmatprep.subr.mxu0 0.0
    %4458 = vmatpush1.xpose.msra.mxu0 0.0
    %4459 = vmatprep.subr.mxu0 0.0
    %4460 = vmatpush1.xpose.msra.mxu0 0.0
    %4461 = vmatprep.subr.mxu0 0.0
    %4462 = vmatpush1.xpose.msra.mxu0 0.0
    %4463 = vmatprep.subr.mxu0 0.0
    %4464 = vmatpush1.xpose.msra.mxu0 0.0
    %4465 = vmatprep.subr.mxu0 0.0
    %4466 = vmatpush1.xpose.msra.mxu0 0.0
    %4467 = vmatprep.subr.mxu0 0.0
    %4468 = vmatpush1.xpose.msra.mxu0 0.0
    %4469 = vmatprep.subr.mxu0 0.0
    %4470 = vmatpush1.xpose.msra.mxu0 0.0
    %4471 = vmatprep.subr.mxu0 0.0
    %4472 = vmatpush1.xpose.msra.mxu0 0.0
    %4473 = vmatprep.subr.mxu0 0.0
    %4474 = vmatpush1.xpose.msra.mxu0 0.0
    %4475 = vmatprep.subr.mxu0 0.0
    %4476 = vmatpush1.xpose.msra.mxu0 0.0
    %4477 = vmatprep.subr.mxu0 0.0
    %4478 = vmatpush1.xpose.msra.mxu0 0.0
    %4479 = vmatprep.subr.mxu0 0.0
    %4480 = vmatpush1.xpose.msra.mxu0 0.0
    %4481 = vmatprep.subr.mxu0 0.0
    %4482 = vmatpush1.xpose.msra.mxu0 0.0
    %4483 = vmatprep.subr.mxu0 0.0
    %4484 = vmatpush1.xpose.msra.mxu0 %v4451
    %4485 = vmatprep.subr.mxu0 0.0
    %4486 = vmatpush2.xpose.msra.mxu0 0.0
    %4487 = vmatprep.subr.mxu0 0.0
    %4488 = vmatpush2.xpose.msra.mxu0 0.0
    %4489 = vmatprep.subr.mxu0 0.0
    %4490 = vmatpush2.xpose.msra.mxu0 0.0
    %4491 = vmatprep.subr.mxu0 0.0
    %4492 = vmatpush2.xpose.msra.mxu0 0.0
    %4493 = vmatprep.subr.mxu0 0.0
    %4494 = vmatpush2.xpose.msra.mxu0 0.0
    %4495 = vmatprep.subr.mxu0 0.0
    %4496 = vmatpush2.xpose.msra.mxu0 0.0
    %4497 = vmatprep.subr.mxu0 0.0
    %4498 = vmatpush2.xpose.msra.mxu0 0.0
    %4499 = vmatprep.subr.mxu0 0.0
    %4500 = vmatpush2.xpose.msra.mxu0 0.0
    %4501 = vmatprep.subr.mxu0 0.0
    %4502 = vmatpush2.xpose.msra.mxu0 0.0
    %4503 = vmatprep.subr.mxu0 0.0
    %4504 = vmatpush2.xpose.msra.mxu0 0.0
    %4505 = vmatprep.subr.mxu0 0.0
    %4506 = vmatpush2.xpose.msra.mxu0 0.0
    %4507 = vmatprep.subr.mxu0 0.0
    %4508 = vmatpush2.xpose.msra.mxu0 0.0
    %4509 = vmatprep.subr.mxu0 0.0
    %4510 = vmatpush2.xpose.msra.mxu0 0.0
    %4511 = vmatprep.subr.mxu0 0.0
    %4512 = vmatpush2.xpose.msra.mxu0 0.0
    %4513 = vmatprep.subr.mxu0 0.0
    %4514 = vmatpush2.xpose.msra.mxu0 0.0
    %4515 = vmatprep.subr.mxu0 0.0
    %4516 = vmatpush2.xpose.msra.mxu0 0.0
    %4517 = vmatprep.mubr.f32.mxu0 0.0
    %4518 = vmatmul.mubr.f32.gmra.mxu0 %v4449
    %v4519 = vpop.f32.mrf.mxu0
    %v4520 = vadd.f32 0.0, %v4519
    %v4521 = vpop.f32.mrf.mxu0
    %4522 = vdwg.mxu0
    %4523 = vrot.lane.b32.xlu0 %v4013, 120
    %v4524 = vpop.permute.xlu0 %4523
    %4525 = vrot.lane.b32.xlu0 %v4013, 88
    %v4526 = vpop.permute.xlu0 %4525
    %v4527 = vsel %vm358, %v4524, 0
    %v4529 = vsel %vm358, %v4526, 0
    %4531 = vmatprep.subr.mxu0 0.0
    %4532 = vmatpush1.xpose.msra.mxu0 0.0
    %4533 = vmatprep.subr.mxu0 0.0
    %4534 = vmatpush1.xpose.msra.mxu0 0.0
    %4535 = vmatprep.subr.mxu0 0.0
    %4536 = vmatpush1.xpose.msra.mxu0 0.0
    %4537 = vmatprep.subr.mxu0 0.0
    %4538 = vmatpush1.xpose.msra.mxu0 0.0
    %4539 = vmatprep.subr.mxu0 0.0
    %4540 = vmatpush1.xpose.msra.mxu0 0.0
    %4541 = vmatprep.subr.mxu0 0.0
    %4542 = vmatpush1.xpose.msra.mxu0 0.0
    %4543 = vmatprep.subr.mxu0 0.0
    %4544 = vmatpush1.xpose.msra.mxu0 0.0
    %4545 = vmatprep.subr.mxu0 0.0
    %4546 = vmatpush1.xpose.msra.mxu0 0.0
    %4547 = vmatprep.subr.mxu0 0.0
    %4548 = vmatpush1.xpose.msra.mxu0 0.0
    %4549 = vmatprep.subr.mxu0 0.0
    %4550 = vmatpush1.xpose.msra.mxu0 0.0
    %4551 = vmatprep.subr.mxu0 0.0
    %4552 = vmatpush1.xpose.msra.mxu0 0.0
    %4553 = vmatprep.subr.mxu0 0.0
    %4554 = vmatpush1.xpose.msra.mxu0 0.0
    %4555 = vmatprep.subr.mxu0 0.0
    %4556 = vmatpush1.xpose.msra.mxu0 0.0
    %4557 = vmatprep.subr.mxu0 0.0
    %4558 = vmatpush1.xpose.msra.mxu0 0.0
    %4559 = vmatprep.subr.mxu0 0.0
    %4560 = vmatpush1.xpose.msra.mxu0 0.0
    %4561 = vmatprep.subr.mxu0 0.0
    %4562 = vmatpush1.xpose.msra.mxu0 %v4529
    %4563 = vmatprep.subr.mxu0 0.0
    %4564 = vmatpush2.xpose.msra.mxu0 0.0
    %4565 = vmatprep.subr.mxu0 0.0
    %4566 = vmatpush2.xpose.msra.mxu0 0.0
    %4567 = vmatprep.subr.mxu0 0.0
    %4568 = vmatpush2.xpose.msra.mxu0 0.0
    %4569 = vmatprep.subr.mxu0 0.0
    %4570 = vmatpush2.xpose.msra.mxu0 0.0
    %4571 = vmatprep.subr.mxu0 0.0
    %4572 = vmatpush2.xpose.msra.mxu0 0.0
    %4573 = vmatprep.subr.mxu0 0.0
    %4574 = vmatpush2.xpose.msra.mxu0 0.0
    %4575 = vmatprep.subr.mxu0 0.0
    %4576 = vmatpush2.xpose.msra.mxu0 0.0
    %4577 = vmatprep.subr.mxu0 0.0
    %4578 = vmatpush2.xpose.msra.mxu0 0.0
    %4579 = vmatprep.subr.mxu0 0.0
    %4580 = vmatpush2.xpose.msra.mxu0 0.0
    %4581 = vmatprep.subr.mxu0 0.0
    %4582 = vmatpush2.xpose.msra.mxu0 0.0
    %4583 = vmatprep.subr.mxu0 0.0
    %4584 = vmatpush2.xpose.msra.mxu0 0.0
    %4585 = vmatprep.subr.mxu0 0.0
    %4586 = vmatpush2.xpose.msra.mxu0 0.0
    %4587 = vmatprep.subr.mxu0 0.0
    %4588 = vmatpush2.xpose.msra.mxu0 0.0
    %4589 = vmatprep.subr.mxu0 0.0
    %4590 = vmatpush2.xpose.msra.mxu0 0.0
    %4591 = vmatprep.subr.mxu0 0.0
    %4592 = vmatpush2.xpose.msra.mxu0 0.0
    %4593 = vmatprep.subr.mxu0 0.0
    %4594 = vmatpush2.xpose.msra.mxu0 0.0
    %4595 = vmatprep.mubr.f32.mxu0 0.0
    %4596 = vmatmul.mubr.f32.gmra.mxu0 %v4527
    %v4597 = vpop.f32.mrf.mxu0
    %v4598 = vadd.f32 0.0, %v4597
    %v4599 = vpop.f32.mrf.mxu0
    %4600 = vdwg.mxu0
    %v4601 = vsel %vm358, %v4520, -inf
    %4602 = vmax.xlane.f32.xlu0 %v4601
    %v4603 = vpop.xlane.xlu0 %4602
    %v4604 = vsel %vm358, %v4598, -inf
    %4605 = vmax.xlane.f32.xlu0 %v4604
    %v4606 = vpop.xlane.xlu0 %4605
    %v4607 = vsub.f32 %v4520, %v4603
    %v4608 = vsub.f32 %v4598, %v4606
    %v4609 = vmul.f32 %v4607, 1.442695
    %v4610 = vpow.pop %v4609
    %v4611 = vmul.f32 %v4608, 1.442695
    %v4612 = vpow.pop %v4611
    %v4613 = vsel %vm358, %v4610, 0.0
    %4614 = vadd.xlane.f32.xlu0 %v4613
    %v4615 = vpop.xlane.xlu0 %4614
    %v4616 = vsel %vm358, %v4612, 0.0
    %4617 = vadd.xlane.f32.xlu0 %v4616
    %v4618 = vpop.xlane.xlu0 %4617
    %v4619 = vrcp.pop %v4615
    %v4620 = vrcp.pop %v4618
    %v4621 = vmul.f32 %v4610, %v4619
    %v4622 = vmul.f32 %v4612, %v4620
    %4624 = vrot.lane.b32.xlu0 %v4108, 120
    %v4625 = vpop.permute.xlu0 %4624
    %v4628 = vsel %vm358, %v4621, 0
    %4630 = vmatprep.subr.mxu0 0.0
    %4631 = vmatpush1.msra.mxu0 0.0
    %4632 = vmatprep.subr.mxu0 0.0
    %4633 = vmatpush1.msra.mxu0 0.0
    %4634 = vmatprep.subr.mxu0 0.0
    %4635 = vmatpush1.msra.mxu0 0.0
    %4636 = vmatprep.subr.mxu0 0.0
    %4637 = vmatpush1.msra.mxu0 0.0
    %4638 = vmatprep.subr.mxu0 0.0
    %4639 = vmatpush1.msra.mxu0 0.0
    %4640 = vmatprep.subr.mxu0 0.0
    %4641 = vmatpush1.msra.mxu0 0.0
    %4642 = vmatprep.subr.mxu0 0.0
    %4643 = vmatpush1.msra.mxu0 0.0
    %4644 = vmatprep.subr.mxu0 0.0
    %4645 = vmatpush1.msra.mxu0 0.0
    %4646 = vmatprep.subr.mxu0 0.0
    %4647 = vmatpush1.msra.mxu0 0.0
    %4648 = vmatprep.subr.mxu0 0.0
    %4649 = vmatpush1.msra.mxu0 0.0
    %4650 = vmatprep.subr.mxu0 0.0
    %4651 = vmatpush1.msra.mxu0 0.0
    %4652 = vmatprep.subr.mxu0 0.0
    %4653 = vmatpush1.msra.mxu0 0.0
    %4654 = vmatprep.subr.mxu0 0.0
    %4655 = vmatpush1.msra.mxu0 0.0
    %4656 = vmatprep.subr.mxu0 0.0
    %4657 = vmatpush1.msra.mxu0 0.0
    %4658 = vmatprep.subr.mxu0 0.0
    %4659 = vmatpush1.msra.mxu0 0.0
    %4660 = vmatprep.subr.mxu0 0.0
    %4661 = vmatpush1.msra.mxu0 %v4625
    %4662 = vmatprep.subr.mxu0 0.0
    %4663 = vmatpush2.msra.mxu0 0.0
    %4664 = vmatprep.subr.mxu0 0.0
    %4665 = vmatpush2.msra.mxu0 0.0
    %4666 = vmatprep.subr.mxu0 0.0
    %4667 = vmatpush2.msra.mxu0 0.0
    %4668 = vmatprep.subr.mxu0 0.0
    %4669 = vmatpush2.msra.mxu0 0.0
    %4670 = vmatprep.subr.mxu0 0.0
    %4671 = vmatpush2.msra.mxu0 0.0
    %4672 = vmatprep.subr.mxu0 0.0
    %4673 = vmatpush2.msra.mxu0 0.0
    %4674 = vmatprep.subr.mxu0 0.0
    %4675 = vmatpush2.msra.mxu0 0.0
    %4676 = vmatprep.subr.mxu0 0.0
    %4677 = vmatpush2.msra.mxu0 0.0
    %4678 = vmatprep.subr.mxu0 0.0
    %4679 = vmatpush2.msra.mxu0 0.0
    %4680 = vmatprep.subr.mxu0 0.0
    %4681 = vmatpush2.msra.mxu0 0.0
    %4682 = vmatprep.subr.mxu0 0.0
    %4683 = vmatpush2.msra.mxu0 0.0
    %4684 = vmatprep.subr.mxu0 0.0
    %4685 = vmatpush2.msra.mxu0 0.0
    %4686 = vmatprep.subr.mxu0 0.0
    %4687 = vmatpush2.msra.mxu0 0.0
    %4688 = vmatprep.subr.mxu0 0.0
    %4689 = vmatpush2.msra.mxu0 0.0
    %4690 = vmatprep.subr.mxu0 0.0
    %4691 = vmatpush2.msra.mxu0 0.0
    %4692 = vmatprep.subr.mxu0 0.0
    %4693 = vmatpush2.msra.mxu0 0.0
    %4694 = vmatprep.mubr.f32.mxu0 0.0
    %4695 = vmatmul.mubr.f32.gmra.mxu0 %v4628
    %v4696 = vpop.f32.mrf.mxu0
    %v4697 = vadd.f32 0.0, %v4696
    %v4698 = vpop.f32.mrf.mxu0
    %4699 = vdwg.mxu0
    %4701 = vrot.lane.b32.xlu0 %v4113, 120
    %v4702 = vpop.permute.xlu0 %4701
    %v4705 = vsel %vm358, %v4622, 0
    %4707 = vmatprep.subr.mxu0 0.0
    %4708 = vmatpush1.msra.mxu0 0.0
    %4709 = vmatprep.subr.mxu0 0.0
    %4710 = vmatpush1.msra.mxu0 0.0
    %4711 = vmatprep.subr.mxu0 0.0
    %4712 = vmatpush1.msra.mxu0 0.0
    %4713 = vmatprep.subr.mxu0 0.0
    %4714 = vmatpush1.msra.mxu0 0.0
    %4715 = vmatprep.subr.mxu0 0.0
    %4716 = vmatpush1.msra.mxu0 0.0
    %4717 = vmatprep.subr.mxu0 0.0
    %4718 = vmatpush1.msra.mxu0 0.0
    %4719 = vmatprep.subr.mxu0 0.0
    %4720 = vmatpush1.msra.mxu0 0.0
    %4721 = vmatprep.subr.mxu0 0.0
    %4722 = vmatpush1.msra.mxu0 0.0
    %4723 = vmatprep.subr.mxu0 0.0
    %4724 = vmatpush1.msra.mxu0 0.0
    %4725 = vmatprep.subr.mxu0 0.0
    %4726 = vmatpush1.msra.mxu0 0.0
    %4727 = vmatprep.subr.mxu0 0.0
    %4728 = vmatpush1.msra.mxu0 0.0
    %4729 = vmatprep.subr.mxu0 0.0
    %4730 = vmatpush1.msra.mxu0 0.0
    %4731 = vmatprep.subr.mxu0 0.0
    %4732 = vmatpush1.msra.mxu0 0.0
    %4733 = vmatprep.subr.mxu0 0.0
    %4734 = vmatpush1.msra.mxu0 0.0
    %4735 = vmatprep.subr.mxu0 0.0
    %4736 = vmatpush1.msra.mxu0 0.0
    %4737 = vmatprep.subr.mxu0 0.0
    %4738 = vmatpush1.msra.mxu0 %v4702
    %4739 = vmatprep.subr.mxu0 0.0
    %4740 = vmatpush2.msra.mxu0 0.0
    %4741 = vmatprep.subr.mxu0 0.0
    %4742 = vmatpush2.msra.mxu0 0.0
    %4743 = vmatprep.subr.mxu0 0.0
    %4744 = vmatpush2.msra.mxu0 0.0
    %4745 = vmatprep.subr.mxu0 0.0
    %4746 = vmatpush2.msra.mxu0 0.0
    %4747 = vmatprep.subr.mxu0 0.0
    %4748 = vmatpush2.msra.mxu0 0.0
    %4749 = vmatprep.subr.mxu0 0.0
    %4750 = vmatpush2.msra.mxu0 0.0
    %4751 = vmatprep.subr.mxu0 0.0
    %4752 = vmatpush2.msra.mxu0 0.0
    %4753 = vmatprep.subr.mxu0 0.0
    %4754 = vmatpush2.msra.mxu0 0.0
    %4755 = vmatprep.subr.mxu0 0.0
    %4756 = vmatpush2.msra.mxu0 0.0
    %4757 = vmatprep.subr.mxu0 0.0
    %4758 = vmatpush2.msra.mxu0 0.0
    %4759 = vmatprep.subr.mxu0 0.0
    %4760 = vmatpush2.msra.mxu0 0.0
    %4761 = vmatprep.subr.mxu0 0.0
    %4762 = vmatpush2.msra.mxu0 0.0
    %4763 = vmatprep.subr.mxu0 0.0
    %4764 = vmatpush2.msra.mxu0 0.0
    %4765 = vmatprep.subr.mxu0 0.0
    %4766 = vmatpush2.msra.mxu0 0.0
    %4767 = vmatprep.subr.mxu0 0.0
    %4768 = vmatpush2.msra.mxu0 0.0
    %4769 = vmatprep.subr.mxu0 0.0
    %4770 = vmatpush2.msra.mxu0 0.0
    %4771 = vmatprep.mubr.f32.mxu0 0.0
    %4772 = vmatmul.mubr.f32.gmra.mxu0 %v4705
    %v4773 = vpop.f32.mrf.mxu0
    %v4774 = vadd.f32 0.0, %v4773
    %v4775 = vpop.f32.mrf.mxu0
    %4776 = vdwg.mxu0
    %4777 = vrot.lane.b32.xlu0 %v4008, 112
    %v4778 = vpop.permute.xlu0 %4777
    %4779 = vrot.lane.b32.xlu0 %v4008, 80
    %v4780 = vpop.permute.xlu0 %4779
    %v4781 = vsel %vm358, %v4778, 0
    %v4783 = vsel %vm358, %v4780, 0
    %4785 = vmatprep.subr.mxu0 0.0
    %4786 = vmatpush1.xpose.msra.mxu0 0.0
    %4787 = vmatprep.subr.mxu0 0.0
    %4788 = vmatpush1.xpose.msra.mxu0 0.0
    %4789 = vmatprep.subr.mxu0 0.0
    %4790 = vmatpush1.xpose.msra.mxu0 0.0
    %4791 = vmatprep.subr.mxu0 0.0
    %4792 = vmatpush1.xpose.msra.mxu0 0.0
    %4793 = vmatprep.subr.mxu0 0.0
    %4794 = vmatpush1.xpose.msra.mxu0 0.0
    %4795 = vmatprep.subr.mxu0 0.0
    %4796 = vmatpush1.xpose.msra.mxu0 0.0
    %4797 = vmatprep.subr.mxu0 0.0
    %4798 = vmatpush1.xpose.msra.mxu0 0.0
    %4799 = vmatprep.subr.mxu0 0.0
    %4800 = vmatpush1.xpose.msra.mxu0 0.0
    %4801 = vmatprep.subr.mxu0 0.0
    %4802 = vmatpush1.xpose.msra.mxu0 0.0
    %4803 = vmatprep.subr.mxu0 0.0
    %4804 = vmatpush1.xpose.msra.mxu0 0.0
    %4805 = vmatprep.subr.mxu0 0.0
    %4806 = vmatpush1.xpose.msra.mxu0 0.0
    %4807 = vmatprep.subr.mxu0 0.0
    %4808 = vmatpush1.xpose.msra.mxu0 0.0
    %4809 = vmatprep.subr.mxu0 0.0
    %4810 = vmatpush1.xpose.msra.mxu0 0.0
    %4811 = vmatprep.subr.mxu0 0.0
    %4812 = vmatpush1.xpose.msra.mxu0 0.0
    %4813 = vmatprep.subr.mxu0 0.0
    %4814 = vmatpush1.xpose.msra.mxu0 0.0
    %4815 = vmatprep.subr.mxu0 0.0
    %4816 = vmatpush1.xpose.msra.mxu0 %v4783
    %4817 = vmatprep.subr.mxu0 0.0
    %4818 = vmatpush2.xpose.msra.mxu0 0.0
    %4819 = vmatprep.subr.mxu0 0.0
    %4820 = vmatpush2.xpose.msra.mxu0 0.0
    %4821 = vmatprep.subr.mxu0 0.0
    %4822 = vmatpush2.xpose.msra.mxu0 0.0
    %4823 = vmatprep.subr.mxu0 0.0
    %4824 = vmatpush2.xpose.msra.mxu0 0.0
    %4825 = vmatprep.subr.mxu0 0.0
    %4826 = vmatpush2.xpose.msra.mxu0 0.0
    %4827 = vmatprep.subr.mxu0 0.0
    %4828 = vmatpush2.xpose.msra.mxu0 0.0
    %4829 = vmatprep.subr.mxu0 0.0
    %4830 = vmatpush2.xpose.msra.mxu0 0.0
    %4831 = vmatprep.subr.mxu0 0.0
    %4832 = vmatpush2.xpose.msra.mxu0 0.0
    %4833 = vmatprep.subr.mxu0 0.0
    %4834 = vmatpush2.xpose.msra.mxu0 0.0
    %4835 = vmatprep.subr.mxu0 0.0
    %4836 = vmatpush2.xpose.msra.mxu0 0.0
    %4837 = vmatprep.subr.mxu0 0.0
    %4838 = vmatpush2.xpose.msra.mxu0 0.0
    %4839 = vmatprep.subr.mxu0 0.0
    %4840 = vmatpush2.xpose.msra.mxu0 0.0
    %4841 = vmatprep.subr.mxu0 0.0
    %4842 = vmatpush2.xpose.msra.mxu0 0.0
    %4843 = vmatprep.subr.mxu0 0.0
    %4844 = vmatpush2.xpose.msra.mxu0 0.0
    %4845 = vmatprep.subr.mxu0 0.0
    %4846 = vmatpush2.xpose.msra.mxu0 0.0
    %4847 = vmatprep.subr.mxu0 0.0
    %4848 = vmatpush2.xpose.msra.mxu0 0.0
    %4849 = vmatprep.mubr.f32.mxu0 0.0
    %4850 = vmatmul.mubr.f32.gmra.mxu0 %v4781
    %v4851 = vpop.f32.mrf.mxu0
    %v4852 = vadd.f32 0.0, %v4851
    %v4853 = vpop.f32.mrf.mxu0
    %4854 = vdwg.mxu0
    %4855 = vrot.lane.b32.xlu0 %v4013, 112
    %v4856 = vpop.permute.xlu0 %4855
    %4857 = vrot.lane.b32.xlu0 %v4013, 80
    %v4858 = vpop.permute.xlu0 %4857
    %v4859 = vsel %vm358, %v4856, 0
    %v4861 = vsel %vm358, %v4858, 0
    %4863 = vmatprep.subr.mxu0 0.0
    %4864 = vmatpush1.xpose.msra.mxu0 0.0
    %4865 = vmatprep.subr.mxu0 0.0
    %4866 = vmatpush1.xpose.msra.mxu0 0.0
    %4867 = vmatprep.subr.mxu0 0.0
    %4868 = vmatpush1.xpose.msra.mxu0 0.0
    %4869 = vmatprep.subr.mxu0 0.0
    %4870 = vmatpush1.xpose.msra.mxu0 0.0
    %4871 = vmatprep.subr.mxu0 0.0
    %4872 = vmatpush1.xpose.msra.mxu0 0.0
    %4873 = vmatprep.subr.mxu0 0.0
    %4874 = vmatpush1.xpose.msra.mxu0 0.0
    %4875 = vmatprep.subr.mxu0 0.0
    %4876 = vmatpush1.xpose.msra.mxu0 0.0
    %4877 = vmatprep.subr.mxu0 0.0
    %4878 = vmatpush1.xpose.msra.mxu0 0.0
    %4879 = vmatprep.subr.mxu0 0.0
    %4880 = vmatpush1.xpose.msra.mxu0 0.0
    %4881 = vmatprep.subr.mxu0 0.0
    %4882 = vmatpush1.xpose.msra.mxu0 0.0
    %4883 = vmatprep.subr.mxu0 0.0
    %4884 = vmatpush1.xpose.msra.mxu0 0.0
    %4885 = vmatprep.subr.mxu0 0.0
    %4886 = vmatpush1.xpose.msra.mxu0 0.0
    %4887 = vmatprep.subr.mxu0 0.0
    %4888 = vmatpush1.xpose.msra.mxu0 0.0
    %4889 = vmatprep.subr.mxu0 0.0
    %4890 = vmatpush1.xpose.msra.mxu0 0.0
    %4891 = vmatprep.subr.mxu0 0.0
    %4892 = vmatpush1.xpose.msra.mxu0 0.0
    %4893 = vmatprep.subr.mxu0 0.0
    %4894 = vmatpush1.xpose.msra.mxu0 %v4861
    %4895 = vmatprep.subr.mxu0 0.0
    %4896 = vmatpush2.xpose.msra.mxu0 0.0
    %4897 = vmatprep.subr.mxu0 0.0
    %4898 = vmatpush2.xpose.msra.mxu0 0.0
    %4899 = vmatprep.subr.mxu0 0.0
    %4900 = vmatpush2.xpose.msra.mxu0 0.0
    %4901 = vmatprep.subr.mxu0 0.0
    %4902 = vmatpush2.xpose.msra.mxu0 0.0
    %4903 = vmatprep.subr.mxu0 0.0
    %4904 = vmatpush2.xpose.msra.mxu0 0.0
    %4905 = vmatprep.subr.mxu0 0.0
    %4906 = vmatpush2.xpose.msra.mxu0 0.0
    %4907 = vmatprep.subr.mxu0 0.0
    %4908 = vmatpush2.xpose.msra.mxu0 0.0
    %4909 = vmatprep.subr.mxu0 0.0
    %4910 = vmatpush2.xpose.msra.mxu0 0.0
    %4911 = vmatprep.subr.mxu0 0.0
    %4912 = vmatpush2.xpose.msra.mxu0 0.0
    %4913 = vmatprep.subr.mxu0 0.0
    %4914 = vmatpush2.xpose.msra.mxu0 0.0
    %4915 = vmatprep.subr.mxu0 0.0
    %4916 = vmatpush2.xpose.msra.mxu0 0.0
    %4917 = vmatprep.subr.mxu0 0.0
    %4918 = vmatpush2.xpose.msra.mxu0 0.0
    %4919 = vmatprep.subr.mxu0 0.0
    %4920 = vmatpush2.xpose.msra.mxu0 0.0
    %4921 = vmatprep.subr.mxu0 0.0
    %4922 = vmatpush2.xpose.msra.mxu0 0.0
    %4923 = vmatprep.subr.mxu0 0.0
    %4924 = vmatpush2.xpose.msra.mxu0 0.0
    %4925 = vmatprep.subr.mxu0 0.0
    %4926 = vmatpush2.xpose.msra.mxu0 0.0
    %4927 = vmatprep.mubr.f32.mxu0 0.0
    %4928 = vmatmul.mubr.f32.gmra.mxu0 %v4859
    %v4929 = vpop.f32.mrf.mxu0
    %v4930 = vadd.f32 0.0, %v4929
    %v4931 = vpop.f32.mrf.mxu0
    %4932 = vdwg.mxu0
    %v4933 = vsel %vm358, %v4852, -inf
    %4934 = vmax.xlane.f32.xlu0 %v4933
    %v4935 = vpop.xlane.xlu0 %4934
    %v4936 = vsel %vm358, %v4930, -inf
    %4937 = vmax.xlane.f32.xlu0 %v4936
    %v4938 = vpop.xlane.xlu0 %4937
    %v4939 = vsub.f32 %v4852, %v4935
    %v4940 = vsub.f32 %v4930, %v4938
    %v4941 = vmul.f32 %v4939, 1.442695
    %v4942 = vpow.pop %v4941
    %v4943 = vmul.f32 %v4940, 1.442695
    %v4944 = vpow.pop %v4943
    %v4945 = vsel %vm358, %v4942, 0.0
    %4946 = vadd.xlane.f32.xlu0 %v4945
    %v4947 = vpop.xlane.xlu0 %4946
    %v4948 = vsel %vm358, %v4944, 0.0
    %4949 = vadd.xlane.f32.xlu0 %v4948
    %v4950 = vpop.xlane.xlu0 %4949
    %v4951 = vrcp.pop %v4947
    %v4952 = vrcp.pop %v4950
    %v4953 = vmul.f32 %v4942, %v4951
    %v4954 = vmul.f32 %v4944, %v4952
    %4955 = vrot.lane.b32.xlu0 %v4108, 112
    %v4956 = vpop.permute.xlu0 %4955
    %v4959 = vsel %vm358, %v4953, 0
    %4961 = vmatprep.subr.mxu0 0.0
    %4962 = vmatpush1.msra.mxu0 0.0
    %4963 = vmatprep.subr.mxu0 0.0
    %4964 = vmatpush1.msra.mxu0 0.0
    %4965 = vmatprep.subr.mxu0 0.0
    %4966 = vmatpush1.msra.mxu0 0.0
    %4967 = vmatprep.subr.mxu0 0.0
    %4968 = vmatpush1.msra.mxu0 0.0
    %4969 = vmatprep.subr.mxu0 0.0
    %4970 = vmatpush1.msra.mxu0 0.0
    %4971 = vmatprep.subr.mxu0 0.0
    %4972 = vmatpush1.msra.mxu0 0.0
    %4973 = vmatprep.subr.mxu0 0.0
    %4974 = vmatpush1.msra.mxu0 0.0
    %4975 = vmatprep.subr.mxu0 0.0
    %4976 = vmatpush1.msra.mxu0 0.0
    %4977 = vmatprep.subr.mxu0 0.0
    %4978 = vmatpush1.msra.mxu0 0.0
    %4979 = vmatprep.subr.mxu0 0.0
    %4980 = vmatpush1.msra.mxu0 0.0
    %4981 = vmatprep.subr.mxu0 0.0
    %4982 = vmatpush1.msra.mxu0 0.0
    %4983 = vmatprep.subr.mxu0 0.0
    %4984 = vmatpush1.msra.mxu0 0.0
    %4985 = vmatprep.subr.mxu0 0.0
    %4986 = vmatpush1.msra.mxu0 0.0
    %4987 = vmatprep.subr.mxu0 0.0
    %4988 = vmatpush1.msra.mxu0 0.0
    %4989 = vmatprep.subr.mxu0 0.0
    %4990 = vmatpush1.msra.mxu0 0.0
    %4991 = vmatprep.subr.mxu0 0.0
    %4992 = vmatpush1.msra.mxu0 %v4956
    %4993 = vmatprep.subr.mxu0 0.0
    %4994 = vmatpush2.msra.mxu0 0.0
    %4995 = vmatprep.subr.mxu0 0.0
    %4996 = vmatpush2.msra.mxu0 0.0
    %4997 = vmatprep.subr.mxu0 0.0
    %4998 = vmatpush2.msra.mxu0 0.0
    %4999 = vmatprep.subr.mxu0 0.0
    %5000 = vmatpush2.msra.mxu0 0.0
    %5001 = vmatprep.subr.mxu0 0.0
    %5002 = vmatpush2.msra.mxu0 0.0
    %5003 = vmatprep.subr.mxu0 0.0
    %5004 = vmatpush2.msra.mxu0 0.0
    %5005 = vmatprep.subr.mxu0 0.0
    %5006 = vmatpush2.msra.mxu0 0.0
    %5007 = vmatprep.subr.mxu0 0.0
    %5008 = vmatpush2.msra.mxu0 0.0
    %5009 = vmatprep.subr.mxu0 0.0
    %5010 = vmatpush2.msra.mxu0 0.0
    %5011 = vmatprep.subr.mxu0 0.0
    %5012 = vmatpush2.msra.mxu0 0.0
    %5013 = vmatprep.subr.mxu0 0.0
    %5014 = vmatpush2.msra.mxu0 0.0
    %5015 = vmatprep.subr.mxu0 0.0
    %5016 = vmatpush2.msra.mxu0 0.0
    %5017 = vmatprep.subr.mxu0 0.0
    %5018 = vmatpush2.msra.mxu0 0.0
    %5019 = vmatprep.subr.mxu0 0.0
    %5020 = vmatpush2.msra.mxu0 0.0
    %5021 = vmatprep.subr.mxu0 0.0
    %5022 = vmatpush2.msra.mxu0 0.0
    %5023 = vmatprep.subr.mxu0 0.0
    %5024 = vmatpush2.msra.mxu0 0.0
    %5025 = vmatprep.mubr.f32.mxu0 0.0
    %5026 = vmatmul.mubr.f32.gmra.mxu0 %v4959
    %v5027 = vpop.f32.mrf.mxu0
    %v5028 = vadd.f32 0.0, %v5027
    %v5029 = vpop.f32.mrf.mxu0
    %5030 = vdwg.mxu0
    %5031 = vrot.lane.b32.xlu0 %v4113, 112
    %v5032 = vpop.permute.xlu0 %5031
    %v5035 = vsel %vm358, %v4954, 0
    %5037 = vmatprep.subr.mxu0 0.0
    %5038 = vmatpush1.msra.mxu0 0.0
    %5039 = vmatprep.subr.mxu0 0.0
    %5040 = vmatpush1.msra.mxu0 0.0
    %5041 = vmatprep.subr.mxu0 0.0
    %5042 = vmatpush1.msra.mxu0 0.0
    %5043 = vmatprep.subr.mxu0 0.0
    %5044 = vmatpush1.msra.mxu0 0.0
    %5045 = vmatprep.subr.mxu0 0.0
    %5046 = vmatpush1.msra.mxu0 0.0
    %5047 = vmatprep.subr.mxu0 0.0
    %5048 = vmatpush1.msra.mxu0 0.0
    %5049 = vmatprep.subr.mxu0 0.0
    %5050 = vmatpush1.msra.mxu0 0.0
    %5051 = vmatprep.subr.mxu0 0.0
    %5052 = vmatpush1.msra.mxu0 0.0
    %5053 = vmatprep.subr.mxu0 0.0
    %5054 = vmatpush1.msra.mxu0 0.0
    %5055 = vmatprep.subr.mxu0 0.0
    %5056 = vmatpush1.msra.mxu0 0.0
    %5057 = vmatprep.subr.mxu0 0.0
    %5058 = vmatpush1.msra.mxu0 0.0
    %5059 = vmatprep.subr.mxu0 0.0
    %5060 = vmatpush1.msra.mxu0 0.0
    %5061 = vmatprep.subr.mxu0 0.0
    %5062 = vmatpush1.msra.mxu0 0.0
    %5063 = vmatprep.subr.mxu0 0.0
    %5064 = vmatpush1.msra.mxu0 0.0
    %5065 = vmatprep.subr.mxu0 0.0
    %5066 = vmatpush1.msra.mxu0 0.0
    %5067 = vmatprep.subr.mxu0 0.0
    %5068 = vmatpush1.msra.mxu0 %v5032
    %5069 = vmatprep.subr.mxu0 0.0
    %5070 = vmatpush2.msra.mxu0 0.0
    %5071 = vmatprep.subr.mxu0 0.0
    %5072 = vmatpush2.msra.mxu0 0.0
    %5073 = vmatprep.subr.mxu0 0.0
    %5074 = vmatpush2.msra.mxu0 0.0
    %5075 = vmatprep.subr.mxu0 0.0
    %5076 = vmatpush2.msra.mxu0 0.0
    %5077 = vmatprep.subr.mxu0 0.0
    %5078 = vmatpush2.msra.mxu0 0.0
    %5079 = vmatprep.subr.mxu0 0.0
    %5080 = vmatpush2.msra.mxu0 0.0
    %5081 = vmatprep.subr.mxu0 0.0
    %5082 = vmatpush2.msra.mxu0 0.0
    %5083 = vmatprep.subr.mxu0 0.0
    %5084 = vmatpush2.msra.mxu0 0.0
    %5085 = vmatprep.subr.mxu0 0.0
    %5086 = vmatpush2.msra.mxu0 0.0
    %5087 = vmatprep.subr.mxu0 0.0
    %5088 = vmatpush2.msra.mxu0 0.0
    %5089 = vmatprep.subr.mxu0 0.0
    %5090 = vmatpush2.msra.mxu0 0.0
    %5091 = vmatprep.subr.mxu0 0.0
    %5092 = vmatpush2.msra.mxu0 0.0
    %5093 = vmatprep.subr.mxu0 0.0
    %5094 = vmatpush2.msra.mxu0 0.0
    %5095 = vmatprep.subr.mxu0 0.0
    %5096 = vmatpush2.msra.mxu0 0.0
    %5097 = vmatprep.subr.mxu0 0.0
    %5098 = vmatpush2.msra.mxu0 0.0
    %5099 = vmatprep.subr.mxu0 0.0
    %5100 = vmatpush2.msra.mxu0 0.0
    %5101 = vmatprep.mubr.f32.mxu0 0.0
    %5102 = vmatmul.mubr.f32.gmra.mxu0 %v5035
    %v5103 = vpop.f32.mrf.mxu0
    %v5104 = vadd.f32 0.0, %v5103
    %v5105 = vpop.f32.mrf.mxu0
    %5106 = vdwg.mxu0
    %5107 = vrot.lane.b32.xlu0 %v4008, 104
    %v5108 = vpop.permute.xlu0 %5107
    %5109 = vrot.lane.b32.xlu0 %v4008, 72
    %v5110 = vpop.permute.xlu0 %5109
    %v5111 = vsel %vm358, %v5108, 0
    %v5113 = vsel %vm358, %v5110, 0
    %5115 = vmatprep.subr.mxu0 0.0
    %5116 = vmatpush1.xpose.msra.mxu0 0.0
    %5117 = vmatprep.subr.mxu0 0.0
    %5118 = vmatpush1.xpose.msra.mxu0 0.0
    %5119 = vmatprep.subr.mxu0 0.0
    %5120 = vmatpush1.xpose.msra.mxu0 0.0
    %5121 = vmatprep.subr.mxu0 0.0
    %5122 = vmatpush1.xpose.msra.mxu0 0.0
    %5123 = vmatprep.subr.mxu0 0.0
    %5124 = vmatpush1.xpose.msra.mxu0 0.0
    %5125 = vmatprep.subr.mxu0 0.0
    %5126 = vmatpush1.xpose.msra.mxu0 0.0
    %5127 = vmatprep.subr.mxu0 0.0
    %5128 = vmatpush1.xpose.msra.mxu0 0.0
    %5129 = vmatprep.subr.mxu0 0.0
    %5130 = vmatpush1.xpose.msra.mxu0 0.0
    %5131 = vmatprep.subr.mxu0 0.0
    %5132 = vmatpush1.xpose.msra.mxu0 0.0
    %5133 = vmatprep.subr.mxu0 0.0
    %5134 = vmatpush1.xpose.msra.mxu0 0.0
    %5135 = vmatprep.subr.mxu0 0.0
    %5136 = vmatpush1.xpose.msra.mxu0 0.0
    %5137 = vmatprep.subr.mxu0 0.0
    %5138 = vmatpush1.xpose.msra.mxu0 0.0
    %5139 = vmatprep.subr.mxu0 0.0
    %5140 = vmatpush1.xpose.msra.mxu0 0.0
    %5141 = vmatprep.subr.mxu0 0.0
    %5142 = vmatpush1.xpose.msra.mxu0 0.0
    %5143 = vmatprep.subr.mxu0 0.0
    %5144 = vmatpush1.xpose.msra.mxu0 0.0
    %5145 = vmatprep.subr.mxu0 0.0
    %5146 = vmatpush1.xpose.msra.mxu0 %v5113
    %5147 = vmatprep.subr.mxu0 0.0
    %5148 = vmatpush2.xpose.msra.mxu0 0.0
    %5149 = vmatprep.subr.mxu0 0.0
    %5150 = vmatpush2.xpose.msra.mxu0 0.0
    %5151 = vmatprep.subr.mxu0 0.0
    %5152 = vmatpush2.xpose.msra.mxu0 0.0
    %5153 = vmatprep.subr.mxu0 0.0
    %5154 = vmatpush2.xpose.msra.mxu0 0.0
    %5155 = vmatprep.subr.mxu0 0.0
    %5156 = vmatpush2.xpose.msra.mxu0 0.0
    %5157 = vmatprep.subr.mxu0 0.0
    %5158 = vmatpush2.xpose.msra.mxu0 0.0
    %5159 = vmatprep.subr.mxu0 0.0
    %5160 = vmatpush2.xpose.msra.mxu0 0.0
    %5161 = vmatprep.subr.mxu0 0.0
    %5162 = vmatpush2.xpose.msra.mxu0 0.0
    %5163 = vmatprep.subr.mxu0 0.0
    %5164 = vmatpush2.xpose.msra.mxu0 0.0
    %5165 = vmatprep.subr.mxu0 0.0
    %5166 = vmatpush2.xpose.msra.mxu0 0.0
    %5167 = vmatprep.subr.mxu0 0.0
    %5168 = vmatpush2.xpose.msra.mxu0 0.0
    %5169 = vmatprep.subr.mxu0 0.0
    %5170 = vmatpush2.xpose.msra.mxu0 0.0
    %5171 = vmatprep.subr.mxu0 0.0
    %5172 = vmatpush2.xpose.msra.mxu0 0.0
    %5173 = vmatprep.subr.mxu0 0.0
    %5174 = vmatpush2.xpose.msra.mxu0 0.0
    %5175 = vmatprep.subr.mxu0 0.0
    %5176 = vmatpush2.xpose.msra.mxu0 0.0
    %5177 = vmatprep.subr.mxu0 0.0
    %5178 = vmatpush2.xpose.msra.mxu0 0.0
    %5179 = vmatprep.mubr.f32.mxu0 0.0
    %5180 = vmatmul.mubr.f32.gmra.mxu0 %v5111
    %v5181 = vpop.f32.mrf.mxu0
    %v5182 = vadd.f32 0.0, %v5181
    %v5183 = vpop.f32.mrf.mxu0
    %5184 = vdwg.mxu0
    %5185 = vrot.lane.b32.xlu0 %v4013, 104
    %v5186 = vpop.permute.xlu0 %5185
    %5187 = vrot.lane.b32.xlu0 %v4013, 72
    %v5188 = vpop.permute.xlu0 %5187
    %v5189 = vsel %vm358, %v5186, 0
    %v5191 = vsel %vm358, %v5188, 0
    %5193 = vmatprep.subr.mxu0 0.0
    %5194 = vmatpush1.xpose.msra.mxu0 0.0
    %5195 = vmatprep.subr.mxu0 0.0
    %5196 = vmatpush1.xpose.msra.mxu0 0.0
    %5197 = vmatprep.subr.mxu0 0.0
    %5198 = vmatpush1.xpose.msra.mxu0 0.0
    %5199 = vmatprep.subr.mxu0 0.0
    %5200 = vmatpush1.xpose.msra.mxu0 0.0
    %5201 = vmatprep.subr.mxu0 0.0
    %5202 = vmatpush1.xpose.msra.mxu0 0.0
    %5203 = vmatprep.subr.mxu0 0.0
    %5204 = vmatpush1.xpose.msra.mxu0 0.0
    %5205 = vmatprep.subr.mxu0 0.0
    %5206 = vmatpush1.xpose.msra.mxu0 0.0
    %5207 = vmatprep.subr.mxu0 0.0
    %5208 = vmatpush1.xpose.msra.mxu0 0.0
    %5209 = vmatprep.subr.mxu0 0.0
    %5210 = vmatpush1.xpose.msra.mxu0 0.0
    %5211 = vmatprep.subr.mxu0 0.0
    %5212 = vmatpush1.xpose.msra.mxu0 0.0
    %5213 = vmatprep.subr.mxu0 0.0
    %5214 = vmatpush1.xpose.msra.mxu0 0.0
    %5215 = vmatprep.subr.mxu0 0.0
    %5216 = vmatpush1.xpose.msra.mxu0 0.0
    %5217 = vmatprep.subr.mxu0 0.0
    %5218 = vmatpush1.xpose.msra.mxu0 0.0
    %5219 = vmatprep.subr.mxu0 0.0
    %5220 = vmatpush1.xpose.msra.mxu0 0.0
    %5221 = vmatprep.subr.mxu0 0.0
    %5222 = vmatpush1.xpose.msra.mxu0 0.0
    %5223 = vmatprep.subr.mxu0 0.0
    %5224 = vmatpush1.xpose.msra.mxu0 %v5191
    %5225 = vmatprep.subr.mxu0 0.0
    %5226 = vmatpush2.xpose.msra.mxu0 0.0
    %5227 = vmatprep.subr.mxu0 0.0
    %5228 = vmatpush2.xpose.msra.mxu0 0.0
    %5229 = vmatprep.subr.mxu0 0.0
    %5230 = vmatpush2.xpose.msra.mxu0 0.0
    %5231 = vmatprep.subr.mxu0 0.0
    %5232 = vmatpush2.xpose.msra.mxu0 0.0
    %5233 = vmatprep.subr.mxu0 0.0
    %5234 = vmatpush2.xpose.msra.mxu0 0.0
    %5235 = vmatprep.subr.mxu0 0.0
    %5236 = vmatpush2.xpose.msra.mxu0 0.0
    %5237 = vmatprep.subr.mxu0 0.0
    %5238 = vmatpush2.xpose.msra.mxu0 0.0
    %5239 = vmatprep.subr.mxu0 0.0
    %5240 = vmatpush2.xpose.msra.mxu0 0.0
    %5241 = vmatprep.subr.mxu0 0.0
    %5242 = vmatpush2.xpose.msra.mxu0 0.0
    %5243 = vmatprep.subr.mxu0 0.0
    %5244 = vmatpush2.xpose.msra.mxu0 0.0
    %5245 = vmatprep.subr.mxu0 0.0
    %5246 = vmatpush2.xpose.msra.mxu0 0.0
    %5247 = vmatprep.subr.mxu0 0.0
    %5248 = vmatpush2.xpose.msra.mxu0 0.0
    %5249 = vmatprep.subr.mxu0 0.0
    %5250 = vmatpush2.xpose.msra.mxu0 0.0
    %5251 = vmatprep.subr.mxu0 0.0
    %5252 = vmatpush2.xpose.msra.mxu0 0.0
    %5253 = vmatprep.subr.mxu0 0.0
    %5254 = vmatpush2.xpose.msra.mxu0 0.0
    %5255 = vmatprep.subr.mxu0 0.0
    %5256 = vmatpush2.xpose.msra.mxu0 0.0
    %5257 = vmatprep.mubr.f32.mxu0 0.0
    %5258 = vmatmul.mubr.f32.gmra.mxu0 %v5189
    %v5259 = vpop.f32.mrf.mxu0
    %v5260 = vadd.f32 0.0, %v5259
    %v5261 = vpop.f32.mrf.mxu0
    %5262 = vdwg.mxu0
    %v5263 = vsel %vm358, %v5182, -inf
    %5264 = vmax.xlane.f32.xlu0 %v5263
    %v5265 = vpop.xlane.xlu0 %5264
    %v5266 = vsel %vm358, %v5260, -inf
    %5267 = vmax.xlane.f32.xlu0 %v5266
    %v5268 = vpop.xlane.xlu0 %5267
    %v5269 = vsub.f32 %v5182, %v5265
    %v5270 = vsub.f32 %v5260, %v5268
    %v5271 = vmul.f32 %v5269, 1.442695
    %v5272 = vpow.pop %v5271
    %v5273 = vmul.f32 %v5270, 1.442695
    %v5274 = vpow.pop %v5273
    %v5275 = vsel %vm358, %v5272, 0.0
    %5276 = vadd.xlane.f32.xlu0 %v5275
    %v5277 = vpop.xlane.xlu0 %5276
    %v5278 = vsel %vm358, %v5274, 0.0
    %5279 = vadd.xlane.f32.xlu0 %v5278
    %v5280 = vpop.xlane.xlu0 %5279
    %v5281 = vrcp.pop %v5277
    %v5282 = vrcp.pop %v5280
    %v5283 = vmul.f32 %v5272, %v5281
    %v5284 = vmul.f32 %v5274, %v5282
    %5285 = vrot.lane.b32.xlu0 %v4108, 104
    %v5286 = vpop.permute.xlu0 %5285
    %v5289 = vsel %vm358, %v5283, 0
    %5291 = vmatprep.subr.mxu0 0.0
    %5292 = vmatpush1.msra.mxu0 0.0
    %5293 = vmatprep.subr.mxu0 0.0
    %5294 = vmatpush1.msra.mxu0 0.0
    %5295 = vmatprep.subr.mxu0 0.0
    %5296 = vmatpush1.msra.mxu0 0.0
    %5297 = vmatprep.subr.mxu0 0.0
    %5298 = vmatpush1.msra.mxu0 0.0
    %5299 = vmatprep.subr.mxu0 0.0
    %5300 = vmatpush1.msra.mxu0 0.0
    %5301 = vmatprep.subr.mxu0 0.0
    %5302 = vmatpush1.msra.mxu0 0.0
    %5303 = vmatprep.subr.mxu0 0.0
    %5304 = vmatpush1.msra.mxu0 0.0
    %5305 = vmatprep.subr.mxu0 0.0
    %5306 = vmatpush1.msra.mxu0 0.0
    %5307 = vmatprep.subr.mxu0 0.0
    %5308 = vmatpush1.msra.mxu0 0.0
    %5309 = vmatprep.subr.mxu0 0.0
    %5310 = vmatpush1.msra.mxu0 0.0
    %5311 = vmatprep.subr.mxu0 0.0
    %5312 = vmatpush1.msra.mxu0 0.0
    %5313 = vmatprep.subr.mxu0 0.0
    %5314 = vmatpush1.msra.mxu0 0.0
    %5315 = vmatprep.subr.mxu0 0.0
    %5316 = vmatpush1.msra.mxu0 0.0
    %5317 = vmatprep.subr.mxu0 0.0
    %5318 = vmatpush1.msra.mxu0 0.0
    %5319 = vmatprep.subr.mxu0 0.0
    %5320 = vmatpush1.msra.mxu0 0.0
    %5321 = vmatprep.subr.mxu0 0.0
    %5322 = vmatpush1.msra.mxu0 %v5286
    %5323 = vmatprep.subr.mxu0 0.0
    %5324 = vmatpush2.msra.mxu0 0.0
    %5325 = vmatprep.subr.mxu0 0.0
    %5326 = vmatpush2.msra.mxu0 0.0
    %5327 = vmatprep.subr.mxu0 0.0
    %5328 = vmatpush2.msra.mxu0 0.0
    %5329 = vmatprep.subr.mxu0 0.0
    %5330 = vmatpush2.msra.mxu0 0.0
    %5331 = vmatprep.subr.mxu0 0.0
    %5332 = vmatpush2.msra.mxu0 0.0
    %5333 = vmatprep.subr.mxu0 0.0
    %5334 = vmatpush2.msra.mxu0 0.0
    %5335 = vmatprep.subr.mxu0 0.0
    %5336 = vmatpush2.msra.mxu0 0.0
    %5337 = vmatprep.subr.mxu0 0.0
    %5338 = vmatpush2.msra.mxu0 0.0
    %5339 = vmatprep.subr.mxu0 0.0
    %5340 = vmatpush2.msra.mxu0 0.0
    %5341 = vmatprep.subr.mxu0 0.0
    %5342 = vmatpush2.msra.mxu0 0.0
    %5343 = vmatprep.subr.mxu0 0.0
    %5344 = vmatpush2.msra.mxu0 0.0
    %5345 = vmatprep.subr.mxu0 0.0
    %5346 = vmatpush2.msra.mxu0 0.0
    %5347 = vmatprep.subr.mxu0 0.0
    %5348 = vmatpush2.msra.mxu0 0.0
    %5349 = vmatprep.subr.mxu0 0.0
    %5350 = vmatpush2.msra.mxu0 0.0
    %5351 = vmatprep.subr.mxu0 0.0
    %5352 = vmatpush2.msra.mxu0 0.0
    %5353 = vmatprep.subr.mxu0 0.0
    %5354 = vmatpush2.msra.mxu0 0.0
    %5355 = vmatprep.mubr.f32.mxu0 0.0
    %5356 = vmatmul.mubr.f32.gmra.mxu0 %v5289
    %v5357 = vpop.f32.mrf.mxu0
    %v5358 = vadd.f32 0.0, %v5357
    %v5359 = vpop.f32.mrf.mxu0
    %5360 = vdwg.mxu0
    %5361 = vrot.lane.b32.xlu0 %v4113, 104
    %v5362 = vpop.permute.xlu0 %5361
    %v5365 = vsel %vm358, %v5284, 0
    %5367 = vmatprep.subr.mxu0 0.0
    %5368 = vmatpush1.msra.mxu0 0.0
    %5369 = vmatprep.subr.mxu0 0.0
    %5370 = vmatpush1.msra.mxu0 0.0
    %5371 = vmatprep.subr.mxu0 0.0
    %5372 = vmatpush1.msra.mxu0 0.0
    %5373 = vmatprep.subr.mxu0 0.0
    %5374 = vmatpush1.msra.mxu0 0.0
    %5375 = vmatprep.subr.mxu0 0.0
    %5376 = vmatpush1.msra.mxu0 0.0
    %5377 = vmatprep.subr.mxu0 0.0
    %5378 = vmatpush1.msra.mxu0 0.0
    %5379 = vmatprep.subr.mxu0 0.0
    %5380 = vmatpush1.msra.mxu0 0.0
    %5381 = vmatprep.subr.mxu0 0.0
    %5382 = vmatpush1.msra.mxu0 0.0
    %5383 = vmatprep.subr.mxu0 0.0
    %5384 = vmatpush1.msra.mxu0 0.0
    %5385 = vmatprep.subr.mxu0 0.0
    %5386 = vmatpush1.msra.mxu0 0.0
    %5387 = vmatprep.subr.mxu0 0.0
    %5388 = vmatpush1.msra.mxu0 0.0
    %5389 = vmatprep.subr.mxu0 0.0
    %5390 = vmatpush1.msra.mxu0 0.0
    %5391 = vmatprep.subr.mxu0 0.0
    %5392 = vmatpush1.msra.mxu0 0.0
    %5393 = vmatprep.subr.mxu0 0.0
    %5394 = vmatpush1.msra.mxu0 0.0
    %5395 = vmatprep.subr.mxu0 0.0
    %5396 = vmatpush1.msra.mxu0 0.0
    %5397 = vmatprep.subr.mxu0 0.0
    %5398 = vmatpush1.msra.mxu0 %v5362
    %5399 = vmatprep.subr.mxu0 0.0
    %5400 = vmatpush2.msra.mxu0 0.0
    %5401 = vmatprep.subr.mxu0 0.0
    %5402 = vmatpush2.msra.mxu0 0.0
    %5403 = vmatprep.subr.mxu0 0.0
    %5404 = vmatpush2.msra.mxu0 0.0
    %5405 = vmatprep.subr.mxu0 0.0
    %5406 = vmatpush2.msra.mxu0 0.0
    %5407 = vmatprep.subr.mxu0 0.0
    %5408 = vmatpush2.msra.mxu0 0.0
    %5409 = vmatprep.subr.mxu0 0.0
    %5410 = vmatpush2.msra.mxu0 0.0
    %5411 = vmatprep.subr.mxu0 0.0
    %5412 = vmatpush2.msra.mxu0 0.0
    %5413 = vmatprep.subr.mxu0 0.0
    %5414 = vmatpush2.msra.mxu0 0.0
    %5415 = vmatprep.subr.mxu0 0.0
    %5416 = vmatpush2.msra.mxu0 0.0
    %5417 = vmatprep.subr.mxu0 0.0
    %5418 = vmatpush2.msra.mxu0 0.0
    %5419 = vmatprep.subr.mxu0 0.0
    %5420 = vmatpush2.msra.mxu0 0.0
    %5421 = vmatprep.subr.mxu0 0.0
    %5422 = vmatpush2.msra.mxu0 0.0
    %5423 = vmatprep.subr.mxu0 0.0
    %5424 = vmatpush2.msra.mxu0 0.0
    %5425 = vmatprep.subr.mxu0 0.0
    %5426 = vmatpush2.msra.mxu0 0.0
    %5427 = vmatprep.subr.mxu0 0.0
    %5428 = vmatpush2.msra.mxu0 0.0
    %5429 = vmatprep.subr.mxu0 0.0
    %5430 = vmatpush2.msra.mxu0 0.0
    %5431 = vmatprep.mubr.f32.mxu0 0.0
    %5432 = vmatmul.mubr.f32.gmra.mxu0 %v5365
    %v5433 = vpop.f32.mrf.mxu0
    %v5434 = vadd.f32 0.0, %v5433
    %v5435 = vpop.f32.mrf.mxu0
    %5436 = vdwg.mxu0
    %5439 = vrot.lane.b32.xlu0 %v4697, 8
    %v5440 = vpop.permute.xlu0 %5439
    %5441 = vrot.lane.b32.xlu0 %v4774, 8
    %v5442 = vpop.permute.xlu0 %5441
    %5447 = vrot.lane.b32.xlu0 %v5028, 16
    %v5448 = vpop.permute.xlu0 %5447
    %5449 = vrot.lane.b32.xlu0 %v5104, 16
    %v5450 = vpop.permute.xlu0 %5449
    %5455 = vrot.lane.b32.xlu0 %v5358, 24
    %v5456 = vpop.permute.xlu0 %5455
    %5457 = vrot.lane.b32.xlu0 %v5434, 24
    %v5458 = vpop.permute.xlu0 %5457
    %v5461 = vsel %vm358, %v4369, %v5440
    %v5462 = vsel %vm358, %v4442, %v5442
    %v5463 = vsel %vm1696, %v5461, %v5448
    %v5464 = vsel %vm1696, %v5462, %v5450
    %v5465 = vsel %vm1699, %v5463, %v5456
    %v5466 = vsel %vm1699, %v5464, %v5458
    %v5468 = vlaneseq
    %v5469 = vshrl.u32 %v5468, 7
    %v5470 = vsub.s32 0, %v5469
    %v5471 = vrot.slane %v4122, %v5470
    %v5474 = vsel %vm168, %v5465, 0
    %v5477 = vsel %vm168, %v5466, 0
    %5479 = vmatprep.subr.mxu0 0.0
    %5480 = vmatpush1.msra.mxu0 0.0
    %5481 = vmatprep.subr.mxu0 0.0
    %5482 = vmatpush1.msra.mxu0 0.0
    %5483 = vmatprep.subr.mxu0 0.0
    %5484 = vmatpush1.msra.mxu0 0.0
    %5485 = vmatprep.subr.mxu0 0.0
    %5486 = vmatpush1.msra.mxu0 0.0
    %5487 = vmatprep.subr.mxu0 0.0
    %5488 = vmatpush1.msra.mxu0 0.0
    %5489 = vmatprep.subr.mxu0 0.0
    %5490 = vmatpush1.msra.mxu0 0.0
    %5491 = vmatprep.subr.mxu0 0.0
    %5492 = vmatpush1.msra.mxu0 0.0
    %5493 = vmatprep.subr.mxu0 0.0
    %5494 = vmatpush1.msra.mxu0 0.0
    %5495 = vmatprep.subr.mxu0 0.0
    %5496 = vmatpush1.msra.mxu0 0.0
    %5497 = vmatprep.subr.mxu0 0.0
    %5498 = vmatpush1.msra.mxu0 0.0
    %5499 = vmatprep.subr.mxu0 0.0
    %5500 = vmatpush1.msra.mxu0 0.0
    %5501 = vmatprep.subr.mxu0 0.0
    %5502 = vmatpush1.msra.mxu0 0.0
    %5503 = vmatprep.subr.mxu0 0.0
    %5504 = vmatpush1.msra.mxu0 %v4120
    %5505 = vmatprep.subr.mxu0 0.0
    %5506 = vmatpush1.msra.mxu0 %v4119
    %5507 = vmatprep.subr.mxu0 0.0
    %5508 = vmatpush1.msra.mxu0 %v4118
    %5509 = vmatprep.subr.mxu0 0.0
    %5510 = vmatpush1.msra.mxu0 %v4117
    %5511 = vmatprep.subr.mxu0 0.0
    %5512 = vmatpush2.msra.mxu0 0.0
    %5513 = vmatprep.subr.mxu0 0.0
    %5514 = vmatpush2.msra.mxu0 0.0
    %5515 = vmatprep.subr.mxu0 0.0
    %5516 = vmatpush2.msra.mxu0 0.0
    %5517 = vmatprep.subr.mxu0 0.0
    %5518 = vmatpush2.msra.mxu0 0.0
    %5519 = vmatprep.subr.mxu0 0.0
    %5520 = vmatpush2.msra.mxu0 0.0
    %5521 = vmatprep.subr.mxu0 0.0
    %5522 = vmatpush2.msra.mxu0 0.0
    %5523 = vmatprep.subr.mxu0 0.0
    %5524 = vmatpush2.msra.mxu0 0.0
    %5525 = vmatprep.subr.mxu0 0.0
    %5526 = vmatpush2.msra.mxu0 0.0
    %5527 = vmatprep.subr.mxu0 0.0
    %5528 = vmatpush2.msra.mxu0 0.0
    %5529 = vmatprep.subr.mxu0 0.0
    %5530 = vmatpush2.msra.mxu0 0.0
    %5531 = vmatprep.subr.mxu0 0.0
    %5532 = vmatpush2.msra.mxu0 0.0
    %5533 = vmatprep.subr.mxu0 0.0
    %5534 = vmatpush2.msra.mxu0 0.0
    %5535 = vmatprep.subr.mxu0 0.0
    %5536 = vmatpush2.msra.mxu0 0.0
    %5537 = vmatprep.subr.mxu0 0.0
    %5538 = vmatpush2.msra.mxu0 0.0
    %5539 = vmatprep.subr.mxu0 0.0
    %5540 = vmatpush2.msra.mxu0 0.0
    %5541 = vmatprep.subr.mxu0 0.0
    %5542 = vmatpush2.msra.mxu0 0.0
    %5543 = vmatprep.mubr.f32.mxu0 0.0
    %5544 = vmatmul.mubr.f32.gmra.mxu0 %v5474
    %v5545 = vpop.f32.mrf.mxu0
    %v5546 = vadd.f32 %v5471, %v5545
    %v5547 = vpop.f32.mrf.mxu0
    %5548 = vmatprep.mubr.f32.mxu0 0.0
    %5549 = vmatmul.mubr.f32.gmra.mxu0 %v5477
    %v5550 = vpop.f32.mrf.mxu0
    %v5551 = vadd.f32 %v5471, %v5550
    %v5552 = vpop.f32.mrf.mxu0
    %5553 = vdwg.mxu0
    %v5554 = vadd.f32 %v3916, %v5546
    %v5555 = vadd.f32 %v3917, %v5551
    %v5556 = vmul.f32 %v5554, %v5554
    %v5557 = vmul.f32 %v5555, %v5555
    %v5558 = vsel %vm168, %v5554, 0.0
    %5559 = vadd.xlane.f32.xlu0 %v5558
    %v5560 = vpop.xlane.xlu0 %5559
    %v5561 = vsel %vm168, %v5555, 0.0
    %5562 = vadd.xlane.f32.xlu0 %v5561
    %v5563 = vpop.xlane.xlu0 %5562
    %v5564 = vsel %vm168, %v5556, 0.0
    %5565 = vadd.xlane.f32.xlu0 %v5564
    %v5566 = vpop.xlane.xlu0 %5565
    %v5567 = vsel %vm168, %v5557, 0.0
    %5568 = vadd.xlane.f32.xlu0 %v5567
    %v5569 = vpop.xlane.xlu0 %5568
    %v5570 = vmul.f32 %v5560, 0.03125
    %v5571 = vmul.f32 %v5563, 0.03125
    %v5572 = vmul.f32 %v5566, 0.03125
    %v5573 = vmul.f32 %v5569, 0.03125
    %v5574 = vmul.f32 %v5570, %v5570
    %v5575 = vmul.f32 %v5571, %v5571
    %v5576 = vsub.f32 %v5572, %v5574
    %v5577 = vsub.f32 %v5573, %v5575
    %v5578 = vsub.f32 %v5554, %v5570
    %v5579 = vsub.f32 %v5555, %v5571
    %v5580 = vadd.f32 %v5576, 1e-05
    %v5581 = vadd.f32 %v5577, 1e-05
    %v5582 = vrsqrt.pop %v5580
    %v5583 = vrsqrt.pop %v5581
    %v5584 = vmul.f32 %v5578, %v5582
    %v5585 = vmul.f32 %v5579, %v5583
    %v5586 = vlaneseq
    %v5587 = vshrl.u32 %v5586, 7
    %v5588 = vsub.s32 0, %v5587
    %v5589 = vrot.slane %v3919, %v5588
    %v5590 = vmul.f32 %v5584, %v5589
    %v5591 = vmul.f32 %v5585, %v5589
    %v5592 = vlaneseq
    %v5593 = vshrl.u32 %v5592, 7
    %v5594 = vsub.s32 1, %v5593
    %v5595 = vrot.slane %v3919, %v5594
    %v5596 = vadd.f32 %v5590, %v5595
    %v5597 = vadd.f32 %v5591, %v5595
    %s5598 = scalar_lea.vmem %s4, 96
    %v5599 = vld [vmem:[%s5598] sm:$0xff]
    %v5600 = vld [vmem:[%s5598 + $0x8] sm:$0xff]
    %v5601 = vld [vmem:[%s5598 + $0x10] sm:$0xff]
    %v5602 = vld [vmem:[%s5598 + $0x18] sm:$0xff]
    %s5603 = scalar_lea.vmem [#allocation8], 3
    %v5604 = vld [vmem:[%s5603] sm:$0x1]
    %v5605 = vadd.f32 %v5596, %v144
    %v5606 = vadd.f32 %v5597, %v145
    %v5608 = vlaneseq
    %v5609 = vshrl.u32 %v5608, 7
    %v5610 = vsub.s32 0, %v5609
    %v5611 = vrot.slane %v5604, %v5610
    %v5614 = vsel %vm168, %v5605, 0
    %v5617 = vsel %vm168, %v5606, 0
    %5619 = vmatprep.subr.mxu0 0.0
    %5620 = vmatpush1.msra.mxu0 0.0
    %5621 = vmatprep.subr.mxu0 0.0
    %5622 = vmatpush1.msra.mxu0 0.0
    %5623 = vmatprep.subr.mxu0 0.0
    %5624 = vmatpush1.msra.mxu0 0.0
    %5625 = vmatprep.subr.mxu0 0.0
    %5626 = vmatpush1.msra.mxu0 0.0
    %5627 = vmatprep.subr.mxu0 0.0
    %5628 = vmatpush1.msra.mxu0 0.0
    %5629 = vmatprep.subr.mxu0 0.0
    %5630 = vmatpush1.msra.mxu0 0.0
    %5631 = vmatprep.subr.mxu0 0.0
    %5632 = vmatpush1.msra.mxu0 0.0
    %5633 = vmatprep.subr.mxu0 0.0
    %5634 = vmatpush1.msra.mxu0 0.0
    %5635 = vmatprep.subr.mxu0 0.0
    %5636 = vmatpush1.msra.mxu0 0.0
    %5637 = vmatprep.subr.mxu0 0.0
    %5638 = vmatpush1.msra.mxu0 0.0
    %5639 = vmatprep.subr.mxu0 0.0
    %5640 = vmatpush1.msra.mxu0 0.0
    %5641 = vmatprep.subr.mxu0 0.0
    %5642 = vmatpush1.msra.mxu0 0.0
    %5643 = vmatprep.subr.mxu0 0.0
    %5644 = vmatpush1.msra.mxu0 %v5602
    %5645 = vmatprep.subr.mxu0 0.0
    %5646 = vmatpush1.msra.mxu0 %v5601
    %5647 = vmatprep.subr.mxu0 0.0
    %5648 = vmatpush1.msra.mxu0 %v5600
    %5649 = vmatprep.subr.mxu0 0.0
    %5650 = vmatpush1.msra.mxu0 %v5599
    %5651 = vmatprep.subr.mxu0 0.0
    %5652 = vmatpush2.msra.mxu0 0.0
    %5653 = vmatprep.subr.mxu0 0.0
    %5654 = vmatpush2.msra.mxu0 0.0
    %5655 = vmatprep.subr.mxu0 0.0
    %5656 = vmatpush2.msra.mxu0 0.0
    %5657 = vmatprep.subr.mxu0 0.0
    %5658 = vmatpush2.msra.mxu0 0.0
    %5659 = vmatprep.subr.mxu0 0.0
    %5660 = vmatpush2.msra.mxu0 0.0
    %5661 = vmatprep.subr.mxu0 0.0
    %5662 = vmatpush2.msra.mxu0 0.0
    %5663 = vmatprep.subr.mxu0 0.0
    %5664 = vmatpush2.msra.mxu0 0.0
    %5665 = vmatprep.subr.mxu0 0.0
    %5666 = vmatpush2.msra.mxu0 0.0
    %5667 = vmatprep.subr.mxu0 0.0
    %5668 = vmatpush2.msra.mxu0 0.0
    %5669 = vmatprep.subr.mxu0 0.0
    %5670 = vmatpush2.msra.mxu0 0.0
    %5671 = vmatprep.subr.mxu0 0.0
    %5672 = vmatpush2.msra.mxu0 0.0
    %5673 = vmatprep.subr.mxu0 0.0
    %5674 = vmatpush2.msra.mxu0 0.0
    %5675 = vmatprep.subr.mxu0 0.0
    %5676 = vmatpush2.msra.mxu0 0.0
    %5677 = vmatprep.subr.mxu0 0.0
    %5678 = vmatpush2.msra.mxu0 0.0
    %5679 = vmatprep.subr.mxu0 0.0
    %5680 = vmatpush2.msra.mxu0 0.0
    %5681 = vmatprep.subr.mxu0 0.0
    %5682 = vmatpush2.msra.mxu0 0.0
    %5683 = vmatprep.mubr.f32.mxu0 0.0
    %5684 = vmatmul.mubr.f32.gmra.mxu0 %v5614
    %v5685 = vpop.f32.mrf.mxu0
    %v5686 = vadd.f32 %v5611, %v5685
    %v5687 = vpop.f32.mrf.mxu0
    %5688 = vmatprep.mubr.f32.mxu0 0.0
    %5689 = vmatmul.mubr.f32.gmra.mxu0 %v5617
    %v5690 = vpop.f32.mrf.mxu0
    %v5691 = vadd.f32 %v5611, %v5690
    %v5692 = vpop.f32.mrf.mxu0
    %5693 = vdwg.mxu0
    %5698 = vrot.lane.b32.xlu0 %v5599, 96
    %v5699 = vpop.permute.xlu0 %5698
    %5700 = vrot.lane.b32.xlu0 %v5600, 96
    %v5701 = vpop.permute.xlu0 %5700
    %5702 = vrot.lane.b32.xlu0 %v5601, 96
    %v5703 = vpop.permute.xlu0 %5702
    %5704 = vrot.lane.b32.xlu0 %v5602, 96
    %v5705 = vpop.permute.xlu0 %5704
    %5710 = vrot.lane.b32.xlu0 %v5611, 96
    %v5711 = vpop.permute.xlu0 %5710
    %5713 = vmatprep.subr.mxu0 0.0
    %5714 = vmatpush1.msra.mxu0 0.0
    %5715 = vmatprep.subr.mxu0 0.0
    %5716 = vmatpush1.msra.mxu0 0.0
    %5717 = vmatprep.subr.mxu0 0.0
    %5718 = vmatpush1.msra.mxu0 0.0
    %5719 = vmatprep.subr.mxu0 0.0
    %5720 = vmatpush1.msra.mxu0 0.0
    %5721 = vmatprep.subr.mxu0 0.0
    %5722 = vmatpush1.msra.mxu0 0.0
    %5723 = vmatprep.subr.mxu0 0.0
    %5724 = vmatpush1.msra.mxu0 0.0
    %5725 = vmatprep.subr.mxu0 0.0
    %5726 = vmatpush1.msra.mxu0 0.0
    %5727 = vmatprep.subr.mxu0 0.0
    %5728 = vmatpush1.msra.mxu0 0.0
    %5729 = vmatprep.subr.mxu0 0.0
    %5730 = vmatpush1.msra.mxu0 0.0
    %5731 = vmatprep.subr.mxu0 0.0
    %5732 = vmatpush1.msra.mxu0 0.0
    %5733 = vmatprep.subr.mxu0 0.0
    %5734 = vmatpush1.msra.mxu0 0.0
    %5735 = vmatprep.subr.mxu0 0.0
    %5736 = vmatpush1.msra.mxu0 0.0
    %5737 = vmatprep.subr.mxu0 0.0
    %5738 = vmatpush1.msra.mxu0 %v5705
    %5739 = vmatprep.subr.mxu0 0.0
    %5740 = vmatpush1.msra.mxu0 %v5703
    %5741 = vmatprep.subr.mxu0 0.0
    %5742 = vmatpush1.msra.mxu0 %v5701
    %5743 = vmatprep.subr.mxu0 0.0
    %5744 = vmatpush1.msra.mxu0 %v5699
    %5745 = vmatprep.subr.mxu0 0.0
    %5746 = vmatpush2.msra.mxu0 0.0
    %5747 = vmatprep.subr.mxu0 0.0
    %5748 = vmatpush2.msra.mxu0 0.0
    %5749 = vmatprep.subr.mxu0 0.0
    %5750 = vmatpush2.msra.mxu0 0.0
    %5751 = vmatprep.subr.mxu0 0.0
    %5752 = vmatpush2.msra.mxu0 0.0
    %5753 = vmatprep.subr.mxu0 0.0
    %5754 = vmatpush2.msra.mxu0 0.0
    %5755 = vmatprep.subr.mxu0 0.0
    %5756 = vmatpush2.msra.mxu0 0.0
    %5757 = vmatprep.subr.mxu0 0.0
    %5758 = vmatpush2.msra.mxu0 0.0
    %5759 = vmatprep.subr.mxu0 0.0
    %5760 = vmatpush2.msra.mxu0 0.0
    %5761 = vmatprep.subr.mxu0 0.0
    %5762 = vmatpush2.msra.mxu0 0.0
    %5763 = vmatprep.subr.mxu0 0.0
    %5764 = vmatpush2.msra.mxu0 0.0
    %5765 = vmatprep.subr.mxu0 0.0
    %5766 = vmatpush2.msra.mxu0 0.0
    %5767 = vmatprep.subr.mxu0 0.0
    %5768 = vmatpush2.msra.mxu0 0.0
    %5769 = vmatprep.subr.mxu0 0.0
    %5770 = vmatpush2.msra.mxu0 0.0
    %5771 = vmatprep.subr.mxu0 0.0
    %5772 = vmatpush2.msra.mxu0 0.0
    %5773 = vmatprep.subr.mxu0 0.0
    %5774 = vmatpush2.msra.mxu0 0.0
    %5775 = vmatprep.subr.mxu0 0.0
    %5776 = vmatpush2.msra.mxu0 0.0
    %5777 = vmatprep.mubr.f32.mxu0 0.0
    %5778 = vmatmul.mubr.f32.gmra.mxu0 %v1949
    %v5779 = vpop.f32.mrf.mxu0
    %v5780 = vadd.f32 %v5711, %v5779
    %v5781 = vpop.f32.mrf.mxu0
    %5782 = vmatprep.mubr.f32.mxu0 0.0
    %5783 = vmatmul.mubr.f32.gmra.mxu0 %v1952
    %v5784 = vpop.f32.mrf.mxu0
    %v5785 = vadd.f32 %v5711, %v5784
    %v5786 = vpop.f32.mrf.mxu0
    %5787 = vmatprep.mubr.f32.mxu0 0.0
    %5788 = vmatmul.mubr.f32.gmra.mxu0 %v1955
    %v5789 = vpop.f32.mrf.mxu0
    %v5790 = vadd.f32 %v5711, %v5789
    %v5791 = vpop.f32.mrf.mxu0
    %5792 = vmatprep.mubr.f32.mxu0 0.0
    %5793 = vmatmul.mubr.f32.gmra.mxu0 %v1958
    %v5794 = vpop.f32.mrf.mxu0
    %v5795 = vadd.f32 %v5711, %v5794
    %v5796 = vpop.f32.mrf.mxu0
    %5797 = vdwg.mxu0
    %5798 = vrot.lane.b32.xlu0 %v5599, 64
    %v5799 = vpop.permute.xlu0 %5798
    %5800 = vrot.lane.b32.xlu0 %v5600, 64
    %v5801 = vpop.permute.xlu0 %5800
    %5802 = vrot.lane.b32.xlu0 %v5601, 64
    %v5803 = vpop.permute.xlu0 %5802
    %5804 = vrot.lane.b32.xlu0 %v5602, 64
    %v5805 = vpop.permute.xlu0 %5804
    %5810 = vrot.lane.b32.xlu0 %v5611, 64
    %v5811 = vpop.permute.xlu0 %5810
    %5813 = vmatprep.subr.mxu0 0.0
    %5814 = vmatpush1.msra.mxu0 0.0
    %5815 = vmatprep.subr.mxu0 0.0
    %5816 = vmatpush1.msra.mxu0 0.0
    %5817 = vmatprep.subr.mxu0 0.0
    %5818 = vmatpush1.msra.mxu0 0.0
    %5819 = vmatprep.subr.mxu0 0.0
    %5820 = vmatpush1.msra.mxu0 0.0
    %5821 = vmatprep.subr.mxu0 0.0
    %5822 = vmatpush1.msra.mxu0 0.0
    %5823 = vmatprep.subr.mxu0 0.0
    %5824 = vmatpush1.msra.mxu0 0.0
    %5825 = vmatprep.subr.mxu0 0.0
    %5826 = vmatpush1.msra.mxu0 0.0
    %5827 = vmatprep.subr.mxu0 0.0
    %5828 = vmatpush1.msra.mxu0 0.0
    %5829 = vmatprep.subr.mxu0 0.0
    %5830 = vmatpush1.msra.mxu0 0.0
    %5831 = vmatprep.subr.mxu0 0.0
    %5832 = vmatpush1.msra.mxu0 0.0
    %5833 = vmatprep.subr.mxu0 0.0
    %5834 = vmatpush1.msra.mxu0 0.0
    %5835 = vmatprep.subr.mxu0 0.0
    %5836 = vmatpush1.msra.mxu0 0.0
    %5837 = vmatprep.subr.mxu0 0.0
    %5838 = vmatpush1.msra.mxu0 %v5805
    %5839 = vmatprep.subr.mxu0 0.0
    %5840 = vmatpush1.msra.mxu0 %v5803
    %5841 = vmatprep.subr.mxu0 0.0
    %5842 = vmatpush1.msra.mxu0 %v5801
    %5843 = vmatprep.subr.mxu0 0.0
    %5844 = vmatpush1.msra.mxu0 %v5799
    %5845 = vmatprep.subr.mxu0 0.0
    %5846 = vmatpush2.msra.mxu0 0.0
    %5847 = vmatprep.subr.mxu0 0.0
    %5848 = vmatpush2.msra.mxu0 0.0
    %5849 = vmatprep.subr.mxu0 0.0
    %5850 = vmatpush2.msra.mxu0 0.0
    %5851 = vmatprep.subr.mxu0 0.0
    %5852 = vmatpush2.msra.mxu0 0.0
    %5853 = vmatprep.subr.mxu0 0.0
    %5854 = vmatpush2.msra.mxu0 0.0
    %5855 = vmatprep.subr.mxu0 0.0
    %5856 = vmatpush2.msra.mxu0 0.0
    %5857 = vmatprep.subr.mxu0 0.0
    %5858 = vmatpush2.msra.mxu0 0.0
    %5859 = vmatprep.subr.mxu0 0.0
    %5860 = vmatpush2.msra.mxu0 0.0
    %5861 = vmatprep.subr.mxu0 0.0
    %5862 = vmatpush2.msra.mxu0 0.0
    %5863 = vmatprep.subr.mxu0 0.0
    %5864 = vmatpush2.msra.mxu0 0.0
    %5865 = vmatprep.subr.mxu0 0.0
    %5866 = vmatpush2.msra.mxu0 0.0
    %5867 = vmatprep.subr.mxu0 0.0
    %5868 = vmatpush2.msra.mxu0 0.0
    %5869 = vmatprep.subr.mxu0 0.0
    %5870 = vmatpush2.msra.mxu0 0.0
    %5871 = vmatprep.subr.mxu0 0.0
    %5872 = vmatpush2.msra.mxu0 0.0
    %5873 = vmatprep.subr.mxu0 0.0
    %5874 = vmatpush2.msra.mxu0 0.0
    %5875 = vmatprep.subr.mxu0 0.0
    %5876 = vmatpush2.msra.mxu0 0.0
    %5877 = vmatprep.mubr.f32.mxu0 0.0
    %5878 = vmatmul.mubr.f32.gmra.mxu0 %v2061
    %v5879 = vpop.f32.mrf.mxu0
    %v5880 = vadd.f32 %v5811, %v5879
    %v5881 = vpop.f32.mrf.mxu0
    %5882 = vmatprep.mubr.f32.mxu0 0.0
    %5883 = vmatmul.mubr.f32.gmra.mxu0 %v2064
    %v5884 = vpop.f32.mrf.mxu0
    %v5885 = vadd.f32 %v5811, %v5884
    %v5886 = vpop.f32.mrf.mxu0
    %5887 = vmatprep.mubr.f32.mxu0 0.0
    %5888 = vmatmul.mubr.f32.gmra.mxu0 %v2067
    %v5889 = vpop.f32.mrf.mxu0
    %v5890 = vadd.f32 %v5811, %v5889
    %v5891 = vpop.f32.mrf.mxu0
    %5892 = vmatprep.mubr.f32.mxu0 0.0
    %5893 = vmatmul.mubr.f32.gmra.mxu0 %v2070
    %v5894 = vpop.f32.mrf.mxu0
    %v5895 = vadd.f32 %v5811, %v5894
    %v5896 = vpop.f32.mrf.mxu0
    %5897 = vdwg.mxu0
    %s5898 = scalar_lea.vmem [#allocation10], 96
    %v5899 = vld [vmem:[%s5898] sm:$0xff]
    %v5900 = vld [vmem:[%s5898 + $0x8] sm:$0xff]
    %v5901 = vld [vmem:[%s5898 + $0x10] sm:$0xff]
    %v5902 = vld [vmem:[%s5898 + $0x18] sm:$0xff]
    %s5903 = scalar_lea.vmem %s7, 3
    %v5904 = vld [vmem:[%s5903] sm:$0x1]
    %v5906 = vsel %vm358, %v5686, 0
    %v5909 = vsel %vm358, %v5780, 0
    %v5912 = vsel %vm358, %v5785, 0
    %5914 = vmatprep.subr.mxu0 0.0
    %5915 = vmatpush1.xpose.msra.mxu0 0.0
    %5916 = vmatprep.subr.mxu0 0.0
    %5917 = vmatpush1.xpose.msra.mxu0 0.0
    %5918 = vmatprep.subr.mxu0 0.0
    %5919 = vmatpush1.xpose.msra.mxu0 0.0
    %5920 = vmatprep.subr.mxu0 0.0
    %5921 = vmatpush1.xpose.msra.mxu0 0.0
    %5922 = vmatprep.subr.mxu0 0.0
    %5923 = vmatpush1.xpose.msra.mxu0 0.0
    %5924 = vmatprep.subr.mxu0 0.0
    %5925 = vmatpush1.xpose.msra.mxu0 0.0
    %5926 = vmatprep.subr.mxu0 0.0
    %5927 = vmatpush1.xpose.msra.mxu0 0.0
    %5928 = vmatprep.subr.mxu0 0.0
    %5929 = vmatpush1.xpose.msra.mxu0 0.0
    %5930 = vmatprep.subr.mxu0 0.0
    %5931 = vmatpush1.xpose.msra.mxu0 0.0
    %5932 = vmatprep.subr.mxu0 0.0
    %5933 = vmatpush1.xpose.msra.mxu0 0.0
    %5934 = vmatprep.subr.mxu0 0.0
    %5935 = vmatpush1.xpose.msra.mxu0 0.0
    %5936 = vmatprep.subr.mxu0 0.0
    %5937 = vmatpush1.xpose.msra.mxu0 0.0
    %5938 = vmatprep.subr.mxu0 0.0
    %5939 = vmatpush1.xpose.msra.mxu0 0.0
    %5940 = vmatprep.subr.mxu0 0.0
    %5941 = vmatpush1.xpose.msra.mxu0 0.0
    %5942 = vmatprep.subr.mxu0 0.0
    %5943 = vmatpush1.xpose.msra.mxu0 %v5912
    %5944 = vmatprep.subr.mxu0 0.0
    %5945 = vmatpush1.xpose.msra.mxu0 %v5909
    %5946 = vmatprep.subr.mxu0 0.0
    %5947 = vmatpush2.xpose.msra.mxu0 0.0
    %5948 = vmatprep.subr.mxu0 0.0
    %5949 = vmatpush2.xpose.msra.mxu0 0.0
    %5950 = vmatprep.subr.mxu0 0.0
    %5951 = vmatpush2.xpose.msra.mxu0 0.0
    %5952 = vmatprep.subr.mxu0 0.0
    %5953 = vmatpush2.xpose.msra.mxu0 0.0
    %5954 = vmatprep.subr.mxu0 0.0
    %5955 = vmatpush2.xpose.msra.mxu0 0.0
    %5956 = vmatprep.subr.mxu0 0.0
    %5957 = vmatpush2.xpose.msra.mxu0 0.0
    %5958 = vmatprep.subr.mxu0 0.0
    %5959 = vmatpush2.xpose.msra.mxu0 0.0
    %5960 = vmatprep.subr.mxu0 0.0
    %5961 = vmatpush2.xpose.msra.mxu0 0.0
    %5962 = vmatprep.subr.mxu0 0.0
    %5963 = vmatpush2.xpose.msra.mxu0 0.0
    %5964 = vmatprep.subr.mxu0 0.0
    %5965 = vmatpush2.xpose.msra.mxu0 0.0
    %5966 = vmatprep.subr.mxu0 0.0
    %5967 = vmatpush2.xpose.msra.mxu0 0.0
    %5968 = vmatprep.subr.mxu0 0.0
    %5969 = vmatpush2.xpose.msra.mxu0 0.0
    %5970 = vmatprep.subr.mxu0 0.0
    %5971 = vmatpush2.xpose.msra.mxu0 0.0
    %5972 = vmatprep.subr.mxu0 0.0
    %5973 = vmatpush2.xpose.msra.mxu0 0.0
    %5974 = vmatprep.subr.mxu0 0.0
    %5975 = vmatpush2.xpose.msra.mxu0 0.0
    %5976 = vmatprep.subr.mxu0 0.0
    %5977 = vmatpush2.xpose.msra.mxu0 0.0
    %5978 = vmatprep.mubr.f32.mxu0 0.0
    %5979 = vmatmul.mubr.f32.gmra.mxu0 %v5906
    %v5980 = vpop.f32.mrf.mxu0
    %v5981 = vadd.f32 0.0, %v5980
    %v5982 = vpop.f32.mrf.mxu0
    %5983 = vdwg.mxu0
    %v5985 = vsel %vm358, %v5691, 0
    %v5988 = vsel %vm358, %v5790, 0
    %v5991 = vsel %vm358, %v5795, 0
    %5993 = vmatprep.subr.mxu0 0.0
    %5994 = vmatpush1.xpose.msra.mxu0 0.0
    %5995 = vmatprep.subr.mxu0 0.0
    %5996 = vmatpush1.xpose.msra.mxu0 0.0
    %5997 = vmatprep.subr.mxu0 0.0
    %5998 = vmatpush1.xpose.msra.mxu0 0.0
    %5999 = vmatprep.subr.mxu0 0.0
    %6000 = vmatpush1.xpose.msra.mxu0 0.0
    %6001 = vmatprep.subr.mxu0 0.0
    %6002 = vmatpush1.xpose.msra.mxu0 0.0
    %6003 = vmatprep.subr.mxu0 0.0
    %6004 = vmatpush1.xpose.msra.mxu0 0.0
    %6005 = vmatprep.subr.mxu0 0.0
    %6006 = vmatpush1.xpose.msra.mxu0 0.0
    %6007 = vmatprep.subr.mxu0 0.0
    %6008 = vmatpush1.xpose.msra.mxu0 0.0
    %6009 = vmatprep.subr.mxu0 0.0
    %6010 = vmatpush1.xpose.msra.mxu0 0.0
    %6011 = vmatprep.subr.mxu0 0.0
    %6012 = vmatpush1.xpose.msra.mxu0 0.0
    %6013 = vmatprep.subr.mxu0 0.0
    %6014 = vmatpush1.xpose.msra.mxu0 0.0
    %6015 = vmatprep.subr.mxu0 0.0
    %6016 = vmatpush1.xpose.msra.mxu0 0.0
    %6017 = vmatprep.subr.mxu0 0.0
    %6018 = vmatpush1.xpose.msra.mxu0 0.0
    %6019 = vmatprep.subr.mxu0 0.0
    %6020 = vmatpush1.xpose.msra.mxu0 0.0
    %6021 = vmatprep.subr.mxu0 0.0
    %6022 = vmatpush1.xpose.msra.mxu0 %v5991
    %6023 = vmatprep.subr.mxu0 0.0
    %6024 = vmatpush1.xpose.msra.mxu0 %v5988
    %6025 = vmatprep.subr.mxu0 0.0
    %6026 = vmatpush2.xpose.msra.mxu0 0.0
    %6027 = vmatprep.subr.mxu0 0.0
    %6028 = vmatpush2.xpose.msra.mxu0 0.0
    %6029 = vmatprep.subr.mxu0 0.0
    %6030 = vmatpush2.xpose.msra.mxu0 0.0
    %6031 = vmatprep.subr.mxu0 0.0
    %6032 = vmatpush2.xpose.msra.mxu0 0.0
    %6033 = vmatprep.subr.mxu0 0.0
    %6034 = vmatpush2.xpose.msra.mxu0 0.0
    %6035 = vmatprep.subr.mxu0 0.0
    %6036 = vmatpush2.xpose.msra.mxu0 0.0
    %6037 = vmatprep.subr.mxu0 0.0
    %6038 = vmatpush2.xpose.msra.mxu0 0.0
    %6039 = vmatprep.subr.mxu0 0.0
    %6040 = vmatpush2.xpose.msra.mxu0 0.0
    %6041 = vmatprep.subr.mxu0 0.0
    %6042 = vmatpush2.xpose.msra.mxu0 0.0
    %6043 = vmatprep.subr.mxu0 0.0
    %6044 = vmatpush2.xpose.msra.mxu0 0.0
    %6045 = vmatprep.subr.mxu0 0.0
    %6046 = vmatpush2.xpose.msra.mxu0 0.0
    %6047 = vmatprep.subr.mxu0 0.0
    %6048 = vmatpush2.xpose.msra.mxu0 0.0
    %6049 = vmatprep.subr.mxu0 0.0
    %6050 = vmatpush2.xpose.msra.mxu0 0.0
    %6051 = vmatprep.subr.mxu0 0.0
    %6052 = vmatpush2.xpose.msra.mxu0 0.0
    %6053 = vmatprep.subr.mxu0 0.0
    %6054 = vmatpush2.xpose.msra.mxu0 0.0
    %6055 = vmatprep.subr.mxu0 0.0
    %6056 = vmatpush2.xpose.msra.mxu0 0.0
    %6057 = vmatprep.mubr.f32.mxu0 0.0
    %6058 = vmatmul.mubr.f32.gmra.mxu0 %v5985
    %v6059 = vpop.f32.mrf.mxu0
    %v6060 = vadd.f32 0.0, %v6059
    %v6061 = vpop.f32.mrf.mxu0
    %6062 = vdwg.mxu0
    %v6063 = vsel %vm1696, %v5981, -inf
    %6064 = vmax.xlane.f32.xlu0 %v6063
    %v6065 = vpop.xlane.xlu0 %6064
    %v6066 = vsel %vm1696, %v6060, -inf
    %6067 = vmax.xlane.f32.xlu0 %v6066
    %v6068 = vpop.xlane.xlu0 %6067
    %v6069 = vsub.f32 %v5981, %v6065
    %v6070 = vsub.f32 %v6060, %v6068
    %v6071 = vmul.f32 %v6069, 1.442695
    %v6072 = vpow.pop %v6071
    %v6073 = vmul.f32 %v6070, 1.442695
    %v6074 = vpow.pop %v6073
    %v6075 = vsel %vm1696, %v6072, 0.0
    %6076 = vadd.xlane.f32.xlu0 %v6075
    %v6077 = vpop.xlane.xlu0 %6076
    %v6078 = vsel %vm1696, %v6074, 0.0
    %6079 = vadd.xlane.f32.xlu0 %v6078
    %v6080 = vpop.xlane.xlu0 %6079
    %v6081 = vrcp.pop %v6077
    %v6082 = vrcp.pop %v6080
    %v6083 = vmul.f32 %v6072, %v6081
    %v6084 = vmul.f32 %v6074, %v6082
    %v6086 = vsel %vm1696, %v6083, 0
    %6088 = vmatprep.subr.mxu0 0.0
    %6089 = vmatpush1.msra.mxu0 0.0
    %6090 = vmatprep.subr.mxu0 0.0
    %6091 = vmatpush1.msra.mxu0 0.0
    %6092 = vmatprep.subr.mxu0 0.0
    %6093 = vmatpush1.msra.mxu0 0.0
    %6094 = vmatprep.subr.mxu0 0.0
    %6095 = vmatpush1.msra.mxu0 0.0
    %6096 = vmatprep.subr.mxu0 0.0
    %6097 = vmatpush1.msra.mxu0 0.0
    %6098 = vmatprep.subr.mxu0 0.0
    %6099 = vmatpush1.msra.mxu0 0.0
    %6100 = vmatprep.subr.mxu0 0.0
    %6101 = vmatpush1.msra.mxu0 0.0
    %6102 = vmatprep.subr.mxu0 0.0
    %6103 = vmatpush1.msra.mxu0 0.0
    %6104 = vmatprep.subr.mxu0 0.0
    %6105 = vmatpush1.msra.mxu0 0.0
    %6106 = vmatprep.subr.mxu0 0.0
    %6107 = vmatpush1.msra.mxu0 0.0
    %6108 = vmatprep.subr.mxu0 0.0
    %6109 = vmatpush1.msra.mxu0 0.0
    %6110 = vmatprep.subr.mxu0 0.0
    %6111 = vmatpush1.msra.mxu0 0.0
    %6112 = vmatprep.subr.mxu0 0.0
    %6113 = vmatpush1.msra.mxu0 0.0
    %6114 = vmatprep.subr.mxu0 0.0
    %6115 = vmatpush1.msra.mxu0 0.0
    %6116 = vmatprep.subr.mxu0 0.0
    %6117 = vmatpush1.msra.mxu0 %v5885
    %6118 = vmatprep.subr.mxu0 0.0
    %6119 = vmatpush1.msra.mxu0 %v5880
    %6120 = vmatprep.subr.mxu0 0.0
    %6121 = vmatpush2.msra.mxu0 0.0
    %6122 = vmatprep.subr.mxu0 0.0
    %6123 = vmatpush2.msra.mxu0 0.0
    %6124 = vmatprep.subr.mxu0 0.0
    %6125 = vmatpush2.msra.mxu0 0.0
    %6126 = vmatprep.subr.mxu0 0.0
    %6127 = vmatpush2.msra.mxu0 0.0
    %6128 = vmatprep.subr.mxu0 0.0
    %6129 = vmatpush2.msra.mxu0 0.0
    %6130 = vmatprep.subr.mxu0 0.0
    %6131 = vmatpush2.msra.mxu0 0.0
    %6132 = vmatprep.subr.mxu0 0.0
    %6133 = vmatpush2.msra.mxu0 0.0
    %6134 = vmatprep.subr.mxu0 0.0
    %6135 = vmatpush2.msra.mxu0 0.0
    %6136 = vmatprep.subr.mxu0 0.0
    %6137 = vmatpush2.msra.mxu0 0.0
    %6138 = vmatprep.subr.mxu0 0.0
    %6139 = vmatpush2.msra.mxu0 0.0
    %6140 = vmatprep.subr.mxu0 0.0
    %6141 = vmatpush2.msra.mxu0 0.0
    %6142 = vmatprep.subr.mxu0 0.0
    %6143 = vmatpush2.msra.mxu0 0.0
    %6144 = vmatprep.subr.mxu0 0.0
    %6145 = vmatpush2.msra.mxu0 0.0
    %6146 = vmatprep.subr.mxu0 0.0
    %6147 = vmatpush2.msra.mxu0 0.0
    %6148 = vmatprep.subr.mxu0 0.0
    %6149 = vmatpush2.msra.mxu0 0.0
    %6150 = vmatprep.subr.mxu0 0.0
    %6151 = vmatpush2.msra.mxu0 0.0
    %6152 = vmatprep.mubr.f32.mxu0 0.0
    %6153 = vmatmul.mubr.f32.gmra.mxu0 %v6086
    %v6154 = vpop.f32.mrf.mxu0
    %v6155 = vadd.f32 0.0, %v6154
    %v6156 = vpop.f32.mrf.mxu0
    %6157 = vdwg.mxu0
    %v6159 = vsel %vm1696, %v6084, 0
    %6161 = vmatprep.subr.mxu0 0.0
    %6162 = vmatpush1.msra.mxu0 0.0
    %6163 = vmatprep.subr.mxu0 0.0
    %6164 = vmatpush1.msra.mxu0 0.0
    %6165 = vmatprep.subr.mxu0 0.0
    %6166 = vmatpush1.msra.mxu0 0.0
    %6167 = vmatprep.subr.mxu0 0.0
    %6168 = vmatpush1.msra.mxu0 0.0
    %6169 = vmatprep.subr.mxu0 0.0
    %6170 = vmatpush1.msra.mxu0 0.0
    %6171 = vmatprep.subr.mxu0 0.0
    %6172 = vmatpush1.msra.mxu0 0.0
    %6173 = vmatprep.subr.mxu0 0.0
    %6174 = vmatpush1.msra.mxu0 0.0
    %6175 = vmatprep.subr.mxu0 0.0
    %6176 = vmatpush1.msra.mxu0 0.0
    %6177 = vmatprep.subr.mxu0 0.0
    %6178 = vmatpush1.msra.mxu0 0.0
    %6179 = vmatprep.subr.mxu0 0.0
    %6180 = vmatpush1.msra.mxu0 0.0
    %6181 = vmatprep.subr.mxu0 0.0
    %6182 = vmatpush1.msra.mxu0 0.0
    %6183 = vmatprep.subr.mxu0 0.0
    %6184 = vmatpush1.msra.mxu0 0.0
    %6185 = vmatprep.subr.mxu0 0.0
    %6186 = vmatpush1.msra.mxu0 0.0
    %6187 = vmatprep.subr.mxu0 0.0
    %6188 = vmatpush1.msra.mxu0 0.0
    %6189 = vmatprep.subr.mxu0 0.0
    %6190 = vmatpush1.msra.mxu0 %v5895
    %6191 = vmatprep.subr.mxu0 0.0
    %6192 = vmatpush1.msra.mxu0 %v5890
    %6193 = vmatprep.subr.mxu0 0.0
    %6194 = vmatpush2.msra.mxu0 0.0
    %6195 = vmatprep.subr.mxu0 0.0
    %6196 = vmatpush2.msra.mxu0 0.0
    %6197 = vmatprep.subr.mxu0 0.0
    %6198 = vmatpush2.msra.mxu0 0.0
    %6199 = vmatprep.subr.mxu0 0.0
    %6200 = vmatpush2.msra.mxu0 0.0
    %6201 = vmatprep.subr.mxu0 0.0
    %6202 = vmatpush2.msra.mxu0 0.0
    %6203 = vmatprep.subr.mxu0 0.0
    %6204 = vmatpush2.msra.mxu0 0.0
    %6205 = vmatprep.subr.mxu0 0.0
    %6206 = vmatpush2.msra.mxu0 0.0
    %6207 = vmatprep.subr.mxu0 0.0
    %6208 = vmatpush2.msra.mxu0 0.0
    %6209 = vmatprep.subr.mxu0 0.0
    %6210 = vmatpush2.msra.mxu0 0.0
    %6211 = vmatprep.subr.mxu0 0.0
    %6212 = vmatpush2.msra.mxu0 0.0
    %6213 = vmatprep.subr.mxu0 0.0
    %6214 = vmatpush2.msra.mxu0 0.0
    %6215 = vmatprep.subr.mxu0 0.0
    %6216 = vmatpush2.msra.mxu0 0.0
    %6217 = vmatprep.subr.mxu0 0.0
    %6218 = vmatpush2.msra.mxu0 0.0
    %6219 = vmatprep.subr.mxu0 0.0
    %6220 = vmatpush2.msra.mxu0 0.0
    %6221 = vmatprep.subr.mxu0 0.0
    %6222 = vmatpush2.msra.mxu0 0.0
    %6223 = vmatprep.subr.mxu0 0.0
    %6224 = vmatpush2.msra.mxu0 0.0
    %6225 = vmatprep.mubr.f32.mxu0 0.0
    %6226 = vmatmul.mubr.f32.gmra.mxu0 %v6159
    %v6227 = vpop.f32.mrf.mxu0
    %v6228 = vadd.f32 0.0, %v6227
    %v6229 = vpop.f32.mrf.mxu0
    %6230 = vdwg.mxu0
    %6231 = vrot.lane.b32.xlu0 %v5686, 120
    %v6232 = vpop.permute.xlu0 %6231
    %6233 = vrot.lane.b32.xlu0 %v5780, 120
    %v6234 = vpop.permute.xlu0 %6233
    %6235 = vrot.lane.b32.xlu0 %v5785, 120
    %v6236 = vpop.permute.xlu0 %6235
    %v6237 = vsel %vm358, %v6232, 0
    %v6239 = vsel %vm358, %v6234, 0
    %v6241 = vsel %vm358, %v6236, 0
    %6243 = vmatprep.subr.mxu0 0.0
    %6244 = vmatpush1.xpose.msra.mxu0 0.0
    %6245 = vmatprep.subr.mxu0 0.0
    %6246 = vmatpush1.xpose.msra.mxu0 0.0
    %6247 = vmatprep.subr.mxu0 0.0
    %6248 = vmatpush1.xpose.msra.mxu0 0.0
    %6249 = vmatprep.subr.mxu0 0.0
    %6250 = vmatpush1.xpose.msra.mxu0 0.0
    %6251 = vmatprep.subr.mxu0 0.0
    %6252 = vmatpush1.xpose.msra.mxu0 0.0
    %6253 = vmatprep.subr.mxu0 0.0
    %6254 = vmatpush1.xpose.msra.mxu0 0.0
    %6255 = vmatprep.subr.mxu0 0.0
    %6256 = vmatpush1.xpose.msra.mxu0 0.0
    %6257 = vmatprep.subr.mxu0 0.0
    %6258 = vmatpush1.xpose.msra.mxu0 0.0
    %6259 = vmatprep.subr.mxu0 0.0
    %6260 = vmatpush1.xpose.msra.mxu0 0.0
    %6261 = vmatprep.subr.mxu0 0.0
    %6262 = vmatpush1.xpose.msra.mxu0 0.0
    %6263 = vmatprep.subr.mxu0 0.0
    %6264 = vmatpush1.xpose.msra.mxu0 0.0
    %6265 = vmatprep.subr.mxu0 0.0
    %6266 = vmatpush1.xpose.msra.mxu0 0.0
    %6267 = vmatprep.subr.mxu0 0.0
    %6268 = vmatpush1.xpose.msra.mxu0 0.0
    %6269 = vmatprep.subr.mxu0 0.0
    %6270 = vmatpush1.xpose.msra.mxu0 0.0
    %6271 = vmatprep.subr.mxu0 0.0
    %6272 = vmatpush1.xpose.msra.mxu0 %v6241
    %6273 = vmatprep.subr.mxu0 0.0
    %6274 = vmatpush1.xpose.msra.mxu0 %v6239
    %6275 = vmatprep.subr.mxu0 0.0
    %6276 = vmatpush2.xpose.msra.mxu0 0.0
    %6277 = vmatprep.subr.mxu0 0.0
    %6278 = vmatpush2.xpose.msra.mxu0 0.0
    %6279 = vmatprep.subr.mxu0 0.0
    %6280 = vmatpush2.xpose.msra.mxu0 0.0
    %6281 = vmatprep.subr.mxu0 0.0
    %6282 = vmatpush2.xpose.msra.mxu0 0.0
    %6283 = vmatprep.subr.mxu0 0.0
    %6284 = vmatpush2.xpose.msra.mxu0 0.0
    %6285 = vmatprep.subr.mxu0 0.0
    %6286 = vmatpush2.xpose.msra.mxu0 0.0
    %6287 = vmatprep.subr.mxu0 0.0
    %6288 = vmatpush2.xpose.msra.mxu0 0.0
    %6289 = vmatprep.subr.mxu0 0.0
    %6290 = vmatpush2.xpose.msra.mxu0 0.0
    %6291 = vmatprep.subr.mxu0 0.0
    %6292 = vmatpush2.xpose.msra.mxu0 0.0
    %6293 = vmatprep.subr.mxu0 0.0
    %6294 = vmatpush2.xpose.msra.mxu0 0.0
    %6295 = vmatprep.subr.mxu0 0.0
    %6296 = vmatpush2.xpose.msra.mxu0 0.0
    %6297 = vmatprep.subr.mxu0 0.0
    %6298 = vmatpush2.xpose.msra.mxu0 0.0
    %6299 = vmatprep.subr.mxu0 0.0
    %6300 = vmatpush2.xpose.msra.mxu0 0.0
    %6301 = vmatprep.subr.mxu0 0.0
    %6302 = vmatpush2.xpose.msra.mxu0 0.0
    %6303 = vmatprep.subr.mxu0 0.0
    %6304 = vmatpush2.xpose.msra.mxu0 0.0
    %6305 = vmatprep.subr.mxu0 0.0
    %6306 = vmatpush2.xpose.msra.mxu0 0.0
    %6307 = vmatprep.mubr.f32.mxu0 0.0
    %6308 = vmatmul.mubr.f32.gmra.mxu0 %v6237
    %v6309 = vpop.f32.mrf.mxu0
    %v6310 = vadd.f32 0.0, %v6309
    %v6311 = vpop.f32.mrf.mxu0
    %6312 = vdwg.mxu0
    %6313 = vrot.lane.b32.xlu0 %v5691, 120
    %v6314 = vpop.permute.xlu0 %6313
    %6315 = vrot.lane.b32.xlu0 %v5790, 120
    %v6316 = vpop.permute.xlu0 %6315
    %6317 = vrot.lane.b32.xlu0 %v5795, 120
    %v6318 = vpop.permute.xlu0 %6317
    %v6319 = vsel %vm358, %v6314, 0
    %v6321 = vsel %vm358, %v6316, 0
    %v6323 = vsel %vm358, %v6318, 0
    %6325 = vmatprep.subr.mxu0 0.0
    %6326 = vmatpush1.xpose.msra.mxu0 0.0
    %6327 = vmatprep.subr.mxu0 0.0
    %6328 = vmatpush1.xpose.msra.mxu0 0.0
    %6329 = vmatprep.subr.mxu0 0.0
    %6330 = vmatpush1.xpose.msra.mxu0 0.0
    %6331 = vmatprep.subr.mxu0 0.0
    %6332 = vmatpush1.xpose.msra.mxu0 0.0
    %6333 = vmatprep.subr.mxu0 0.0
    %6334 = vmatpush1.xpose.msra.mxu0 0.0
    %6335 = vmatprep.subr.mxu0 0.0
    %6336 = vmatpush1.xpose.msra.mxu0 0.0
    %6337 = vmatprep.subr.mxu0 0.0
    %6338 = vmatpush1.xpose.msra.mxu0 0.0
    %6339 = vmatprep.subr.mxu0 0.0
    %6340 = vmatpush1.xpose.msra.mxu0 0.0
    %6341 = vmatprep.subr.mxu0 0.0
    %6342 = vmatpush1.xpose.msra.mxu0 0.0
    %6343 = vmatprep.subr.mxu0 0.0
    %6344 = vmatpush1.xpose.msra.mxu0 0.0
    %6345 = vmatprep.subr.mxu0 0.0
    %6346 = vmatpush1.xpose.msra.mxu0 0.0
    %6347 = vmatprep.subr.mxu0 0.0
    %6348 = vmatpush1.xpose.msra.mxu0 0.0
    %6349 = vmatprep.subr.mxu0 0.0
    %6350 = vmatpush1.xpose.msra.mxu0 0.0
    %6351 = vmatprep.subr.mxu0 0.0
    %6352 = vmatpush1.xpose.msra.mxu0 0.0
    %6353 = vmatprep.subr.mxu0 0.0
    %6354 = vmatpush1.xpose.msra.mxu0 %v6323
    %6355 = vmatprep.subr.mxu0 0.0
    %6356 = vmatpush1.xpose.msra.mxu0 %v6321
    %6357 = vmatprep.subr.mxu0 0.0
    %6358 = vmatpush2.xpose.msra.mxu0 0.0
    %6359 = vmatprep.subr.mxu0 0.0
    %6360 = vmatpush2.xpose.msra.mxu0 0.0
    %6361 = vmatprep.subr.mxu0 0.0
    %6362 = vmatpush2.xpose.msra.mxu0 0.0
    %6363 = vmatprep.subr.mxu0 0.0
    %6364 = vmatpush2.xpose.msra.mxu0 0.0
    %6365 = vmatprep.subr.mxu0 0.0
    %6366 = vmatpush2.xpose.msra.mxu0 0.0
    %6367 = vmatprep.subr.mxu0 0.0
    %6368 = vmatpush2.xpose.msra.mxu0 0.0
    %6369 = vmatprep.subr.mxu0 0.0
    %6370 = vmatpush2.xpose.msra.mxu0 0.0
    %6371 = vmatprep.subr.mxu0 0.0
    %6372 = vmatpush2.xpose.msra.mxu0 0.0
    %6373 = vmatprep.subr.mxu0 0.0
    %6374 = vmatpush2.xpose.msra.mxu0 0.0
    %6375 = vmatprep.subr.mxu0 0.0
    %6376 = vmatpush2.xpose.msra.mxu0 0.0
    %6377 = vmatprep.subr.mxu0 0.0
    %6378 = vmatpush2.xpose.msra.mxu0 0.0
    %6379 = vmatprep.subr.mxu0 0.0
    %6380 = vmatpush2.xpose.msra.mxu0 0.0
    %6381 = vmatprep.subr.mxu0 0.0
    %6382 = vmatpush2.xpose.msra.mxu0 0.0
    %6383 = vmatprep.subr.mxu0 0.0
    %6384 = vmatpush2.xpose.msra.mxu0 0.0
    %6385 = vmatprep.subr.mxu0 0.0
    %6386 = vmatpush2.xpose.msra.mxu0 0.0
    %6387 = vmatprep.subr.mxu0 0.0
    %6388 = vmatpush2.xpose.msra.mxu0 0.0
    %6389 = vmatprep.mubr.f32.mxu0 0.0
    %6390 = vmatmul.mubr.f32.gmra.mxu0 %v6319
    %v6391 = vpop.f32.mrf.mxu0
    %v6392 = vadd.f32 0.0, %v6391
    %v6393 = vpop.f32.mrf.mxu0
    %6394 = vdwg.mxu0
    %v6395 = vsel %vm1696, %v6310, -inf
    %6396 = vmax.xlane.f32.xlu0 %v6395
    %v6397 = vpop.xlane.xlu0 %6396
    %v6398 = vsel %vm1696, %v6392, -inf
    %6399 = vmax.xlane.f32.xlu0 %v6398
    %v6400 = vpop.xlane.xlu0 %6399
    %v6401 = vsub.f32 %v6310, %v6397
    %v6402 = vsub.f32 %v6392, %v6400
    %v6403 = vmul.f32 %v6401, 1.442695
    %v6404 = vpow.pop %v6403
    %v6405 = vmul.f32 %v6402, 1.442695
    %v6406 = vpow.pop %v6405
    %v6407 = vsel %vm1696, %v6404, 0.0
    %6408 = vadd.xlane.f32.xlu0 %v6407
    %v6409 = vpop.xlane.xlu0 %6408
    %v6410 = vsel %vm1696, %v6406, 0.0
    %6411 = vadd.xlane.f32.xlu0 %v6410
    %v6412 = vpop.xlane.xlu0 %6411
    %v6413 = vrcp.pop %v6409
    %v6414 = vrcp.pop %v6412
    %v6415 = vmul.f32 %v6404, %v6413
    %v6416 = vmul.f32 %v6406, %v6414
    %6419 = vrot.lane.b32.xlu0 %v5880, 120
    %v6420 = vpop.permute.xlu0 %6419
    %6421 = vrot.lane.b32.xlu0 %v5885, 120
    %v6422 = vpop.permute.xlu0 %6421
    %v6426 = vsel %vm1696, %v6415, 0
    %6428 = vmatprep.subr.mxu0 0.0
    %6429 = vmatpush1.msra.mxu0 0.0
    %6430 = vmatprep.subr.mxu0 0.0
    %6431 = vmatpush1.msra.mxu0 0.0
    %6432 = vmatprep.subr.mxu0 0.0
    %6433 = vmatpush1.msra.mxu0 0.0
    %6434 = vmatprep.subr.mxu0 0.0
    %6435 = vmatpush1.msra.mxu0 0.0
    %6436 = vmatprep.subr.mxu0 0.0
    %6437 = vmatpush1.msra.mxu0 0.0
    %6438 = vmatprep.subr.mxu0 0.0
    %6439 = vmatpush1.msra.mxu0 0.0
    %6440 = vmatprep.subr.mxu0 0.0
    %6441 = vmatpush1.msra.mxu0 0.0
    %6442 = vmatprep.subr.mxu0 0.0
    %6443 = vmatpush1.msra.mxu0 0.0
    %6444 = vmatprep.subr.mxu0 0.0
    %6445 = vmatpush1.msra.mxu0 0.0
    %6446 = vmatprep.subr.mxu0 0.0
    %6447 = vmatpush1.msra.mxu0 0.0
    %6448 = vmatprep.subr.mxu0 0.0
    %6449 = vmatpush1.msra.mxu0 0.0
    %6450 = vmatprep.subr.mxu0 0.0
    %6451 = vmatpush1.msra.mxu0 0.0
    %6452 = vmatprep.subr.mxu0 0.0
    %6453 = vmatpush1.msra.mxu0 0.0
    %6454 = vmatprep.subr.mxu0 0.0
    %6455 = vmatpush1.msra.mxu0 0.0
    %6456 = vmatprep.subr.mxu0 0.0
    %6457 = vmatpush1.msra.mxu0 %v6422
    %6458 = vmatprep.subr.mxu0 0.0
    %6459 = vmatpush1.msra.mxu0 %v6420
    %6460 = vmatprep.subr.mxu0 0.0
    %6461 = vmatpush2.msra.mxu0 0.0
    %6462 = vmatprep.subr.mxu0 0.0
    %6463 = vmatpush2.msra.mxu0 0.0
    %6464 = vmatprep.subr.mxu0 0.0
    %6465 = vmatpush2.msra.mxu0 0.0
    %6466 = vmatprep.subr.mxu0 0.0
    %6467 = vmatpush2.msra.mxu0 0.0
    %6468 = vmatprep.subr.mxu0 0.0
    %6469 = vmatpush2.msra.mxu0 0.0
    %6470 = vmatprep.subr.mxu0 0.0
    %6471 = vmatpush2.msra.mxu0 0.0
    %6472 = vmatprep.subr.mxu0 0.0
    %6473 = vmatpush2.msra.mxu0 0.0
    %6474 = vmatprep.subr.mxu0 0.0
    %6475 = vmatpush2.msra.mxu0 0.0
    %6476 = vmatprep.subr.mxu0 0.0
    %6477 = vmatpush2.msra.mxu0 0.0
    %6478 = vmatprep.subr.mxu0 0.0
    %6479 = vmatpush2.msra.mxu0 0.0
    %6480 = vmatprep.subr.mxu0 0.0
    %6481 = vmatpush2.msra.mxu0 0.0
    %6482 = vmatprep.subr.mxu0 0.0
    %6483 = vmatpush2.msra.mxu0 0.0
    %6484 = vmatprep.subr.mxu0 0.0
    %6485 = vmatpush2.msra.mxu0 0.0
    %6486 = vmatprep.subr.mxu0 0.0
    %6487 = vmatpush2.msra.mxu0 0.0
    %6488 = vmatprep.subr.mxu0 0.0
    %6489 = vmatpush2.msra.mxu0 0.0
    %6490 = vmatprep.subr.mxu0 0.0
    %6491 = vmatpush2.msra.mxu0 0.0
    %6492 = vmatprep.mubr.f32.mxu0 0.0
    %6493 = vmatmul.mubr.f32.gmra.mxu0 %v6426
    %v6494 = vpop.f32.mrf.mxu0
    %v6495 = vadd.f32 0.0, %v6494
    %v6496 = vpop.f32.mrf.mxu0
    %6497 = vdwg.mxu0
    %6500 = vrot.lane.b32.xlu0 %v5890, 120
    %v6501 = vpop.permute.xlu0 %6500
    %6502 = vrot.lane.b32.xlu0 %v5895, 120
    %v6503 = vpop.permute.xlu0 %6502
    %v6507 = vsel %vm1696, %v6416, 0
    %6509 = vmatprep.subr.mxu0 0.0
    %6510 = vmatpush1.msra.mxu0 0.0
    %6511 = vmatprep.subr.mxu0 0.0
    %6512 = vmatpush1.msra.mxu0 0.0
    %6513 = vmatprep.subr.mxu0 0.0
    %6514 = vmatpush1.msra.mxu0 0.0
    %6515 = vmatprep.subr.mxu0 0.0
    %6516 = vmatpush1.msra.mxu0 0.0
    %6517 = vmatprep.subr.mxu0 0.0
    %6518 = vmatpush1.msra.mxu0 0.0
    %6519 = vmatprep.subr.mxu0 0.0
    %6520 = vmatpush1.msra.mxu0 0.0
    %6521 = vmatprep.subr.mxu0 0.0
    %6522 = vmatpush1.msra.mxu0 0.0
    %6523 = vmatprep.subr.mxu0 0.0
    %6524 = vmatpush1.msra.mxu0 0.0
    %6525 = vmatprep.subr.mxu0 0.0
    %6526 = vmatpush1.msra.mxu0 0.0
    %6527 = vmatprep.subr.mxu0 0.0
    %6528 = vmatpush1.msra.mxu0 0.0
    %6529 = vmatprep.subr.mxu0 0.0
    %6530 = vmatpush1.msra.mxu0 0.0
    %6531 = vmatprep.subr.mxu0 0.0
    %6532 = vmatpush1.msra.mxu0 0.0
    %6533 = vmatprep.subr.mxu0 0.0
    %6534 = vmatpush1.msra.mxu0 0.0
    %6535 = vmatprep.subr.mxu0 0.0
    %6536 = vmatpush1.msra.mxu0 0.0
    %6537 = vmatprep.subr.mxu0 0.0
    %6538 = vmatpush1.msra.mxu0 %v6503
    %6539 = vmatprep.subr.mxu0 0.0
    %6540 = vmatpush1.msra.mxu0 %v6501
    %6541 = vmatprep.subr.mxu0 0.0
    %6542 = vmatpush2.msra.mxu0 0.0
    %6543 = vmatprep.subr.mxu0 0.0
    %6544 = vmatpush2.msra.mxu0 0.0
    %6545 = vmatprep.subr.mxu0 0.0
    %6546 = vmatpush2.msra.mxu0 0.0
    %6547 = vmatprep.subr.mxu0 0.0
    %6548 = vmatpush2.msra.mxu0 0.0
    %6549 = vmatprep.subr.mxu0 0.0
    %6550 = vmatpush2.msra.mxu0 0.0
    %6551 = vmatprep.subr.mxu0 0.0
    %6552 = vmatpush2.msra.mxu0 0.0
    %6553 = vmatprep.subr.mxu0 0.0
    %6554 = vmatpush2.msra.mxu0 0.0
    %6555 = vmatprep.subr.mxu0 0.0
    %6556 = vmatpush2.msra.mxu0 0.0
    %6557 = vmatprep.subr.mxu0 0.0
    %6558 = vmatpush2.msra.mxu0 0.0
    %6559 = vmatprep.subr.mxu0 0.0
    %6560 = vmatpush2.msra.mxu0 0.0
    %6561 = vmatprep.subr.mxu0 0.0
    %6562 = vmatpush2.msra.mxu0 0.0
    %6563 = vmatprep.subr.mxu0 0.0
    %6564 = vmatpush2.msra.mxu0 0.0
    %6565 = vmatprep.subr.mxu0 0.0
    %6566 = vmatpush2.msra.mxu0 0.0
    %6567 = vmatprep.subr.mxu0 0.0
    %6568 = vmatpush2.msra.mxu0 0.0
    %6569 = vmatprep.subr.mxu0 0.0
    %6570 = vmatpush2.msra.mxu0 0.0
    %6571 = vmatprep.subr.mxu0 0.0
    %6572 = vmatpush2.msra.mxu0 0.0
    %6573 = vmatprep.mubr.f32.mxu0 0.0
    %6574 = vmatmul.mubr.f32.gmra.mxu0 %v6507
    %v6575 = vpop.f32.mrf.mxu0
    %v6576 = vadd.f32 0.0, %v6575
    %v6577 = vpop.f32.mrf.mxu0
    %6578 = vdwg.mxu0
    %6579 = vrot.lane.b32.xlu0 %v5686, 112
    %v6580 = vpop.permute.xlu0 %6579
    %6581 = vrot.lane.b32.xlu0 %v5780, 112
    %v6582 = vpop.permute.xlu0 %6581
    %6583 = vrot.lane.b32.xlu0 %v5785, 112
    %v6584 = vpop.permute.xlu0 %6583
    %v6585 = vsel %vm358, %v6580, 0
    %v6587 = vsel %vm358, %v6582, 0
    %v6589 = vsel %vm358, %v6584, 0
    %6591 = vmatprep.subr.mxu0 0.0
    %6592 = vmatpush1.xpose.msra.mxu0 0.0
    %6593 = vmatprep.subr.mxu0 0.0
    %6594 = vmatpush1.xpose.msra.mxu0 0.0
    %6595 = vmatprep.subr.mxu0 0.0
    %6596 = vmatpush1.xpose.msra.mxu0 0.0
    %6597 = vmatprep.subr.mxu0 0.0
    %6598 = vmatpush1.xpose.msra.mxu0 0.0
    %6599 = vmatprep.subr.mxu0 0.0
    %6600 = vmatpush1.xpose.msra.mxu0 0.0
    %6601 = vmatprep.subr.mxu0 0.0
    %6602 = vmatpush1.xpose.msra.mxu0 0.0
    %6603 = vmatprep.subr.mxu0 0.0
    %6604 = vmatpush1.xpose.msra.mxu0 0.0
    %6605 = vmatprep.subr.mxu0 0.0
    %6606 = vmatpush1.xpose.msra.mxu0 0.0
    %6607 = vmatprep.subr.mxu0 0.0
    %6608 = vmatpush1.xpose.msra.mxu0 0.0
    %6609 = vmatprep.subr.mxu0 0.0
    %6610 = vmatpush1.xpose.msra.mxu0 0.0
    %6611 = vmatprep.subr.mxu0 0.0
    %6612 = vmatpush1.xpose.msra.mxu0 0.0
    %6613 = vmatprep.subr.mxu0 0.0
    %6614 = vmatpush1.xpose.msra.mxu0 0.0
    %6615 = vmatprep.subr.mxu0 0.0
    %6616 = vmatpush1.xpose.msra.mxu0 0.0
    %6617 = vmatprep.subr.mxu0 0.0
    %6618 = vmatpush1.xpose.msra.mxu0 0.0
    %6619 = vmatprep.subr.mxu0 0.0
    %6620 = vmatpush1.xpose.msra.mxu0 %v6589
    %6621 = vmatprep.subr.mxu0 0.0
    %6622 = vmatpush1.xpose.msra.mxu0 %v6587
    %6623 = vmatprep.subr.mxu0 0.0
    %6624 = vmatpush2.xpose.msra.mxu0 0.0
    %6625 = vmatprep.subr.mxu0 0.0
    %6626 = vmatpush2.xpose.msra.mxu0 0.0
    %6627 = vmatprep.subr.mxu0 0.0
    %6628 = vmatpush2.xpose.msra.mxu0 0.0
    %6629 = vmatprep.subr.mxu0 0.0
    %6630 = vmatpush2.xpose.msra.mxu0 0.0
    %6631 = vmatprep.subr.mxu0 0.0
    %6632 = vmatpush2.xpose.msra.mxu0 0.0
    %6633 = vmatprep.subr.mxu0 0.0
    %6634 = vmatpush2.xpose.msra.mxu0 0.0
    %6635 = vmatprep.subr.mxu0 0.0
    %6636 = vmatpush2.xpose.msra.mxu0 0.0
    %6637 = vmatprep.subr.mxu0 0.0
    %6638 = vmatpush2.xpose.msra.mxu0 0.0
    %6639 = vmatprep.subr.mxu0 0.0
    %6640 = vmatpush2.xpose.msra.mxu0 0.0
    %6641 = vmatprep.subr.mxu0 0.0
    %6642 = vmatpush2.xpose.msra.mxu0 0.0
    %6643 = vmatprep.subr.mxu0 0.0
    %6644 = vmatpush2.xpose.msra.mxu0 0.0
    %6645 = vmatprep.subr.mxu0 0.0
    %6646 = vmatpush2.xpose.msra.mxu0 0.0
    %6647 = vmatprep.subr.mxu0 0.0
    %6648 = vmatpush2.xpose.msra.mxu0 0.0
    %6649 = vmatprep.subr.mxu0 0.0
    %6650 = vmatpush2.xpose.msra.mxu0 0.0
    %6651 = vmatprep.subr.mxu0 0.0
    %6652 = vmatpush2.xpose.msra.mxu0 0.0
    %6653 = vmatprep.subr.mxu0 0.0
    %6654 = vmatpush2.xpose.msra.mxu0 0.0
    %6655 = vmatprep.mubr.f32.mxu0 0.0
    %6656 = vmatmul.mubr.f32.gmra.mxu0 %v6585
    %v6657 = vpop.f32.mrf.mxu0
    %v6658 = vadd.f32 0.0, %v6657
    %v6659 = vpop.f32.mrf.mxu0
    %6660 = vdwg.mxu0
    %6661 = vrot.lane.b32.xlu0 %v5691, 112
    %v6662 = vpop.permute.xlu0 %6661
    %6663 = vrot.lane.b32.xlu0 %v5790, 112
    %v6664 = vpop.permute.xlu0 %6663
    %6665 = vrot.lane.b32.xlu0 %v5795, 112
    %v6666 = vpop.permute.xlu0 %6665
    %v6667 = vsel %vm358, %v6662, 0
    %v6669 = vsel %vm358, %v6664, 0
    %v6671 = vsel %vm358, %v6666, 0
    %6673 = vmatprep.subr.mxu0 0.0
    %6674 = vmatpush1.xpose.msra.mxu0 0.0
    %6675 = vmatprep.subr.mxu0 0.0
    %6676 = vmatpush1.xpose.msra.mxu0 0.0
    %6677 = vmatprep.subr.mxu0 0.0
    %6678 = vmatpush1.xpose.msra.mxu0 0.0
    %6679 = vmatprep.subr.mxu0 0.0
    %6680 = vmatpush1.xpose.msra.mxu0 0.0
    %6681 = vmatprep.subr.mxu0 0.0
    %6682 = vmatpush1.xpose.msra.mxu0 0.0
    %6683 = vmatprep.subr.mxu0 0.0
    %6684 = vmatpush1.xpose.msra.mxu0 0.0
    %6685 = vmatprep.subr.mxu0 0.0
    %6686 = vmatpush1.xpose.msra.mxu0 0.0
    %6687 = vmatprep.subr.mxu0 0.0
    %6688 = vmatpush1.xpose.msra.mxu0 0.0
    %6689 = vmatprep.subr.mxu0 0.0
    %6690 = vmatpush1.xpose.msra.mxu0 0.0
    %6691 = vmatprep.subr.mxu0 0.0
    %6692 = vmatpush1.xpose.msra.mxu0 0.0
    %6693 = vmatprep.subr.mxu0 0.0
    %6694 = vmatpush1.xpose.msra.mxu0 0.0
    %6695 = vmatprep.subr.mxu0 0.0
    %6696 = vmatpush1.xpose.msra.mxu0 0.0
    %6697 = vmatprep.subr.mxu0 0.0
    %6698 = vmatpush1.xpose.msra.mxu0 0.0
    %6699 = vmatprep.subr.mxu0 0.0
    %6700 = vmatpush1.xpose.msra.mxu0 0.0
    %6701 = vmatprep.subr.mxu0 0.0
    %6702 = vmatpush1.xpose.msra.mxu0 %v6671
    %6703 = vmatprep.subr.mxu0 0.0
    %6704 = vmatpush1.xpose.msra.mxu0 %v6669
    %6705 = vmatprep.subr.mxu0 0.0
    %6706 = vmatpush2.xpose.msra.mxu0 0.0
    %6707 = vmatprep.subr.mxu0 0.0
    %6708 = vmatpush2.xpose.msra.mxu0 0.0
    %6709 = vmatprep.subr.mxu0 0.0
    %6710 = vmatpush2.xpose.msra.mxu0 0.0
    %6711 = vmatprep.subr.mxu0 0.0
    %6712 = vmatpush2.xpose.msra.mxu0 0.0
    %6713 = vmatprep.subr.mxu0 0.0
    %6714 = vmatpush2.xpose.msra.mxu0 0.0
    %6715 = vmatprep.subr.mxu0 0.0
    %6716 = vmatpush2.xpose.msra.mxu0 0.0
    %6717 = vmatprep.subr.mxu0 0.0
    %6718 = vmatpush2.xpose.msra.mxu0 0.0
    %6719 = vmatprep.subr.mxu0 0.0
    %6720 = vmatpush2.xpose.msra.mxu0 0.0
    %6721 = vmatprep.subr.mxu0 0.0
    %6722 = vmatpush2.xpose.msra.mxu0 0.0
    %6723 = vmatprep.subr.mxu0 0.0
    %6724 = vmatpush2.xpose.msra.mxu0 0.0
    %6725 = vmatprep.subr.mxu0 0.0
    %6726 = vmatpush2.xpose.msra.mxu0 0.0
    %6727 = vmatprep.subr.mxu0 0.0
    %6728 = vmatpush2.xpose.msra.mxu0 0.0
    %6729 = vmatprep.subr.mxu0 0.0
    %6730 = vmatpush2.xpose.msra.mxu0 0.0
    %6731 = vmatprep.subr.mxu0 0.0
    %6732 = vmatpush2.xpose.msra.mxu0 0.0
    %6733 = vmatprep.subr.mxu0 0.0
    %6734 = vmatpush2.xpose.msra.mxu0 0.0
    %6735 = vmatprep.subr.mxu0 0.0
    %6736 = vmatpush2.xpose.msra.mxu0 0.0
    %6737 = vmatprep.mubr.f32.mxu0 0.0
    %6738 = vmatmul.mubr.f32.gmra.mxu0 %v6667
    %v6739 = vpop.f32.mrf.mxu0
    %v6740 = vadd.f32 0.0, %v6739
    %v6741 = vpop.f32.mrf.mxu0
    %6742 = vdwg.mxu0
    %v6743 = vsel %vm1696, %v6658, -inf
    %6744 = vmax.xlane.f32.xlu0 %v6743
    %v6745 = vpop.xlane.xlu0 %6744
    %v6746 = vsel %vm1696, %v6740, -inf
    %6747 = vmax.xlane.f32.xlu0 %v6746
    %v6748 = vpop.xlane.xlu0 %6747
    %v6749 = vsub.f32 %v6658, %v6745
    %v6750 = vsub.f32 %v6740, %v6748
    %v6751 = vmul.f32 %v6749, 1.442695
    %v6752 = vpow.pop %v6751
    %v6753 = vmul.f32 %v6750, 1.442695
    %v6754 = vpow.pop %v6753
    %v6755 = vsel %vm1696, %v6752, 0.0
    %6756 = vadd.xlane.f32.xlu0 %v6755
    %v6757 = vpop.xlane.xlu0 %6756
    %v6758 = vsel %vm1696, %v6754, 0.0
    %6759 = vadd.xlane.f32.xlu0 %v6758
    %v6760 = vpop.xlane.xlu0 %6759
    %v6761 = vrcp.pop %v6757
    %v6762 = vrcp.pop %v6760
    %v6763 = vmul.f32 %v6752, %v6761
    %v6764 = vmul.f32 %v6754, %v6762
    %6765 = vrot.lane.b32.xlu0 %v5880, 112
    %v6766 = vpop.permute.xlu0 %6765
    %6767 = vrot.lane.b32.xlu0 %v5885, 112
    %v6768 = vpop.permute.xlu0 %6767
    %v6772 = vsel %vm1696, %v6763, 0
    %6774 = vmatprep.subr.mxu0 0.0
    %6775 = vmatpush1.msra.mxu0 0.0
    %6776 = vmatprep.subr.mxu0 0.0
    %6777 = vmatpush1.msra.mxu0 0.0
    %6778 = vmatprep.subr.mxu0 0.0
    %6779 = vmatpush1.msra.mxu0 0.0
    %6780 = vmatprep.subr.mxu0 0.0
    %6781 = vmatpush1.msra.mxu0 0.0
    %6782 = vmatprep.subr.mxu0 0.0
    %6783 = vmatpush1.msra.mxu0 0.0
    %6784 = vmatprep.subr.mxu0 0.0
    %6785 = vmatpush1.msra.mxu0 0.0
    %6786 = vmatprep.subr.mxu0 0.0
    %6787 = vmatpush1.msra.mxu0 0.0
    %6788 = vmatprep.subr.mxu0 0.0
    %6789 = vmatpush1.msra.mxu0 0.0
    %6790 = vmatprep.subr.mxu0 0.0
    %6791 = vmatpush1.msra.mxu0 0.0
    %6792 = vmatprep.subr.mxu0 0.0
    %6793 = vmatpush1.msra.mxu0 0.0
    %6794 = vmatprep.subr.mxu0 0.0
    %6795 = vmatpush1.msra.mxu0 0.0
    %6796 = vmatprep.subr.mxu0 0.0
    %6797 = vmatpush1.msra.mxu0 0.0
    %6798 = vmatprep.subr.mxu0 0.0
    %6799 = vmatpush1.msra.mxu0 0.0
    %6800 = vmatprep.subr.mxu0 0.0
    %6801 = vmatpush1.msra.mxu0 0.0
    %6802 = vmatprep.subr.mxu0 0.0
    %6803 = vmatpush1.msra.mxu0 %v6768
    %6804 = vmatprep.subr.mxu0 0.0
    %6805 = vmatpush1.msra.mxu0 %v6766
    %6806 = vmatprep.subr.mxu0 0.0
    %6807 = vmatpush2.msra.mxu0 0.0
    %6808 = vmatprep.subr.mxu0 0.0
    %6809 = vmatpush2.msra.mxu0 0.0
    %6810 = vmatprep.subr.mxu0 0.0
    %6811 = vmatpush2.msra.mxu0 0.0
    %6812 = vmatprep.subr.mxu0 0.0
    %6813 = vmatpush2.msra.mxu0 0.0
    %6814 = vmatprep.subr.mxu0 0.0
    %6815 = vmatpush2.msra.mxu0 0.0
    %6816 = vmatprep.subr.mxu0 0.0
    %6817 = vmatpush2.msra.mxu0 0.0
    %6818 = vmatprep.subr.mxu0 0.0
    %6819 = vmatpush2.msra.mxu0 0.0
    %6820 = vmatprep.subr.mxu0 0.0
    %6821 = vmatpush2.msra.mxu0 0.0
    %6822 = vmatprep.subr.mxu0 0.0
    %6823 = vmatpush2.msra.mxu0 0.0
    %6824 = vmatprep.subr.mxu0 0.0
    %6825 = vmatpush2.msra.mxu0 0.0
    %6826 = vmatprep.subr.mxu0 0.0
    %6827 = vmatpush2.msra.mxu0 0.0
    %6828 = vmatprep.subr.mxu0 0.0
    %6829 = vmatpush2.msra.mxu0 0.0
    %6830 = vmatprep.subr.mxu0 0.0
    %6831 = vmatpush2.msra.mxu0 0.0
    %6832 = vmatprep.subr.mxu0 0.0
    %6833 = vmatpush2.msra.mxu0 0.0
    %6834 = vmatprep.subr.mxu0 0.0
    %6835 = vmatpush2.msra.mxu0 0.0
    %6836 = vmatprep.subr.mxu0 0.0
    %6837 = vmatpush2.msra.mxu0 0.0
    %6838 = vmatprep.mubr.f32.mxu0 0.0
    %6839 = vmatmul.mubr.f32.gmra.mxu0 %v6772
    %v6840 = vpop.f32.mrf.mxu0
    %v6841 = vadd.f32 0.0, %v6840
    %v6842 = vpop.f32.mrf.mxu0
    %6843 = vdwg.mxu0
    %6844 = vrot.lane.b32.xlu0 %v5890, 112
    %v6845 = vpop.permute.xlu0 %6844
    %6846 = vrot.lane.b32.xlu0 %v5895, 112
    %v6847 = vpop.permute.xlu0 %6846
    %v6851 = vsel %vm1696, %v6764, 0
    %6853 = vmatprep.subr.mxu0 0.0
    %6854 = vmatpush1.msra.mxu0 0.0
    %6855 = vmatprep.subr.mxu0 0.0
    %6856 = vmatpush1.msra.mxu0 0.0
    %6857 = vmatprep.subr.mxu0 0.0
    %6858 = vmatpush1.msra.mxu0 0.0
    %6859 = vmatprep.subr.mxu0 0.0
    %6860 = vmatpush1.msra.mxu0 0.0
    %6861 = vmatprep.subr.mxu0 0.0
    %6862 = vmatpush1.msra.mxu0 0.0
    %6863 = vmatprep.subr.mxu0 0.0
    %6864 = vmatpush1.msra.mxu0 0.0
    %6865 = vmatprep.subr.mxu0 0.0
    %6866 = vmatpush1.msra.mxu0 0.0
    %6867 = vmatprep.subr.mxu0 0.0
    %6868 = vmatpush1.msra.mxu0 0.0
    %6869 = vmatprep.subr.mxu0 0.0
    %6870 = vmatpush1.msra.mxu0 0.0
    %6871 = vmatprep.subr.mxu0 0.0
    %6872 = vmatpush1.msra.mxu0 0.0
    %6873 = vmatprep.subr.mxu0 0.0
    %6874 = vmatpush1.msra.mxu0 0.0
    %6875 = vmatprep.subr.mxu0 0.0
    %6876 = vmatpush1.msra.mxu0 0.0
    %6877 = vmatprep.subr.mxu0 0.0
    %6878 = vmatpush1.msra.mxu0 0.0
    %6879 = vmatprep.subr.mxu0 0.0
    %6880 = vmatpush1.msra.mxu0 0.0
    %6881 = vmatprep.subr.mxu0 0.0
    %6882 = vmatpush1.msra.mxu0 %v6847
    %6883 = vmatprep.subr.mxu0 0.0
    %6884 = vmatpush1.msra.mxu0 %v6845
    %6885 = vmatprep.subr.mxu0 0.0
    %6886 = vmatpush2.msra.mxu0 0.0
    %6887 = vmatprep.subr.mxu0 0.0
    %6888 = vmatpush2.msra.mxu0 0.0
    %6889 = vmatprep.subr.mxu0 0.0
    %6890 = vmatpush2.msra.mxu0 0.0
    %6891 = vmatprep.subr.mxu0 0.0
    %6892 = vmatpush2.msra.mxu0 0.0
    %6893 = vmatprep.subr.mxu0 0.0
    %6894 = vmatpush2.msra.mxu0 0.0
    %6895 = vmatprep.subr.mxu0 0.0
    %6896 = vmatpush2.msra.mxu0 0.0
    %6897 = vmatprep.subr.mxu0 0.0
    %6898 = vmatpush2.msra.mxu0 0.0
    %6899 = vmatprep.subr.mxu0 0.0
    %6900 = vmatpush2.msra.mxu0 0.0
    %6901 = vmatprep.subr.mxu0 0.0
    %6902 = vmatpush2.msra.mxu0 0.0
    %6903 = vmatprep.subr.mxu0 0.0
    %6904 = vmatpush2.msra.mxu0 0.0
    %6905 = vmatprep.subr.mxu0 0.0
    %6906 = vmatpush2.msra.mxu0 0.0
    %6907 = vmatprep.subr.mxu0 0.0
    %6908 = vmatpush2.msra.mxu0 0.0
    %6909 = vmatprep.subr.mxu0 0.0
    %6910 = vmatpush2.msra.mxu0 0.0
    %6911 = vmatprep.subr.mxu0 0.0
    %6912 = vmatpush2.msra.mxu0 0.0
    %6913 = vmatprep.subr.mxu0 0.0
    %6914 = vmatpush2.msra.mxu0 0.0
    %6915 = vmatprep.subr.mxu0 0.0
    %6916 = vmatpush2.msra.mxu0 0.0
    %6917 = vmatprep.mubr.f32.mxu0 0.0
    %6918 = vmatmul.mubr.f32.gmra.mxu0 %v6851
    %v6919 = vpop.f32.mrf.mxu0
    %v6920 = vadd.f32 0.0, %v6919
    %v6921 = vpop.f32.mrf.mxu0
    %6922 = vdwg.mxu0
    %6923 = vrot.lane.b32.xlu0 %v5686, 104
    %v6924 = vpop.permute.xlu0 %6923
    %6925 = vrot.lane.b32.xlu0 %v5780, 104
    %v6926 = vpop.permute.xlu0 %6925
    %6927 = vrot.lane.b32.xlu0 %v5785, 104
    %v6928 = vpop.permute.xlu0 %6927
    %v6929 = vsel %vm358, %v6924, 0
    %v6931 = vsel %vm358, %v6926, 0
    %v6933 = vsel %vm358, %v6928, 0
    %6935 = vmatprep.subr.mxu0 0.0
    %6936 = vmatpush1.xpose.msra.mxu0 0.0
    %6937 = vmatprep.subr.mxu0 0.0
    %6938 = vmatpush1.xpose.msra.mxu0 0.0
    %6939 = vmatprep.subr.mxu0 0.0
    %6940 = vmatpush1.xpose.msra.mxu0 0.0
    %6941 = vmatprep.subr.mxu0 0.0
    %6942 = vmatpush1.xpose.msra.mxu0 0.0
    %6943 = vmatprep.subr.mxu0 0.0
    %6944 = vmatpush1.xpose.msra.mxu0 0.0
    %6945 = vmatprep.subr.mxu0 0.0
    %6946 = vmatpush1.xpose.msra.mxu0 0.0
    %6947 = vmatprep.subr.mxu0 0.0
    %6948 = vmatpush1.xpose.msra.mxu0 0.0
    %6949 = vmatprep.subr.mxu0 0.0
    %6950 = vmatpush1.xpose.msra.mxu0 0.0
    %6951 = vmatprep.subr.mxu0 0.0
    %6952 = vmatpush1.xpose.msra.mxu0 0.0
    %6953 = vmatprep.subr.mxu0 0.0
    %6954 = vmatpush1.xpose.msra.mxu0 0.0
    %6955 = vmatprep.subr.mxu0 0.0
    %6956 = vmatpush1.xpose.msra.mxu0 0.0
    %6957 = vmatprep.subr.mxu0 0.0
    %6958 = vmatpush1.xpose.msra.mxu0 0.0
    %6959 = vmatprep.subr.mxu0 0.0
    %6960 = vmatpush1.xpose.msra.mxu0 0.0
    %6961 = vmatprep.subr.mxu0 0.0
    %6962 = vmatpush1.xpose.msra.mxu0 0.0
    %6963 = vmatprep.subr.mxu0 0.0
    %6964 = vmatpush1.xpose.msra.mxu0 %v6933
    %6965 = vmatprep.subr.mxu0 0.0
    %6966 = vmatpush1.xpose.msra.mxu0 %v6931
    %6967 = vmatprep.subr.mxu0 0.0
    %6968 = vmatpush2.xpose.msra.mxu0 0.0
    %6969 = vmatprep.subr.mxu0 0.0
    %6970 = vmatpush2.xpose.msra.mxu0 0.0
    %6971 = vmatprep.subr.mxu0 0.0
    %6972 = vmatpush2.xpose.msra.mxu0 0.0
    %6973 = vmatprep.subr.mxu0 0.0
    %6974 = vmatpush2.xpose.msra.mxu0 0.0
    %6975 = vmatprep.subr.mxu0 0.0
    %6976 = vmatpush2.xpose.msra.mxu0 0.0
    %6977 = vmatprep.subr.mxu0 0.0
    %6978 = vmatpush2.xpose.msra.mxu0 0.0
    %6979 = vmatprep.subr.mxu0 0.0
    %6980 = vmatpush2.xpose.msra.mxu0 0.0
    %6981 = vmatprep.subr.mxu0 0.0
    %6982 = vmatpush2.xpose.msra.mxu0 0.0
    %6983 = vmatprep.subr.mxu0 0.0
    %6984 = vmatpush2.xpose.msra.mxu0 0.0
    %6985 = vmatprep.subr.mxu0 0.0
    %6986 = vmatpush2.xpose.msra.mxu0 0.0
    %6987 = vmatprep.subr.mxu0 0.0
    %6988 = vmatpush2.xpose.msra.mxu0 0.0
    %6989 = vmatprep.subr.mxu0 0.0
    %6990 = vmatpush2.xpose.msra.mxu0 0.0
    %6991 = vmatprep.subr.mxu0 0.0
    %6992 = vmatpush2.xpose.msra.mxu0 0.0
    %6993 = vmatprep.subr.mxu0 0.0
    %6994 = vmatpush2.xpose.msra.mxu0 0.0
    %6995 = vmatprep.subr.mxu0 0.0
    %6996 = vmatpush2.xpose.msra.mxu0 0.0
    %6997 = vmatprep.subr.mxu0 0.0
    %6998 = vmatpush2.xpose.msra.mxu0 0.0
    %6999 = vmatprep.mubr.f32.mxu0 0.0
    %7000 = vmatmul.mubr.f32.gmra.mxu0 %v6929
    %v7001 = vpop.f32.mrf.mxu0
    %v7002 = vadd.f32 0.0, %v7001
    %v7003 = vpop.f32.mrf.mxu0
    %7004 = vdwg.mxu0
    %7005 = vrot.lane.b32.xlu0 %v5691, 104
    %v7006 = vpop.permute.xlu0 %7005
    %7007 = vrot.lane.b32.xlu0 %v5790, 104
    %v7008 = vpop.permute.xlu0 %7007
    %7009 = vrot.lane.b32.xlu0 %v5795, 104
    %v7010 = vpop.permute.xlu0 %7009
    %v7011 = vsel %vm358, %v7006, 0
    %v7013 = vsel %vm358, %v7008, 0
    %v7015 = vsel %vm358, %v7010, 0
    %7017 = vmatprep.subr.mxu0 0.0
    %7018 = vmatpush1.xpose.msra.mxu0 0.0
    %7019 = vmatprep.subr.mxu0 0.0
    %7020 = vmatpush1.xpose.msra.mxu0 0.0
    %7021 = vmatprep.subr.mxu0 0.0
    %7022 = vmatpush1.xpose.msra.mxu0 0.0
    %7023 = vmatprep.subr.mxu0 0.0
    %7024 = vmatpush1.xpose.msra.mxu0 0.0
    %7025 = vmatprep.subr.mxu0 0.0
    %7026 = vmatpush1.xpose.msra.mxu0 0.0
    %7027 = vmatprep.subr.mxu0 0.0
    %7028 = vmatpush1.xpose.msra.mxu0 0.0
    %7029 = vmatprep.subr.mxu0 0.0
    %7030 = vmatpush1.xpose.msra.mxu0 0.0
    %7031 = vmatprep.subr.mxu0 0.0
    %7032 = vmatpush1.xpose.msra.mxu0 0.0
    %7033 = vmatprep.subr.mxu0 0.0
    %7034 = vmatpush1.xpose.msra.mxu0 0.0
    %7035 = vmatprep.subr.mxu0 0.0
    %7036 = vmatpush1.xpose.msra.mxu0 0.0
    %7037 = vmatprep.subr.mxu0 0.0
    %7038 = vmatpush1.xpose.msra.mxu0 0.0
    %7039 = vmatprep.subr.mxu0 0.0
    %7040 = vmatpush1.xpose.msra.mxu0 0.0
    %7041 = vmatprep.subr.mxu0 0.0
    %7042 = vmatpush1.xpose.msra.mxu0 0.0
    %7043 = vmatprep.subr.mxu0 0.0
    %7044 = vmatpush1.xpose.msra.mxu0 0.0
    %7045 = vmatprep.subr.mxu0 0.0
    %7046 = vmatpush1.xpose.msra.mxu0 %v7015
    %7047 = vmatprep.subr.mxu0 0.0
    %7048 = vmatpush1.xpose.msra.mxu0 %v7013
    %7049 = vmatprep.subr.mxu0 0.0
    %7050 = vmatpush2.xpose.msra.mxu0 0.0
    %7051 = vmatprep.subr.mxu0 0.0
    %7052 = vmatpush2.xpose.msra.mxu0 0.0
    %7053 = vmatprep.subr.mxu0 0.0
    %7054 = vmatpush2.xpose.msra.mxu0 0.0
    %7055 = vmatprep.subr.mxu0 0.0
    %7056 = vmatpush2.xpose.msra.mxu0 0.0
    %7057 = vmatprep.subr.mxu0 0.0
    %7058 = vmatpush2.xpose.msra.mxu0 0.0
    %7059 = vmatprep.subr.mxu0 0.0
    %7060 = vmatpush2.xpose.msra.mxu0 0.0
    %7061 = vmatprep.subr.mxu0 0.0
    %7062 = vmatpush2.xpose.msra.mxu0 0.0
    %7063 = vmatprep.subr.mxu0 0.0
    %7064 = vmatpush2.xpose.msra.mxu0 0.0
    %7065 = vmatprep.subr.mxu0 0.0
    %7066 = vmatpush2.xpose.msra.mxu0 0.0
    %7067 = vmatprep.subr.mxu0 0.0
    %7068 = vmatpush2.xpose.msra.mxu0 0.0
    %7069 = vmatprep.subr.mxu0 0.0
    %7070 = vmatpush2.xpose.msra.mxu0 0.0
    %7071 = vmatprep.subr.mxu0 0.0
    %7072 = vmatpush2.xpose.msra.mxu0 0.0
    %7073 = vmatprep.subr.mxu0 0.0
    %7074 = vmatpush2.xpose.msra.mxu0 0.0
    %7075 = vmatprep.subr.mxu0 0.0
    %7076 = vmatpush2.xpose.msra.mxu0 0.0
    %7077 = vmatprep.subr.mxu0 0.0
    %7078 = vmatpush2.xpose.msra.mxu0 0.0
    %7079 = vmatprep.subr.mxu0 0.0
    %7080 = vmatpush2.xpose.msra.mxu0 0.0
    %7081 = vmatprep.mubr.f32.mxu0 0.0
    %7082 = vmatmul.mubr.f32.gmra.mxu0 %v7011
    %v7083 = vpop.f32.mrf.mxu0
    %v7084 = vadd.f32 0.0, %v7083
    %v7085 = vpop.f32.mrf.mxu0
    %7086 = vdwg.mxu0
    %v7087 = vsel %vm1696, %v7002, -inf
    %7088 = vmax.xlane.f32.xlu0 %v7087
    %v7089 = vpop.xlane.xlu0 %7088
    %v7090 = vsel %vm1696, %v7084, -inf
    %7091 = vmax.xlane.f32.xlu0 %v7090
    %v7092 = vpop.xlane.xlu0 %7091
    %v7093 = vsub.f32 %v7002, %v7089
    %v7094 = vsub.f32 %v7084, %v7092
    %v7095 = vmul.f32 %v7093, 1.442695
    %v7096 = vpow.pop %v7095
    %v7097 = vmul.f32 %v7094, 1.442695
    %v7098 = vpow.pop %v7097
    %v7099 = vsel %vm1696, %v7096, 0.0
    %7100 = vadd.xlane.f32.xlu0 %v7099
    %v7101 = vpop.xlane.xlu0 %7100
    %v7102 = vsel %vm1696, %v7098, 0.0
    %7103 = vadd.xlane.f32.xlu0 %v7102
    %v7104 = vpop.xlane.xlu0 %7103
    %v7105 = vrcp.pop %v7101
    %v7106 = vrcp.pop %v7104
    %v7107 = vmul.f32 %v7096, %v7105
    %v7108 = vmul.f32 %v7098, %v7106
    %7109 = vrot.lane.b32.xlu0 %v5880, 104
    %v7110 = vpop.permute.xlu0 %7109
    %7111 = vrot.lane.b32.xlu0 %v5885, 104
    %v7112 = vpop.permute.xlu0 %7111
    %v7116 = vsel %vm1696, %v7107, 0
    %7118 = vmatprep.subr.mxu0 0.0
    %7119 = vmatpush1.msra.mxu0 0.0
    %7120 = vmatprep.subr.mxu0 0.0
    %7121 = vmatpush1.msra.mxu0 0.0
    %7122 = vmatprep.subr.mxu0 0.0
    %7123 = vmatpush1.msra.mxu0 0.0
    %7124 = vmatprep.subr.mxu0 0.0
    %7125 = vmatpush1.msra.mxu0 0.0
    %7126 = vmatprep.subr.mxu0 0.0
    %7127 = vmatpush1.msra.mxu0 0.0
    %7128 = vmatprep.subr.mxu0 0.0
    %7129 = vmatpush1.msra.mxu0 0.0
    %7130 = vmatprep.subr.mxu0 0.0
    %7131 = vmatpush1.msra.mxu0 0.0
    %7132 = vmatprep.subr.mxu0 0.0
    %7133 = vmatpush1.msra.mxu0 0.0
    %7134 = vmatprep.subr.mxu0 0.0
    %7135 = vmatpush1.msra.mxu0 0.0
    %7136 = vmatprep.subr.mxu0 0.0
    %7137 = vmatpush1.msra.mxu0 0.0
    %7138 = vmatprep.subr.mxu0 0.0
    %7139 = vmatpush1.msra.mxu0 0.0
    %7140 = vmatprep.subr.mxu0 0.0
    %7141 = vmatpush1.msra.mxu0 0.0
    %7142 = vmatprep.subr.mxu0 0.0
    %7143 = vmatpush1.msra.mxu0 0.0
    %7144 = vmatprep.subr.mxu0 0.0
    %7145 = vmatpush1.msra.mxu0 0.0
    %7146 = vmatprep.subr.mxu0 0.0
    %7147 = vmatpush1.msra.mxu0 %v7112
    %7148 = vmatprep.subr.mxu0 0.0
    %7149 = vmatpush1.msra.mxu0 %v7110
    %7150 = vmatprep.subr.mxu0 0.0
    %7151 = vmatpush2.msra.mxu0 0.0
    %7152 = vmatprep.subr.mxu0 0.0
    %7153 = vmatpush2.msra.mxu0 0.0
    %7154 = vmatprep.subr.mxu0 0.0
    %7155 = vmatpush2.msra.mxu0 0.0
    %7156 = vmatprep.subr.mxu0 0.0
    %7157 = vmatpush2.msra.mxu0 0.0
    %7158 = vmatprep.subr.mxu0 0.0
    %7159 = vmatpush2.msra.mxu0 0.0
    %7160 = vmatprep.subr.mxu0 0.0
    %7161 = vmatpush2.msra.mxu0 0.0
    %7162 = vmatprep.subr.mxu0 0.0
    %7163 = vmatpush2.msra.mxu0 0.0
    %7164 = vmatprep.subr.mxu0 0.0
    %7165 = vmatpush2.msra.mxu0 0.0
    %7166 = vmatprep.subr.mxu0 0.0
    %7167 = vmatpush2.msra.mxu0 0.0
    %7168 = vmatprep.subr.mxu0 0.0
    %7169 = vmatpush2.msra.mxu0 0.0
    %7170 = vmatprep.subr.mxu0 0.0
    %7171 = vmatpush2.msra.mxu0 0.0
    %7172 = vmatprep.subr.mxu0 0.0
    %7173 = vmatpush2.msra.mxu0 0.0
    %7174 = vmatprep.subr.mxu0 0.0
    %7175 = vmatpush2.msra.mxu0 0.0
    %7176 = vmatprep.subr.mxu0 0.0
    %7177 = vmatpush2.msra.mxu0 0.0
    %7178 = vmatprep.subr.mxu0 0.0
    %7179 = vmatpush2.msra.mxu0 0.0
    %7180 = vmatprep.subr.mxu0 0.0
    %7181 = vmatpush2.msra.mxu0 0.0
    %7182 = vmatprep.mubr.f32.mxu0 0.0
    %7183 = vmatmul.mubr.f32.gmra.mxu0 %v7116
    %v7184 = vpop.f32.mrf.mxu0
    %v7185 = vadd.f32 0.0, %v7184
    %v7186 = vpop.f32.mrf.mxu0
    %7187 = vdwg.mxu0
    %7188 = vrot.lane.b32.xlu0 %v5890, 104
    %v7189 = vpop.permute.xlu0 %7188
    %7190 = vrot.lane.b32.xlu0 %v5895, 104
    %v7191 = vpop.permute.xlu0 %7190
    %v7195 = vsel %vm1696, %v7108, 0
    %7197 = vmatprep.subr.mxu0 0.0
    %7198 = vmatpush1.msra.mxu0 0.0
    %7199 = vmatprep.subr.mxu0 0.0
    %7200 = vmatpush1.msra.mxu0 0.0
    %7201 = vmatprep.subr.mxu0 0.0
    %7202 = vmatpush1.msra.mxu0 0.0
    %7203 = vmatprep.subr.mxu0 0.0
    %7204 = vmatpush1.msra.mxu0 0.0
    %7205 = vmatprep.subr.mxu0 0.0
    %7206 = vmatpush1.msra.mxu0 0.0
    %7207 = vmatprep.subr.mxu0 0.0
    %7208 = vmatpush1.msra.mxu0 0.0
    %7209 = vmatprep.subr.mxu0 0.0
    %7210 = vmatpush1.msra.mxu0 0.0
    %7211 = vmatprep.subr.mxu0 0.0
    %7212 = vmatpush1.msra.mxu0 0.0
    %7213 = vmatprep.subr.mxu0 0.0
    %7214 = vmatpush1.msra.mxu0 0.0
    %7215 = vmatprep.subr.mxu0 0.0
    %7216 = vmatpush1.msra.mxu0 0.0
    %7217 = vmatprep.subr.mxu0 0.0
    %7218 = vmatpush1.msra.mxu0 0.0
    %7219 = vmatprep.subr.mxu0 0.0
    %7220 = vmatpush1.msra.mxu0 0.0
    %7221 = vmatprep.subr.mxu0 0.0
    %7222 = vmatpush1.msra.mxu0 0.0
    %7223 = vmatprep.subr.mxu0 0.0
    %7224 = vmatpush1.msra.mxu0 0.0
    %7225 = vmatprep.subr.mxu0 0.0
    %7226 = vmatpush1.msra.mxu0 %v7191
    %7227 = vmatprep.subr.mxu0 0.0
    %7228 = vmatpush1.msra.mxu0 %v7189
    %7229 = vmatprep.subr.mxu0 0.0
    %7230 = vmatpush2.msra.mxu0 0.0
    %7231 = vmatprep.subr.mxu0 0.0
    %7232 = vmatpush2.msra.mxu0 0.0
    %7233 = vmatprep.subr.mxu0 0.0
    %7234 = vmatpush2.msra.mxu0 0.0
    %7235 = vmatprep.subr.mxu0 0.0
    %7236 = vmatpush2.msra.mxu0 0.0
    %7237 = vmatprep.subr.mxu0 0.0
    %7238 = vmatpush2.msra.mxu0 0.0
    %7239 = vmatprep.subr.mxu0 0.0
    %7240 = vmatpush2.msra.mxu0 0.0
    %7241 = vmatprep.subr.mxu0 0.0
    %7242 = vmatpush2.msra.mxu0 0.0
    %7243 = vmatprep.subr.mxu0 0.0
    %7244 = vmatpush2.msra.mxu0 0.0
    %7245 = vmatprep.subr.mxu0 0.0
    %7246 = vmatpush2.msra.mxu0 0.0
    %7247 = vmatprep.subr.mxu0 0.0
    %7248 = vmatpush2.msra.mxu0 0.0
    %7249 = vmatprep.subr.mxu0 0.0
    %7250 = vmatpush2.msra.mxu0 0.0
    %7251 = vmatprep.subr.mxu0 0.0
    %7252 = vmatpush2.msra.mxu0 0.0
    %7253 = vmatprep.subr.mxu0 0.0
    %7254 = vmatpush2.msra.mxu0 0.0
    %7255 = vmatprep.subr.mxu0 0.0
    %7256 = vmatpush2.msra.mxu0 0.0
    %7257 = vmatprep.subr.mxu0 0.0
    %7258 = vmatpush2.msra.mxu0 0.0
    %7259 = vmatprep.subr.mxu0 0.0
    %7260 = vmatpush2.msra.mxu0 0.0
    %7261 = vmatprep.mubr.f32.mxu0 0.0
    %7262 = vmatmul.mubr.f32.gmra.mxu0 %v7195
    %v7263 = vpop.f32.mrf.mxu0
    %v7264 = vadd.f32 0.0, %v7263
    %v7265 = vpop.f32.mrf.mxu0
    %7266 = vdwg.mxu0
    %7269 = vrot.lane.b32.xlu0 %v6495, 8
    %v7270 = vpop.permute.xlu0 %7269
    %7271 = vrot.lane.b32.xlu0 %v6576, 8
    %v7272 = vpop.permute.xlu0 %7271
    %7277 = vrot.lane.b32.xlu0 %v6841, 16
    %v7278 = vpop.permute.xlu0 %7277
    %7279 = vrot.lane.b32.xlu0 %v6920, 16
    %v7280 = vpop.permute.xlu0 %7279
    %7285 = vrot.lane.b32.xlu0 %v7185, 24
    %v7286 = vpop.permute.xlu0 %7285
    %7287 = vrot.lane.b32.xlu0 %v7264, 24
    %v7288 = vpop.permute.xlu0 %7287
    %v7291 = vsel %vm358, %v6155, %v7270
    %v7292 = vsel %vm358, %v6228, %v7272
    %v7293 = vsel %vm1696, %v7291, %v7278
    %v7294 = vsel %vm1696, %v7292, %v7280
    %v7295 = vsel %vm1699, %v7293, %v7286
    %v7296 = vsel %vm1699, %v7294, %v7288
    %v7298 = vlaneseq
    %v7299 = vshrl.u32 %v7298, 7
    %v7300 = vsub.s32 0, %v7299
    %v7301 = vrot.slane %v5904, %v7300
    %v7304 = vsel %vm168, %v7295, 0
    %v7307 = vsel %vm168, %v7296, 0
    %7309 = vmatprep.subr.mxu0 0.0
    %7310 = vmatpush1.msra.mxu0 0.0
    %7311 = vmatprep.subr.mxu0 0.0
    %7312 = vmatpush1.msra.mxu0 0.0
    %7313 = vmatprep.subr.mxu0 0.0
    %7314 = vmatpush1.msra.mxu0 0.0
    %7315 = vmatprep.subr.mxu0 0.0
    %7316 = vmatpush1.msra.mxu0 0.0
    %7317 = vmatprep.subr.mxu0 0.0
    %7318 = vmatpush1.msra.mxu0 0.0
    %7319 = vmatprep.subr.mxu0 0.0
    %7320 = vmatpush1.msra.mxu0 0.0
    %7321 = vmatprep.subr.mxu0 0.0
    %7322 = vmatpush1.msra.mxu0 0.0
    %7323 = vmatprep.subr.mxu0 0.0
    %7324 = vmatpush1.msra.mxu0 0.0
    %7325 = vmatprep.subr.mxu0 0.0
    %7326 = vmatpush1.msra.mxu0 0.0
    %7327 = vmatprep.subr.mxu0 0.0
    %7328 = vmatpush1.msra.mxu0 0.0
    %7329 = vmatprep.subr.mxu0 0.0
    %7330 = vmatpush1.msra.mxu0 0.0
    %7331 = vmatprep.subr.mxu0 0.0
    %7332 = vmatpush1.msra.mxu0 0.0
    %7333 = vmatprep.subr.mxu0 0.0
    %7334 = vmatpush1.msra.mxu0 %v5902
    %7335 = vmatprep.subr.mxu0 0.0
    %7336 = vmatpush1.msra.mxu0 %v5901
    %7337 = vmatprep.subr.mxu0 0.0
    %7338 = vmatpush1.msra.mxu0 %v5900
    %7339 = vmatprep.subr.mxu0 0.0
    %7340 = vmatpush1.msra.mxu0 %v5899
    %7341 = vmatprep.subr.mxu0 0.0
    %7342 = vmatpush2.msra.mxu0 0.0
    %7343 = vmatprep.subr.mxu0 0.0
    %7344 = vmatpush2.msra.mxu0 0.0
    %7345 = vmatprep.subr.mxu0 0.0
    %7346 = vmatpush2.msra.mxu0 0.0
    %7347 = vmatprep.subr.mxu0 0.0
    %7348 = vmatpush2.msra.mxu0 0.0
    %7349 = vmatprep.subr.mxu0 0.0
    %7350 = vmatpush2.msra.mxu0 0.0
    %7351 = vmatprep.subr.mxu0 0.0
    %7352 = vmatpush2.msra.mxu0 0.0
    %7353 = vmatprep.subr.mxu0 0.0
    %7354 = vmatpush2.msra.mxu0 0.0
    %7355 = vmatprep.subr.mxu0 0.0
    %7356 = vmatpush2.msra.mxu0 0.0
    %7357 = vmatprep.subr.mxu0 0.0
    %7358 = vmatpush2.msra.mxu0 0.0
    %7359 = vmatprep.subr.mxu0 0.0
    %7360 = vmatpush2.msra.mxu0 0.0
    %7361 = vmatprep.subr.mxu0 0.0
    %7362 = vmatpush2.msra.mxu0 0.0
    %7363 = vmatprep.subr.mxu0 0.0
    %7364 = vmatpush2.msra.mxu0 0.0
    %7365 = vmatprep.subr.mxu0 0.0
    %7366 = vmatpush2.msra.mxu0 0.0
    %7367 = vmatprep.subr.mxu0 0.0
    %7368 = vmatpush2.msra.mxu0 0.0
    %7369 = vmatprep.subr.mxu0 0.0
    %7370 = vmatpush2.msra.mxu0 0.0
    %7371 = vmatprep.subr.mxu0 0.0
    %7372 = vmatpush2.msra.mxu0 0.0
    %7373 = vmatprep.mubr.f32.mxu0 0.0
    %7374 = vmatmul.mubr.f32.gmra.mxu0 %v7304
    %v7375 = vpop.f32.mrf.mxu0
    %v7376 = vadd.f32 %v7301, %v7375
    %v7377 = vpop.f32.mrf.mxu0
    %7378 = vmatprep.mubr.f32.mxu0 0.0
    %7379 = vmatmul.mubr.f32.gmra.mxu0 %v7307
    %v7380 = vpop.f32.mrf.mxu0
    %v7381 = vadd.f32 %v7301, %v7380
    %v7382 = vpop.f32.mrf.mxu0
    %7383 = vdwg.mxu0
    %v7384 = vadd.f32 %v5596, %v7376
    %v7385 = vadd.f32 %v5597, %v7381
    %v7386 = vmul.f32 %v7384, %v7384
    %v7387 = vmul.f32 %v7385, %v7385
    %v7388 = vsel %vm168, %v7384, 0.0
    %7389 = vadd.xlane.f32.xlu0 %v7388
    %v7390 = vpop.xlane.xlu0 %7389
    %v7391 = vsel %vm168, %v7385, 0.0
    %7392 = vadd.xlane.f32.xlu0 %v7391
    %v7393 = vpop.xlane.xlu0 %7392
    %v7394 = vsel %vm168, %v7386, 0.0
    %7395 = vadd.xlane.f32.xlu0 %v7394
    %v7396 = vpop.xlane.xlu0 %7395
    %v7397 = vsel %vm168, %v7387, 0.0
    %7398 = vadd.xlane.f32.xlu0 %v7397
    %v7399 = vpop.xlane.xlu0 %7398
    %v7400 = vmul.f32 %v7390, 0.03125
    %v7401 = vmul.f32 %v7393, 0.03125
    %v7402 = vmul.f32 %v7396, 0.03125
    %v7403 = vmul.f32 %v7399, 0.03125
    %v7404 = vmul.f32 %v7400, %v7400
    %v7405 = vmul.f32 %v7401, %v7401
    %v7406 = vsub.f32 %v7402, %v7404
    %v7407 = vsub.f32 %v7403, %v7405
    %v7408 = vsub.f32 %v7384, %v7400
    %v7409 = vsub.f32 %v7385, %v7401
    %v7410 = vadd.f32 %v7406, 1e-05
    %v7411 = vadd.f32 %v7407, 1e-05
    %v7412 = vrsqrt.pop %v7410
    %v7413 = vrsqrt.pop %v7411
    %v7414 = vmul.f32 %v7408, %v7412
    %v7415 = vmul.f32 %v7409, %v7413
    %v7416 = vlaneseq
    %v7417 = vshrl.u32 %v7416, 7
    %v7418 = vsub.s32 2, %v7417
    %v7419 = vrot.slane %v3919, %v7418
    %v7420 = vmul.f32 %v7414, %v7419
    %v7421 = vmul.f32 %v7415, %v7419
    %v7422 = vlaneseq
    %v7423 = vshrl.u32 %v7422, 7
    %v7424 = vsub.s32 3, %v7423
    %v7425 = vrot.slane %v3919, %v7424
    %v7426 = vadd.f32 %v7420, %v7425
    %v7427 = vadd.f32 %v7421, %v7425
    %s7428 = scalar_lea.vmem [#allocation11], 1
    %v7429 = vld [vmem:[%s7428] sm:$0x1]
    %s7430 = scalar_lea.vmem %s8, 32
    %v7431 = vld [vmem:[%s7430] sm:$0xff]
    %v7432 = vld [vmem:[%s7430 + $0x8] sm:$0xff]
    %v7433 = vld [vmem:[%s7430 + $0x10] sm:$0xff]
    %v7434 = vld [vmem:[%s7430 + $0x18] sm:$0xff]
    %v7436 = vlaneseq
    %v7437 = vshrl.u32 %v7436, 7
    %v7438 = vsub.s32 0, %v7437
    %v7439 = vrot.slane %v7429, %v7438
    %v7442 = vsel %vm168, %v7426, 0
    %v7445 = vsel %vm168, %v7427, 0
    %7447 = vmatprep.subr.mxu0 0.0
    %7448 = vmatpush1.msra.mxu0 0.0
    %7449 = vmatprep.subr.mxu0 0.0
    %7450 = vmatpush1.msra.mxu0 0.0
    %7451 = vmatprep.subr.mxu0 0.0
    %7452 = vmatpush1.msra.mxu0 0.0
    %7453 = vmatprep.subr.mxu0 0.0
    %7454 = vmatpush1.msra.mxu0 0.0
    %7455 = vmatprep.subr.mxu0 0.0
    %7456 = vmatpush1.msra.mxu0 0.0
    %7457 = vmatprep.subr.mxu0 0.0
    %7458 = vmatpush1.msra.mxu0 0.0
    %7459 = vmatprep.subr.mxu0 0.0
    %7460 = vmatpush1.msra.mxu0 0.0
    %7461 = vmatprep.subr.mxu0 0.0
    %7462 = vmatpush1.msra.mxu0 0.0
    %7463 = vmatprep.subr.mxu0 0.0
    %7464 = vmatpush1.msra.mxu0 0.0
    %7465 = vmatprep.subr.mxu0 0.0
    %7466 = vmatpush1.msra.mxu0 0.0
    %7467 = vmatprep.subr.mxu0 0.0
    %7468 = vmatpush1.msra.mxu0 0.0
    %7469 = vmatprep.subr.mxu0 0.0
    %7470 = vmatpush1.msra.mxu0 0.0
    %7471 = vmatprep.subr.mxu0 0.0
    %7472 = vmatpush1.msra.mxu0 %v7434
    %7473 = vmatprep.subr.mxu0 0.0
    %7474 = vmatpush1.msra.mxu0 %v7433
    %7475 = vmatprep.subr.mxu0 0.0
    %7476 = vmatpush1.msra.mxu0 %v7432
    %7477 = vmatprep.subr.mxu0 0.0
    %7478 = vmatpush1.msra.mxu0 %v7431
    %7479 = vmatprep.subr.mxu0 0.0
    %7480 = vmatpush2.msra.mxu0 0.0
    %7481 = vmatprep.subr.mxu0 0.0
    %7482 = vmatpush2.msra.mxu0 0.0
    %7483 = vmatprep.subr.mxu0 0.0
    %7484 = vmatpush2.msra.mxu0 0.0
    %7485 = vmatprep.subr.mxu0 0.0
    %7486 = vmatpush2.msra.mxu0 0.0
    %7487 = vmatprep.subr.mxu0 0.0
    %7488 = vmatpush2.msra.mxu0 0.0
    %7489 = vmatprep.subr.mxu0 0.0
    %7490 = vmatpush2.msra.mxu0 0.0
    %7491 = vmatprep.subr.mxu0 0.0
    %7492 = vmatpush2.msra.mxu0 0.0
    %7493 = vmatprep.subr.mxu0 0.0
    %7494 = vmatpush2.msra.mxu0 0.0
    %7495 = vmatprep.subr.mxu0 0.0
    %7496 = vmatpush2.msra.mxu0 0.0
    %7497 = vmatprep.subr.mxu0 0.0
    %7498 = vmatpush2.msra.mxu0 0.0
    %7499 = vmatprep.subr.mxu0 0.0
    %7500 = vmatpush2.msra.mxu0 0.0
    %7501 = vmatprep.subr.mxu0 0.0
    %7502 = vmatpush2.msra.mxu0 0.0
    %7503 = vmatprep.subr.mxu0 0.0
    %7504 = vmatpush2.msra.mxu0 0.0
    %7505 = vmatprep.subr.mxu0 0.0
    %7506 = vmatpush2.msra.mxu0 0.0
    %7507 = vmatprep.subr.mxu0 0.0
    %7508 = vmatpush2.msra.mxu0 0.0
    %7509 = vmatprep.subr.mxu0 0.0
    %7510 = vmatpush2.msra.mxu0 0.0
    %7511 = vmatprep.mubr.f32.mxu0 0.0
    %7512 = vmatmul.mubr.f32.gmra.mxu0 %v7442
    %v7513 = vpop.f32.mrf.mxu0
    %v7514 = vadd.f32 %v7439, %v7513
    %v7515 = vpop.f32.mrf.mxu0
    %7516 = vmatprep.mubr.f32.mxu0 0.0
    %7517 = vmatmul.mubr.f32.gmra.mxu0 %v7445
    %v7518 = vpop.f32.mrf.mxu0
    %v7519 = vadd.f32 %v7439, %v7518
    %v7520 = vpop.f32.mrf.mxu0
    %7521 = vdwg.mxu0
    %v7522 = vmax.f32 %v7514, 0.0
    %v7523 = vmax.f32 %v7519, 0.0
    %s7524 = scalar_lea.vmem %s9, 64
    %v7525 = vld [vmem:[%s7524] sm:$0xff]
    %v7526 = vld [vmem:[%s7524 + $0x8] sm:$0xff]
    %v7527 = vld [vmem:[%s7524 + $0x10] sm:$0xff]
    %v7528 = vld [vmem:[%s7524 + $0x18] sm:$0xff]
    %v7529 = vld [vmem:[%s7524 + $0x20] sm:$0xff]
    %v7530 = vld [vmem:[%s7524 + $0x28] sm:$0xff]
    %v7531 = vld [vmem:[%s7524 + $0x30] sm:$0xff]
    %v7532 = vld [vmem:[%s7524 + $0x38] sm:$0xff]
    %7533 = vrot.lane.b32.xlu0 %v7439, 64
    %v7534 = vpop.permute.xlu0 %7533
    %v7537 = vsel %vm3792, %v7522, 0
    %v7540 = vsel %vm3792, %v7523, 0
    %7542 = vmatprep.subr.mxu0 0.0
    %7543 = vmatpush1.msra.mxu0 0.0
    %7544 = vmatprep.subr.mxu0 0.0
    %7545 = vmatpush1.msra.mxu0 0.0
    %7546 = vmatprep.subr.mxu0 0.0
    %7547 = vmatpush1.msra.mxu0 0.0
    %7548 = vmatprep.subr.mxu0 0.0
    %7549 = vmatpush1.msra.mxu0 0.0
    %7550 = vmatprep.subr.mxu0 0.0
    %7551 = vmatpush1.msra.mxu0 0.0
    %7552 = vmatprep.subr.mxu0 0.0
    %7553 = vmatpush1.msra.mxu0 0.0
    %7554 = vmatprep.subr.mxu0 0.0
    %7555 = vmatpush1.msra.mxu0 0.0
    %7556 = vmatprep.subr.mxu0 0.0
    %7557 = vmatpush1.msra.mxu0 0.0
    %7558 = vmatprep.subr.mxu0 0.0
    %7559 = vmatpush1.msra.mxu0 %v7532
    %7560 = vmatprep.subr.mxu0 0.0
    %7561 = vmatpush1.msra.mxu0 %v7531
    %7562 = vmatprep.subr.mxu0 0.0
    %7563 = vmatpush1.msra.mxu0 %v7530
    %7564 = vmatprep.subr.mxu0 0.0
    %7565 = vmatpush1.msra.mxu0 %v7529
    %7566 = vmatprep.subr.mxu0 0.0
    %7567 = vmatpush1.msra.mxu0 %v7528
    %7568 = vmatprep.subr.mxu0 0.0
    %7569 = vmatpush1.msra.mxu0 %v7527
    %7570 = vmatprep.subr.mxu0 0.0
    %7571 = vmatpush1.msra.mxu0 %v7526
    %7572 = vmatprep.subr.mxu0 0.0
    %7573 = vmatpush1.msra.mxu0 %v7525
    %7574 = vmatprep.subr.mxu0 0.0
    %7575 = vmatpush2.msra.mxu0 0.0
    %7576 = vmatprep.subr.mxu0 0.0
    %7577 = vmatpush2.msra.mxu0 0.0
    %7578 = vmatprep.subr.mxu0 0.0
    %7579 = vmatpush2.msra.mxu0 0.0
    %7580 = vmatprep.subr.mxu0 0.0
    %7581 = vmatpush2.msra.mxu0 0.0
    %7582 = vmatprep.subr.mxu0 0.0
    %7583 = vmatpush2.msra.mxu0 0.0
    %7584 = vmatprep.subr.mxu0 0.0
    %7585 = vmatpush2.msra.mxu0 0.0
    %7586 = vmatprep.subr.mxu0 0.0
    %7587 = vmatpush2.msra.mxu0 0.0
    %7588 = vmatprep.subr.mxu0 0.0
    %7589 = vmatpush2.msra.mxu0 0.0
    %7590 = vmatprep.subr.mxu0 0.0
    %7591 = vmatpush2.msra.mxu0 0.0
    %7592 = vmatprep.subr.mxu0 0.0
    %7593 = vmatpush2.msra.mxu0 0.0
    %7594 = vmatprep.subr.mxu0 0.0
    %7595 = vmatpush2.msra.mxu0 0.0
    %7596 = vmatprep.subr.mxu0 0.0
    %7597 = vmatpush2.msra.mxu0 0.0
    %7598 = vmatprep.subr.mxu0 0.0
    %7599 = vmatpush2.msra.mxu0 0.0
    %7600 = vmatprep.subr.mxu0 0.0
    %7601 = vmatpush2.msra.mxu0 0.0
    %7602 = vmatprep.subr.mxu0 0.0
    %7603 = vmatpush2.msra.mxu0 0.0
    %7604 = vmatprep.subr.mxu0 0.0
    %7605 = vmatpush2.msra.mxu0 0.0
    %7606 = vmatprep.mubr.f32.mxu0 0.0
    %7607 = vmatmul.mubr.f32.gmra.mxu0 %v7537
    %v7608 = vpop.f32.mrf.mxu0
    %v7609 = vadd.f32 %v7534, %v7608
    %v7610 = vpop.f32.mrf.mxu0
    %7611 = vmatprep.mubr.f32.mxu0 0.0
    %7612 = vmatmul.mubr.f32.gmra.mxu0 %v7540
    %v7613 = vpop.f32.mrf.mxu0
    %v7614 = vadd.f32 %v7534, %v7613
    %v7615 = vpop.f32.mrf.mxu0
    %7616 = vdwg.mxu0
    %v7617 = vadd.f32 %v7426, %v7609
    %v7618 = vadd.f32 %v7427, %v7614
    %v7619 = vmul.f32 %v7617, %v7617
    %v7620 = vmul.f32 %v7618, %v7618
    %v7621 = vsel %vm168, %v7617, 0.0
    %7622 = vadd.xlane.f32.xlu0 %v7621
    %v7623 = vpop.xlane.xlu0 %7622
    %v7624 = vsel %vm168, %v7618, 0.0
    %7625 = vadd.xlane.f32.xlu0 %v7624
    %v7626 = vpop.xlane.xlu0 %7625
    %v7627 = vsel %vm168, %v7619, 0.0
    %7628 = vadd.xlane.f32.xlu0 %v7627
    %v7629 = vpop.xlane.xlu0 %7628
    %v7630 = vsel %vm168, %v7620, 0.0
    %7631 = vadd.xlane.f32.xlu0 %v7630
    %v7632 = vpop.xlane.xlu0 %7631
    %v7633 = vmul.f32 %v7623, 0.03125
    %v7634 = vmul.f32 %v7626, 0.03125
    %v7635 = vmul.f32 %v7629, 0.03125
    %v7636 = vmul.f32 %v7632, 0.03125
    %v7637 = vmul.f32 %v7633, %v7633
    %v7638 = vmul.f32 %v7634, %v7634
    %v7639 = vsub.f32 %v7635, %v7637
    %v7640 = vsub.f32 %v7636, %v7638
    %v7641 = vsub.f32 %v7617, %v7633
    %v7642 = vsub.f32 %v7618, %v7634
    %v7643 = vadd.f32 %v7639, 1e-05
    %v7644 = vadd.f32 %v7640, 1e-05
    %v7645 = vrsqrt.pop %v7643
    %v7646 = vrsqrt.pop %v7644
    %v7647 = vmul.f32 %v7641, %v7645
    %v7648 = vmul.f32 %v7642, %v7646
    %v7649 = vlaneseq
    %v7650 = vshrl.u32 %v7649, 7
    %v7651 = vsub.s32 4, %v7650
    %v7652 = vrot.slane %v3919, %v7651
    %v7653 = vmul.f32 %v7647, %v7652
    %v7654 = vmul.f32 %v7648, %v7652
    %v7655 = vlaneseq
    %v7656 = vshrl.u32 %v7655, 7
    %v7657 = vsub.s32 5, %v7656
    %v7658 = vrot.slane %v3919, %v7657
    %v7659 = vadd.f32 %v7653, %v7658
    %v7660 = vadd.f32 %v7654, %v7658
    %v7661 = vld [vmem:[#allocation13] sm:$0x3]
    %v7662 = vmul.f32 %v7659, %v7659
    %v7663 = vmul.f32 %v7660, %v7660
    %v7664 = vsel %vm168, %v7659, 0.0
    %7665 = vadd.xlane.f32.xlu0 %v7664
    %v7666 = vpop.xlane.xlu0 %7665
    %v7667 = vsel %vm168, %v7660, 0.0
    %7668 = vadd.xlane.f32.xlu0 %v7667
    %v7669 = vpop.xlane.xlu0 %7668
    %v7670 = vsel %vm168, %v7662, 0.0
    %7671 = vadd.xlane.f32.xlu0 %v7670
    %v7672 = vpop.xlane.xlu0 %7671
    %v7673 = vsel %vm168, %v7663, 0.0
    %7674 = vadd.xlane.f32.xlu0 %v7673
    %v7675 = vpop.xlane.xlu0 %7674
    %v7676 = vmul.f32 %v7666, 0.03125
    %v7677 = vmul.f32 %v7669, 0.03125
    %v7678 = vmul.f32 %v7672, 0.03125
    %v7679 = vmul.f32 %v7675, 0.03125
    %v7680 = vmul.f32 %v7676, %v7676
    %v7681 = vmul.f32 %v7677, %v7677
    %v7682 = vsub.f32 %v7678, %v7680
    %v7683 = vsub.f32 %v7679, %v7681
    %v7684 = vsub.f32 %v7659, %v7676
    %v7685 = vsub.f32 %v7660, %v7677
    %v7686 = vadd.f32 %v7682, 1e-05
    %v7687 = vadd.f32 %v7683, 1e-05
    %v7688 = vrsqrt.pop %v7686
    %v7689 = vrsqrt.pop %v7687
    %v7690 = vmul.f32 %v7684, %v7688
    %v7691 = vmul.f32 %v7685, %v7689
    %v7692 = vlaneseq
    %v7693 = vshrl.u32 %v7692, 7
    %v7694 = vsub.s32 0, %v7693
    %v7695 = vrot.slane %v7661, %v7694
    %v7696 = vmul.f32 %v7690, %v7695
    %v7697 = vmul.f32 %v7691, %v7695
    %v7698 = vlaneseq
    %v7699 = vshrl.u32 %v7698, 7
    %v7700 = vsub.s32 1, %v7699
    %v7701 = vrot.slane %v7661, %v7700
    %v7702 = vadd.f32 %v7696, %v7701
    %v7703 = vadd.f32 %v7697, %v7701
    %7704 = vst.msk [vmem:[#allocation14] sm:$0xff] %vm168, %v7702
    %7705 = vst.msk [vmem:[#allocation14 + $0x8] sm:$0xff] %vm168, %v7703
    // Predicated region
    $region82: #{tpu_custom_call.1} parent=1 // pred_check
      _
    $region83: #{tpu_custom_call.1} parent=1 // pred_check_branch
      %7707 = sbr.rel (0) target = $region85
    $region84: #{tpu_custom_call.1} parent=1 // pred_region
      %s7709 = ssub.s32 256, 256
      %7710 = vsyncadd [#allocation4], %s7709
      %s7711 = sshll.u32 [#allocation14], 4
      %s7712 = int_to_ptr.vmem [resolvable:$true] %s7711
      %7717 = dma.vmem_to_hbm [thread:$0]  %s7712, 256, %s13, [#allocation4], 128, 128, 8
    $region85: #{tpu_custom_call.1} parent=1 // pred_fallthru
      _
    // Predicated region
    $region86: #{tpu_custom_call.1} parent=1 // pred_check
      _
    $region87: #{tpu_custom_call.1} parent=1 // pred_check_branch
      %7719 = sbr.rel (0) target = $region89
    $region88: #{tpu_custom_call.1} parent=1 // pred_region
      %7720 = dma.done [#allocation4], 256
    $region89: #{tpu_custom_call.1} parent=1 // pred_fallthru
      _
    %7721 = vsyncpa [#allocation3], 1
    %7722 = vsyncpa [#allocation6], 1
    %7723 = vsyncpa [#allocation9], 1
    %7724 = vsyncpa [#allocation12], 1
    %7725 = vsyncpa [#allocation4], 1

</llo_original>
